<compile_context>
chip_gen: v7x
topology: tpu7x:2x2x1
jax: 0.10.0
libtpu: 0.0.40
codegen_flags: <defaults>
</compile_context>

<pallas_src>
import functools
import math

import numpy as np

import jax
import jax.numpy as jnp
from jax.experimental import pallas as pl
from jax.experimental.pallas import tpu as pltpu


# ----------------------------- in-kernel pieces -----------------------------

def _convt(h, r_ref, p_ref):
    """One ConvTranspose2d as 4 (kh) pairs of 2-D GEMMs.

    h:      (N*H_in, W_in*Cin) f32 activation (rows=(n,ih), lanes=(iw,ci)).
    r_ref:  (4, W_in*Cin, W_out*Cout) bf16  -- kw-taps + W-scatter + channel mix.
    p_ref:  (4, N*H_out, N*H_in)     f32   -- H-scatter (0/1 row selection).
    Returns (N*H_out, W_out*Cout) f32.
    """
    hb = h.astype(jnp.bfloat16)
    acc = None
    for kh in range(r_ref.shape[0]):
        t = jnp.dot(hb, r_ref[kh], preferred_element_type=jnp.float32)
        c = jnp.dot(p_ref[kh], t, preferred_element_type=jnp.float32)
        acc = c if acc is None else acc + c
    return acc


def _bn_lrelu(y, g_ref, gt_ref, gb_ref):
    """Training-mode BatchNorm2d (batch stats, eps=1e-5) + LeakyReLU(0.2).

    y:      (N*H, W*C) f32, lanes ordered (w-major, c-minor).
    g_ref:  (W*C, C) 0/1 fold matrix (sum over spatial w per channel).
    gt_ref: (C, W*C) its transpose (per-channel -> per-lane broadcast).
    gb_ref: (2, C) = [gamma; beta].
    """
    rows, lanes = y.shape
    cout = gt_ref.shape[0]
    inv_cnt = 1.0 / float(rows * (lanes // cout))        # 1 / (N*H*W)
    ones = jnp.ones((1, rows), jnp.float32)
    s1 = jnp.dot(ones, y, preferred_element_type=jnp.float32)        # (1, W*C)
    s2 = jnp.dot(ones, y * y, preferred_element_type=jnp.float32)
    mean = jnp.dot(s1, g_ref[...], preferred_element_type=jnp.float32) * inv_cnt
    ex2 = jnp.dot(s2, g_ref[...], preferred_element_type=jnp.float32) * inv_cnt
    # Single-pass variance; post-spectral-norm activations are small so
    # cancellation is benign.  TODO(synk): switch to two-pass if needed.
    var = ex2 - mean * mean
    gamma = gb_ref[0:1, :]
    beta = gb_ref[1:2, :]
    scale = gamma * jax.lax.rsqrt(var + 1e-5)             # (1, C)
    bias = beta - mean * scale
    scale_l = jnp.dot(scale, gt_ref[...], preferred_element_type=jnp.float32)
    bias_l = jnp.dot(bias, gt_ref[...], preferred_element_type=jnp.float32)
    z = y * scale_l + bias_l
    return jnp.maximum(z, 0.2 * z)


def _gen_kernel(x_ref,
                r0, p0, g0, q0, a0,
                r1, p1, g1, q1, a1,
                r2, p2, g2, q2, a2,
                r3, p3, g3, q3, a3,
                r4, p4,
                out_ref):
    """Whole generator: 5 fused ConvTranspose2d layers, VMEM resident."""
    h = x_ref[...]                                            # (N, nz) f32
    h = _bn_lrelu(_convt(h, r0, p0), g0, q0, a0)
    h = _bn_lrelu(_convt(h, r1, p1), g1, q1, a1)
    h = _bn_lrelu(_convt(h, r2, p2), g2, q2, a2)
    h = _bn_lrelu(_convt(h, r3, p3), g3, q3, a3)
    out_ref[...] = jnp.tanh(_convt(h, r4, p4))                # (N*64, 64*nc)


# ------------------------------- parameters ---------------------------------

def init_params(key, nz=16, ngf=8, nc=3, batch=2, k=4):
    """Builds the per-layer GEMM constants for the fused kernel.

    ConvTranspose2d weights: kaiming_normal_(fan_out, leaky_relu) + spectral
    norm (dim=1).  TODO(synk): PyTorch runs ONE power iteration per forward
    from a persistent random u; here sigma is converged deterministically at
    init, so outputs differ from an un-converged PyTorch reference.
    """
    chans = [nz, ngf * 8, ngf * 4, ngf * 2, ngf, nc]
    cfg = [(1, 0, True), (2, 1, True), (2, 1, True), (2, 1, True), (2, 1, False)]
    h = w = 1
    layers = []
    for i, (stride, pad, has_bn) in enumerate(cfg):
        cin, cout = chans[i], chans[i + 1]
        key, wk = jax.random.split(key)
        std = math.sqrt(2.0) / math.sqrt(cin * k * k)   # scale cancels under SN
        wt = std * jax.random.normal(wk, (cin, cout, k, k), jnp.float32)

        # spectral_norm (dim=1 for ConvTranspose2d): divide by largest sigma.
        wmat = jnp.transpose(wt, (1, 0, 2, 3)).reshape(cout, -1)
        u = jnp.ones((cout,), jnp.float32) / math.sqrt(cout)
        v = wmat.T @ u
        for _ in range(30):
            v = wmat.T @ u
            v = v / (jnp.linalg.norm(v) + 1e-12)
            u = wmat @ v
            u = u / (jnp.linalg.norm(u) + 1e-12)
        sigma = u @ (wmat @ v)
        wnp = np.asarray(wt / sigma)                     # (cin, cout, k, k)

        h_out = (h - 1) * stride - 2 * pad + k
        w_out = (w - 1) * stride - 2 * pad + k

        # R_kh: width-scatter + channel mix.  R[kh, iw*cin+ci, ow*cout+co] =
        #   sum_kw w[ci,co,kh,kw] * [ow == iw*stride - pad + kw]
        R = np.zeros((k, w * cin, w_out * cout), np.float32)
        for kh in range(k):
            for kw in range(k):
                for iw in range(w):
                    ow = iw * stride - pad + kw
                    if 0 <= ow < w_out:
                        R[kh, iw * cin:(iw + 1) * cin,
                          ow * cout:(ow + 1) * cout] += wnp[:, :, kh, kw]

        # P_kh: height-scatter. P[kh, n*h_out+oh, n*h+ih] = [oh == ih*s-p+kh]
        P = np.zeros((k, batch * h_out, batch * h), np.float32)
        for kh in range(k):
            for n in range(batch):
                for ih in range(h):
                    oh = ih * stride - pad + kh
                    if 0 <= oh < h_out:
                        P[kh, n * h_out + oh, n * h + ih] = 1.0

        layer = {"R": jnp.asarray(R, jnp.bfloat16), "P": jnp.asarray(P)}

        if has_bn:
            # G folds lanes (w-major, c-minor) -> per channel; GT broadcasts back.
            G = np.zeros((w_out * cout, cout), np.float32)
            for ow in range(w_out):
                for co in range(cout):
                    G[ow * cout + co, co] = 1.0
            key, gk = jax.random.split(key)
            gamma = 1.0 + 0.02 * jax.random.normal(gk, (cout,), jnp.float32)
            beta = jnp.zeros((cout,), jnp.float32)
            layer["G"] = jnp.asarray(G)
            layer["GT"] = jnp.asarray(np.ascontiguousarray(G.T))
            layer["gb"] = jnp.stack([gamma, beta], axis=0)   # (2, cout)

        layers.append(layer)
        h, w = h_out, w_out

    meta = dict(batch=batch, nc=nc, h_out=h, w_out=w)
    return layers, meta


# -------------------------------- forward -----------------------------------

def _fs(shape):
    nd = len(shape)
    return pl.BlockSpec(shape, lambda i, nd=nd: (0,) * nd)


def generator_forward(x, layers, *, batch, nc, h_out, w_out):
    """x: (N, nz) or (N, nz, 1, 1).  Returns (N, nc, 64, 64) float32."""
    if x.ndim == 4:
        x = x.reshape(x.shape[0], x.shape[1])
    x2 = x.astype(jnp.float32)                 # rows=(n, ih=0), lanes=(iw=0, ci)

    inputs = [x2]
    for lyr in layers:
        inputs.append(lyr["R"])
        inputs.append(lyr["P"])
        if "G" in lyr:
            inputs += [lyr["G"], lyr["GT"], lyr["gb"]]

    out = pl.pallas_call(
        _gen_kernel,
        out_shape=jax.ShapeDtypeStruct((batch * h_out, w_out * nc), jnp.float32),
        grid=(1,),
        in_specs=[_fs(a.shape) for a in inputs],
        out_specs=_fs((batch * h_out, w_out * nc)),
        compiler_params=pltpu.CompilerParams(dimension_semantics=("arbitrary",)),
    )(*inputs)

    # (N*H, W*C) lane-dense kernel layout -> NCHW (tiny, outside the kernel).
    return out.reshape(batch, h_out, w_out, nc).transpose(0, 3, 1, 2)


# ---------------------------------- main -------------------------------------

if __name__ == "__main__":
    key = jax.random.PRNGKey(0)
    pkey, xkey = jax.random.split(key)

    # dim_args = {'random_dim': 16, 'gen_dim': 8, 'num_channels': 3}
    nz, ngf, nc, batch = 16, 8, 3, 2
    layers, meta = init_params(pkey, nz=nz, ngf=ngf, nc=nc, batch=batch)

    fwd = jax.jit(functools.partial(
        generator_forward, batch=meta["batch"], nc=meta["nc"],
        h_out=meta["h_out"], w_out=meta["w_out"]))

    x = jax.random.normal(xkey, (batch, nz), jnp.float32)   # 2-D latent input
    out = jax.block_until_ready(fwd(x, layers))

    assert out.shape == (batch, nc, 64, 64), out.shape
    assert out.dtype == jnp.float32
    assert bool(jnp.all(jnp.isfinite(out)))
    print("KERNEL_OK")
</pallas_src>

<mosaic_0001>
module attributes {stable_mosaic.version = 11 : i64} {
  func.func @_gen_kernel(%arg0: i32, %arg1: memref<2x16xf32, #tpu.memory_space<vmem>>, %arg2: memref<4x16x256xbf16, #tpu.memory_space<vmem>>, %arg3: memref<4x8x2xf32, #tpu.memory_space<vmem>>, %arg4: memref<256x64xf32, #tpu.memory_space<vmem>>, %arg5: memref<64x256xf32, #tpu.memory_space<vmem>>, %arg6: memref<2x64xf32, #tpu.memory_space<vmem>>, %arg7: memref<4x256x256xbf16, #tpu.memory_space<vmem>>, %arg8: memref<4x16x8xf32, #tpu.memory_space<vmem>>, %arg9: memref<256x32xf32, #tpu.memory_space<vmem>>, %arg10: memref<32x256xf32, #tpu.memory_space<vmem>>, %arg11: memref<2x32xf32, #tpu.memory_space<vmem>>, %arg12: memref<4x256x256xbf16, #tpu.memory_space<vmem>>, %arg13: memref<4x32x16xf32, #tpu.memory_space<vmem>>, %arg14: memref<256x16xf32, #tpu.memory_space<vmem>>, %arg15: memref<16x256xf32, #tpu.memory_space<vmem>>, %arg16: memref<2x16xf32, #tpu.memory_space<vmem>>, %arg17: memref<4x256x256xbf16, #tpu.memory_space<vmem>>, %arg18: memref<4x64x32xf32, #tpu.memory_space<vmem>>, %arg19: memref<256x8xf32, #tpu.memory_space<vmem>>, %arg20: memref<8x256xf32, #tpu.memory_space<vmem>>, %arg21: memref<2x8xf32, #tpu.memory_space<vmem>>, %arg22: memref<4x256x192xbf16, #tpu.memory_space<vmem>>, %arg23: memref<4x128x64xf32, #tpu.memory_space<vmem>>, %arg24: memref<128x192xf32, #tpu.memory_space<vmem>>) attributes {dimension_semantics = [#tpu.dimension_semantics<arbitrary>], iteration_bounds = array<i64: 1>, scalar_prefetch = 0 : i64, scratch_operands = 0 : i64, tpu.core_type = #tpu.core_type<tc>, window_params = [{pipeline_mode = #tpu.pipeline_mode<synchronous>, transform_indices = @transform_0, window_bounds = array<i64: 2, 16>}, {pipeline_mode = #tpu.pipeline_mode<synchronous>, transform_indices = @transform_1, window_bounds = array<i64: 4, 16, 256>}, {pipeline_mode = #tpu.pipeline_mode<synchronous>, transform_indices = @transform_2, window_bounds = array<i64: 4, 8, 2>}, {pipeline_mode = #tpu.pipeline_mode<synchronous>, transform_indices = @transform_3, window_bounds = array<i64: 256, 64>}, {pipeline_mode = #tpu.pipeline_mode<synchronous>, transform_indices = @transform_4, window_bounds = array<i64: 64, 256>}, {pipeline_mode = #tpu.pipeline_mode<synchronous>, transform_indices = @transform_5, window_bounds = array<i64: 2, 64>}, {pipeline_mode = #tpu.pipeline_mode<synchronous>, transform_indices = @transform_6, window_bounds = array<i64: 4, 256, 256>}, {pipeline_mode = #tpu.pipeline_mode<synchronous>, transform_indices = @transform_7, window_bounds = array<i64: 4, 16, 8>}, {pipeline_mode = #tpu.pipeline_mode<synchronous>, transform_indices = @transform_8, window_bounds = array<i64: 256, 32>}, {pipeline_mode = #tpu.pipeline_mode<synchronous>, transform_indices = @transform_9, window_bounds = array<i64: 32, 256>}, {pipeline_mode = #tpu.pipeline_mode<synchronous>, transform_indices = @transform_10, window_bounds = array<i64: 2, 32>}, {pipeline_mode = #tpu.pipeline_mode<synchronous>, transform_indices = @transform_11, window_bounds = array<i64: 4, 256, 256>}, {pipeline_mode = #tpu.pipeline_mode<synchronous>, transform_indices = @transform_12, window_bounds = array<i64: 4, 32, 16>}, {pipeline_mode = #tpu.pipeline_mode<synchronous>, transform_indices = @transform_13, window_bounds = array<i64: 256, 16>}, {pipeline_mode = #tpu.pipeline_mode<synchronous>, transform_indices = @transform_14, window_bounds = array<i64: 16, 256>}, {pipeline_mode = #tpu.pipeline_mode<synchronous>, transform_indices = @transform_15, window_bounds = array<i64: 2, 16>}, {pipeline_mode = #tpu.pipeline_mode<synchronous>, transform_indices = @transform_16, window_bounds = array<i64: 4, 256, 256>}, {pipeline_mode = #tpu.pipeline_mode<synchronous>, transform_indices = @transform_17, window_bounds = array<i64: 4, 64, 32>}, {pipeline_mode = #tpu.pipeline_mode<synchronous>, transform_indices = @transform_18, window_bounds = array<i64: 256, 8>}, {pipeline_mode = #tpu.pipeline_mode<synchronous>, transform_indices = @transform_19, window_bounds = array<i64: 8, 256>}, {pipeline_mode = #tpu.pipeline_mode<synchronous>, transform_indices = @transform_20, window_bounds = array<i64: 2, 8>}, {pipeline_mode = #tpu.pipeline_mode<synchronous>, transform_indices = @transform_21, window_bounds = array<i64: 4, 256, 192>}, {pipeline_mode = #tpu.pipeline_mode<synchronous>, transform_indices = @transform_22, window_bounds = array<i64: 4, 128, 64>}, {pipeline_mode = #tpu.pipeline_mode<synchronous>, transform_indices = @transform_23, window_bounds = array<i64: 128, 192>}]} {
    %c0 = arith.constant 0 : index
    %c0_0 = arith.constant 0 : index
    %0 = vector.load %arg1[%c0, %c0_0] : memref<2x16xf32, #tpu.memory_space<vmem>>, vector<2x16xf32>
    %1 = arith.truncf %0 : vector<2x16xf32> to vector<2x16xbf16>
    %c0_1 = arith.constant 0 : index
    %c0_2 = arith.constant 0 : index
    %c0_3 = arith.constant 0 : index
    %2 = vector.load %arg2[%c0_1, %c0_2, %c0_3] : memref<4x16x256xbf16, #tpu.memory_space<vmem>>, vector<1x16x256xbf16>
    %3 = vector.shape_cast %2 : vector<1x16x256xbf16> to vector<16x256xbf16>
    %cst = arith.constant dense<0.000000e+00> : vector<2x256xf32>
    %4 = tpu.matmul %1, %3, %cst {dimension_numbers = #tpu.dot_dimension_numbers<[1], [0], [0], [1], [0, 0, 1, 1], [], []>} : vector<2x16xbf16>, vector<16x256xbf16>, vector<2x256xf32> -> vector<2x256xf32>
    %c0_4 = arith.constant 0 : index
    %c0_5 = arith.constant 0 : index
    %c0_6 = arith.constant 0 : index
    %5 = vector.load %arg3[%c0_4, %c0_5, %c0_6] : memref<4x8x2xf32, #tpu.memory_space<vmem>>, vector<1x8x2xf32>
    %6 = vector.shape_cast %5 : vector<1x8x2xf32> to vector<8x2xf32>
    %cst_7 = arith.constant dense<0.000000e+00> : vector<8x256xf32>
    %7 = tpu.matmul %6, %4, %cst_7 {dimension_numbers = #tpu.dot_dimension_numbers<[1], [0], [0], [1], [0, 0, 1, 1], [], []>} : vector<8x2xf32>, vector<2x256xf32>, vector<8x256xf32> -> vector<8x256xf32>
    %c1 = arith.constant 1 : index
    %c0_8 = arith.constant 0 : index
    %c0_9 = arith.constant 0 : index
    %8 = vector.load %arg2[%c1, %c0_8, %c0_9] : memref<4x16x256xbf16, #tpu.memory_space<vmem>>, vector<1x16x256xbf16>
    %9 = vector.shape_cast %8 : vector<1x16x256xbf16> to vector<16x256xbf16>
    %cst_10 = arith.constant dense<0.000000e+00> : vector<2x256xf32>
    %10 = tpu.matmul %1, %9, %cst_10 {dimension_numbers = #tpu.dot_dimension_numbers<[1], [0], [0], [1], [0, 0, 1, 1], [], []>} : vector<2x16xbf16>, vector<16x256xbf16>, vector<2x256xf32> -> vector<2x256xf32>
    %c1_11 = arith.constant 1 : index
    %c0_12 = arith.constant 0 : index
    %c0_13 = arith.constant 0 : index
    %11 = vector.load %arg3[%c1_11, %c0_12, %c0_13] : memref<4x8x2xf32, #tpu.memory_space<vmem>>, vector<1x8x2xf32>
    %12 = vector.shape_cast %11 : vector<1x8x2xf32> to vector<8x2xf32>
    %cst_14 = arith.constant dense<0.000000e+00> : vector<8x256xf32>
    %13 = tpu.matmul %12, %10, %cst_14 {dimension_numbers = #tpu.dot_dimension_numbers<[1], [0], [0], [1], [0, 0, 1, 1], [], []>} : vector<8x2xf32>, vector<2x256xf32>, vector<8x256xf32> -> vector<8x256xf32>
    %14 = arith.addf %7, %13 : vector<8x256xf32>
    %c2 = arith.constant 2 : index
    %c0_15 = arith.constant 0 : index
    %c0_16 = arith.constant 0 : index
    %15 = vector.load %arg2[%c2, %c0_15, %c0_16] : memref<4x16x256xbf16, #tpu.memory_space<vmem>>, vector<1x16x256xbf16>
    %16 = vector.shape_cast %15 : vector<1x16x256xbf16> to vector<16x256xbf16>
    %cst_17 = arith.constant dense<0.000000e+00> : vector<2x256xf32>
    %17 = tpu.matmul %1, %16, %cst_17 {dimension_numbers = #tpu.dot_dimension_numbers<[1], [0], [0], [1], [0, 0, 1, 1], [], []>} : vector<2x16xbf16>, vector<16x256xbf16>, vector<2x256xf32> -> vector<2x256xf32>
    %c2_18 = arith.constant 2 : index
    %c0_19 = arith.constant 0 : index
    %c0_20 = arith.constant 0 : index
    %18 = vector.load %arg3[%c2_18, %c0_19, %c0_20] : memref<4x8x2xf32, #tpu.memory_space<vmem>>, vector<1x8x2xf32>
    %19 = vector.shape_cast %18 : vector<1x8x2xf32> to vector<8x2xf32>
    %cst_21 = arith.constant dense<0.000000e+00> : vector<8x256xf32>
    %20 = tpu.matmul %19, %17, %cst_21 {dimension_numbers = #tpu.dot_dimension_numbers<[1], [0], [0], [1], [0, 0, 1, 1], [], []>} : vector<8x2xf32>, vector<2x256xf32>, vector<8x256xf32> -> vector<8x256xf32>
    %21 = arith.addf %14, %20 : vector<8x256xf32>
    %c3 = arith.constant 3 : index
    %c0_22 = arith.constant 0 : index
    %c0_23 = arith.constant 0 : index
    %22 = vector.load %arg2[%c3, %c0_22, %c0_23] : memref<4x16x256xbf16, #tpu.memory_space<vmem>>, vector<1x16x256xbf16>
    %23 = vector.shape_cast %22 : vector<1x16x256xbf16> to vector<16x256xbf16>
    %cst_24 = arith.constant dense<0.000000e+00> : vector<2x256xf32>
    %24 = tpu.matmul %1, %23, %cst_24 {dimension_numbers = #tpu.dot_dimension_numbers<[1], [0], [0], [1], [0, 0, 1, 1], [], []>} : vector<2x16xbf16>, vector<16x256xbf16>, vector<2x256xf32> -> vector<2x256xf32>
    %c3_25 = arith.constant 3 : index
    %c0_26 = arith.constant 0 : index
    %c0_27 = arith.constant 0 : index
    %25 = vector.load %arg3[%c3_25, %c0_26, %c0_27] : memref<4x8x2xf32, #tpu.memory_space<vmem>>, vector<1x8x2xf32>
    %26 = vector.shape_cast %25 : vector<1x8x2xf32> to vector<8x2xf32>
    %cst_28 = arith.constant dense<0.000000e+00> : vector<8x256xf32>
    %27 = tpu.matmul %26, %24, %cst_28 {dimension_numbers = #tpu.dot_dimension_numbers<[1], [0], [0], [1], [0, 0, 1, 1], [], []>} : vector<8x2xf32>, vector<2x256xf32>, vector<8x256xf32> -> vector<8x256xf32>
    %28 = arith.addf %21, %27 : vector<8x256xf32>
    %cst_29 = arith.constant 1.000000e+00 : f32
    %29 = vector.broadcast %cst_29 : f32 to vector<1x8xf32>
    %cst_30 = arith.constant dense<0.000000e+00> : vector<1x256xf32>
    %30 = tpu.matmul %29, %28, %cst_30 {dimension_numbers = #tpu.dot_dimension_numbers<[1], [0], [0], [1], [0, 0, 1, 1], [], []>} : vector<1x8xf32>, vector<8x256xf32>, vector<1x256xf32> -> vector<1x256xf32>
    %31 = arith.mulf %28, %28 : vector<8x256xf32>
    %cst_31 = arith.constant dense<0.000000e+00> : vector<1x256xf32>
    %32 = tpu.matmul %29, %31, %cst_31 {dimension_numbers = #tpu.dot_dimension_numbers<[1], [0], [0], [1], [0, 0, 1, 1], [], []>} : vector<1x8xf32>, vector<8x256xf32>, vector<1x256xf32> -> vector<1x256xf32>
    %c0_32 = arith.constant 0 : index
    %c0_33 = arith.constant 0 : index
    %33 = vector.load %arg4[%c0_32, %c0_33] : memref<256x64xf32, #tpu.memory_space<vmem>>, vector<256x64xf32>
    %cst_34 = arith.constant dense<0.000000e+00> : vector<1x64xf32>
    %34 = tpu.matmul %30, %33, %cst_34 {dimension_numbers = #tpu.dot_dimension_numbers<[1], [0], [0], [1], [0, 0, 1, 1], [], []>} : vector<1x256xf32>, vector<256x64xf32>, vector<1x64xf32> -> vector<1x64xf32>
    %cst_35 = arith.constant 3.125000e-02 : f32
    %35 = vector.broadcast %cst_35 : f32 to vector<1x64xf32>
    %36 = arith.mulf %34, %35 : vector<1x64xf32>
    %c0_36 = arith.constant 0 : index
    %c0_37 = arith.constant 0 : index
    %37 = vector.load %arg4[%c0_36, %c0_37] : memref<256x64xf32, #tpu.memory_space<vmem>>, vector<256x64xf32>
    %cst_38 = arith.constant dense<0.000000e+00> : vector<1x64xf32>
    %38 = tpu.matmul %32, %37, %cst_38 {dimension_numbers = #tpu.dot_dimension_numbers<[1], [0], [0], [1], [0, 0, 1, 1], [], []>} : vector<1x256xf32>, vector<256x64xf32>, vector<1x64xf32> -> vector<1x64xf32>
    %cst_39 = arith.constant 3.125000e-02 : f32
    %39 = vector.broadcast %cst_39 : f32 to vector<1x64xf32>
    %40 = arith.mulf %38, %39 : vector<1x64xf32>
    %41 = arith.mulf %36, %36 : vector<1x64xf32>
    %42 = arith.subf %40, %41 : vector<1x64xf32>
    %c0_40 = arith.constant 0 : index
    %c0_41 = arith.constant 0 : index
    %43 = vector.load %arg6[%c0_40, %c0_41] : memref<2x64xf32, #tpu.memory_space<vmem>>, vector<1x64xf32>
    %c1_42 = arith.constant 1 : index
    %c0_43 = arith.constant 0 : index
    %44 = vector.load %arg6[%c1_42, %c0_43] : memref<2x64xf32, #tpu.memory_space<vmem>>, vector<1x64xf32>
    %cst_44 = arith.constant 9.99999974E-6 : f32
    %45 = vector.broadcast %cst_44 : f32 to vector<1x64xf32>
    %46 = arith.addf %42, %45 : vector<1x64xf32>
    %47 = math.rsqrt %46 : vector<1x64xf32>
    %48 = arith.mulf %43, %47 : vector<1x64xf32>
    %49 = arith.mulf %36, %48 : vector<1x64xf32>
    %50 = arith.subf %44, %49 : vector<1x64xf32>
    %c0_45 = arith.constant 0 : index
    %c0_46 = arith.constant 0 : index
    %51 = vector.load %arg5[%c0_45, %c0_46] : memref<64x256xf32, #tpu.memory_space<vmem>>, vector<64x256xf32>
    %cst_47 = arith.constant dense<0.000000e+00> : vector<1x256xf32>
    %52 = tpu.matmul %48, %51, %cst_47 {dimension_numbers = #tpu.dot_dimension_numbers<[1], [0], [0], [1], [0, 0, 1, 1], [], []>} : vector<1x64xf32>, vector<64x256xf32>, vector<1x256xf32> -> vector<1x256xf32>
    %c0_48 = arith.constant 0 : index
    %c0_49 = arith.constant 0 : index
    %53 = vector.load %arg5[%c0_48, %c0_49] : memref<64x256xf32, #tpu.memory_space<vmem>>, vector<64x256xf32>
    %cst_50 = arith.constant dense<0.000000e+00> : vector<1x256xf32>
    %54 = tpu.matmul %50, %53, %cst_50 {dimension_numbers = #tpu.dot_dimension_numbers<[1], [0], [0], [1], [0, 0, 1, 1], [], []>} : vector<1x64xf32>, vector<64x256xf32>, vector<1x256xf32> -> vector<1x256xf32>
    %55 = vector.broadcast %52 : vector<1x256xf32> to vector<8x256xf32>
    %56 = arith.mulf %28, %55 : vector<8x256xf32>
    %57 = vector.broadcast %54 : vector<1x256xf32> to vector<8x256xf32>
    %58 = arith.addf %56, %57 : vector<8x256xf32>
    %cst_51 = arith.constant 2.000000e-01 : f32
    %59 = vector.broadcast %cst_51 : f32 to vector<8x256xf32>
    %60 = arith.mulf %59, %58 : vector<8x256xf32>
    %61 = arith.maximumf %58, %60 : vector<8x256xf32>
    %62 = arith.truncf %61 : vector<8x256xf32> to vector<8x256xbf16>
    %c0_52 = arith.constant 0 : index
    %c0_53 = arith.constant 0 : index
    %c0_54 = arith.constant 0 : index
    %63 = vector.load %arg7[%c0_52, %c0_53, %c0_54] : memref<4x256x256xbf16, #tpu.memory_space<vmem>>, vector<1x256x256xbf16>
    %64 = vector.shape_cast %63 : vector<1x256x256xbf16> to vector<256x256xbf16>
    %cst_55 = arith.constant dense<0.000000e+00> : vector<8x256xf32>
    %65 = tpu.matmul %62, %64, %cst_55 {dimension_numbers = #tpu.dot_dimension_numbers<[1], [0], [0], [1], [0, 0, 1, 1], [], []>} : vector<8x256xbf16>, vector<256x256xbf16>, vector<8x256xf32> -> vector<8x256xf32>
    %c0_56 = arith.constant 0 : index
    %c0_57 = arith.constant 0 : index
    %c0_58 = arith.constant 0 : index
    %66 = vector.load %arg8[%c0_56, %c0_57, %c0_58] : memref<4x16x8xf32, #tpu.memory_space<vmem>>, vector<1x16x8xf32>
    %67 = vector.shape_cast %66 : vector<1x16x8xf32> to vector<16x8xf32>
    %cst_59 = arith.constant dense<0.000000e+00> : vector<16x256xf32>
    %68 = tpu.matmul %67, %65, %cst_59 {dimension_numbers = #tpu.dot_dimension_numbers<[1], [0], [0], [1], [0, 0, 1, 1], [], []>} : vector<16x8xf32>, vector<8x256xf32>, vector<16x256xf32> -> vector<16x256xf32>
    %c1_60 = arith.constant 1 : index
    %c0_61 = arith.constant 0 : index
    %c0_62 = arith.constant 0 : index
    %69 = vector.load %arg7[%c1_60, %c0_61, %c0_62] : memref<4x256x256xbf16, #tpu.memory_space<vmem>>, vector<1x256x256xbf16>
    %70 = vector.shape_cast %69 : vector<1x256x256xbf16> to vector<256x256xbf16>
    %cst_63 = arith.constant dense<0.000000e+00> : vector<8x256xf32>
    %71 = tpu.matmul %62, %70, %cst_63 {dimension_numbers = #tpu.dot_dimension_numbers<[1], [0], [0], [1], [0, 0, 1, 1], [], []>} : vector<8x256xbf16>, vector<256x256xbf16>, vector<8x256xf32> -> vector<8x256xf32>
    %c1_64 = arith.constant 1 : index
    %c0_65 = arith.constant 0 : index
    %c0_66 = arith.constant 0 : index
    %72 = vector.load %arg8[%c1_64, %c0_65, %c0_66] : memref<4x16x8xf32, #tpu.memory_space<vmem>>, vector<1x16x8xf32>
    %73 = vector.shape_cast %72 : vector<1x16x8xf32> to vector<16x8xf32>
    %cst_67 = arith.constant dense<0.000000e+00> : vector<16x256xf32>
    %74 = tpu.matmul %73, %71, %cst_67 {dimension_numbers = #tpu.dot_dimension_numbers<[1], [0], [0], [1], [0, 0, 1, 1], [], []>} : vector<16x8xf32>, vector<8x256xf32>, vector<16x256xf32> -> vector<16x256xf32>
    %75 = arith.addf %68, %74 : vector<16x256xf32>
    %c2_68 = arith.constant 2 : index
    %c0_69 = arith.constant 0 : index
    %c0_70 = arith.constant 0 : index
    %76 = vector.load %arg7[%c2_68, %c0_69, %c0_70] : memref<4x256x256xbf16, #tpu.memory_space<vmem>>, vector<1x256x256xbf16>
    %77 = vector.shape_cast %76 : vector<1x256x256xbf16> to vector<256x256xbf16>
    %cst_71 = arith.constant dense<0.000000e+00> : vector<8x256xf32>
    %78 = tpu.matmul %62, %77, %cst_71 {dimension_numbers = #tpu.dot_dimension_numbers<[1], [0], [0], [1], [0, 0, 1, 1], [], []>} : vector<8x256xbf16>, vector<256x256xbf16>, vector<8x256xf32> -> vector<8x256xf32>
    %c2_72 = arith.constant 2 : index
    %c0_73 = arith.constant 0 : index
    %c0_74 = arith.constant 0 : index
    %79 = vector.load %arg8[%c2_72, %c0_73, %c0_74] : memref<4x16x8xf32, #tpu.memory_space<vmem>>, vector<1x16x8xf32>
    %80 = vector.shape_cast %79 : vector<1x16x8xf32> to vector<16x8xf32>
    %cst_75 = arith.constant dense<0.000000e+00> : vector<16x256xf32>
    %81 = tpu.matmul %80, %78, %cst_75 {dimension_numbers = #tpu.dot_dimension_numbers<[1], [0], [0], [1], [0, 0, 1, 1], [], []>} : vector<16x8xf32>, vector<8x256xf32>, vector<16x256xf32> -> vector<16x256xf32>
    %82 = arith.addf %75, %81 : vector<16x256xf32>
    %c3_76 = arith.constant 3 : index
    %c0_77 = arith.constant 0 : index
    %c0_78 = arith.constant 0 : index
    %83 = vector.load %arg7[%c3_76, %c0_77, %c0_78] : memref<4x256x256xbf16, #tpu.memory_space<vmem>>, vector<1x256x256xbf16>
    %84 = vector.shape_cast %83 : vector<1x256x256xbf16> to vector<256x256xbf16>
    %cst_79 = arith.constant dense<0.000000e+00> : vector<8x256xf32>
    %85 = tpu.matmul %62, %84, %cst_79 {dimension_numbers = #tpu.dot_dimension_numbers<[1], [0], [0], [1], [0, 0, 1, 1], [], []>} : vector<8x256xbf16>, vector<256x256xbf16>, vector<8x256xf32> -> vector<8x256xf32>
    %c3_80 = arith.constant 3 : index
    %c0_81 = arith.constant 0 : index
    %c0_82 = arith.constant 0 : index
    %86 = vector.load %arg8[%c3_80, %c0_81, %c0_82] : memref<4x16x8xf32, #tpu.memory_space<vmem>>, vector<1x16x8xf32>
    %87 = vector.shape_cast %86 : vector<1x16x8xf32> to vector<16x8xf32>
    %cst_83 = arith.constant dense<0.000000e+00> : vector<16x256xf32>
    %88 = tpu.matmul %87, %85, %cst_83 {dimension_numbers = #tpu.dot_dimension_numbers<[1], [0], [0], [1], [0, 0, 1, 1], [], []>} : vector<16x8xf32>, vector<8x256xf32>, vector<16x256xf32> -> vector<16x256xf32>
    %89 = arith.addf %82, %88 : vector<16x256xf32>
    %cst_84 = arith.constant 1.000000e+00 : f32
    %90 = vector.broadcast %cst_84 : f32 to vector<1x16xf32>
    %cst_85 = arith.constant dense<0.000000e+00> : vector<1x256xf32>
    %91 = tpu.matmul %90, %89, %cst_85 {dimension_numbers = #tpu.dot_dimension_numbers<[1], [0], [0], [1], [0, 0, 1, 1], [], []>} : vector<1x16xf32>, vector<16x256xf32>, vector<1x256xf32> -> vector<1x256xf32>
    %92 = arith.mulf %89, %89 : vector<16x256xf32>
    %cst_86 = arith.constant dense<0.000000e+00> : vector<1x256xf32>
    %93 = tpu.matmul %90, %92, %cst_86 {dimension_numbers = #tpu.dot_dimension_numbers<[1], [0], [0], [1], [0, 0, 1, 1], [], []>} : vector<1x16xf32>, vector<16x256xf32>, vector<1x256xf32> -> vector<1x256xf32>
    %c0_87 = arith.constant 0 : index
    %c0_88 = arith.constant 0 : index
    %94 = vector.load %arg9[%c0_87, %c0_88] : memref<256x32xf32, #tpu.memory_space<vmem>>, vector<256x32xf32>
    %cst_89 = arith.constant dense<0.000000e+00> : vector<1x32xf32>
    %95 = tpu.matmul %91, %94, %cst_89 {dimension_numbers = #tpu.dot_dimension_numbers<[1], [0], [0], [1], [0, 0, 1, 1], [], []>} : vector<1x256xf32>, vector<256x32xf32>, vector<1x32xf32> -> vector<1x32xf32>
    %cst_90 = arith.constant 7.812500e-03 : f32
    %96 = vector.broadcast %cst_90 : f32 to vector<1x32xf32>
    %97 = arith.mulf %95, %96 : vector<1x32xf32>
    %c0_91 = arith.constant 0 : index
    %c0_92 = arith.constant 0 : index
    %98 = vector.load %arg9[%c0_91, %c0_92] : memref<256x32xf32, #tpu.memory_space<vmem>>, vector<256x32xf32>
    %cst_93 = arith.constant dense<0.000000e+00> : vector<1x32xf32>
    %99 = tpu.matmul %93, %98, %cst_93 {dimension_numbers = #tpu.dot_dimension_numbers<[1], [0], [0], [1], [0, 0, 1, 1], [], []>} : vector<1x256xf32>, vector<256x32xf32>, vector<1x32xf32> -> vector<1x32xf32>
    %cst_94 = arith.constant 7.812500e-03 : f32
    %100 = vector.broadcast %cst_94 : f32 to vector<1x32xf32>
    %101 = arith.mulf %99, %100 : vector<1x32xf32>
    %102 = arith.mulf %97, %97 : vector<1x32xf32>
    %103 = arith.subf %101, %102 : vector<1x32xf32>
    %c0_95 = arith.constant 0 : index
    %c0_96 = arith.constant 0 : index
    %104 = vector.load %arg11[%c0_95, %c0_96] : memref<2x32xf32, #tpu.memory_space<vmem>>, vector<1x32xf32>
    %c1_97 = arith.constant 1 : index
    %c0_98 = arith.constant 0 : index
    %105 = vector.load %arg11[%c1_97, %c0_98] : memref<2x32xf32, #tpu.memory_space<vmem>>, vector<1x32xf32>
    %cst_99 = arith.constant 9.99999974E-6 : f32
    %106 = vector.broadcast %cst_99 : f32 to vector<1x32xf32>
    %107 = arith.addf %103, %106 : vector<1x32xf32>
    %108 = math.rsqrt %107 : vector<1x32xf32>
    %109 = arith.mulf %104, %108 : vector<1x32xf32>
    %110 = arith.mulf %97, %109 : vector<1x32xf32>
    %111 = arith.subf %105, %110 : vector<1x32xf32>
    %c0_100 = arith.constant 0 : index
    %c0_101 = arith.constant 0 : index
    %112 = vector.load %arg10[%c0_100, %c0_101] : memref<32x256xf32, #tpu.memory_space<vmem>>, vector<32x256xf32>
    %cst_102 = arith.constant dense<0.000000e+00> : vector<1x256xf32>
    %113 = tpu.matmul %109, %112, %cst_102 {dimension_numbers = #tpu.dot_dimension_numbers<[1], [0], [0], [1], [0, 0, 1, 1], [], []>} : vector<1x32xf32>, vector<32x256xf32>, vector<1x256xf32> -> vector<1x256xf32>
    %c0_103 = arith.constant 0 : index
    %c0_104 = arith.constant 0 : index
    %114 = vector.load %arg10[%c0_103, %c0_104] : memref<32x256xf32, #tpu.memory_space<vmem>>, vector<32x256xf32>
    %cst_105 = arith.constant dense<0.000000e+00> : vector<1x256xf32>
    %115 = tpu.matmul %111, %114, %cst_105 {dimension_numbers = #tpu.dot_dimension_numbers<[1], [0], [0], [1], [0, 0, 1, 1], [], []>} : vector<1x32xf32>, vector<32x256xf32>, vector<1x256xf32> -> vector<1x256xf32>
    %116 = vector.broadcast %113 : vector<1x256xf32> to vector<16x256xf32>
    %117 = arith.mulf %89, %116 : vector<16x256xf32>
    %118 = vector.broadcast %115 : vector<1x256xf32> to vector<16x256xf32>
    %119 = arith.addf %117, %118 : vector<16x256xf32>
    %cst_106 = arith.constant 2.000000e-01 : f32
    %120 = vector.broadcast %cst_106 : f32 to vector<16x256xf32>
    %121 = arith.mulf %120, %119 : vector<16x256xf32>
    %122 = arith.maximumf %119, %121 : vector<16x256xf32>
    %123 = arith.truncf %122 : vector<16x256xf32> to vector<16x256xbf16>
    %c0_107 = arith.constant 0 : index
    %c0_108 = arith.constant 0 : index
    %c0_109 = arith.constant 0 : index
    %124 = vector.load %arg12[%c0_107, %c0_108, %c0_109] : memref<4x256x256xbf16, #tpu.memory_space<vmem>>, vector<1x256x256xbf16>
    %125 = vector.shape_cast %124 : vector<1x256x256xbf16> to vector<256x256xbf16>
    %cst_110 = arith.constant dense<0.000000e+00> : vector<16x256xf32>
    %126 = tpu.matmul %123, %125, %cst_110 {dimension_numbers = #tpu.dot_dimension_numbers<[1], [0], [0], [1], [0, 0, 1, 1], [], []>} : vector<16x256xbf16>, vector<256x256xbf16>, vector<16x256xf32> -> vector<16x256xf32>
    %c0_111 = arith.constant 0 : index
    %c0_112 = arith.constant 0 : index
    %c0_113 = arith.constant 0 : index
    %127 = vector.load %arg13[%c0_111, %c0_112, %c0_113] : memref<4x32x16xf32, #tpu.memory_space<vmem>>, vector<1x32x16xf32>
    %128 = vector.shape_cast %127 : vector<1x32x16xf32> to vector<32x16xf32>
    %cst_114 = arith.constant dense<0.000000e+00> : vector<32x256xf32>
    %129 = tpu.matmul %128, %126, %cst_114 {dimension_numbers = #tpu.dot_dimension_numbers<[1], [0], [0], [1], [0, 0, 1, 1], [], []>} : vector<32x16xf32>, vector<16x256xf32>, vector<32x256xf32> -> vector<32x256xf32>
    %c1_115 = arith.constant 1 : index
    %c0_116 = arith.constant 0 : index
    %c0_117 = arith.constant 0 : index
    %130 = vector.load %arg12[%c1_115, %c0_116, %c0_117] : memref<4x256x256xbf16, #tpu.memory_space<vmem>>, vector<1x256x256xbf16>
    %131 = vector.shape_cast %130 : vector<1x256x256xbf16> to vector<256x256xbf16>
    %cst_118 = arith.constant dense<0.000000e+00> : vector<16x256xf32>
    %132 = tpu.matmul %123, %131, %cst_118 {dimension_numbers = #tpu.dot_dimension_numbers<[1], [0], [0], [1], [0, 0, 1, 1], [], []>} : vector<16x256xbf16>, vector<256x256xbf16>, vector<16x256xf32> -> vector<16x256xf32>
    %c1_119 = arith.constant 1 : index
    %c0_120 = arith.constant 0 : index
    %c0_121 = arith.constant 0 : index
    %133 = vector.load %arg13[%c1_119, %c0_120, %c0_121] : memref<4x32x16xf32, #tpu.memory_space<vmem>>, vector<1x32x16xf32>
    %134 = vector.shape_cast %133 : vector<1x32x16xf32> to vector<32x16xf32>
    %cst_122 = arith.constant dense<0.000000e+00> : vector<32x256xf32>
    %135 = tpu.matmul %134, %132, %cst_122 {dimension_numbers = #tpu.dot_dimension_numbers<[1], [0], [0], [1], [0, 0, 1, 1], [], []>} : vector<32x16xf32>, vector<16x256xf32>, vector<32x256xf32> -> vector<32x256xf32>
    %136 = arith.addf %129, %135 : vector<32x256xf32>
    %c2_123 = arith.constant 2 : index
    %c0_124 = arith.constant 0 : index
    %c0_125 = arith.constant 0 : index
    %137 = vector.load %arg12[%c2_123, %c0_124, %c0_125] : memref<4x256x256xbf16, #tpu.memory_space<vmem>>, vector<1x256x256xbf16>
    %138 = vector.shape_cast %137 : vector<1x256x256xbf16> to vector<256x256xbf16>
    %cst_126 = arith.constant dense<0.000000e+00> : vector<16x256xf32>
    %139 = tpu.matmul %123, %138, %cst_126 {dimension_numbers = #tpu.dot_dimension_numbers<[1], [0], [0], [1], [0, 0, 1, 1], [], []>} : vector<16x256xbf16>, vector<256x256xbf16>, vector<16x256xf32> -> vector<16x256xf32>
    %c2_127 = arith.constant 2 : index
    %c0_128 = arith.constant 0 : index
    %c0_129 = arith.constant 0 : index
    %140 = vector.load %arg13[%c2_127, %c0_128, %c0_129] : memref<4x32x16xf32, #tpu.memory_space<vmem>>, vector<1x32x16xf32>
    %141 = vector.shape_cast %140 : vector<1x32x16xf32> to vector<32x16xf32>
    %cst_130 = arith.constant dense<0.000000e+00> : vector<32x256xf32>
    %142 = tpu.matmul %141, %139, %cst_130 {dimension_numbers = #tpu.dot_dimension_numbers<[1], [0], [0], [1], [0, 0, 1, 1], [], []>} : vector<32x16xf32>, vector<16x256xf32>, vector<32x256xf32> -> vector<32x256xf32>
    %143 = arith.addf %136, %142 : vector<32x256xf32>
    %c3_131 = arith.constant 3 : index
    %c0_132 = arith.constant 0 : index
    %c0_133 = arith.constant 0 : index
    %144 = vector.load %arg12[%c3_131, %c0_132, %c0_133] : memref<4x256x256xbf16, #tpu.memory_space<vmem>>, vector<1x256x256xbf16>
    %145 = vector.shape_cast %144 : vector<1x256x256xbf16> to vector<256x256xbf16>
    %cst_134 = arith.constant dense<0.000000e+00> : vector<16x256xf32>
    %146 = tpu.matmul %123, %145, %cst_134 {dimension_numbers = #tpu.dot_dimension_numbers<[1], [0], [0], [1], [0, 0, 1, 1], [], []>} : vector<16x256xbf16>, vector<256x256xbf16>, vector<16x256xf32> -> vector<16x256xf32>
    %c3_135 = arith.constant 3 : index
    %c0_136 = arith.constant 0 : index
    %c0_137 = arith.constant 0 : index
    %147 = vector.load %arg13[%c3_135, %c0_136, %c0_137] : memref<4x32x16xf32, #tpu.memory_space<vmem>>, vector<1x32x16xf32>
    %148 = vector.shape_cast %147 : vector<1x32x16xf32> to vector<32x16xf32>
    %cst_138 = arith.constant dense<0.000000e+00> : vector<32x256xf32>
    %149 = tpu.matmul %148, %146, %cst_138 {dimension_numbers = #tpu.dot_dimension_numbers<[1], [0], [0], [1], [0, 0, 1, 1], [], []>} : vector<32x16xf32>, vector<16x256xf32>, vector<32x256xf32> -> vector<32x256xf32>
    %150 = arith.addf %143, %149 : vector<32x256xf32>
    %cst_139 = arith.constant 1.000000e+00 : f32
    %151 = vector.broadcast %cst_139 : f32 to vector<1x32xf32>
    %cst_140 = arith.constant dense<0.000000e+00> : vector<1x256xf32>
    %152 = tpu.matmul %151, %150, %cst_140 {dimension_numbers = #tpu.dot_dimension_numbers<[1], [0], [0], [1], [0, 0, 1, 1], [], []>} : vector<1x32xf32>, vector<32x256xf32>, vector<1x256xf32> -> vector<1x256xf32>
    %153 = arith.mulf %150, %150 : vector<32x256xf32>
    %cst_141 = arith.constant dense<0.000000e+00> : vector<1x256xf32>
    %154 = tpu.matmul %151, %153, %cst_141 {dimension_numbers = #tpu.dot_dimension_numbers<[1], [0], [0], [1], [0, 0, 1, 1], [], []>} : vector<1x32xf32>, vector<32x256xf32>, vector<1x256xf32> -> vector<1x256xf32>
    %c0_142 = arith.constant 0 : index
    %c0_143 = arith.constant 0 : index
    %155 = vector.load %arg14[%c0_142, %c0_143] : memref<256x16xf32, #tpu.memory_space<vmem>>, vector<256x16xf32>
    %cst_144 = arith.constant dense<0.000000e+00> : vector<1x16xf32>
    %156 = tpu.matmul %152, %155, %cst_144 {dimension_numbers = #tpu.dot_dimension_numbers<[1], [0], [0], [1], [0, 0, 1, 1], [], []>} : vector<1x256xf32>, vector<256x16xf32>, vector<1x16xf32> -> vector<1x16xf32>
    %cst_145 = arith.constant 0.001953125 : f32
    %157 = vector.broadcast %cst_145 : f32 to vector<1x16xf32>
    %158 = arith.mulf %156, %157 : vector<1x16xf32>
    %c0_146 = arith.constant 0 : index
    %c0_147 = arith.constant 0 : index
    %159 = vector.load %arg14[%c0_146, %c0_147] : memref<256x16xf32, #tpu.memory_space<vmem>>, vector<256x16xf32>
    %cst_148 = arith.constant dense<0.000000e+00> : vector<1x16xf32>
    %160 = tpu.matmul %154, %159, %cst_148 {dimension_numbers = #tpu.dot_dimension_numbers<[1], [0], [0], [1], [0, 0, 1, 1], [], []>} : vector<1x256xf32>, vector<256x16xf32>, vector<1x16xf32> -> vector<1x16xf32>
    %cst_149 = arith.constant 0.001953125 : f32
    %161 = vector.broadcast %cst_149 : f32 to vector<1x16xf32>
    %162 = arith.mulf %160, %161 : vector<1x16xf32>
    %163 = arith.mulf %158, %158 : vector<1x16xf32>
    %164 = arith.subf %162, %163 : vector<1x16xf32>
    %c0_150 = arith.constant 0 : index
    %c0_151 = arith.constant 0 : index
    %165 = vector.load %arg16[%c0_150, %c0_151] : memref<2x16xf32, #tpu.memory_space<vmem>>, vector<1x16xf32>
    %c1_152 = arith.constant 1 : index
    %c0_153 = arith.constant 0 : index
    %166 = vector.load %arg16[%c1_152, %c0_153] : memref<2x16xf32, #tpu.memory_space<vmem>>, vector<1x16xf32>
    %cst_154 = arith.constant 9.99999974E-6 : f32
    %167 = vector.broadcast %cst_154 : f32 to vector<1x16xf32>
    %168 = arith.addf %164, %167 : vector<1x16xf32>
    %169 = math.rsqrt %168 : vector<1x16xf32>
    %170 = arith.mulf %165, %169 : vector<1x16xf32>
    %171 = arith.mulf %158, %170 : vector<1x16xf32>
    %172 = arith.subf %166, %171 : vector<1x16xf32>
    %c0_155 = arith.constant 0 : index
    %c0_156 = arith.constant 0 : index
    %173 = vector.load %arg15[%c0_155, %c0_156] : memref<16x256xf32, #tpu.memory_space<vmem>>, vector<16x256xf32>
    %cst_157 = arith.constant dense<0.000000e+00> : vector<1x256xf32>
    %174 = tpu.matmul %170, %173, %cst_157 {dimension_numbers = #tpu.dot_dimension_numbers<[1], [0], [0], [1], [0, 0, 1, 1], [], []>} : vector<1x16xf32>, vector<16x256xf32>, vector<1x256xf32> -> vector<1x256xf32>
    %c0_158 = arith.constant 0 : index
    %c0_159 = arith.constant 0 : index
    %175 = vector.load %arg15[%c0_158, %c0_159] : memref<16x256xf32, #tpu.memory_space<vmem>>, vector<16x256xf32>
    %cst_160 = arith.constant dense<0.000000e+00> : vector<1x256xf32>
    %176 = tpu.matmul %172, %175, %cst_160 {dimension_numbers = #tpu.dot_dimension_numbers<[1], [0], [0], [1], [0, 0, 1, 1], [], []>} : vector<1x16xf32>, vector<16x256xf32>, vector<1x256xf32> -> vector<1x256xf32>
    %177 = vector.broadcast %174 : vector<1x256xf32> to vector<32x256xf32>
    %178 = arith.mulf %150, %177 : vector<32x256xf32>
    %179 = vector.broadcast %176 : vector<1x256xf32> to vector<32x256xf32>
    %180 = arith.addf %178, %179 : vector<32x256xf32>
    %cst_161 = arith.constant 2.000000e-01 : f32
    %181 = vector.broadcast %cst_161 : f32 to vector<32x256xf32>
    %182 = arith.mulf %181, %180 : vector<32x256xf32>
    %183 = arith.maximumf %180, %182 : vector<32x256xf32>
    %184 = arith.truncf %183 : vector<32x256xf32> to vector<32x256xbf16>
    %c0_162 = arith.constant 0 : index
    %c0_163 = arith.constant 0 : index
    %c0_164 = arith.constant 0 : index
    %185 = vector.load %arg17[%c0_162, %c0_163, %c0_164] : memref<4x256x256xbf16, #tpu.memory_space<vmem>>, vector<1x256x256xbf16>
    %186 = vector.shape_cast %185 : vector<1x256x256xbf16> to vector<256x256xbf16>
    %cst_165 = arith.constant dense<0.000000e+00> : vector<32x256xf32>
    %187 = tpu.matmul %184, %186, %cst_165 {dimension_numbers = #tpu.dot_dimension_numbers<[1], [0], [0], [1], [0, 0, 1, 1], [], []>} : vector<32x256xbf16>, vector<256x256xbf16>, vector<32x256xf32> -> vector<32x256xf32>
    %c0_166 = arith.constant 0 : index
    %c0_167 = arith.constant 0 : index
    %c0_168 = arith.constant 0 : index
    %188 = vector.load %arg18[%c0_166, %c0_167, %c0_168] : memref<4x64x32xf32, #tpu.memory_space<vmem>>, vector<1x64x32xf32>
    %189 = vector.shape_cast %188 : vector<1x64x32xf32> to vector<64x32xf32>
    %cst_169 = arith.constant dense<0.000000e+00> : vector<64x256xf32>
    %190 = tpu.matmul %189, %187, %cst_169 {dimension_numbers = #tpu.dot_dimension_numbers<[1], [0], [0], [1], [0, 0, 1, 1], [], []>} : vector<64x32xf32>, vector<32x256xf32>, vector<64x256xf32> -> vector<64x256xf32>
    %c1_170 = arith.constant 1 : index
    %c0_171 = arith.constant 0 : index
    %c0_172 = arith.constant 0 : index
    %191 = vector.load %arg17[%c1_170, %c0_171, %c0_172] : memref<4x256x256xbf16, #tpu.memory_space<vmem>>, vector<1x256x256xbf16>
    %192 = vector.shape_cast %191 : vector<1x256x256xbf16> to vector<256x256xbf16>
    %cst_173 = arith.constant dense<0.000000e+00> : vector<32x256xf32>
    %193 = tpu.matmul %184, %192, %cst_173 {dimension_numbers = #tpu.dot_dimension_numbers<[1], [0], [0], [1], [0, 0, 1, 1], [], []>} : vector<32x256xbf16>, vector<256x256xbf16>, vector<32x256xf32> -> vector<32x256xf32>
    %c1_174 = arith.constant 1 : index
    %c0_175 = arith.constant 0 : index
    %c0_176 = arith.constant 0 : index
    %194 = vector.load %arg18[%c1_174, %c0_175, %c0_176] : memref<4x64x32xf32, #tpu.memory_space<vmem>>, vector<1x64x32xf32>
    %195 = vector.shape_cast %194 : vector<1x64x32xf32> to vector<64x32xf32>
    %cst_177 = arith.constant dense<0.000000e+00> : vector<64x256xf32>
    %196 = tpu.matmul %195, %193, %cst_177 {dimension_numbers = #tpu.dot_dimension_numbers<[1], [0], [0], [1], [0, 0, 1, 1], [], []>} : vector<64x32xf32>, vector<32x256xf32>, vector<64x256xf32> -> vector<64x256xf32>
    %197 = arith.addf %190, %196 : vector<64x256xf32>
    %c2_178 = arith.constant 2 : index
    %c0_179 = arith.constant 0 : index
    %c0_180 = arith.constant 0 : index
    %198 = vector.load %arg17[%c2_178, %c0_179, %c0_180] : memref<4x256x256xbf16, #tpu.memory_space<vmem>>, vector<1x256x256xbf16>
    %199 = vector.shape_cast %198 : vector<1x256x256xbf16> to vector<256x256xbf16>
    %cst_181 = arith.constant dense<0.000000e+00> : vector<32x256xf32>
    %200 = tpu.matmul %184, %199, %cst_181 {dimension_numbers = #tpu.dot_dimension_numbers<[1], [0], [0], [1], [0, 0, 1, 1], [], []>} : vector<32x256xbf16>, vector<256x256xbf16>, vector<32x256xf32> -> vector<32x256xf32>
    %c2_182 = arith.constant 2 : index
    %c0_183 = arith.constant 0 : index
    %c0_184 = arith.constant 0 : index
    %201 = vector.load %arg18[%c2_182, %c0_183, %c0_184] : memref<4x64x32xf32, #tpu.memory_space<vmem>>, vector<1x64x32xf32>
    %202 = vector.shape_cast %201 : vector<1x64x32xf32> to vector<64x32xf32>
    %cst_185 = arith.constant dense<0.000000e+00> : vector<64x256xf32>
    %203 = tpu.matmul %202, %200, %cst_185 {dimension_numbers = #tpu.dot_dimension_numbers<[1], [0], [0], [1], [0, 0, 1, 1], [], []>} : vector<64x32xf32>, vector<32x256xf32>, vector<64x256xf32> -> vector<64x256xf32>
    %204 = arith.addf %197, %203 : vector<64x256xf32>
    %c3_186 = arith.constant 3 : index
    %c0_187 = arith.constant 0 : index
    %c0_188 = arith.constant 0 : index
    %205 = vector.load %arg17[%c3_186, %c0_187, %c0_188] : memref<4x256x256xbf16, #tpu.memory_space<vmem>>, vector<1x256x256xbf16>
    %206 = vector.shape_cast %205 : vector<1x256x256xbf16> to vector<256x256xbf16>
    %cst_189 = arith.constant dense<0.000000e+00> : vector<32x256xf32>
    %207 = tpu.matmul %184, %206, %cst_189 {dimension_numbers = #tpu.dot_dimension_numbers<[1], [0], [0], [1], [0, 0, 1, 1], [], []>} : vector<32x256xbf16>, vector<256x256xbf16>, vector<32x256xf32> -> vector<32x256xf32>
    %c3_190 = arith.constant 3 : index
    %c0_191 = arith.constant 0 : index
    %c0_192 = arith.constant 0 : index
    %208 = vector.load %arg18[%c3_190, %c0_191, %c0_192] : memref<4x64x32xf32, #tpu.memory_space<vmem>>, vector<1x64x32xf32>
    %209 = vector.shape_cast %208 : vector<1x64x32xf32> to vector<64x32xf32>
    %cst_193 = arith.constant dense<0.000000e+00> : vector<64x256xf32>
    %210 = tpu.matmul %209, %207, %cst_193 {dimension_numbers = #tpu.dot_dimension_numbers<[1], [0], [0], [1], [0, 0, 1, 1], [], []>} : vector<64x32xf32>, vector<32x256xf32>, vector<64x256xf32> -> vector<64x256xf32>
    %211 = arith.addf %204, %210 : vector<64x256xf32>
    %cst_194 = arith.constant 1.000000e+00 : f32
    %212 = vector.broadcast %cst_194 : f32 to vector<1x64xf32>
    %cst_195 = arith.constant dense<0.000000e+00> : vector<1x256xf32>
    %213 = tpu.matmul %212, %211, %cst_195 {dimension_numbers = #tpu.dot_dimension_numbers<[1], [0], [0], [1], [0, 0, 1, 1], [], []>} : vector<1x64xf32>, vector<64x256xf32>, vector<1x256xf32> -> vector<1x256xf32>
    %214 = arith.mulf %211, %211 : vector<64x256xf32>
    %cst_196 = arith.constant dense<0.000000e+00> : vector<1x256xf32>
    %215 = tpu.matmul %212, %214, %cst_196 {dimension_numbers = #tpu.dot_dimension_numbers<[1], [0], [0], [1], [0, 0, 1, 1], [], []>} : vector<1x64xf32>, vector<64x256xf32>, vector<1x256xf32> -> vector<1x256xf32>
    %c0_197 = arith.constant 0 : index
    %c0_198 = arith.constant 0 : index
    %216 = vector.load %arg19[%c0_197, %c0_198] : memref<256x8xf32, #tpu.memory_space<vmem>>, vector<256x8xf32>
    %cst_199 = arith.constant dense<0.000000e+00> : vector<1x8xf32>
    %217 = tpu.matmul %213, %216, %cst_199 {dimension_numbers = #tpu.dot_dimension_numbers<[1], [0], [0], [1], [0, 0, 1, 1], [], []>} : vector<1x256xf32>, vector<256x8xf32>, vector<1x8xf32> -> vector<1x8xf32>
    %cst_200 = arith.constant 4.8828125E-4 : f32
    %218 = vector.broadcast %cst_200 : f32 to vector<1x8xf32>
    %219 = arith.mulf %217, %218 : vector<1x8xf32>
    %c0_201 = arith.constant 0 : index
    %c0_202 = arith.constant 0 : index
    %220 = vector.load %arg19[%c0_201, %c0_202] : memref<256x8xf32, #tpu.memory_space<vmem>>, vector<256x8xf32>
    %cst_203 = arith.constant dense<0.000000e+00> : vector<1x8xf32>
    %221 = tpu.matmul %215, %220, %cst_203 {dimension_numbers = #tpu.dot_dimension_numbers<[1], [0], [0], [1], [0, 0, 1, 1], [], []>} : vector<1x256xf32>, vector<256x8xf32>, vector<1x8xf32> -> vector<1x8xf32>
    %cst_204 = arith.constant 4.8828125E-4 : f32
    %222 = vector.broadcast %cst_204 : f32 to vector<1x8xf32>
    %223 = arith.mulf %221, %222 : vector<1x8xf32>
    %224 = arith.mulf %219, %219 : vector<1x8xf32>
    %225 = arith.subf %223, %224 : vector<1x8xf32>
    %c0_205 = arith.constant 0 : index
    %c0_206 = arith.constant 0 : index
    %226 = vector.load %arg21[%c0_205, %c0_206] : memref<2x8xf32, #tpu.memory_space<vmem>>, vector<1x8xf32>
    %c1_207 = arith.constant 1 : index
    %c0_208 = arith.constant 0 : index
    %227 = vector.load %arg21[%c1_207, %c0_208] : memref<2x8xf32, #tpu.memory_space<vmem>>, vector<1x8xf32>
    %cst_209 = arith.constant 9.99999974E-6 : f32
    %228 = vector.broadcast %cst_209 : f32 to vector<1x8xf32>
    %229 = arith.addf %225, %228 : vector<1x8xf32>
    %230 = math.rsqrt %229 : vector<1x8xf32>
    %231 = arith.mulf %226, %230 : vector<1x8xf32>
    %232 = arith.mulf %219, %231 : vector<1x8xf32>
    %233 = arith.subf %227, %232 : vector<1x8xf32>
    %c0_210 = arith.constant 0 : index
    %c0_211 = arith.constant 0 : index
    %234 = vector.load %arg20[%c0_210, %c0_211] : memref<8x256xf32, #tpu.memory_space<vmem>>, vector<8x256xf32>
    %cst_212 = arith.constant dense<0.000000e+00> : vector<1x256xf32>
    %235 = tpu.matmul %231, %234, %cst_212 {dimension_numbers = #tpu.dot_dimension_numbers<[1], [0], [0], [1], [0, 0, 1, 1], [], []>} : vector<1x8xf32>, vector<8x256xf32>, vector<1x256xf32> -> vector<1x256xf32>
    %c0_213 = arith.constant 0 : index
    %c0_214 = arith.constant 0 : index
    %236 = vector.load %arg20[%c0_213, %c0_214] : memref<8x256xf32, #tpu.memory_space<vmem>>, vector<8x256xf32>
    %cst_215 = arith.constant dense<0.000000e+00> : vector<1x256xf32>
    %237 = tpu.matmul %233, %236, %cst_215 {dimension_numbers = #tpu.dot_dimension_numbers<[1], [0], [0], [1], [0, 0, 1, 1], [], []>} : vector<1x8xf32>, vector<8x256xf32>, vector<1x256xf32> -> vector<1x256xf32>
    %238 = vector.broadcast %235 : vector<1x256xf32> to vector<64x256xf32>
    %239 = arith.mulf %211, %238 : vector<64x256xf32>
    %240 = vector.broadcast %237 : vector<1x256xf32> to vector<64x256xf32>
    %241 = arith.addf %239, %240 : vector<64x256xf32>
    %cst_216 = arith.constant 2.000000e-01 : f32
    %242 = vector.broadcast %cst_216 : f32 to vector<64x256xf32>
    %243 = arith.mulf %242, %241 : vector<64x256xf32>
    %244 = arith.maximumf %241, %243 : vector<64x256xf32>
    %245 = arith.truncf %244 : vector<64x256xf32> to vector<64x256xbf16>
    %c0_217 = arith.constant 0 : index
    %c0_218 = arith.constant 0 : index
    %c0_219 = arith.constant 0 : index
    %246 = vector.load %arg22[%c0_217, %c0_218, %c0_219] : memref<4x256x192xbf16, #tpu.memory_space<vmem>>, vector<1x256x192xbf16>
    %247 = vector.shape_cast %246 : vector<1x256x192xbf16> to vector<256x192xbf16>
    %cst_220 = arith.constant dense<0.000000e+00> : vector<64x192xf32>
    %248 = tpu.matmul %245, %247, %cst_220 {dimension_numbers = #tpu.dot_dimension_numbers<[1], [0], [0], [1], [0, 0, 1, 1], [], []>} : vector<64x256xbf16>, vector<256x192xbf16>, vector<64x192xf32> -> vector<64x192xf32>
    %c0_221 = arith.constant 0 : index
    %c0_222 = arith.constant 0 : index
    %c0_223 = arith.constant 0 : index
    %249 = vector.load %arg23[%c0_221, %c0_222, %c0_223] : memref<4x128x64xf32, #tpu.memory_space<vmem>>, vector<1x128x64xf32>
    %250 = vector.shape_cast %249 : vector<1x128x64xf32> to vector<128x64xf32>
    %cst_224 = arith.constant dense<0.000000e+00> : vector<128x192xf32>
    %251 = tpu.matmul %250, %248, %cst_224 {dimension_numbers = #tpu.dot_dimension_numbers<[1], [0], [0], [1], [0, 0, 1, 1], [], []>} : vector<128x64xf32>, vector<64x192xf32>, vector<128x192xf32> -> vector<128x192xf32>
    %c1_225 = arith.constant 1 : index
    %c0_226 = arith.constant 0 : index
    %c0_227 = arith.constant 0 : index
    %252 = vector.load %arg22[%c1_225, %c0_226, %c0_227] : memref<4x256x192xbf16, #tpu.memory_space<vmem>>, vector<1x256x192xbf16>
    %253 = vector.shape_cast %252 : vector<1x256x192xbf16> to vector<256x192xbf16>
    %cst_228 = arith.constant dense<0.000000e+00> : vector<64x192xf32>
    %254 = tpu.matmul %245, %253, %cst_228 {dimension_numbers = #tpu.dot_dimension_numbers<[1], [0], [0], [1], [0, 0, 1, 1], [], []>} : vector<64x256xbf16>, vector<256x192xbf16>, vector<64x192xf32> -> vector<64x192xf32>
    %c1_229 = arith.constant 1 : index
    %c0_230 = arith.constant 0 : index
    %c0_231 = arith.constant 0 : index
    %255 = vector.load %arg23[%c1_229, %c0_230, %c0_231] : memref<4x128x64xf32, #tpu.memory_space<vmem>>, vector<1x128x64xf32>
    %256 = vector.shape_cast %255 : vector<1x128x64xf32> to vector<128x64xf32>
    %cst_232 = arith.constant dense<0.000000e+00> : vector<128x192xf32>
    %257 = tpu.matmul %256, %254, %cst_232 {dimension_numbers = #tpu.dot_dimension_numbers<[1], [0], [0], [1], [0, 0, 1, 1], [], []>} : vector<128x64xf32>, vector<64x192xf32>, vector<128x192xf32> -> vector<128x192xf32>
    %258 = arith.addf %251, %257 : vector<128x192xf32>
    %c2_233 = arith.constant 2 : index
    %c0_234 = arith.constant 0 : index
    %c0_235 = arith.constant 0 : index
    %259 = vector.load %arg22[%c2_233, %c0_234, %c0_235] : memref<4x256x192xbf16, #tpu.memory_space<vmem>>, vector<1x256x192xbf16>
    %260 = vector.shape_cast %259 : vector<1x256x192xbf16> to vector<256x192xbf16>
    %cst_236 = arith.constant dense<0.000000e+00> : vector<64x192xf32>
    %261 = tpu.matmul %245, %260, %cst_236 {dimension_numbers = #tpu.dot_dimension_numbers<[1], [0], [0], [1], [0, 0, 1, 1], [], []>} : vector<64x256xbf16>, vector<256x192xbf16>, vector<64x192xf32> -> vector<64x192xf32>
    %c2_237 = arith.constant 2 : index
    %c0_238 = arith.constant 0 : index
    %c0_239 = arith.constant 0 : index
    %262 = vector.load %arg23[%c2_237, %c0_238, %c0_239] : memref<4x128x64xf32, #tpu.memory_space<vmem>>, vector<1x128x64xf32>
    %263 = vector.shape_cast %262 : vector<1x128x64xf32> to vector<128x64xf32>
    %cst_240 = arith.constant dense<0.000000e+00> : vector<128x192xf32>
    %264 = tpu.matmul %263, %261, %cst_240 {dimension_numbers = #tpu.dot_dimension_numbers<[1], [0], [0], [1], [0, 0, 1, 1], [], []>} : vector<128x64xf32>, vector<64x192xf32>, vector<128x192xf32> -> vector<128x192xf32>
    %265 = arith.addf %258, %264 : vector<128x192xf32>
    %c3_241 = arith.constant 3 : index
    %c0_242 = arith.constant 0 : index
    %c0_243 = arith.constant 0 : index
    %266 = vector.load %arg22[%c3_241, %c0_242, %c0_243] : memref<4x256x192xbf16, #tpu.memory_space<vmem>>, vector<1x256x192xbf16>
    %267 = vector.shape_cast %266 : vector<1x256x192xbf16> to vector<256x192xbf16>
    %cst_244 = arith.constant dense<0.000000e+00> : vector<64x192xf32>
    %268 = tpu.matmul %245, %267, %cst_244 {dimension_numbers = #tpu.dot_dimension_numbers<[1], [0], [0], [1], [0, 0, 1, 1], [], []>} : vector<64x256xbf16>, vector<256x192xbf16>, vector<64x192xf32> -> vector<64x192xf32>
    %c3_245 = arith.constant 3 : index
    %c0_246 = arith.constant 0 : index
    %c0_247 = arith.constant 0 : index
    %269 = vector.load %arg23[%c3_245, %c0_246, %c0_247] : memref<4x128x64xf32, #tpu.memory_space<vmem>>, vector<1x128x64xf32>
    %270 = vector.shape_cast %269 : vector<1x128x64xf32> to vector<128x64xf32>
    %cst_248 = arith.constant dense<0.000000e+00> : vector<128x192xf32>
    %271 = tpu.matmul %270, %268, %cst_248 {dimension_numbers = #tpu.dot_dimension_numbers<[1], [0], [0], [1], [0, 0, 1, 1], [], []>} : vector<128x64xf32>, vector<64x192xf32>, vector<128x192xf32> -> vector<128x192xf32>
    %272 = arith.addf %265, %271 : vector<128x192xf32>
    %273 = math.tanh %272 : vector<128x192xf32>
    %c0_249 = arith.constant 0 : index
    %c0_250 = arith.constant 0 : index
    %274 = vector.load %arg24[%c0_249, %c0_250] : memref<128x192xf32, #tpu.memory_space<vmem>>, vector<128x192xf32>
    tpu.vector_store %arg24[%c0_249, %c0_250], %273 {strides = array<i32>} : memref<128x192xf32, #tpu.memory_space<vmem>>, vector<128x192xf32>,
    return
  }
  func.func @transform_0(%arg0: i32) -> (i32, i32) {
    %c0_i32 = arith.constant 0 : i32
    %c0_i32_0 = arith.constant 0 : i32
    %c0_i32_1 = arith.constant 0 : i32
    return %c0_i32, %c0_i32_0 : i32, i32
  }
  func.func @transform_1(%arg0: i32) -> (i32, i32, i32) {
    %c0_i32 = arith.constant 0 : i32
    %c0_i32_0 = arith.constant 0 : i32
    %c0_i32_1 = arith.constant 0 : i32
    %c0_i32_2 = arith.constant 0 : i32
    return %c0_i32, %c0_i32_0, %c0_i32_1 : i32, i32, i32
  }
  func.func @transform_2(%arg0: i32) -> (i32, i32, i32) {
    %c0_i32 = arith.constant 0 : i32
    %c0_i32_0 = arith.constant 0 : i32
    %c0_i32_1 = arith.constant 0 : i32
    %c0_i32_2 = arith.constant 0 : i32
    return %c0_i32, %c0_i32_0, %c0_i32_1 : i32, i32, i32
  }
  func.func @transform_3(%arg0: i32) -> (i32, i32) {
    %c0_i32 = arith.constant 0 : i32
    %c0_i32_0 = arith.constant 0 : i32
    %c0_i32_1 = arith.constant 0 : i32
    return %c0_i32, %c0_i32_0 : i32, i32
  }
  func.func @transform_4(%arg0: i32) -> (i32, i32) {
    %c0_i32 = arith.constant 0 : i32
    %c0_i32_0 = arith.constant 0 : i32
    %c0_i32_1 = arith.constant 0 : i32
    return %c0_i32, %c0_i32_0 : i32, i32
  }
  func.func @transform_5(%arg0: i32) -> (i32, i32) {
    %c0_i32 = arith.constant 0 : i32
    %c0_i32_0 = arith.constant 0 : i32
    %c0_i32_1 = arith.constant 0 : i32
    return %c0_i32, %c0_i32_0 : i32, i32
  }
  func.func @transform_6(%arg0: i32) -> (i32, i32, i32) {
    %c0_i32 = arith.constant 0 : i32
    %c0_i32_0 = arith.constant 0 : i32
    %c0_i32_1 = arith.constant 0 : i32
    %c0_i32_2 = arith.constant 0 : i32
    return %c0_i32, %c0_i32_0, %c0_i32_1 : i32, i32, i32
  }
  func.func @transform_7(%arg0: i32) -> (i32, i32, i32) {
    %c0_i32 = arith.constant 0 : i32
    %c0_i32_0 = arith.constant 0 : i32
    %c0_i32_1 = arith.constant 0 : i32
    %c0_i32_2 = arith.constant 0 : i32
    return %c0_i32, %c0_i32_0, %c0_i32_1 : i32, i32, i32
  }
  func.func @transform_8(%arg0: i32) -> (i32, i32) {
    %c0_i32 = arith.constant 0 : i32
    %c0_i32_0 = arith.constant 0 : i32
    %c0_i32_1 = arith.constant 0 : i32
    return %c0_i32, %c0_i32_0 : i32, i32
  }
  func.func @transform_9(%arg0: i32) -> (i32, i32) {
    %c0_i32 = arith.constant 0 : i32
    %c0_i32_0 = arith.constant 0 : i32
    %c0_i32_1 = arith.constant 0 : i32
    return %c0_i32, %c0_i32_0 : i32, i32
  }
  func.func @transform_10(%arg0: i32) -> (i32, i32) {
    %c0_i32 = arith.constant 0 : i32
    %c0_i32_0 = arith.constant 0 : i32
    %c0_i32_1 = arith.constant 0 : i32
    return %c0_i32, %c0_i32_0 : i32, i32
  }
  func.func @transform_11(%arg0: i32) -> (i32, i32, i32) {
    %c0_i32 = arith.constant 0 : i32
    %c0_i32_0 = arith.constant 0 : i32
    %c0_i32_1 = arith.constant 0 : i32
    %c0_i32_2 = arith.constant 0 : i32
    return %c0_i32, %c0_i32_0, %c0_i32_1 : i32, i32, i32
  }
  func.func @transform_12(%arg0: i32) -> (i32, i32, i32) {
    %c0_i32 = arith.constant 0 : i32
    %c0_i32_0 = arith.constant 0 : i32
    %c0_i32_1 = arith.constant 0 : i32
    %c0_i32_2 = arith.constant 0 : i32
    return %c0_i32, %c0_i32_0, %c0_i32_1 : i32, i32, i32
  }
  func.func @transform_13(%arg0: i32) -> (i32, i32) {
    %c0_i32 = arith.constant 0 : i32
    %c0_i32_0 = arith.constant 0 : i32
    %c0_i32_1 = arith.constant 0 : i32
    return %c0_i32, %c0_i32_0 : i32, i32
  }
  func.func @transform_14(%arg0: i32) -> (i32, i32) {
    %c0_i32 = arith.constant 0 : i32
    %c0_i32_0 = arith.constant 0 : i32
    %c0_i32_1 = arith.constant 0 : i32
    return %c0_i32, %c0_i32_0 : i32, i32
  }
  func.func @transform_15(%arg0: i32) -> (i32, i32) {
    %c0_i32 = arith.constant 0 : i32
    %c0_i32_0 = arith.constant 0 : i32
    %c0_i32_1 = arith.constant 0 : i32
    return %c0_i32, %c0_i32_0 : i32, i32
  }
  func.func @transform_16(%arg0: i32) -> (i32, i32, i32) {
    %c0_i32 = arith.constant 0 : i32
    %c0_i32_0 = arith.constant 0 : i32
    %c0_i32_1 = arith.constant 0 : i32
    %c0_i32_2 = arith.constant 0 : i32
    return %c0_i32, %c0_i32_0, %c0_i32_1 : i32, i32, i32
  }
  func.func @transform_17(%arg0: i32) -> (i32, i32, i32) {
    %c0_i32 = arith.constant 0 : i32
    %c0_i32_0 = arith.constant 0 : i32
    %c0_i32_1 = arith.constant 0 : i32
    %c0_i32_2 = arith.constant 0 : i32
    return %c0_i32, %c0_i32_0, %c0_i32_1 : i32, i32, i32
  }
  func.func @transform_18(%arg0: i32) -> (i32, i32) {
    %c0_i32 = arith.constant 0 : i32
    %c0_i32_0 = arith.constant 0 : i32
    %c0_i32_1 = arith.constant 0 : i32
    return %c0_i32, %c0_i32_0 : i32, i32
  }
  func.func @transform_19(%arg0: i32) -> (i32, i32) {
    %c0_i32 = arith.constant 0 : i32
    %c0_i32_0 = arith.constant 0 : i32
    %c0_i32_1 = arith.constant 0 : i32
    return %c0_i32, %c0_i32_0 : i32, i32
  }
  func.func @transform_20(%arg0: i32) -> (i32, i32) {
    %c0_i32 = arith.constant 0 : i32
    %c0_i32_0 = arith.constant 0 : i32
    %c0_i32_1 = arith.constant 0 : i32
    return %c0_i32, %c0_i32_0 : i32, i32
  }
  func.func @transform_21(%arg0: i32) -> (i32, i32, i32) {
    %c0_i32 = arith.constant 0 : i32
    %c0_i32_0 = arith.constant 0 : i32
    %c0_i32_1 = arith.constant 0 : i32
    %c0_i32_2 = arith.constant 0 : i32
    return %c0_i32, %c0_i32_0, %c0_i32_1 : i32, i32, i32
  }
  func.func @transform_22(%arg0: i32) -> (i32, i32, i32) {
    %c0_i32 = arith.constant 0 : i32
    %c0_i32_0 = arith.constant 0 : i32
    %c0_i32_1 = arith.constant 0 : i32
    %c0_i32_2 = arith.constant 0 : i32
    return %c0_i32, %c0_i32_0, %c0_i32_1 : i32, i32, i32
  }
  func.func @transform_23(%arg0: i32) -> (i32, i32) {
    %c0_i32 = arith.constant 0 : i32
    %c0_i32_0 = arith.constant 0 : i32
    %c0_i32_1 = arith.constant 0 : i32
    return %c0_i32, %c0_i32_0 : i32, i32
  }
}

</mosaic_0001>

<llo_original>
// kernel: generator_forward.1
$region0: #{generator_forward.1}
  #allocation0 [shape = 'u32[]', space=smem, size = 0x4, offset = 0x4, fixed_abs, tag = 'smem constant byte address 0x4 - core index']
  #allocation1 [shape = 'u32[144,128]{1,0:T(1,128)}', space=vmem, size = 0x12000, scoped, tag = 'internal scratch']
  %s0 = inlined_call_operand.vmem [shape: f32[2,16], index: 0, kind: input, shape index: {}]
  %s1 = inlined_call_operand.hbm [shape: bf16[4,16,256], index: 1, kind: input, shape index: {}]
  %s2 = inlined_call_operand.vmem [shape: f32[4,8,2], index: 2, kind: input, shape index: {}]
  %s3 = inlined_call_operand.vmem [shape: f32[256,64], index: 3, kind: input, shape index: {}]
  %s4 = inlined_call_operand.vmem [shape: f32[64,256], index: 4, kind: input, shape index: {}]
  %s5 = inlined_call_operand.hbm [shape: f32[2,64], index: 5, kind: input, shape index: {}]
  %s6 = inlined_call_operand.vmem [shape: bf16[4,256,256], index: 6, kind: input, shape index: {}]
  %s7 = inlined_call_operand.vmem [shape: f32[4,16,8], index: 7, kind: input, shape index: {}]
  %s8 = inlined_call_operand.vmem [shape: f32[256,32], index: 8, kind: input, shape index: {}]
  %s9 = inlined_call_operand.hbm [shape: f32[32,256], index: 9, kind: input, shape index: {}]
  %s10 = inlined_call_operand.hbm [shape: f32[2,32], index: 10, kind: input, shape index: {}]
  %s11 = inlined_call_operand.vmem [shape: bf16[4,256,256], index: 11, kind: input, shape index: {}]
  %s12 = inlined_call_operand.vmem [shape: f32[4,32,16], index: 12, kind: input, shape index: {}]
  %s13 = inlined_call_operand.vmem [shape: f32[256,16], index: 13, kind: input, shape index: {}]
  %s14 = inlined_call_operand.hbm [shape: f32[16,256], index: 14, kind: input, shape index: {}]
  %s15 = inlined_call_operand.vmem [shape: f32[2,16], index: 15, kind: input, shape index: {}]
  %s16 = inlined_call_operand.vmem [shape: bf16[4,256,256], index: 16, kind: input, shape index: {}]
  %s17 = inlined_call_operand.vmem [shape: f32[4,64,32], index: 17, kind: input, shape index: {}]
  %s18 = inlined_call_operand.vmem [shape: f32[256,8], index: 18, kind: input, shape index: {}]
  %s19 = inlined_call_operand.vmem [shape: f32[8,256], index: 19, kind: input, shape index: {}]
  %s20 = inlined_call_operand.vmem [shape: f32[2,8], index: 20, kind: input, shape index: {}]
  %s21 = inlined_call_operand.vmem [shape: bf16[4,256,192], index: 21, kind: input, shape index: {}]
  %s22 = inlined_call_operand.vmem [shape: f32[4,128,64], index: 22, kind: input, shape index: {}]
  %s23 = inlined_call_operand.vmem [shape: f32[128,192], index: 23, kind: output, shape index: {}]
  %s24 = sld [smem:[#allocation0]]
  $region122: #{generator_forward.1} parent=0
    _
  %s26 = ssub.s32 1, %s24
  %s27 = scalar_select 0, %s26, %s24
  $region1: #{generator_forward.1} parent=0
    #allocation2 [shape = 'u8[32768]{0}', space=vmem, size = 0x8000, scoped, tag = 'input window, operand 1, single buffered']
    #allocation3 [shape = 's32[1]{0}', space=sflag, size = 0x4, scoped, tag = 'scoped memory for generator_forward.1']
    #allocation4 [shape = 'u8[1024]{0}', space=vmem, size = 0x400, scoped, tag = 'input window, operand 5, single buffered']
    #allocation5 [shape = 's32[1]{0}', space=sflag, size = 0x4, scoped, tag = 'scoped memory for generator_forward.1']
    #allocation6 [shape = 'u8[32768]{0}', space=vmem, size = 0x8000, scoped, tag = 'input window, operand 9, single buffered']
    #allocation7 [shape = 'u8[1024]{0}', space=vmem, size = 0x400, scoped, tag = 'input window, operand 10, single buffered']
    #allocation8 [shape = 's32[1]{0}', space=sflag, size = 0x4, scoped, tag = 'scoped memory for generator_forward.1']
    #allocation9 [shape = 'u8[16384]{0}', space=vmem, size = 0x4000, scoped, tag = 'input window, operand 14, single buffered']
    %28 = vsyncpa [#allocation3], 0
    %29 = vsyncpa [#allocation5], 0
    %30 = vsyncpa [#allocation8], 0
    // Predicated region
    $region2: #{generator_forward.1} parent=1 // pred_check
      _
    $region3: #{generator_forward.1} parent=1 // pred_check_branch
      %32 = sbr.rel (0) target = $region5
    $region4: #{generator_forward.1} parent=1 // pred_region
      _
    $region5: #{generator_forward.1} parent=1 // pred_fallthru
      _
    // Predicated region
    $region6: #{generator_forward.1} parent=1 // pred_check
      _
    $region7: #{generator_forward.1} parent=1 // pred_check_branch
      %34 = sbr.rel (0) target = $region9
    $region8: #{generator_forward.1} parent=1 // pred_region
      %s36 = ssub.s32 1024, 1024
      %37 = vsyncadd [#allocation3], %s36
      %s38 = sshll.u32 [#allocation2], 4
      %s39 = int_to_ptr.vmem [resolvable:$true] %s38
      %44 = dma.hbm_to_vmem [thread:$0]  %s1, 1024, %s39, [#allocation3], 128, 128, 8
    $region9: #{generator_forward.1} parent=1 // pred_fallthru
      _
    // Predicated region
    $region10: #{generator_forward.1} parent=1 // pred_check
      _
    $region11: #{generator_forward.1} parent=1 // pred_check_branch
      %46 = sbr.rel (0) target = $region13
    $region12: #{generator_forward.1} parent=1 // pred_region
      _
    $region13: #{generator_forward.1} parent=1 // pred_fallthru
      _
    // Predicated region
    $region14: #{generator_forward.1} parent=1 // pred_check
      _
    $region15: #{generator_forward.1} parent=1 // pred_check_branch
      %48 = sbr.rel (0) target = $region17
    $region16: #{generator_forward.1} parent=1 // pred_region
      _
    $region17: #{generator_forward.1} parent=1 // pred_fallthru
      _
    // Predicated region
    $region18: #{generator_forward.1} parent=1 // pred_check
      _
    $region19: #{generator_forward.1} parent=1 // pred_check_branch
      %50 = sbr.rel (0) target = $region21
    $region20: #{generator_forward.1} parent=1 // pred_region
      _
    $region21: #{generator_forward.1} parent=1 // pred_fallthru
      _
    // Predicated region
    $region22: #{generator_forward.1} parent=1 // pred_check
      _
    $region23: #{generator_forward.1} parent=1 // pred_check_branch
      %52 = sbr.rel (0) target = $region25
    $region24: #{generator_forward.1} parent=1 // pred_region
      %s54 = ssub.s32 32, 32
      %55 = vsyncadd [#allocation5], %s54
      %s57 = sshll.u32 [#allocation4], 4
      %s58 = int_to_ptr.vmem [resolvable:$true] %s57
      %60 = dma.hbm_to_vmem [thread:$0]  %s5, 32, %s58, [#allocation5]
    $region25: #{generator_forward.1} parent=1 // pred_fallthru
      _
    // Predicated region
    $region26: #{generator_forward.1} parent=1 // pred_check
      _
    $region27: #{generator_forward.1} parent=1 // pred_check_branch
      %62 = sbr.rel (0) target = $region29
    $region28: #{generator_forward.1} parent=1 // pred_region
      _
    $region29: #{generator_forward.1} parent=1 // pred_fallthru
      _
    // Predicated region
    $region30: #{generator_forward.1} parent=1 // pred_check
      _
    $region31: #{generator_forward.1} parent=1 // pred_check_branch
      %64 = sbr.rel (0) target = $region33
    $region32: #{generator_forward.1} parent=1 // pred_region
      _
    $region33: #{generator_forward.1} parent=1 // pred_fallthru
      _
    // Predicated region
    $region34: #{generator_forward.1} parent=1 // pred_check
      _
    $region35: #{generator_forward.1} parent=1 // pred_check_branch
      %66 = sbr.rel (0) target = $region37
    $region36: #{generator_forward.1} parent=1 // pred_region
      _
    $region37: #{generator_forward.1} parent=1 // pred_fallthru
      _
    // Predicated region
    $region38: #{generator_forward.1} parent=1 // pred_check
      _
    $region39: #{generator_forward.1} parent=1 // pred_check_branch
      %68 = sbr.rel (0) target = $region41
    $region40: #{generator_forward.1} parent=1 // pred_region
      %s70 = ssub.s32 1024, 1024
      %71 = vsyncadd [#allocation5], %s70
      %s72 = sshll.u32 [#allocation6], 4
      %s73 = int_to_ptr.vmem [resolvable:$true] %s72
      %78 = dma.hbm_to_vmem [thread:$0]  %s9, 1024, %s73, [#allocation5], 256, 256, 16
    $region41: #{generator_forward.1} parent=1 // pred_fallthru
      _
    // Predicated region
    $region42: #{generator_forward.1} parent=1 // pred_check
      _
    $region43: #{generator_forward.1} parent=1 // pred_check_branch
      %80 = sbr.rel (0) target = $region45
    $region44: #{generator_forward.1} parent=1 // pred_region
      %s82 = ssub.s32 32, 32
      %83 = vsyncadd [#allocation8], %s82
      %s85 = sshll.u32 [#allocation7], 4
      %s86 = int_to_ptr.vmem [resolvable:$true] %s85
      %88 = dma.hbm_to_vmem [thread:$0]  %s10, 32, %s86, [#allocation8]
    $region45: #{generator_forward.1} parent=1 // pred_fallthru
      _
    // Predicated region
    $region46: #{generator_forward.1} parent=1 // pred_check
      _
    $region47: #{generator_forward.1} parent=1 // pred_check_branch
      %90 = sbr.rel (0) target = $region49
    $region48: #{generator_forward.1} parent=1 // pred_region
      _
    $region49: #{generator_forward.1} parent=1 // pred_fallthru
      _
    // Predicated region
    $region50: #{generator_forward.1} parent=1 // pred_check
      _
    $region51: #{generator_forward.1} parent=1 // pred_check_branch
      %92 = sbr.rel (0) target = $region53
    $region52: #{generator_forward.1} parent=1 // pred_region
      _
    $region53: #{generator_forward.1} parent=1 // pred_fallthru
      _
    // Predicated region
    $region54: #{generator_forward.1} parent=1 // pred_check
      _
    $region55: #{generator_forward.1} parent=1 // pred_check_branch
      %94 = sbr.rel (0) target = $region57
    $region56: #{generator_forward.1} parent=1 // pred_region
      _
    $region57: #{generator_forward.1} parent=1 // pred_fallthru
      _
    // Predicated region
    $region58: #{generator_forward.1} parent=1 // pred_check
      _
    $region59: #{generator_forward.1} parent=1 // pred_check_branch
      %96 = sbr.rel (0) target = $region61
    $region60: #{generator_forward.1} parent=1 // pred_region
      %s98 = ssub.s32 512, 512
      %99 = vsyncadd [#allocation8], %s98
      %s100 = sshll.u32 [#allocation9], 4
      %s101 = int_to_ptr.vmem [resolvable:$true] %s100
      %106 = dma.hbm_to_vmem [thread:$0]  %s14, 512, %s101, [#allocation8], 256, 256, 16
    $region61: #{generator_forward.1} parent=1 // pred_fallthru
      _
    // Predicated region
    $region62: #{generator_forward.1} parent=1 // pred_check
      _
    $region63: #{generator_forward.1} parent=1 // pred_check_branch
      %108 = sbr.rel (0) target = $region65
    $region64: #{generator_forward.1} parent=1 // pred_region
      _
    $region65: #{generator_forward.1} parent=1 // pred_fallthru
      _
    // Predicated region
    $region66: #{generator_forward.1} parent=1 // pred_check
      _
    $region67: #{generator_forward.1} parent=1 // pred_check_branch
      %110 = sbr.rel (0) target = $region69
    $region68: #{generator_forward.1} parent=1 // pred_region
      _
    $region69: #{generator_forward.1} parent=1 // pred_fallthru
      _
    // Predicated region
    $region70: #{generator_forward.1} parent=1 // pred_check
      _
    $region71: #{generator_forward.1} parent=1 // pred_check_branch
      %112 = sbr.rel (0) target = $region73
    $region72: #{generator_forward.1} parent=1 // pred_region
      _
    $region73: #{generator_forward.1} parent=1 // pred_fallthru
      _
    // Predicated region
    $region74: #{generator_forward.1} parent=1 // pred_check
      _
    $region75: #{generator_forward.1} parent=1 // pred_check_branch
      %114 = sbr.rel (0) target = $region77
    $region76: #{generator_forward.1} parent=1 // pred_region
      _
    $region77: #{generator_forward.1} parent=1 // pred_fallthru
      _
    // Predicated region
    $region78: #{generator_forward.1} parent=1 // pred_check
      _
    $region79: #{generator_forward.1} parent=1 // pred_check_branch
      %116 = sbr.rel (0) target = $region81
    $region80: #{generator_forward.1} parent=1 // pred_region
      _
    $region81: #{generator_forward.1} parent=1 // pred_fallthru
      _
    // Predicated region
    $region82: #{generator_forward.1} parent=1 // pred_check
      _
    $region83: #{generator_forward.1} parent=1 // pred_check_branch
      %118 = sbr.rel (0) target = $region85
    $region84: #{generator_forward.1} parent=1 // pred_region
      _
    $region85: #{generator_forward.1} parent=1 // pred_fallthru
      _
    // Predicated region
    $region86: #{generator_forward.1} parent=1 // pred_check
      _
    $region87: #{generator_forward.1} parent=1 // pred_check_branch
      %120 = sbr.rel (0) target = $region89
    $region88: #{generator_forward.1} parent=1 // pred_region
      _
    $region89: #{generator_forward.1} parent=1 // pred_fallthru
      _
    // Predicated region
    $region90: #{generator_forward.1} parent=1 // pred_check
      _
    $region91: #{generator_forward.1} parent=1 // pred_check_branch
      %122 = sbr.rel (0) target = $region93
    $region92: #{generator_forward.1} parent=1 // pred_region
      _
    $region93: #{generator_forward.1} parent=1 // pred_fallthru
      _
    // Predicated region
    $region94: #{generator_forward.1} parent=1 // pred_check
      _
    $region95: #{generator_forward.1} parent=1 // pred_check_branch
      %124 = sbr.rel (0) target = $region97
    $region96: #{generator_forward.1} parent=1 // pred_region
      %125 = dma.done [#allocation3], 1024
    $region97: #{generator_forward.1} parent=1 // pred_fallthru
      _
    // Predicated region
    $region98: #{generator_forward.1} parent=1 // pred_check
      _
    $region99: #{generator_forward.1} parent=1 // pred_check_branch
      %127 = sbr.rel (0) target = $region101
    $region100: #{generator_forward.1} parent=1 // pred_region
      %128 = dma.done [#allocation5], 32
    $region101: #{generator_forward.1} parent=1 // pred_fallthru
      _
    // Predicated region
    $region102: #{generator_forward.1} parent=1 // pred_check
      _
    $region103: #{generator_forward.1} parent=1 // pred_check_branch
      %130 = sbr.rel (0) target = $region105
    $region104: #{generator_forward.1} parent=1 // pred_region
      %131 = dma.done [#allocation5], 1024
    $region105: #{generator_forward.1} parent=1 // pred_fallthru
      _
    // Predicated region
    $region106: #{generator_forward.1} parent=1 // pred_check
      _
    $region107: #{generator_forward.1} parent=1 // pred_check_branch
      %133 = sbr.rel (0) target = $region109
    $region108: #{generator_forward.1} parent=1 // pred_region
      %134 = dma.done [#allocation8], 32
    $region109: #{generator_forward.1} parent=1 // pred_fallthru
      _
    // Predicated region
    $region110: #{generator_forward.1} parent=1 // pred_check
      _
    $region111: #{generator_forward.1} parent=1 // pred_check_branch
      %136 = sbr.rel (0) target = $region113
    $region112: #{generator_forward.1} parent=1 // pred_region
      %137 = dma.done [#allocation8], 512
    $region113: #{generator_forward.1} parent=1 // pred_fallthru
      _
    %v139 = vld [vmem:[%s0] sm:$0x3]
    %v140 = vpack.c.bf16 %v139, %v139
    %v141 = vld [vmem:[#allocation2] sm:$0xff]
    %v142 = vld [vmem:[#allocation2 + $0x8] sm:$0xff]
    %v145 = vunpack.c.l.b16 %v141
    %v146 = vunpack.c.h.b16 %v141
    %v147 = vunpack.c.l.b16 %v142
    %v148 = vunpack.c.h.b16 %v142
    %v149 = vpack.c.b16 %v147, %v145
    %v150 = vpack.c.b16 %v148, %v146
    %vm153 = vcmask 130048
    %v155 = vsel %vm153, %v140, 0
    %157 = vmatprep.subr.bf16.mxu0 %v150
    %158 = vmatpush1.bf16.msra.mxu0 %v149
    %159 = vmatprep.subr.bf16.mxu0 0
    %160 = vmatpush1.bf16.msra.mxu0 0
    %161 = vmatprep.subr.bf16.mxu0 0
    %162 = vmatpush1.bf16.msra.mxu0 0
    %163 = vmatprep.subr.bf16.mxu0 0
    %164 = vmatpush1.bf16.msra.mxu0 0
    %165 = vmatprep.subr.bf16.mxu0 0
    %166 = vmatpush1.bf16.msra.mxu0 0
    %167 = vmatprep.subr.bf16.mxu0 0
    %168 = vmatpush1.bf16.msra.mxu0 0
    %169 = vmatprep.subr.bf16.mxu0 0
    %170 = vmatpush1.bf16.msra.mxu0 0
    %171 = vmatprep.subr.bf16.mxu0 0
    %172 = vmatpush1.bf16.msra.mxu0 0
    %173 = vmatprep.subr.bf16.mxu0 0
    %174 = vmatpush1.bf16.msra.mxu0 0
    %175 = vmatprep.subr.bf16.mxu0 0
    %176 = vmatpush1.bf16.msra.mxu0 0
    %177 = vmatprep.subr.bf16.mxu0 0
    %178 = vmatpush1.bf16.msra.mxu0 0
    %179 = vmatprep.subr.bf16.mxu0 0
    %180 = vmatpush1.bf16.msra.mxu0 0
    %181 = vmatprep.subr.bf16.mxu0 0
    %182 = vmatpush1.bf16.msra.mxu0 0
    %183 = vmatprep.subr.bf16.mxu0 0
    %184 = vmatpush1.bf16.msra.mxu0 0
    %185 = vmatprep.subr.bf16.mxu0 0
    %186 = vmatpush1.bf16.msra.mxu0 0
    %187 = vmatprep.subr.bf16.mxu0 0
    %188 = vmatpush1.bf16.msra.mxu0 0
    %189 = vmatprep.mubr.bf16.mxu0 0
    %190 = vmatmul.mubr.bf16.gmra.mrb[0].mxu0 %v155
    %v191 = vpop.f32.mrb[0].mxu0
    %v192 = vadd.f32 0.0, %v191
    %v193 = vpop.f32.mrb[0].mxu0
    %v194 = vadd.f32 0.0, %v193
    %v195 = vpop.f32.mrb[0].mxu0
    %v196 = vpop.f32.mrb[0].mxu0
    %197 = vdwg.mxu0
    %v198 = vld [vmem:[%s2] sm:$0xff]
    %s199 = scalar_lea.vmem [#allocation2], 16
    %v200 = vld [vmem:[%s199] sm:$0xff]
    %v201 = vld [vmem:[%s199 + $0x8] sm:$0xff]
    %v204 = vunpack.c.l.b16 %v200
    %v205 = vunpack.c.h.b16 %v200
    %v206 = vunpack.c.l.b16 %v201
    %v207 = vunpack.c.h.b16 %v201
    %v208 = vpack.c.b16 %v206, %v204
    %v209 = vpack.c.b16 %v207, %v205
    %212 = vmatprep.subr.bf16.mxu0 %v209
    %213 = vmatpush1.bf16.msra.mxu0 %v208
    %214 = vmatprep.subr.bf16.mxu0 0
    %215 = vmatpush1.bf16.msra.mxu0 0
    %216 = vmatprep.subr.bf16.mxu0 0
    %217 = vmatpush1.bf16.msra.mxu0 0
    %218 = vmatprep.subr.bf16.mxu0 0
    %219 = vmatpush1.bf16.msra.mxu0 0
    %220 = vmatprep.subr.bf16.mxu0 0
    %221 = vmatpush1.bf16.msra.mxu0 0
    %222 = vmatprep.subr.bf16.mxu0 0
    %223 = vmatpush1.bf16.msra.mxu0 0
    %224 = vmatprep.subr.bf16.mxu0 0
    %225 = vmatpush1.bf16.msra.mxu0 0
    %226 = vmatprep.subr.bf16.mxu0 0
    %227 = vmatpush1.bf16.msra.mxu0 0
    %228 = vmatprep.subr.bf16.mxu0 0
    %229 = vmatpush1.bf16.msra.mxu0 0
    %230 = vmatprep.subr.bf16.mxu0 0
    %231 = vmatpush1.bf16.msra.mxu0 0
    %232 = vmatprep.subr.bf16.mxu0 0
    %233 = vmatpush1.bf16.msra.mxu0 0
    %234 = vmatprep.subr.bf16.mxu0 0
    %235 = vmatpush1.bf16.msra.mxu0 0
    %236 = vmatprep.subr.bf16.mxu0 0
    %237 = vmatpush1.bf16.msra.mxu0 0
    %238 = vmatprep.subr.bf16.mxu0 0
    %239 = vmatpush1.bf16.msra.mxu0 0
    %240 = vmatprep.subr.bf16.mxu0 0
    %241 = vmatpush1.bf16.msra.mxu0 0
    %242 = vmatprep.subr.bf16.mxu0 0
    %243 = vmatpush1.bf16.msra.mxu0 0
    %244 = vmatprep.mubr.bf16.mxu0 0
    %245 = vmatmul.mubr.bf16.gmra.mrb[0].mxu0 %v155
    %v246 = vpop.f32.mrb[0].mxu0
    %v247 = vadd.f32 0.0, %v246
    %v248 = vpop.f32.mrb[0].mxu0
    %v249 = vadd.f32 0.0, %v248
    %v250 = vpop.f32.mrb[0].mxu0
    %v251 = vpop.f32.mrb[0].mxu0
    %252 = vdwg.mxu0
    %s253 = scalar_lea.vmem %s2, 8
    %v254 = vld [vmem:[%s253] sm:$0xff]
    %vm255 = vcmask 15360
    %v257 = vsel %vm255, %v254, 0
    %vm259 = vcmask 1041408
    %v261 = vsel %vm259, %v247, 0
    %v264 = vsel %vm259, %v249, 0
    %266 = vmatprep.subr.mxu0 %v264
    %267 = vmatpush1.msra.mxu0 %v261
    %268 = vmatprep.subr.mxu0 0.0
    %269 = vmatpush1.msra.mxu0 0.0
    %270 = vmatprep.subr.mxu0 0.0
    %271 = vmatpush1.msra.mxu0 0.0
    %272 = vmatprep.subr.mxu0 0.0
    %273 = vmatpush1.msra.mxu0 0.0
    %274 = vmatprep.subr.mxu0 0.0
    %275 = vmatpush1.msra.mxu0 0.0
    %276 = vmatprep.subr.mxu0 0.0
    %277 = vmatpush1.msra.mxu0 0.0
    %278 = vmatprep.subr.mxu0 0.0
    %279 = vmatpush1.msra.mxu0 0.0
    %280 = vmatprep.subr.mxu0 0.0
    %281 = vmatpush1.msra.mxu0 0.0
    %282 = vmatprep.subr.mxu0 0.0
    %283 = vmatpush1.msra.mxu0 0.0
    %284 = vmatprep.subr.mxu0 0.0
    %285 = vmatpush1.msra.mxu0 0.0
    %286 = vmatprep.subr.mxu0 0.0
    %287 = vmatpush1.msra.mxu0 0.0
    %288 = vmatprep.subr.mxu0 0.0
    %289 = vmatpush1.msra.mxu0 0.0
    %290 = vmatprep.subr.mxu0 0.0
    %291 = vmatpush1.msra.mxu0 0.0
    %292 = vmatprep.subr.mxu0 0.0
    %293 = vmatpush1.msra.mxu0 0.0
    %294 = vmatprep.subr.mxu0 0.0
    %295 = vmatpush1.msra.mxu0 0.0
    %296 = vmatprep.subr.mxu0 0.0
    %297 = vmatpush1.msra.mxu0 0.0
    %298 = vmatprep.subr.mxu0 0.0
    %299 = vmatpush1.msra.mxu0 0.0
    %300 = vmatprep.subr.mxu0 0.0
    %301 = vmatpush1.msra.mxu0 0.0
    %302 = vmatprep.subr.mxu0 0.0
    %303 = vmatpush1.msra.mxu0 0.0
    %304 = vmatprep.subr.mxu0 0.0
    %305 = vmatpush1.msra.mxu0 0.0
    %306 = vmatprep.subr.mxu0 0.0
    %307 = vmatpush1.msra.mxu0 0.0
    %308 = vmatprep.subr.mxu0 0.0
    %309 = vmatpush1.msra.mxu0 0.0
    %310 = vmatprep.subr.mxu0 0.0
    %311 = vmatpush1.msra.mxu0 0.0
    %312 = vmatprep.subr.mxu0 0.0
    %313 = vmatpush1.msra.mxu0 0.0
    %314 = vmatprep.subr.mxu0 0.0
    %315 = vmatpush1.msra.mxu0 0.0
    %316 = vmatprep.subr.mxu0 0.0
    %317 = vmatpush1.msra.mxu0 0.0
    %318 = vmatprep.subr.mxu0 0.0
    %319 = vmatpush1.msra.mxu0 0.0
    %320 = vmatprep.subr.mxu0 0.0
    %321 = vmatpush1.msra.mxu0 0.0
    %322 = vmatprep.subr.mxu0 0.0
    %323 = vmatpush1.msra.mxu0 0.0
    %324 = vmatprep.subr.mxu0 0.0
    %325 = vmatpush1.msra.mxu0 0.0
    %326 = vmatprep.subr.mxu0 0.0
    %327 = vmatpush1.msra.mxu0 0.0
    %328 = vmatprep.subr.mxu0 0.0
    %329 = vmatpush1.msra.mxu0 0.0
    %330 = vmatprep.mubr.f32.mxu0 0.0
    %331 = vmatmul.mubr.f32.gmra.mrb[0].mxu0 %v257
    %v332 = vpop.f32.mrb[0].mxu0
    %v333 = vadd.f32 0.0, %v332
    %v334 = vpop.f32.mrb[0].mxu0
    %v335 = vadd.f32 0.0, %v334
    %336 = vdwg.mxu0
    %v338 = vsel %vm255, %v198, 0
    %v341 = vsel %vm259, %v192, 0
    %v344 = vsel %vm259, %v194, 0
    %346 = vmatprep.subr.mxu0 %v344
    %347 = vmatpush1.msra.mxu0 %v341
    %348 = vmatprep.subr.mxu0 0.0
    %349 = vmatpush1.msra.mxu0 0.0
    %350 = vmatprep.subr.mxu0 0.0
    %351 = vmatpush1.msra.mxu0 0.0
    %352 = vmatprep.subr.mxu0 0.0
    %353 = vmatpush1.msra.mxu0 0.0
    %354 = vmatprep.subr.mxu0 0.0
    %355 = vmatpush1.msra.mxu0 0.0
    %356 = vmatprep.subr.mxu0 0.0
    %357 = vmatpush1.msra.mxu0 0.0
    %358 = vmatprep.subr.mxu0 0.0
    %359 = vmatpush1.msra.mxu0 0.0
    %360 = vmatprep.subr.mxu0 0.0
    %361 = vmatpush1.msra.mxu0 0.0
    %362 = vmatprep.subr.mxu0 0.0
    %363 = vmatpush1.msra.mxu0 0.0
    %364 = vmatprep.subr.mxu0 0.0
    %365 = vmatpush1.msra.mxu0 0.0
    %366 = vmatprep.subr.mxu0 0.0
    %367 = vmatpush1.msra.mxu0 0.0
    %368 = vmatprep.subr.mxu0 0.0
    %369 = vmatpush1.msra.mxu0 0.0
    %370 = vmatprep.subr.mxu0 0.0
    %371 = vmatpush1.msra.mxu0 0.0
    %372 = vmatprep.subr.mxu0 0.0
    %373 = vmatpush1.msra.mxu0 0.0
    %374 = vmatprep.subr.mxu0 0.0
    %375 = vmatpush1.msra.mxu0 0.0
    %376 = vmatprep.subr.mxu0 0.0
    %377 = vmatpush1.msra.mxu0 0.0
    %378 = vmatprep.subr.mxu0 0.0
    %379 = vmatpush1.msra.mxu0 0.0
    %380 = vmatprep.subr.mxu0 0.0
    %381 = vmatpush1.msra.mxu0 0.0
    %382 = vmatprep.subr.mxu0 0.0
    %383 = vmatpush1.msra.mxu0 0.0
    %384 = vmatprep.subr.mxu0 0.0
    %385 = vmatpush1.msra.mxu0 0.0
    %386 = vmatprep.subr.mxu0 0.0
    %387 = vmatpush1.msra.mxu0 0.0
    %388 = vmatprep.subr.mxu0 0.0
    %389 = vmatpush1.msra.mxu0 0.0
    %390 = vmatprep.subr.mxu0 0.0
    %391 = vmatpush1.msra.mxu0 0.0
    %392 = vmatprep.subr.mxu0 0.0
    %393 = vmatpush1.msra.mxu0 0.0
    %394 = vmatprep.subr.mxu0 0.0
    %395 = vmatpush1.msra.mxu0 0.0
    %396 = vmatprep.subr.mxu0 0.0
    %397 = vmatpush1.msra.mxu0 0.0
    %398 = vmatprep.subr.mxu0 0.0
    %399 = vmatpush1.msra.mxu0 0.0
    %400 = vmatprep.subr.mxu0 0.0
    %401 = vmatpush1.msra.mxu0 0.0
    %402 = vmatprep.subr.mxu0 0.0
    %403 = vmatpush1.msra.mxu0 0.0
    %404 = vmatprep.subr.mxu0 0.0
    %405 = vmatpush1.msra.mxu0 0.0
    %406 = vmatprep.subr.mxu0 0.0
    %407 = vmatpush1.msra.mxu0 0.0
    %408 = vmatprep.subr.mxu0 0.0
    %409 = vmatpush1.msra.mxu0 0.0
    %410 = vmatprep.mubr.f32.mxu0 0.0
    %411 = vmatmul.mubr.f32.gmra.mrb[0].mxu0 %v338
    %v412 = vpop.f32.mrb[0].mxu0
    %v413 = vadd.f32 %v333, %v412
    %v414 = vpop.f32.mrb[0].mxu0
    %v415 = vadd.f32 %v335, %v414
    %416 = vdwg.mxu0
    %s417 = scalar_lea.vmem [#allocation2], 32
    %v418 = vld [vmem:[%s417] sm:$0xff]
    %v419 = vld [vmem:[%s417 + $0x8] sm:$0xff]
    %v422 = vunpack.c.l.b16 %v418
    %v423 = vunpack.c.h.b16 %v418
    %v424 = vunpack.c.l.b16 %v419
    %v425 = vunpack.c.h.b16 %v419
    %v426 = vpack.c.b16 %v424, %v422
    %v427 = vpack.c.b16 %v425, %v423
    %430 = vmatprep.subr.bf16.mxu0 %v427
    %431 = vmatpush1.bf16.msra.mxu0 %v426
    %432 = vmatprep.subr.bf16.mxu0 0
    %433 = vmatpush1.bf16.msra.mxu0 0
    %434 = vmatprep.subr.bf16.mxu0 0
    %435 = vmatpush1.bf16.msra.mxu0 0
    %436 = vmatprep.subr.bf16.mxu0 0
    %437 = vmatpush1.bf16.msra.mxu0 0
    %438 = vmatprep.subr.bf16.mxu0 0
    %439 = vmatpush1.bf16.msra.mxu0 0
    %440 = vmatprep.subr.bf16.mxu0 0
    %441 = vmatpush1.bf16.msra.mxu0 0
    %442 = vmatprep.subr.bf16.mxu0 0
    %443 = vmatpush1.bf16.msra.mxu0 0
    %444 = vmatprep.subr.bf16.mxu0 0
    %445 = vmatpush1.bf16.msra.mxu0 0
    %446 = vmatprep.subr.bf16.mxu0 0
    %447 = vmatpush1.bf16.msra.mxu0 0
    %448 = vmatprep.subr.bf16.mxu0 0
    %449 = vmatpush1.bf16.msra.mxu0 0
    %450 = vmatprep.subr.bf16.mxu0 0
    %451 = vmatpush1.bf16.msra.mxu0 0
    %452 = vmatprep.subr.bf16.mxu0 0
    %453 = vmatpush1.bf16.msra.mxu0 0
    %454 = vmatprep.subr.bf16.mxu0 0
    %455 = vmatpush1.bf16.msra.mxu0 0
    %456 = vmatprep.subr.bf16.mxu0 0
    %457 = vmatpush1.bf16.msra.mxu0 0
    %458 = vmatprep.subr.bf16.mxu0 0
    %459 = vmatpush1.bf16.msra.mxu0 0
    %460 = vmatprep.subr.bf16.mxu0 0
    %461 = vmatpush1.bf16.msra.mxu0 0
    %462 = vmatprep.mubr.bf16.mxu0 0
    %463 = vmatmul.mubr.bf16.gmra.mrb[0].mxu0 %v155
    %v464 = vpop.f32.mrb[0].mxu0
    %v465 = vadd.f32 0.0, %v464
    %v466 = vpop.f32.mrb[0].mxu0
    %v467 = vadd.f32 0.0, %v466
    %v468 = vpop.f32.mrb[0].mxu0
    %v469 = vpop.f32.mrb[0].mxu0
    %470 = vdwg.mxu0
    %s471 = scalar_lea.vmem %s2, 16
    %v472 = vld [vmem:[%s471] sm:$0xff]
    %v474 = vsel %vm255, %v472, 0
    %v477 = vsel %vm259, %v465, 0
    %v480 = vsel %vm259, %v467, 0
    %482 = vmatprep.subr.mxu0 %v480
    %483 = vmatpush1.msra.mxu0 %v477
    %484 = vmatprep.subr.mxu0 0.0
    %485 = vmatpush1.msra.mxu0 0.0
    %486 = vmatprep.subr.mxu0 0.0
    %487 = vmatpush1.msra.mxu0 0.0
    %488 = vmatprep.subr.mxu0 0.0
    %489 = vmatpush1.msra.mxu0 0.0
    %490 = vmatprep.subr.mxu0 0.0
    %491 = vmatpush1.msra.mxu0 0.0
    %492 = vmatprep.subr.mxu0 0.0
    %493 = vmatpush1.msra.mxu0 0.0
    %494 = vmatprep.subr.mxu0 0.0
    %495 = vmatpush1.msra.mxu0 0.0
    %496 = vmatprep.subr.mxu0 0.0
    %497 = vmatpush1.msra.mxu0 0.0
    %498 = vmatprep.subr.mxu0 0.0
    %499 = vmatpush1.msra.mxu0 0.0
    %500 = vmatprep.subr.mxu0 0.0
    %501 = vmatpush1.msra.mxu0 0.0
    %502 = vmatprep.subr.mxu0 0.0
    %503 = vmatpush1.msra.mxu0 0.0
    %504 = vmatprep.subr.mxu0 0.0
    %505 = vmatpush1.msra.mxu0 0.0
    %506 = vmatprep.subr.mxu0 0.0
    %507 = vmatpush1.msra.mxu0 0.0
    %508 = vmatprep.subr.mxu0 0.0
    %509 = vmatpush1.msra.mxu0 0.0
    %510 = vmatprep.subr.mxu0 0.0
    %511 = vmatpush1.msra.mxu0 0.0
    %512 = vmatprep.subr.mxu0 0.0
    %513 = vmatpush1.msra.mxu0 0.0
    %514 = vmatprep.subr.mxu0 0.0
    %515 = vmatpush1.msra.mxu0 0.0
    %516 = vmatprep.subr.mxu0 0.0
    %517 = vmatpush1.msra.mxu0 0.0
    %518 = vmatprep.subr.mxu0 0.0
    %519 = vmatpush1.msra.mxu0 0.0
    %520 = vmatprep.subr.mxu0 0.0
    %521 = vmatpush1.msra.mxu0 0.0
    %522 = vmatprep.subr.mxu0 0.0
    %523 = vmatpush1.msra.mxu0 0.0
    %524 = vmatprep.subr.mxu0 0.0
    %525 = vmatpush1.msra.mxu0 0.0
    %526 = vmatprep.subr.mxu0 0.0
    %527 = vmatpush1.msra.mxu0 0.0
    %528 = vmatprep.subr.mxu0 0.0
    %529 = vmatpush1.msra.mxu0 0.0
    %530 = vmatprep.subr.mxu0 0.0
    %531 = vmatpush1.msra.mxu0 0.0
    %532 = vmatprep.subr.mxu0 0.0
    %533 = vmatpush1.msra.mxu0 0.0
    %534 = vmatprep.subr.mxu0 0.0
    %535 = vmatpush1.msra.mxu0 0.0
    %536 = vmatprep.subr.mxu0 0.0
    %537 = vmatpush1.msra.mxu0 0.0
    %538 = vmatprep.subr.mxu0 0.0
    %539 = vmatpush1.msra.mxu0 0.0
    %540 = vmatprep.subr.mxu0 0.0
    %541 = vmatpush1.msra.mxu0 0.0
    %542 = vmatprep.subr.mxu0 0.0
    %543 = vmatpush1.msra.mxu0 0.0
    %544 = vmatprep.subr.mxu0 0.0
    %545 = vmatpush1.msra.mxu0 0.0
    %546 = vmatprep.mubr.f32.mxu0 0.0
    %547 = vmatmul.mubr.f32.gmra.mrb[0].mxu0 %v474
    %v548 = vpop.f32.mrb[0].mxu0
    %v549 = vadd.f32 0.0, %v548
    %v550 = vpop.f32.mrb[0].mxu0
    %v551 = vadd.f32 0.0, %v550
    %552 = vdwg.mxu0
    %v553 = vadd.f32 %v413, %v549
    %v554 = vadd.f32 %v415, %v551
    %s555 = scalar_lea.vmem [#allocation2], 48
    %v556 = vld [vmem:[%s555] sm:$0xff]
    %v557 = vld [vmem:[%s555 + $0x8] sm:$0xff]
    %v560 = vunpack.c.l.b16 %v556
    %v561 = vunpack.c.h.b16 %v556
    %v562 = vunpack.c.l.b16 %v557
    %v563 = vunpack.c.h.b16 %v557
    %v564 = vpack.c.b16 %v562, %v560
    %v565 = vpack.c.b16 %v563, %v561
    %568 = vmatprep.subr.bf16.mxu0 %v565
    %569 = vmatpush1.bf16.msra.mxu0 %v564
    %570 = vmatprep.subr.bf16.mxu0 0
    %571 = vmatpush1.bf16.msra.mxu0 0
    %572 = vmatprep.subr.bf16.mxu0 0
    %573 = vmatpush1.bf16.msra.mxu0 0
    %574 = vmatprep.subr.bf16.mxu0 0
    %575 = vmatpush1.bf16.msra.mxu0 0
    %576 = vmatprep.subr.bf16.mxu0 0
    %577 = vmatpush1.bf16.msra.mxu0 0
    %578 = vmatprep.subr.bf16.mxu0 0
    %579 = vmatpush1.bf16.msra.mxu0 0
    %580 = vmatprep.subr.bf16.mxu0 0
    %581 = vmatpush1.bf16.msra.mxu0 0
    %582 = vmatprep.subr.bf16.mxu0 0
    %583 = vmatpush1.bf16.msra.mxu0 0
    %584 = vmatprep.subr.bf16.mxu0 0
    %585 = vmatpush1.bf16.msra.mxu0 0
    %586 = vmatprep.subr.bf16.mxu0 0
    %587 = vmatpush1.bf16.msra.mxu0 0
    %588 = vmatprep.subr.bf16.mxu0 0
    %589 = vmatpush1.bf16.msra.mxu0 0
    %590 = vmatprep.subr.bf16.mxu0 0
    %591 = vmatpush1.bf16.msra.mxu0 0
    %592 = vmatprep.subr.bf16.mxu0 0
    %593 = vmatpush1.bf16.msra.mxu0 0
    %594 = vmatprep.subr.bf16.mxu0 0
    %595 = vmatpush1.bf16.msra.mxu0 0
    %596 = vmatprep.subr.bf16.mxu0 0
    %597 = vmatpush1.bf16.msra.mxu0 0
    %598 = vmatprep.subr.bf16.mxu0 0
    %599 = vmatpush1.bf16.msra.mxu0 0
    %600 = vmatprep.mubr.bf16.mxu0 0
    %601 = vmatmul.mubr.bf16.gmra.mrb[0].mxu0 %v155
    %v602 = vpop.f32.mrb[0].mxu0
    %v603 = vadd.f32 0.0, %v602
    %v604 = vpop.f32.mrb[0].mxu0
    %v605 = vadd.f32 0.0, %v604
    %v606 = vpop.f32.mrb[0].mxu0
    %v607 = vpop.f32.mrb[0].mxu0
    %608 = vdwg.mxu0
    %s609 = scalar_lea.vmem %s2, 24
    %v610 = vld [vmem:[%s609] sm:$0xff]
    %v612 = vsel %vm255, %v610, 0
    %v615 = vsel %vm259, %v603, 0
    %v618 = vsel %vm259, %v605, 0
    %620 = vmatprep.subr.mxu0 %v618
    %621 = vmatpush1.msra.mxu0 %v615
    %622 = vmatprep.subr.mxu0 0.0
    %623 = vmatpush1.msra.mxu0 0.0
    %624 = vmatprep.subr.mxu0 0.0
    %625 = vmatpush1.msra.mxu0 0.0
    %626 = vmatprep.subr.mxu0 0.0
    %627 = vmatpush1.msra.mxu0 0.0
    %628 = vmatprep.subr.mxu0 0.0
    %629 = vmatpush1.msra.mxu0 0.0
    %630 = vmatprep.subr.mxu0 0.0
    %631 = vmatpush1.msra.mxu0 0.0
    %632 = vmatprep.subr.mxu0 0.0
    %633 = vmatpush1.msra.mxu0 0.0
    %634 = vmatprep.subr.mxu0 0.0
    %635 = vmatpush1.msra.mxu0 0.0
    %636 = vmatprep.subr.mxu0 0.0
    %637 = vmatpush1.msra.mxu0 0.0
    %638 = vmatprep.subr.mxu0 0.0
    %639 = vmatpush1.msra.mxu0 0.0
    %640 = vmatprep.subr.mxu0 0.0
    %641 = vmatpush1.msra.mxu0 0.0
    %642 = vmatprep.subr.mxu0 0.0
    %643 = vmatpush1.msra.mxu0 0.0
    %644 = vmatprep.subr.mxu0 0.0
    %645 = vmatpush1.msra.mxu0 0.0
    %646 = vmatprep.subr.mxu0 0.0
    %647 = vmatpush1.msra.mxu0 0.0
    %648 = vmatprep.subr.mxu0 0.0
    %649 = vmatpush1.msra.mxu0 0.0
    %650 = vmatprep.subr.mxu0 0.0
    %651 = vmatpush1.msra.mxu0 0.0
    %652 = vmatprep.subr.mxu0 0.0
    %653 = vmatpush1.msra.mxu0 0.0
    %654 = vmatprep.subr.mxu0 0.0
    %655 = vmatpush1.msra.mxu0 0.0
    %656 = vmatprep.subr.mxu0 0.0
    %657 = vmatpush1.msra.mxu0 0.0
    %658 = vmatprep.subr.mxu0 0.0
    %659 = vmatpush1.msra.mxu0 0.0
    %660 = vmatprep.subr.mxu0 0.0
    %661 = vmatpush1.msra.mxu0 0.0
    %662 = vmatprep.subr.mxu0 0.0
    %663 = vmatpush1.msra.mxu0 0.0
    %664 = vmatprep.subr.mxu0 0.0
    %665 = vmatpush1.msra.mxu0 0.0
    %666 = vmatprep.subr.mxu0 0.0
    %667 = vmatpush1.msra.mxu0 0.0
    %668 = vmatprep.subr.mxu0 0.0
    %669 = vmatpush1.msra.mxu0 0.0
    %670 = vmatprep.subr.mxu0 0.0
    %671 = vmatpush1.msra.mxu0 0.0
    %672 = vmatprep.subr.mxu0 0.0
    %673 = vmatpush1.msra.mxu0 0.0
    %674 = vmatprep.subr.mxu0 0.0
    %675 = vmatpush1.msra.mxu0 0.0
    %676 = vmatprep.subr.mxu0 0.0
    %677 = vmatpush1.msra.mxu0 0.0
    %678 = vmatprep.subr.mxu0 0.0
    %679 = vmatpush1.msra.mxu0 0.0
    %680 = vmatprep.subr.mxu0 0.0
    %681 = vmatpush1.msra.mxu0 0.0
    %682 = vmatprep.subr.mxu0 0.0
    %683 = vmatpush1.msra.mxu0 0.0
    %684 = vmatprep.mubr.f32.mxu0 0.0
    %685 = vmatmul.mubr.f32.gmra.mrb[0].mxu0 %v612
    %v686 = vpop.f32.mrb[0].mxu0
    %v687 = vadd.f32 0.0, %v686
    %v688 = vpop.f32.mrb[0].mxu0
    %v689 = vadd.f32 0.0, %v688
    %690 = vdwg.mxu0
    %v691 = vadd.f32 %v553, %v687
    %v692 = vadd.f32 %v554, %v689
    %vm693 = vcmask 64512
    %v695 = vsel %vm693, 1.0, 0
    %697 = vmatprep.subr.mxu0 %v692
    %698 = vmatpush1.msra.mxu0 %v691
    %699 = vmatprep.subr.mxu0 0.0
    %700 = vmatpush1.msra.mxu0 0.0
    %701 = vmatprep.subr.mxu0 0.0
    %702 = vmatpush1.msra.mxu0 0.0
    %703 = vmatprep.subr.mxu0 0.0
    %704 = vmatpush1.msra.mxu0 0.0
    %705 = vmatprep.subr.mxu0 0.0
    %706 = vmatpush1.msra.mxu0 0.0
    %707 = vmatprep.subr.mxu0 0.0
    %708 = vmatpush1.msra.mxu0 0.0
    %709 = vmatprep.subr.mxu0 0.0
    %710 = vmatpush1.msra.mxu0 0.0
    %711 = vmatprep.subr.mxu0 0.0
    %712 = vmatpush1.msra.mxu0 0.0
    %713 = vmatprep.subr.mxu0 0.0
    %714 = vmatpush1.msra.mxu0 0.0
    %715 = vmatprep.subr.mxu0 0.0
    %716 = vmatpush1.msra.mxu0 0.0
    %717 = vmatprep.subr.mxu0 0.0
    %718 = vmatpush1.msra.mxu0 0.0
    %719 = vmatprep.subr.mxu0 0.0
    %720 = vmatpush1.msra.mxu0 0.0
    %721 = vmatprep.subr.mxu0 0.0
    %722 = vmatpush1.msra.mxu0 0.0
    %723 = vmatprep.subr.mxu0 0.0
    %724 = vmatpush1.msra.mxu0 0.0
    %725 = vmatprep.subr.mxu0 0.0
    %726 = vmatpush1.msra.mxu0 0.0
    %727 = vmatprep.subr.mxu0 0.0
    %728 = vmatpush1.msra.mxu0 0.0
    %729 = vmatprep.subr.mxu0 0.0
    %730 = vmatpush1.msra.mxu0 0.0
    %731 = vmatprep.subr.mxu0 0.0
    %732 = vmatpush1.msra.mxu0 0.0
    %733 = vmatprep.subr.mxu0 0.0
    %734 = vmatpush1.msra.mxu0 0.0
    %735 = vmatprep.subr.mxu0 0.0
    %736 = vmatpush1.msra.mxu0 0.0
    %737 = vmatprep.subr.mxu0 0.0
    %738 = vmatpush1.msra.mxu0 0.0
    %739 = vmatprep.subr.mxu0 0.0
    %740 = vmatpush1.msra.mxu0 0.0
    %741 = vmatprep.subr.mxu0 0.0
    %742 = vmatpush1.msra.mxu0 0.0
    %743 = vmatprep.subr.mxu0 0.0
    %744 = vmatpush1.msra.mxu0 0.0
    %745 = vmatprep.subr.mxu0 0.0
    %746 = vmatpush1.msra.mxu0 0.0
    %747 = vmatprep.subr.mxu0 0.0
    %748 = vmatpush1.msra.mxu0 0.0
    %749 = vmatprep.subr.mxu0 0.0
    %750 = vmatpush1.msra.mxu0 0.0
    %751 = vmatprep.subr.mxu0 0.0
    %752 = vmatpush1.msra.mxu0 0.0
    %753 = vmatprep.subr.mxu0 0.0
    %754 = vmatpush1.msra.mxu0 0.0
    %755 = vmatprep.subr.mxu0 0.0
    %756 = vmatpush1.msra.mxu0 0.0
    %757 = vmatprep.subr.mxu0 0.0
    %758 = vmatpush1.msra.mxu0 0.0
    %759 = vmatprep.subr.mxu0 0.0
    %760 = vmatpush1.msra.mxu0 0.0
    %761 = vmatprep.mubr.f32.mxu0 0.0
    %762 = vmatmul.mubr.f32.gmra.mrb[0].mxu0 %v695
    %v763 = vpop.f32.mrb[0].mxu0
    %v764 = vadd.f32 0.0, %v763
    %v765 = vpop.f32.mrb[0].mxu0
    %v766 = vadd.f32 0.0, %v765
    %767 = vdwg.mxu0
    %v768 = vmul.f32 %v691, %v691
    %v769 = vmul.f32 %v692, %v692
    %770 = vmatprep.subr.mxu0 %v769
    %771 = vmatpush1.msra.mxu0 %v768
    %772 = vmatprep.subr.mxu0 0.0
    %773 = vmatpush1.msra.mxu0 0.0
    %774 = vmatprep.subr.mxu0 0.0
    %775 = vmatpush1.msra.mxu0 0.0
    %776 = vmatprep.subr.mxu0 0.0
    %777 = vmatpush1.msra.mxu0 0.0
    %778 = vmatprep.subr.mxu0 0.0
    %779 = vmatpush1.msra.mxu0 0.0
    %780 = vmatprep.subr.mxu0 0.0
    %781 = vmatpush1.msra.mxu0 0.0
    %782 = vmatprep.subr.mxu0 0.0
    %783 = vmatpush1.msra.mxu0 0.0
    %784 = vmatprep.subr.mxu0 0.0
    %785 = vmatpush1.msra.mxu0 0.0
    %786 = vmatprep.subr.mxu0 0.0
    %787 = vmatpush1.msra.mxu0 0.0
    %788 = vmatprep.subr.mxu0 0.0
    %789 = vmatpush1.msra.mxu0 0.0
    %790 = vmatprep.subr.mxu0 0.0
    %791 = vmatpush1.msra.mxu0 0.0
    %792 = vmatprep.subr.mxu0 0.0
    %793 = vmatpush1.msra.mxu0 0.0
    %794 = vmatprep.subr.mxu0 0.0
    %795 = vmatpush1.msra.mxu0 0.0
    %796 = vmatprep.subr.mxu0 0.0
    %797 = vmatpush1.msra.mxu0 0.0
    %798 = vmatprep.subr.mxu0 0.0
    %799 = vmatpush1.msra.mxu0 0.0
    %800 = vmatprep.subr.mxu0 0.0
    %801 = vmatpush1.msra.mxu0 0.0
    %802 = vmatprep.subr.mxu0 0.0
    %803 = vmatpush1.msra.mxu0 0.0
    %804 = vmatprep.subr.mxu0 0.0
    %805 = vmatpush1.msra.mxu0 0.0
    %806 = vmatprep.subr.mxu0 0.0
    %807 = vmatpush1.msra.mxu0 0.0
    %808 = vmatprep.subr.mxu0 0.0
    %809 = vmatpush1.msra.mxu0 0.0
    %810 = vmatprep.subr.mxu0 0.0
    %811 = vmatpush1.msra.mxu0 0.0
    %812 = vmatprep.subr.mxu0 0.0
    %813 = vmatpush1.msra.mxu0 0.0
    %814 = vmatprep.subr.mxu0 0.0
    %815 = vmatpush1.msra.mxu0 0.0
    %816 = vmatprep.subr.mxu0 0.0
    %817 = vmatpush1.msra.mxu0 0.0
    %818 = vmatprep.subr.mxu0 0.0
    %819 = vmatpush1.msra.mxu0 0.0
    %820 = vmatprep.subr.mxu0 0.0
    %821 = vmatpush1.msra.mxu0 0.0
    %822 = vmatprep.subr.mxu0 0.0
    %823 = vmatpush1.msra.mxu0 0.0
    %824 = vmatprep.subr.mxu0 0.0
    %825 = vmatpush1.msra.mxu0 0.0
    %826 = vmatprep.subr.mxu0 0.0
    %827 = vmatpush1.msra.mxu0 0.0
    %828 = vmatprep.subr.mxu0 0.0
    %829 = vmatpush1.msra.mxu0 0.0
    %830 = vmatprep.subr.mxu0 0.0
    %831 = vmatpush1.msra.mxu0 0.0
    %832 = vmatprep.subr.mxu0 0.0
    %833 = vmatpush1.msra.mxu0 0.0
    %834 = vmatprep.mubr.f32.mxu0 0.0
    %835 = vmatmul.mubr.f32.gmra.mrb[0].mxu0 %v695
    %v836 = vpop.f32.mrb[0].mxu0
    %v837 = vadd.f32 0.0, %v836
    %v838 = vpop.f32.mrb[0].mxu0
    %v839 = vadd.f32 0.0, %v838
    %840 = vdwg.mxu0
    %v841 = vld [vmem:[%s3] sm:$0xff]
    %v842 = vld [vmem:[%s3 + $0x8] sm:$0xff]
    %v843 = vld [vmem:[%s3 + $0x10] sm:$0xff]
    %v844 = vld [vmem:[%s3 + $0x18] sm:$0xff]
    %v845 = vld [vmem:[%s3 + $0x20] sm:$0xff]
    %v846 = vld [vmem:[%s3 + $0x28] sm:$0xff]
    %v847 = vld [vmem:[%s3 + $0x30] sm:$0xff]
    %v848 = vld [vmem:[%s3 + $0x38] sm:$0xff]
    %v849 = vld [vmem:[%s3 + $0x40] sm:$0xff]
    %v850 = vld [vmem:[%s3 + $0x48] sm:$0xff]
    %v851 = vld [vmem:[%s3 + $0x50] sm:$0xff]
    %v852 = vld [vmem:[%s3 + $0x58] sm:$0xff]
    %v853 = vld [vmem:[%s3 + $0x60] sm:$0xff]
    %v854 = vld [vmem:[%s3 + $0x68] sm:$0xff]
    %v855 = vld [vmem:[%s3 + $0x70] sm:$0xff]
    %v856 = vld [vmem:[%s3 + $0x78] sm:$0xff]
    %v857 = vld [vmem:[%s3 + $0x80] sm:$0xff]
    %v858 = vld [vmem:[%s3 + $0x88] sm:$0xff]
    %v859 = vld [vmem:[%s3 + $0x90] sm:$0xff]
    %v860 = vld [vmem:[%s3 + $0x98] sm:$0xff]
    %v861 = vld [vmem:[%s3 + $0xa0] sm:$0xff]
    %v862 = vld [vmem:[%s3 + $0xa8] sm:$0xff]
    %v863 = vld [vmem:[%s3 + $0xb0] sm:$0xff]
    %v864 = vld [vmem:[%s3 + $0xb8] sm:$0xff]
    %v865 = vld [vmem:[%s3 + $0xc0] sm:$0xff]
    %v866 = vld [vmem:[%s3 + $0xc8] sm:$0xff]
    %v867 = vld [vmem:[%s3 + $0xd0] sm:$0xff]
    %v868 = vld [vmem:[%s3 + $0xd8] sm:$0xff]
    %v869 = vld [vmem:[%s3 + $0xe0] sm:$0xff]
    %v870 = vld [vmem:[%s3 + $0xe8] sm:$0xff]
    %v871 = vld [vmem:[%s3 + $0xf0] sm:$0xff]
    %v872 = vld [vmem:[%s3 + $0xf8] sm:$0xff]
    %873 = vmatprep.subr.mxu0 0.0
    %874 = vmatpush1.msra.mxu0 %v841
    %875 = vmatprep.subr.mxu0 0.0
    %876 = vmatpush1.msra.mxu0 %v842
    %877 = vmatprep.subr.mxu0 0.0
    %878 = vmatpush1.msra.mxu0 %v843
    %879 = vmatprep.subr.mxu0 0.0
    %880 = vmatpush1.msra.mxu0 %v844
    %881 = vmatprep.subr.mxu0 0.0
    %882 = vmatpush1.msra.mxu0 %v845
    %883 = vmatprep.subr.mxu0 0.0
    %884 = vmatpush1.msra.mxu0 %v846
    %885 = vmatprep.subr.mxu0 0.0
    %886 = vmatpush1.msra.mxu0 %v847
    %887 = vmatprep.subr.mxu0 0.0
    %888 = vmatpush1.msra.mxu0 %v848
    %889 = vmatprep.subr.mxu0 0.0
    %890 = vmatpush1.msra.mxu0 %v849
    %891 = vmatprep.subr.mxu0 0.0
    %892 = vmatpush1.msra.mxu0 %v850
    %893 = vmatprep.subr.mxu0 0.0
    %894 = vmatpush1.msra.mxu0 %v851
    %895 = vmatprep.subr.mxu0 0.0
    %896 = vmatpush1.msra.mxu0 %v852
    %897 = vmatprep.subr.mxu0 0.0
    %898 = vmatpush1.msra.mxu0 %v853
    %899 = vmatprep.subr.mxu0 0.0
    %900 = vmatpush1.msra.mxu0 %v854
    %901 = vmatprep.subr.mxu0 0.0
    %902 = vmatpush1.msra.mxu0 %v855
    %903 = vmatprep.subr.mxu0 0.0
    %904 = vmatpush1.msra.mxu0 %v856
    %905 = vmatprep.subr.mxu0 0.0
    %906 = vmatpush1.msra.mxu0 %v857
    %907 = vmatprep.subr.mxu0 0.0
    %908 = vmatpush1.msra.mxu0 %v858
    %909 = vmatprep.subr.mxu0 0.0
    %910 = vmatpush1.msra.mxu0 %v859
    %911 = vmatprep.subr.mxu0 0.0
    %912 = vmatpush1.msra.mxu0 %v860
    %913 = vmatprep.subr.mxu0 0.0
    %914 = vmatpush1.msra.mxu0 %v861
    %915 = vmatprep.subr.mxu0 0.0
    %916 = vmatpush1.msra.mxu0 %v862
    %917 = vmatprep.subr.mxu0 0.0
    %918 = vmatpush1.msra.mxu0 %v863
    %919 = vmatprep.subr.mxu0 0.0
    %920 = vmatpush1.msra.mxu0 %v864
    %921 = vmatprep.subr.mxu0 0.0
    %922 = vmatpush1.msra.mxu0 %v865
    %923 = vmatprep.subr.mxu0 0.0
    %924 = vmatpush1.msra.mxu0 %v866
    %925 = vmatprep.subr.mxu0 0.0
    %926 = vmatpush1.msra.mxu0 %v867
    %927 = vmatprep.subr.mxu0 0.0
    %928 = vmatpush1.msra.mxu0 %v868
    %929 = vmatprep.subr.mxu0 0.0
    %930 = vmatpush1.msra.mxu0 %v869
    %931 = vmatprep.subr.mxu0 0.0
    %932 = vmatpush1.msra.mxu0 %v870
    %933 = vmatprep.subr.mxu0 0.0
    %934 = vmatpush1.msra.mxu0 %v871
    %935 = vmatprep.subr.mxu0 0.0
    %936 = vmatpush1.msra.mxu0 %v872
    %937 = vmatprep.mubr.f32.mxu0 %v766
    %938 = vmatmul.mubr.f32.gmra.mrb[0].mxu0 %v764
    %v939 = vpop.f32.mrb[0].mxu0
    %v940 = vadd.f32 0.0, %v939
    %v941 = vpop.f32.mrb[0].mxu0
    %942 = vdwg.mxu0
    %v943 = vmul.f32 %v940, 0.03125
    %944 = vmatprep.subr.mxu0 0.0
    %945 = vmatpush1.msra.mxu0 %v841
    %946 = vmatprep.subr.mxu0 0.0
    %947 = vmatpush1.msra.mxu0 %v842
    %948 = vmatprep.subr.mxu0 0.0
    %949 = vmatpush1.msra.mxu0 %v843
    %950 = vmatprep.subr.mxu0 0.0
    %951 = vmatpush1.msra.mxu0 %v844
    %952 = vmatprep.subr.mxu0 0.0
    %953 = vmatpush1.msra.mxu0 %v845
    %954 = vmatprep.subr.mxu0 0.0
    %955 = vmatpush1.msra.mxu0 %v846
    %956 = vmatprep.subr.mxu0 0.0
    %957 = vmatpush1.msra.mxu0 %v847
    %958 = vmatprep.subr.mxu0 0.0
    %959 = vmatpush1.msra.mxu0 %v848
    %960 = vmatprep.subr.mxu0 0.0
    %961 = vmatpush1.msra.mxu0 %v849
    %962 = vmatprep.subr.mxu0 0.0
    %963 = vmatpush1.msra.mxu0 %v850
    %964 = vmatprep.subr.mxu0 0.0
    %965 = vmatpush1.msra.mxu0 %v851
    %966 = vmatprep.subr.mxu0 0.0
    %967 = vmatpush1.msra.mxu0 %v852
    %968 = vmatprep.subr.mxu0 0.0
    %969 = vmatpush1.msra.mxu0 %v853
    %970 = vmatprep.subr.mxu0 0.0
    %971 = vmatpush1.msra.mxu0 %v854
    %972 = vmatprep.subr.mxu0 0.0
    %973 = vmatpush1.msra.mxu0 %v855
    %974 = vmatprep.subr.mxu0 0.0
    %975 = vmatpush1.msra.mxu0 %v856
    %976 = vmatprep.subr.mxu0 0.0
    %977 = vmatpush1.msra.mxu0 %v857
    %978 = vmatprep.subr.mxu0 0.0
    %979 = vmatpush1.msra.mxu0 %v858
    %980 = vmatprep.subr.mxu0 0.0
    %981 = vmatpush1.msra.mxu0 %v859
    %982 = vmatprep.subr.mxu0 0.0
    %983 = vmatpush1.msra.mxu0 %v860
    %984 = vmatprep.subr.mxu0 0.0
    %985 = vmatpush1.msra.mxu0 %v861
    %986 = vmatprep.subr.mxu0 0.0
    %987 = vmatpush1.msra.mxu0 %v862
    %988 = vmatprep.subr.mxu0 0.0
    %989 = vmatpush1.msra.mxu0 %v863
    %990 = vmatprep.subr.mxu0 0.0
    %991 = vmatpush1.msra.mxu0 %v864
    %992 = vmatprep.subr.mxu0 0.0
    %993 = vmatpush1.msra.mxu0 %v865
    %994 = vmatprep.subr.mxu0 0.0
    %995 = vmatpush1.msra.mxu0 %v866
    %996 = vmatprep.subr.mxu0 0.0
    %997 = vmatpush1.msra.mxu0 %v867
    %998 = vmatprep.subr.mxu0 0.0
    %999 = vmatpush1.msra.mxu0 %v868
    %1000 = vmatprep.subr.mxu0 0.0
    %1001 = vmatpush1.msra.mxu0 %v869
    %1002 = vmatprep.subr.mxu0 0.0
    %1003 = vmatpush1.msra.mxu0 %v870
    %1004 = vmatprep.subr.mxu0 0.0
    %1005 = vmatpush1.msra.mxu0 %v871
    %1006 = vmatprep.subr.mxu0 0.0
    %1007 = vmatpush1.msra.mxu0 %v872
    %1008 = vmatprep.mubr.f32.mxu0 %v839
    %1009 = vmatmul.mubr.f32.gmra.mrb[0].mxu0 %v837
    %v1010 = vpop.f32.mrb[0].mxu0
    %v1011 = vadd.f32 0.0, %v1010
    %v1012 = vpop.f32.mrb[0].mxu0
    %1013 = vdwg.mxu0
    %v1014 = vmul.f32 %v1011, 0.03125
    %v1015 = vmul.f32 %v943, %v943
    %v1016 = vsub.f32 %v1014, %v1015
    %v1017 = vld [vmem:[#allocation4] sm:$0x1]
    %v1018 = vld [vmem:[#allocation4 + $0x1] sm:$0x1]
    %v1019 = vadd.f32 %v1016, 1e-05
    %v1020 = vrsqrt.pop %v1019
    %v1021 = vmul.f32 %v1017, %v1020
    %v1022 = vmul.f32 %v943, %v1021
    %v1023 = vsub.f32 %v1018, %v1022
    %v1024 = vld [vmem:[%s4] sm:$0xff]
    %v1025 = vld [vmem:[%s4 + $0x8] sm:$0xff]
    %v1026 = vld [vmem:[%s4 + $0x10] sm:$0xff]
    %v1027 = vld [vmem:[%s4 + $0x18] sm:$0xff]
    %v1028 = vld [vmem:[%s4 + $0x20] sm:$0xff]
    %v1029 = vld [vmem:[%s4 + $0x28] sm:$0xff]
    %v1030 = vld [vmem:[%s4 + $0x30] sm:$0xff]
    %v1031 = vld [vmem:[%s4 + $0x38] sm:$0xff]
    %v1032 = vld [vmem:[%s4 + $0x40] sm:$0xff]
    %v1033 = vld [vmem:[%s4 + $0x48] sm:$0xff]
    %v1034 = vld [vmem:[%s4 + $0x50] sm:$0xff]
    %v1035 = vld [vmem:[%s4 + $0x58] sm:$0xff]
    %v1036 = vld [vmem:[%s4 + $0x60] sm:$0xff]
    %v1037 = vld [vmem:[%s4 + $0x68] sm:$0xff]
    %v1038 = vld [vmem:[%s4 + $0x70] sm:$0xff]
    %v1039 = vld [vmem:[%s4 + $0x78] sm:$0xff]
    %vm1040 = vcmask 523264
    %v1042 = vsel %vm1040, %v1021, 0
    %1044 = vmatprep.subr.mxu0 %v1025
    %1045 = vmatpush1.msra.mxu0 %v1024
    %1046 = vmatprep.subr.mxu0 %v1027
    %1047 = vmatpush1.msra.mxu0 %v1026
    %1048 = vmatprep.subr.mxu0 %v1029
    %1049 = vmatpush1.msra.mxu0 %v1028
    %1050 = vmatprep.subr.mxu0 %v1031
    %1051 = vmatpush1.msra.mxu0 %v1030
    %1052 = vmatprep.subr.mxu0 %v1033
    %1053 = vmatpush1.msra.mxu0 %v1032
    %1054 = vmatprep.subr.mxu0 %v1035
    %1055 = vmatpush1.msra.mxu0 %v1034
    %1056 = vmatprep.subr.mxu0 %v1037
    %1057 = vmatpush1.msra.mxu0 %v1036
    %1058 = vmatprep.subr.mxu0 %v1039
    %1059 = vmatpush1.msra.mxu0 %v1038
    %1060 = vmatprep.subr.mxu0 0.0
    %1061 = vmatpush1.msra.mxu0 0.0
    %1062 = vmatprep.subr.mxu0 0.0
    %1063 = vmatpush1.msra.mxu0 0.0
    %1064 = vmatprep.subr.mxu0 0.0
    %1065 = vmatpush1.msra.mxu0 0.0
    %1066 = vmatprep.subr.mxu0 0.0
    %1067 = vmatpush1.msra.mxu0 0.0
    %1068 = vmatprep.subr.mxu0 0.0
    %1069 = vmatpush1.msra.mxu0 0.0
    %1070 = vmatprep.subr.mxu0 0.0
    %1071 = vmatpush1.msra.mxu0 0.0
    %1072 = vmatprep.subr.mxu0 0.0
    %1073 = vmatpush1.msra.mxu0 0.0
    %1074 = vmatprep.subr.mxu0 0.0
    %1075 = vmatpush1.msra.mxu0 0.0
    %1076 = vmatprep.subr.mxu0 0.0
    %1077 = vmatpush1.msra.mxu0 0.0
    %1078 = vmatprep.subr.mxu0 0.0
    %1079 = vmatpush1.msra.mxu0 0.0
    %1080 = vmatprep.subr.mxu0 0.0
    %1081 = vmatpush1.msra.mxu0 0.0
    %1082 = vmatprep.subr.mxu0 0.0
    %1083 = vmatpush1.msra.mxu0 0.0
    %1084 = vmatprep.subr.mxu0 0.0
    %1085 = vmatpush1.msra.mxu0 0.0
    %1086 = vmatprep.subr.mxu0 0.0
    %1087 = vmatpush1.msra.mxu0 0.0
    %1088 = vmatprep.subr.mxu0 0.0
    %1089 = vmatpush1.msra.mxu0 0.0
    %1090 = vmatprep.subr.mxu0 0.0
    %1091 = vmatpush1.msra.mxu0 0.0
    %1092 = vmatprep.subr.mxu0 0.0
    %1093 = vmatpush1.msra.mxu0 0.0
    %1094 = vmatprep.subr.mxu0 0.0
    %1095 = vmatpush1.msra.mxu0 0.0
    %1096 = vmatprep.subr.mxu0 0.0
    %1097 = vmatpush1.msra.mxu0 0.0
    %1098 = vmatprep.subr.mxu0 0.0
    %1099 = vmatpush1.msra.mxu0 0.0
    %1100 = vmatprep.subr.mxu0 0.0
    %1101 = vmatpush1.msra.mxu0 0.0
    %1102 = vmatprep.subr.mxu0 0.0
    %1103 = vmatpush1.msra.mxu0 0.0
    %1104 = vmatprep.subr.mxu0 0.0
    %1105 = vmatpush1.msra.mxu0 0.0
    %1106 = vmatprep.subr.mxu0 0.0
    %1107 = vmatpush1.msra.mxu0 0.0
    %1108 = vmatprep.mubr.f32.mxu0 0.0
    %1109 = vmatmul.mubr.f32.gmra.mrb[0].mxu0 %v1042
    %v1110 = vpop.f32.mrb[0].mxu0
    %v1111 = vadd.f32 0.0, %v1110
    %v1112 = vpop.f32.mrb[0].mxu0
    %v1113 = vadd.f32 0.0, %v1112
    %1114 = vdwg.mxu0
    %v1116 = vsel %vm1040, %v1023, 0
    %1118 = vmatprep.subr.mxu0 %v1025
    %1119 = vmatpush1.msra.mxu0 %v1024
    %1120 = vmatprep.subr.mxu0 %v1027
    %1121 = vmatpush1.msra.mxu0 %v1026
    %1122 = vmatprep.subr.mxu0 %v1029
    %1123 = vmatpush1.msra.mxu0 %v1028
    %1124 = vmatprep.subr.mxu0 %v1031
    %1125 = vmatpush1.msra.mxu0 %v1030
    %1126 = vmatprep.subr.mxu0 %v1033
    %1127 = vmatpush1.msra.mxu0 %v1032
    %1128 = vmatprep.subr.mxu0 %v1035
    %1129 = vmatpush1.msra.mxu0 %v1034
    %1130 = vmatprep.subr.mxu0 %v1037
    %1131 = vmatpush1.msra.mxu0 %v1036
    %1132 = vmatprep.subr.mxu0 %v1039
    %1133 = vmatpush1.msra.mxu0 %v1038
    %1134 = vmatprep.subr.mxu0 0.0
    %1135 = vmatpush1.msra.mxu0 0.0
    %1136 = vmatprep.subr.mxu0 0.0
    %1137 = vmatpush1.msra.mxu0 0.0
    %1138 = vmatprep.subr.mxu0 0.0
    %1139 = vmatpush1.msra.mxu0 0.0
    %1140 = vmatprep.subr.mxu0 0.0
    %1141 = vmatpush1.msra.mxu0 0.0
    %1142 = vmatprep.subr.mxu0 0.0
    %1143 = vmatpush1.msra.mxu0 0.0
    %1144 = vmatprep.subr.mxu0 0.0
    %1145 = vmatpush1.msra.mxu0 0.0
    %1146 = vmatprep.subr.mxu0 0.0
    %1147 = vmatpush1.msra.mxu0 0.0
    %1148 = vmatprep.subr.mxu0 0.0
    %1149 = vmatpush1.msra.mxu0 0.0
    %1150 = vmatprep.subr.mxu0 0.0
    %1151 = vmatpush1.msra.mxu0 0.0
    %1152 = vmatprep.subr.mxu0 0.0
    %1153 = vmatpush1.msra.mxu0 0.0
    %1154 = vmatprep.subr.mxu0 0.0
    %1155 = vmatpush1.msra.mxu0 0.0
    %1156 = vmatprep.subr.mxu0 0.0
    %1157 = vmatpush1.msra.mxu0 0.0
    %1158 = vmatprep.subr.mxu0 0.0
    %1159 = vmatpush1.msra.mxu0 0.0
    %1160 = vmatprep.subr.mxu0 0.0
    %1161 = vmatpush1.msra.mxu0 0.0
    %1162 = vmatprep.subr.mxu0 0.0
    %1163 = vmatpush1.msra.mxu0 0.0
    %1164 = vmatprep.subr.mxu0 0.0
    %1165 = vmatpush1.msra.mxu0 0.0
    %1166 = vmatprep.subr.mxu0 0.0
    %1167 = vmatpush1.msra.mxu0 0.0
    %1168 = vmatprep.subr.mxu0 0.0
    %1169 = vmatpush1.msra.mxu0 0.0
    %1170 = vmatprep.subr.mxu0 0.0
    %1171 = vmatpush1.msra.mxu0 0.0
    %1172 = vmatprep.subr.mxu0 0.0
    %1173 = vmatpush1.msra.mxu0 0.0
    %1174 = vmatprep.subr.mxu0 0.0
    %1175 = vmatpush1.msra.mxu0 0.0
    %1176 = vmatprep.subr.mxu0 0.0
    %1177 = vmatpush1.msra.mxu0 0.0
    %1178 = vmatprep.subr.mxu0 0.0
    %1179 = vmatpush1.msra.mxu0 0.0
    %1180 = vmatprep.subr.mxu0 0.0
    %1181 = vmatpush1.msra.mxu0 0.0
    %1182 = vmatprep.mubr.f32.mxu0 0.0
    %1183 = vmatmul.mubr.f32.gmra.mrb[0].mxu0 %v1116
    %v1184 = vpop.f32.mrb[0].mxu0
    %v1185 = vadd.f32 0.0, %v1184
    %v1186 = vpop.f32.mrb[0].mxu0
    %v1187 = vadd.f32 0.0, %v1186
    %1188 = vdwg.mxu0
    %v1189 = vlaneseq
    %v1190 = vshrl.u32 %v1189, 7
    %v1191 = vsub.s32 0, %v1190
    %v1192 = vrot.slane %v1111, %v1191
    %v1193 = vlaneseq
    %v1194 = vshrl.u32 %v1193, 7
    %v1195 = vsub.s32 0, %v1194
    %v1196 = vrot.slane %v1113, %v1195
    %v1197 = vmul.f32 %v691, %v1192
    %v1198 = vmul.f32 %v692, %v1196
    %v1199 = vlaneseq
    %v1200 = vshrl.u32 %v1199, 7
    %v1201 = vsub.s32 0, %v1200
    %v1202 = vrot.slane %v1185, %v1201
    %v1203 = vlaneseq
    %v1204 = vshrl.u32 %v1203, 7
    %v1205 = vsub.s32 0, %v1204
    %v1206 = vrot.slane %v1187, %v1205
    %v1207 = vadd.f32 %v1197, %v1202
    %v1208 = vadd.f32 %v1198, %v1206
    %v1209 = vmul.f32 %v1207, 0.2
    %v1210 = vmul.f32 %v1208, 0.2
    %v1211 = vmax.f32 %v1207, %v1209
    %v1212 = vmax.f32 %v1208, %v1210
    %v1213 = vpack.c.bf16 %v1211, %v1211
    %v1214 = vpack.c.bf16 %v1212, %v1212
    %v1215 = vld [vmem:[%s6] sm:$0xff]
    %v1216 = vld [vmem:[%s6 + $0x8] sm:$0xff]
    %v1217 = vld [vmem:[%s6 + $0x10] sm:$0xff]
    %v1218 = vld [vmem:[%s6 + $0x18] sm:$0xff]
    %v1219 = vld [vmem:[%s6 + $0x20] sm:$0xff]
    %v1220 = vld [vmem:[%s6 + $0x28] sm:$0xff]
    %v1221 = vld [vmem:[%s6 + $0x30] sm:$0xff]
    %v1222 = vld [vmem:[%s6 + $0x38] sm:$0xff]
    %v1223 = vld [vmem:[%s6 + $0x40] sm:$0xff]
    %v1224 = vld [vmem:[%s6 + $0x48] sm:$0xff]
    %v1225 = vld [vmem:[%s6 + $0x50] sm:$0xff]
    %v1226 = vld [vmem:[%s6 + $0x58] sm:$0xff]
    %v1227 = vld [vmem:[%s6 + $0x60] sm:$0xff]
    %v1228 = vld [vmem:[%s6 + $0x68] sm:$0xff]
    %v1229 = vld [vmem:[%s6 + $0x70] sm:$0xff]
    %v1230 = vld [vmem:[%s6 + $0x78] sm:$0xff]
    %v1231 = vld [vmem:[%s6 + $0x80] sm:$0xff]
    %v1232 = vld [vmem:[%s6 + $0x88] sm:$0xff]
    %v1233 = vld [vmem:[%s6 + $0x90] sm:$0xff]
    %v1234 = vld [vmem:[%s6 + $0x98] sm:$0xff]
    %v1235 = vld [vmem:[%s6 + $0xa0] sm:$0xff]
    %v1236 = vld [vmem:[%s6 + $0xa8] sm:$0xff]
    %v1237 = vld [vmem:[%s6 + $0xb0] sm:$0xff]
    %v1238 = vld [vmem:[%s6 + $0xb8] sm:$0xff]
    %v1239 = vld [vmem:[%s6 + $0xc0] sm:$0xff]
    %v1240 = vld [vmem:[%s6 + $0xc8] sm:$0xff]
    %v1241 = vld [vmem:[%s6 + $0xd0] sm:$0xff]
    %v1242 = vld [vmem:[%s6 + $0xd8] sm:$0xff]
    %v1243 = vld [vmem:[%s6 + $0xe0] sm:$0xff]
    %v1244 = vld [vmem:[%s6 + $0xe8] sm:$0xff]
    %v1245 = vld [vmem:[%s6 + $0xf0] sm:$0xff]
    %v1246 = vld [vmem:[%s6 + $0xf8] sm:$0xff]
    %v1279 = vunpack.c.l.b16 %v1215
    %v1280 = vunpack.c.h.b16 %v1215
    %v1281 = vunpack.c.l.b16 %v1216
    %v1282 = vunpack.c.h.b16 %v1216
    %v1283 = vunpack.c.l.b16 %v1217
    %v1284 = vunpack.c.h.b16 %v1217
    %v1285 = vunpack.c.l.b16 %v1218
    %v1286 = vunpack.c.h.b16 %v1218
    %v1287 = vunpack.c.l.b16 %v1219
    %v1288 = vunpack.c.h.b16 %v1219
    %v1289 = vunpack.c.l.b16 %v1220
    %v1290 = vunpack.c.h.b16 %v1220
    %v1291 = vunpack.c.l.b16 %v1221
    %v1292 = vunpack.c.h.b16 %v1221
    %v1293 = vunpack.c.l.b16 %v1222
    %v1294 = vunpack.c.h.b16 %v1222
    %v1295 = vunpack.c.l.b16 %v1223
    %v1296 = vunpack.c.h.b16 %v1223
    %v1297 = vunpack.c.l.b16 %v1224
    %v1298 = vunpack.c.h.b16 %v1224
    %v1299 = vunpack.c.l.b16 %v1225
    %v1300 = vunpack.c.h.b16 %v1225
    %v1301 = vunpack.c.l.b16 %v1226
    %v1302 = vunpack.c.h.b16 %v1226
    %v1303 = vunpack.c.l.b16 %v1227
    %v1304 = vunpack.c.h.b16 %v1227
    %v1305 = vunpack.c.l.b16 %v1228
    %v1306 = vunpack.c.h.b16 %v1228
    %v1307 = vunpack.c.l.b16 %v1229
    %v1308 = vunpack.c.h.b16 %v1229
    %v1309 = vunpack.c.l.b16 %v1230
    %v1310 = vunpack.c.h.b16 %v1230
    %v1311 = vunpack.c.l.b16 %v1231
    %v1312 = vunpack.c.h.b16 %v1231
    %v1313 = vunpack.c.l.b16 %v1232
    %v1314 = vunpack.c.h.b16 %v1232
    %v1315 = vunpack.c.l.b16 %v1233
    %v1316 = vunpack.c.h.b16 %v1233
    %v1317 = vunpack.c.l.b16 %v1234
    %v1318 = vunpack.c.h.b16 %v1234
    %v1319 = vunpack.c.l.b16 %v1235
    %v1320 = vunpack.c.h.b16 %v1235
    %v1321 = vunpack.c.l.b16 %v1236
    %v1322 = vunpack.c.h.b16 %v1236
    %v1323 = vunpack.c.l.b16 %v1237
    %v1324 = vunpack.c.h.b16 %v1237
    %v1325 = vunpack.c.l.b16 %v1238
    %v1326 = vunpack.c.h.b16 %v1238
    %v1327 = vunpack.c.l.b16 %v1239
    %v1328 = vunpack.c.h.b16 %v1239
    %v1329 = vunpack.c.l.b16 %v1240
    %v1330 = vunpack.c.h.b16 %v1240
    %v1331 = vunpack.c.l.b16 %v1241
    %v1332 = vunpack.c.h.b16 %v1241
    %v1333 = vunpack.c.l.b16 %v1242
    %v1334 = vunpack.c.h.b16 %v1242
    %v1335 = vunpack.c.l.b16 %v1243
    %v1336 = vunpack.c.h.b16 %v1243
    %v1337 = vunpack.c.l.b16 %v1244
    %v1338 = vunpack.c.h.b16 %v1244
    %v1339 = vunpack.c.l.b16 %v1245
    %v1340 = vunpack.c.h.b16 %v1245
    %v1341 = vunpack.c.l.b16 %v1246
    %v1342 = vunpack.c.h.b16 %v1246
    %v1343 = vpack.c.b16 %v1281, %v1279
    %v1344 = vpack.c.b16 %v1282, %v1280
    %v1345 = vpack.c.b16 %v1285, %v1283
    %v1346 = vpack.c.b16 %v1286, %v1284
    %v1347 = vpack.c.b16 %v1289, %v1287
    %v1348 = vpack.c.b16 %v1290, %v1288
    %v1349 = vpack.c.b16 %v1293, %v1291
    %v1350 = vpack.c.b16 %v1294, %v1292
    %v1351 = vpack.c.b16 %v1297, %v1295
    %v1352 = vpack.c.b16 %v1298, %v1296
    %v1353 = vpack.c.b16 %v1301, %v1299
    %v1354 = vpack.c.b16 %v1302, %v1300
    %v1355 = vpack.c.b16 %v1305, %v1303
    %v1356 = vpack.c.b16 %v1306, %v1304
    %v1357 = vpack.c.b16 %v1309, %v1307
    %v1358 = vpack.c.b16 %v1310, %v1308
    %v1359 = vpack.c.b16 %v1313, %v1311
    %v1360 = vpack.c.b16 %v1314, %v1312
    %v1361 = vpack.c.b16 %v1317, %v1315
    %v1362 = vpack.c.b16 %v1318, %v1316
    %v1363 = vpack.c.b16 %v1321, %v1319
    %v1364 = vpack.c.b16 %v1322, %v1320
    %v1365 = vpack.c.b16 %v1325, %v1323
    %v1366 = vpack.c.b16 %v1326, %v1324
    %v1367 = vpack.c.b16 %v1329, %v1327
    %v1368 = vpack.c.b16 %v1330, %v1328
    %v1369 = vpack.c.b16 %v1333, %v1331
    %v1370 = vpack.c.b16 %v1334, %v1332
    %v1371 = vpack.c.b16 %v1337, %v1335
    %v1372 = vpack.c.b16 %v1338, %v1336
    %v1373 = vpack.c.b16 %v1341, %v1339
    %v1374 = vpack.c.b16 %v1342, %v1340
    %1407 = vmatprep.subr.bf16.mxu0 %v1344
    %1408 = vmatpush1.bf16.msra.mxu0 %v1343
    %1409 = vmatprep.subr.bf16.mxu0 %v1346
    %1410 = vmatpush1.bf16.msra.mxu0 %v1345
    %1411 = vmatprep.subr.bf16.mxu0 %v1348
    %1412 = vmatpush1.bf16.msra.mxu0 %v1347
    %1413 = vmatprep.subr.bf16.mxu0 %v1350
    %1414 = vmatpush1.bf16.msra.mxu0 %v1349
    %1415 = vmatprep.subr.bf16.mxu0 %v1352
    %1416 = vmatpush1.bf16.msra.mxu0 %v1351
    %1417 = vmatprep.subr.bf16.mxu0 %v1354
    %1418 = vmatpush1.bf16.msra.mxu0 %v1353
    %1419 = vmatprep.subr.bf16.mxu0 %v1356
    %1420 = vmatpush1.bf16.msra.mxu0 %v1355
    %1421 = vmatprep.subr.bf16.mxu0 %v1358
    %1422 = vmatpush1.bf16.msra.mxu0 %v1357
    %1423 = vmatprep.subr.bf16.mxu0 %v1360
    %1424 = vmatpush1.bf16.msra.mxu0 %v1359
    %1425 = vmatprep.subr.bf16.mxu0 %v1362
    %1426 = vmatpush1.bf16.msra.mxu0 %v1361
    %1427 = vmatprep.subr.bf16.mxu0 %v1364
    %1428 = vmatpush1.bf16.msra.mxu0 %v1363
    %1429 = vmatprep.subr.bf16.mxu0 %v1366
    %1430 = vmatpush1.bf16.msra.mxu0 %v1365
    %1431 = vmatprep.subr.bf16.mxu0 %v1368
    %1432 = vmatpush1.bf16.msra.mxu0 %v1367
    %1433 = vmatprep.subr.bf16.mxu0 %v1370
    %1434 = vmatpush1.bf16.msra.mxu0 %v1369
    %1435 = vmatprep.subr.bf16.mxu0 %v1372
    %1436 = vmatpush1.bf16.msra.mxu0 %v1371
    %1437 = vmatprep.subr.bf16.mxu0 %v1374
    %1438 = vmatpush1.bf16.msra.mxu0 %v1373
    %1439 = vmatprep.mubr.bf16.mxu0 %v1214
    %1440 = vmatmul.mubr.bf16.gmra.mrb[0].mxu0 %v1213
    %v1441 = vpop.f32.mrb[0].mxu0
    %v1442 = vadd.f32 0.0, %v1441
    %v1443 = vpop.f32.mrb[0].mxu0
    %v1444 = vadd.f32 0.0, %v1443
    %v1445 = vpop.f32.mrb[0].mxu0
    %v1446 = vpop.f32.mrb[0].mxu0
    %1447 = vdwg.mxu0
    %v1448 = vld [vmem:[%s7] sm:$0xff]
    %v1449 = vld [vmem:[%s7 + $0x8] sm:$0xff]
    %s1450 = scalar_lea.vmem %s6, 256
    %v1451 = vld [vmem:[%s1450] sm:$0xff]
    %v1452 = vld [vmem:[%s1450 + $0x8] sm:$0xff]
    %v1453 = vld [vmem:[%s1450 + $0x10] sm:$0xff]
    %v1454 = vld [vmem:[%s1450 + $0x18] sm:$0xff]
    %v1455 = vld [vmem:[%s1450 + $0x20] sm:$0xff]
    %v1456 = vld [vmem:[%s1450 + $0x28] sm:$0xff]
    %v1457 = vld [vmem:[%s1450 + $0x30] sm:$0xff]
    %v1458 = vld [vmem:[%s1450 + $0x38] sm:$0xff]
    %v1459 = vld [vmem:[%s1450 + $0x40] sm:$0xff]
    %v1460 = vld [vmem:[%s1450 + $0x48] sm:$0xff]
    %v1461 = vld [vmem:[%s1450 + $0x50] sm:$0xff]
    %v1462 = vld [vmem:[%s1450 + $0x58] sm:$0xff]
    %v1463 = vld [vmem:[%s1450 + $0x60] sm:$0xff]
    %v1464 = vld [vmem:[%s1450 + $0x68] sm:$0xff]
    %v1465 = vld [vmem:[%s1450 + $0x70] sm:$0xff]
    %v1466 = vld [vmem:[%s1450 + $0x78] sm:$0xff]
    %v1467 = vld [vmem:[%s1450 + $0x80] sm:$0xff]
    %v1468 = vld [vmem:[%s1450 + $0x88] sm:$0xff]
    %v1469 = vld [vmem:[%s1450 + $0x90] sm:$0xff]
    %v1470 = vld [vmem:[%s1450 + $0x98] sm:$0xff]
    %v1471 = vld [vmem:[%s1450 + $0xa0] sm:$0xff]
    %v1472 = vld [vmem:[%s1450 + $0xa8] sm:$0xff]
    %v1473 = vld [vmem:[%s1450 + $0xb0] sm:$0xff]
    %v1474 = vld [vmem:[%s1450 + $0xb8] sm:$0xff]
    %v1475 = vld [vmem:[%s1450 + $0xc0] sm:$0xff]
    %v1476 = vld [vmem:[%s1450 + $0xc8] sm:$0xff]
    %v1477 = vld [vmem:[%s1450 + $0xd0] sm:$0xff]
    %v1478 = vld [vmem:[%s1450 + $0xd8] sm:$0xff]
    %v1479 = vld [vmem:[%s1450 + $0xe0] sm:$0xff]
    %v1480 = vld [vmem:[%s1450 + $0xe8] sm:$0xff]
    %v1481 = vld [vmem:[%s1450 + $0xf0] sm:$0xff]
    %v1482 = vld [vmem:[%s1450 + $0xf8] sm:$0xff]
    %v1515 = vunpack.c.l.b16 %v1451
    %v1516 = vunpack.c.h.b16 %v1451
    %v1517 = vunpack.c.l.b16 %v1452
    %v1518 = vunpack.c.h.b16 %v1452
    %v1519 = vunpack.c.l.b16 %v1453
    %v1520 = vunpack.c.h.b16 %v1453
    %v1521 = vunpack.c.l.b16 %v1454
    %v1522 = vunpack.c.h.b16 %v1454
    %v1523 = vunpack.c.l.b16 %v1455
    %v1524 = vunpack.c.h.b16 %v1455
    %v1525 = vunpack.c.l.b16 %v1456
    %v1526 = vunpack.c.h.b16 %v1456
    %v1527 = vunpack.c.l.b16 %v1457
    %v1528 = vunpack.c.h.b16 %v1457
    %v1529 = vunpack.c.l.b16 %v1458
    %v1530 = vunpack.c.h.b16 %v1458
    %v1531 = vunpack.c.l.b16 %v1459
    %v1532 = vunpack.c.h.b16 %v1459
    %v1533 = vunpack.c.l.b16 %v1460
    %v1534 = vunpack.c.h.b16 %v1460
    %v1535 = vunpack.c.l.b16 %v1461
    %v1536 = vunpack.c.h.b16 %v1461
    %v1537 = vunpack.c.l.b16 %v1462
    %v1538 = vunpack.c.h.b16 %v1462
    %v1539 = vunpack.c.l.b16 %v1463
    %v1540 = vunpack.c.h.b16 %v1463
    %v1541 = vunpack.c.l.b16 %v1464
    %v1542 = vunpack.c.h.b16 %v1464
    %v1543 = vunpack.c.l.b16 %v1465
    %v1544 = vunpack.c.h.b16 %v1465
    %v1545 = vunpack.c.l.b16 %v1466
    %v1546 = vunpack.c.h.b16 %v1466
    %v1547 = vunpack.c.l.b16 %v1467
    %v1548 = vunpack.c.h.b16 %v1467
    %v1549 = vunpack.c.l.b16 %v1468
    %v1550 = vunpack.c.h.b16 %v1468
    %v1551 = vunpack.c.l.b16 %v1469
    %v1552 = vunpack.c.h.b16 %v1469
    %v1553 = vunpack.c.l.b16 %v1470
    %v1554 = vunpack.c.h.b16 %v1470
    %v1555 = vunpack.c.l.b16 %v1471
    %v1556 = vunpack.c.h.b16 %v1471
    %v1557 = vunpack.c.l.b16 %v1472
    %v1558 = vunpack.c.h.b16 %v1472
    %v1559 = vunpack.c.l.b16 %v1473
    %v1560 = vunpack.c.h.b16 %v1473
    %v1561 = vunpack.c.l.b16 %v1474
    %v1562 = vunpack.c.h.b16 %v1474
    %v1563 = vunpack.c.l.b16 %v1475
    %v1564 = vunpack.c.h.b16 %v1475
    %v1565 = vunpack.c.l.b16 %v1476
    %v1566 = vunpack.c.h.b16 %v1476
    %v1567 = vunpack.c.l.b16 %v1477
    %v1568 = vunpack.c.h.b16 %v1477
    %v1569 = vunpack.c.l.b16 %v1478
    %v1570 = vunpack.c.h.b16 %v1478
    %v1571 = vunpack.c.l.b16 %v1479
    %v1572 = vunpack.c.h.b16 %v1479
    %v1573 = vunpack.c.l.b16 %v1480
    %v1574 = vunpack.c.h.b16 %v1480
    %v1575 = vunpack.c.l.b16 %v1481
    %v1576 = vunpack.c.h.b16 %v1481
    %v1577 = vunpack.c.l.b16 %v1482
    %v1578 = vunpack.c.h.b16 %v1482
    %v1579 = vpack.c.b16 %v1517, %v1515
    %v1580 = vpack.c.b16 %v1518, %v1516
    %v1581 = vpack.c.b16 %v1521, %v1519
    %v1582 = vpack.c.b16 %v1522, %v1520
    %v1583 = vpack.c.b16 %v1525, %v1523
    %v1584 = vpack.c.b16 %v1526, %v1524
    %v1585 = vpack.c.b16 %v1529, %v1527
    %v1586 = vpack.c.b16 %v1530, %v1528
    %v1587 = vpack.c.b16 %v1533, %v1531
    %v1588 = vpack.c.b16 %v1534, %v1532
    %v1589 = vpack.c.b16 %v1537, %v1535
    %v1590 = vpack.c.b16 %v1538, %v1536
    %v1591 = vpack.c.b16 %v1541, %v1539
    %v1592 = vpack.c.b16 %v1542, %v1540
    %v1593 = vpack.c.b16 %v1545, %v1543
    %v1594 = vpack.c.b16 %v1546, %v1544
    %v1595 = vpack.c.b16 %v1549, %v1547
    %v1596 = vpack.c.b16 %v1550, %v1548
    %v1597 = vpack.c.b16 %v1553, %v1551
    %v1598 = vpack.c.b16 %v1554, %v1552
    %v1599 = vpack.c.b16 %v1557, %v1555
    %v1600 = vpack.c.b16 %v1558, %v1556
    %v1601 = vpack.c.b16 %v1561, %v1559
    %v1602 = vpack.c.b16 %v1562, %v1560
    %v1603 = vpack.c.b16 %v1565, %v1563
    %v1604 = vpack.c.b16 %v1566, %v1564
    %v1605 = vpack.c.b16 %v1569, %v1567
    %v1606 = vpack.c.b16 %v1570, %v1568
    %v1607 = vpack.c.b16 %v1573, %v1571
    %v1608 = vpack.c.b16 %v1574, %v1572
    %v1609 = vpack.c.b16 %v1577, %v1575
    %v1610 = vpack.c.b16 %v1578, %v1576
    %1643 = vmatprep.subr.bf16.mxu0 %v1580
    %1644 = vmatpush1.bf16.msra.mxu0 %v1579
    %1645 = vmatprep.subr.bf16.mxu0 %v1582
    %1646 = vmatpush1.bf16.msra.mxu0 %v1581
    %1647 = vmatprep.subr.bf16.mxu0 %v1584
    %1648 = vmatpush1.bf16.msra.mxu0 %v1583
    %1649 = vmatprep.subr.bf16.mxu0 %v1586
    %1650 = vmatpush1.bf16.msra.mxu0 %v1585
    %1651 = vmatprep.subr.bf16.mxu0 %v1588
    %1652 = vmatpush1.bf16.msra.mxu0 %v1587
    %1653 = vmatprep.subr.bf16.mxu0 %v1590
    %1654 = vmatpush1.bf16.msra.mxu0 %v1589
    %1655 = vmatprep.subr.bf16.mxu0 %v1592
    %1656 = vmatpush1.bf16.msra.mxu0 %v1591
    %1657 = vmatprep.subr.bf16.mxu0 %v1594
    %1658 = vmatpush1.bf16.msra.mxu0 %v1593
    %1659 = vmatprep.subr.bf16.mxu0 %v1596
    %1660 = vmatpush1.bf16.msra.mxu0 %v1595
    %1661 = vmatprep.subr.bf16.mxu0 %v1598
    %1662 = vmatpush1.bf16.msra.mxu0 %v1597
    %1663 = vmatprep.subr.bf16.mxu0 %v1600
    %1664 = vmatpush1.bf16.msra.mxu0 %v1599
    %1665 = vmatprep.subr.bf16.mxu0 %v1602
    %1666 = vmatpush1.bf16.msra.mxu0 %v1601
    %1667 = vmatprep.subr.bf16.mxu0 %v1604
    %1668 = vmatpush1.bf16.msra.mxu0 %v1603
    %1669 = vmatprep.subr.bf16.mxu0 %v1606
    %1670 = vmatpush1.bf16.msra.mxu0 %v1605
    %1671 = vmatprep.subr.bf16.mxu0 %v1608
    %1672 = vmatpush1.bf16.msra.mxu0 %v1607
    %1673 = vmatprep.subr.bf16.mxu0 %v1610
    %1674 = vmatpush1.bf16.msra.mxu0 %v1609
    %1675 = vmatprep.mubr.bf16.mxu0 %v1214
    %1676 = vmatmul.mubr.bf16.gmra.mrb[0].mxu0 %v1213
    %v1677 = vpop.f32.mrb[0].mxu0
    %v1678 = vadd.f32 0.0, %v1677
    %v1679 = vpop.f32.mrb[0].mxu0
    %v1680 = vadd.f32 0.0, %v1679
    %v1681 = vpop.f32.mrb[0].mxu0
    %v1682 = vpop.f32.mrb[0].mxu0
    %1683 = vdwg.mxu0
    %s1684 = scalar_lea.vmem %s7, 16
    %v1685 = vld [vmem:[%s1684] sm:$0xff]
    %v1686 = vld [vmem:[%s1684 + $0x8] sm:$0xff]
    %v1688 = vsel %vm693, %v1685, 0
    %v1691 = vsel %vm693, %v1686, 0
    %1693 = vmatprep.subr.mxu0 %v1680
    %1694 = vmatpush1.msra.mxu0 %v1678
    %1695 = vmatprep.subr.mxu0 0.0
    %1696 = vmatpush1.msra.mxu0 0.0
    %1697 = vmatprep.subr.mxu0 0.0
    %1698 = vmatpush1.msra.mxu0 0.0
    %1699 = vmatprep.subr.mxu0 0.0
    %1700 = vmatpush1.msra.mxu0 0.0
    %1701 = vmatprep.subr.mxu0 0.0
    %1702 = vmatpush1.msra.mxu0 0.0
    %1703 = vmatprep.subr.mxu0 0.0
    %1704 = vmatpush1.msra.mxu0 0.0
    %1705 = vmatprep.subr.mxu0 0.0
    %1706 = vmatpush1.msra.mxu0 0.0
    %1707 = vmatprep.subr.mxu0 0.0
    %1708 = vmatpush1.msra.mxu0 0.0
    %1709 = vmatprep.subr.mxu0 0.0
    %1710 = vmatpush1.msra.mxu0 0.0
    %1711 = vmatprep.subr.mxu0 0.0
    %1712 = vmatpush1.msra.mxu0 0.0
    %1713 = vmatprep.subr.mxu0 0.0
    %1714 = vmatpush1.msra.mxu0 0.0
    %1715 = vmatprep.subr.mxu0 0.0
    %1716 = vmatpush1.msra.mxu0 0.0
    %1717 = vmatprep.subr.mxu0 0.0
    %1718 = vmatpush1.msra.mxu0 0.0
    %1719 = vmatprep.subr.mxu0 0.0
    %1720 = vmatpush1.msra.mxu0 0.0
    %1721 = vmatprep.subr.mxu0 0.0
    %1722 = vmatpush1.msra.mxu0 0.0
    %1723 = vmatprep.subr.mxu0 0.0
    %1724 = vmatpush1.msra.mxu0 0.0
    %1725 = vmatprep.subr.mxu0 0.0
    %1726 = vmatpush1.msra.mxu0 0.0
    %1727 = vmatprep.subr.mxu0 0.0
    %1728 = vmatpush1.msra.mxu0 0.0
    %1729 = vmatprep.subr.mxu0 0.0
    %1730 = vmatpush1.msra.mxu0 0.0
    %1731 = vmatprep.subr.mxu0 0.0
    %1732 = vmatpush1.msra.mxu0 0.0
    %1733 = vmatprep.subr.mxu0 0.0
    %1734 = vmatpush1.msra.mxu0 0.0
    %1735 = vmatprep.subr.mxu0 0.0
    %1736 = vmatpush1.msra.mxu0 0.0
    %1737 = vmatprep.subr.mxu0 0.0
    %1738 = vmatpush1.msra.mxu0 0.0
    %1739 = vmatprep.subr.mxu0 0.0
    %1740 = vmatpush1.msra.mxu0 0.0
    %1741 = vmatprep.subr.mxu0 0.0
    %1742 = vmatpush1.msra.mxu0 0.0
    %1743 = vmatprep.subr.mxu0 0.0
    %1744 = vmatpush1.msra.mxu0 0.0
    %1745 = vmatprep.subr.mxu0 0.0
    %1746 = vmatpush1.msra.mxu0 0.0
    %1747 = vmatprep.subr.mxu0 0.0
    %1748 = vmatpush1.msra.mxu0 0.0
    %1749 = vmatprep.subr.mxu0 0.0
    %1750 = vmatpush1.msra.mxu0 0.0
    %1751 = vmatprep.subr.mxu0 0.0
    %1752 = vmatpush1.msra.mxu0 0.0
    %1753 = vmatprep.subr.mxu0 0.0
    %1754 = vmatpush1.msra.mxu0 0.0
    %1755 = vmatprep.subr.mxu0 0.0
    %1756 = vmatpush1.msra.mxu0 0.0
    %1757 = vmatprep.mubr.f32.mxu0 0.0
    %1758 = vmatmul.mubr.f32.gmra.mrb[0].mxu0 %v1688
    %v1759 = vpop.f32.mrb[0].mxu0
    %v1760 = vadd.f32 0.0, %v1759
    %v1761 = vpop.f32.mrb[0].mxu0
    %v1762 = vadd.f32 0.0, %v1761
    %1763 = vmatprep.mubr.f32.mxu0 0.0
    %1764 = vmatmul.mubr.f32.gmra.mrb[0].mxu0 %v1691
    %v1765 = vpop.f32.mrb[0].mxu0
    %v1766 = vadd.f32 0.0, %v1765
    %v1767 = vpop.f32.mrb[0].mxu0
    %v1768 = vadd.f32 0.0, %v1767
    %1769 = vdwg.mxu0
    %v1771 = vsel %vm693, %v1448, 0
    %v1774 = vsel %vm693, %v1449, 0
    %1776 = vmatprep.subr.mxu0 %v1444
    %1777 = vmatpush1.msra.mxu0 %v1442
    %1778 = vmatprep.subr.mxu0 0.0
    %1779 = vmatpush1.msra.mxu0 0.0
    %1780 = vmatprep.subr.mxu0 0.0
    %1781 = vmatpush1.msra.mxu0 0.0
    %1782 = vmatprep.subr.mxu0 0.0
    %1783 = vmatpush1.msra.mxu0 0.0
    %1784 = vmatprep.subr.mxu0 0.0
    %1785 = vmatpush1.msra.mxu0 0.0
    %1786 = vmatprep.subr.mxu0 0.0
    %1787 = vmatpush1.msra.mxu0 0.0
    %1788 = vmatprep.subr.mxu0 0.0
    %1789 = vmatpush1.msra.mxu0 0.0
    %1790 = vmatprep.subr.mxu0 0.0
    %1791 = vmatpush1.msra.mxu0 0.0
    %1792 = vmatprep.subr.mxu0 0.0
    %1793 = vmatpush1.msra.mxu0 0.0
    %1794 = vmatprep.subr.mxu0 0.0
    %1795 = vmatpush1.msra.mxu0 0.0
    %1796 = vmatprep.subr.mxu0 0.0
    %1797 = vmatpush1.msra.mxu0 0.0
    %1798 = vmatprep.subr.mxu0 0.0
    %1799 = vmatpush1.msra.mxu0 0.0
    %1800 = vmatprep.subr.mxu0 0.0
    %1801 = vmatpush1.msra.mxu0 0.0
    %1802 = vmatprep.subr.mxu0 0.0
    %1803 = vmatpush1.msra.mxu0 0.0
    %1804 = vmatprep.subr.mxu0 0.0
    %1805 = vmatpush1.msra.mxu0 0.0
    %1806 = vmatprep.subr.mxu0 0.0
    %1807 = vmatpush1.msra.mxu0 0.0
    %1808 = vmatprep.subr.mxu0 0.0
    %1809 = vmatpush1.msra.mxu0 0.0
    %1810 = vmatprep.subr.mxu0 0.0
    %1811 = vmatpush1.msra.mxu0 0.0
    %1812 = vmatprep.subr.mxu0 0.0
    %1813 = vmatpush1.msra.mxu0 0.0
    %1814 = vmatprep.subr.mxu0 0.0
    %1815 = vmatpush1.msra.mxu0 0.0
    %1816 = vmatprep.subr.mxu0 0.0
    %1817 = vmatpush1.msra.mxu0 0.0
    %1818 = vmatprep.subr.mxu0 0.0
    %1819 = vmatpush1.msra.mxu0 0.0
    %1820 = vmatprep.subr.mxu0 0.0
    %1821 = vmatpush1.msra.mxu0 0.0
    %1822 = vmatprep.subr.mxu0 0.0
    %1823 = vmatpush1.msra.mxu0 0.0
    %1824 = vmatprep.subr.mxu0 0.0
    %1825 = vmatpush1.msra.mxu0 0.0
    %1826 = vmatprep.subr.mxu0 0.0
    %1827 = vmatpush1.msra.mxu0 0.0
    %1828 = vmatprep.subr.mxu0 0.0
    %1829 = vmatpush1.msra.mxu0 0.0
    %1830 = vmatprep.subr.mxu0 0.0
    %1831 = vmatpush1.msra.mxu0 0.0
    %1832 = vmatprep.subr.mxu0 0.0
    %1833 = vmatpush1.msra.mxu0 0.0
    %1834 = vmatprep.subr.mxu0 0.0
    %1835 = vmatpush1.msra.mxu0 0.0
    %1836 = vmatprep.subr.mxu0 0.0
    %1837 = vmatpush1.msra.mxu0 0.0
    %1838 = vmatprep.subr.mxu0 0.0
    %1839 = vmatpush1.msra.mxu0 0.0
    %1840 = vmatprep.mubr.f32.mxu0 0.0
    %1841 = vmatmul.mubr.f32.gmra.mrb[0].mxu0 %v1771
    %v1842 = vpop.f32.mrb[0].mxu0
    %v1843 = vadd.f32 %v1760, %v1842
    %v1844 = vpop.f32.mrb[0].mxu0
    %v1845 = vadd.f32 %v1762, %v1844
    %1846 = vmatprep.mubr.f32.mxu0 0.0
    %1847 = vmatmul.mubr.f32.gmra.mrb[0].mxu0 %v1774
    %v1848 = vpop.f32.mrb[0].mxu0
    %v1849 = vadd.f32 %v1766, %v1848
    %v1850 = vpop.f32.mrb[0].mxu0
    %v1851 = vadd.f32 %v1768, %v1850
    %1852 = vdwg.mxu0
    %s1853 = scalar_lea.vmem %s6, 512
    %v1854 = vld [vmem:[%s1853] sm:$0xff]
    %v1855 = vld [vmem:[%s1853 + $0x8] sm:$0xff]
    %v1856 = vld [vmem:[%s1853 + $0x10] sm:$0xff]
    %v1857 = vld [vmem:[%s1853 + $0x18] sm:$0xff]
    %v1858 = vld [vmem:[%s1853 + $0x20] sm:$0xff]
    %v1859 = vld [vmem:[%s1853 + $0x28] sm:$0xff]
    %v1860 = vld [vmem:[%s1853 + $0x30] sm:$0xff]
    %v1861 = vld [vmem:[%s1853 + $0x38] sm:$0xff]
    %v1862 = vld [vmem:[%s1853 + $0x40] sm:$0xff]
    %v1863 = vld [vmem:[%s1853 + $0x48] sm:$0xff]
    %v1864 = vld [vmem:[%s1853 + $0x50] sm:$0xff]
    %v1865 = vld [vmem:[%s1853 + $0x58] sm:$0xff]
    %v1866 = vld [vmem:[%s1853 + $0x60] sm:$0xff]
    %v1867 = vld [vmem:[%s1853 + $0x68] sm:$0xff]
    %v1868 = vld [vmem:[%s1853 + $0x70] sm:$0xff]
    %v1869 = vld [vmem:[%s1853 + $0x78] sm:$0xff]
    %v1870 = vld [vmem:[%s1853 + $0x80] sm:$0xff]
    %v1871 = vld [vmem:[%s1853 + $0x88] sm:$0xff]
    %v1872 = vld [vmem:[%s1853 + $0x90] sm:$0xff]
    %v1873 = vld [vmem:[%s1853 + $0x98] sm:$0xff]
    %v1874 = vld [vmem:[%s1853 + $0xa0] sm:$0xff]
    %v1875 = vld [vmem:[%s1853 + $0xa8] sm:$0xff]
    %v1876 = vld [vmem:[%s1853 + $0xb0] sm:$0xff]
    %v1877 = vld [vmem:[%s1853 + $0xb8] sm:$0xff]
    %v1878 = vld [vmem:[%s1853 + $0xc0] sm:$0xff]
    %v1879 = vld [vmem:[%s1853 + $0xc8] sm:$0xff]
    %v1880 = vld [vmem:[%s1853 + $0xd0] sm:$0xff]
    %v1881 = vld [vmem:[%s1853 + $0xd8] sm:$0xff]
    %v1882 = vld [vmem:[%s1853 + $0xe0] sm:$0xff]
    %v1883 = vld [vmem:[%s1853 + $0xe8] sm:$0xff]
    %v1884 = vld [vmem:[%s1853 + $0xf0] sm:$0xff]
    %v1885 = vld [vmem:[%s1853 + $0xf8] sm:$0xff]
    %v1918 = vunpack.c.l.b16 %v1854
    %v1919 = vunpack.c.h.b16 %v1854
    %v1920 = vunpack.c.l.b16 %v1855
    %v1921 = vunpack.c.h.b16 %v1855
    %v1922 = vunpack.c.l.b16 %v1856
    %v1923 = vunpack.c.h.b16 %v1856
    %v1924 = vunpack.c.l.b16 %v1857
    %v1925 = vunpack.c.h.b16 %v1857
    %v1926 = vunpack.c.l.b16 %v1858
    %v1927 = vunpack.c.h.b16 %v1858
    %v1928 = vunpack.c.l.b16 %v1859
    %v1929 = vunpack.c.h.b16 %v1859
    %v1930 = vunpack.c.l.b16 %v1860
    %v1931 = vunpack.c.h.b16 %v1860
    %v1932 = vunpack.c.l.b16 %v1861
    %v1933 = vunpack.c.h.b16 %v1861
    %v1934 = vunpack.c.l.b16 %v1862
    %v1935 = vunpack.c.h.b16 %v1862
    %v1936 = vunpack.c.l.b16 %v1863
    %v1937 = vunpack.c.h.b16 %v1863
    %v1938 = vunpack.c.l.b16 %v1864
    %v1939 = vunpack.c.h.b16 %v1864
    %v1940 = vunpack.c.l.b16 %v1865
    %v1941 = vunpack.c.h.b16 %v1865
    %v1942 = vunpack.c.l.b16 %v1866
    %v1943 = vunpack.c.h.b16 %v1866
    %v1944 = vunpack.c.l.b16 %v1867
    %v1945 = vunpack.c.h.b16 %v1867
    %v1946 = vunpack.c.l.b16 %v1868
    %v1947 = vunpack.c.h.b16 %v1868
    %v1948 = vunpack.c.l.b16 %v1869
    %v1949 = vunpack.c.h.b16 %v1869
    %v1950 = vunpack.c.l.b16 %v1870
    %v1951 = vunpack.c.h.b16 %v1870
    %v1952 = vunpack.c.l.b16 %v1871
    %v1953 = vunpack.c.h.b16 %v1871
    %v1954 = vunpack.c.l.b16 %v1872
    %v1955 = vunpack.c.h.b16 %v1872
    %v1956 = vunpack.c.l.b16 %v1873
    %v1957 = vunpack.c.h.b16 %v1873
    %v1958 = vunpack.c.l.b16 %v1874
    %v1959 = vunpack.c.h.b16 %v1874
    %v1960 = vunpack.c.l.b16 %v1875
    %v1961 = vunpack.c.h.b16 %v1875
    %v1962 = vunpack.c.l.b16 %v1876
    %v1963 = vunpack.c.h.b16 %v1876
    %v1964 = vunpack.c.l.b16 %v1877
    %v1965 = vunpack.c.h.b16 %v1877
    %v1966 = vunpack.c.l.b16 %v1878
    %v1967 = vunpack.c.h.b16 %v1878
    %v1968 = vunpack.c.l.b16 %v1879
    %v1969 = vunpack.c.h.b16 %v1879
    %v1970 = vunpack.c.l.b16 %v1880
    %v1971 = vunpack.c.h.b16 %v1880
    %v1972 = vunpack.c.l.b16 %v1881
    %v1973 = vunpack.c.h.b16 %v1881
    %v1974 = vunpack.c.l.b16 %v1882
    %v1975 = vunpack.c.h.b16 %v1882
    %v1976 = vunpack.c.l.b16 %v1883
    %v1977 = vunpack.c.h.b16 %v1883
    %v1978 = vunpack.c.l.b16 %v1884
    %v1979 = vunpack.c.h.b16 %v1884
    %v1980 = vunpack.c.l.b16 %v1885
    %v1981 = vunpack.c.h.b16 %v1885
    %v1982 = vpack.c.b16 %v1920, %v1918
    %v1983 = vpack.c.b16 %v1921, %v1919
    %v1984 = vpack.c.b16 %v1924, %v1922
    %v1985 = vpack.c.b16 %v1925, %v1923
    %v1986 = vpack.c.b16 %v1928, %v1926
    %v1987 = vpack.c.b16 %v1929, %v1927
    %v1988 = vpack.c.b16 %v1932, %v1930
    %v1989 = vpack.c.b16 %v1933, %v1931
    %v1990 = vpack.c.b16 %v1936, %v1934
    %v1991 = vpack.c.b16 %v1937, %v1935
    %v1992 = vpack.c.b16 %v1940, %v1938
    %v1993 = vpack.c.b16 %v1941, %v1939
    %v1994 = vpack.c.b16 %v1944, %v1942
    %v1995 = vpack.c.b16 %v1945, %v1943
    %v1996 = vpack.c.b16 %v1948, %v1946
    %v1997 = vpack.c.b16 %v1949, %v1947
    %v1998 = vpack.c.b16 %v1952, %v1950
    %v1999 = vpack.c.b16 %v1953, %v1951
    %v2000 = vpack.c.b16 %v1956, %v1954
    %v2001 = vpack.c.b16 %v1957, %v1955
    %v2002 = vpack.c.b16 %v1960, %v1958
    %v2003 = vpack.c.b16 %v1961, %v1959
    %v2004 = vpack.c.b16 %v1964, %v1962
    %v2005 = vpack.c.b16 %v1965, %v1963
    %v2006 = vpack.c.b16 %v1968, %v1966
    %v2007 = vpack.c.b16 %v1969, %v1967
    %v2008 = vpack.c.b16 %v1972, %v1970
    %v2009 = vpack.c.b16 %v1973, %v1971
    %v2010 = vpack.c.b16 %v1976, %v1974
    %v2011 = vpack.c.b16 %v1977, %v1975
    %v2012 = vpack.c.b16 %v1980, %v1978
    %v2013 = vpack.c.b16 %v1981, %v1979
    %2046 = vmatprep.subr.bf16.mxu0 %v1983
    %2047 = vmatpush1.bf16.msra.mxu0 %v1982
    %2048 = vmatprep.subr.bf16.mxu0 %v1985
    %2049 = vmatpush1.bf16.msra.mxu0 %v1984
    %2050 = vmatprep.subr.bf16.mxu0 %v1987
    %2051 = vmatpush1.bf16.msra.mxu0 %v1986
    %2052 = vmatprep.subr.bf16.mxu0 %v1989
    %2053 = vmatpush1.bf16.msra.mxu0 %v1988
    %2054 = vmatprep.subr.bf16.mxu0 %v1991
    %2055 = vmatpush1.bf16.msra.mxu0 %v1990
    %2056 = vmatprep.subr.bf16.mxu0 %v1993
    %2057 = vmatpush1.bf16.msra.mxu0 %v1992
    %2058 = vmatprep.subr.bf16.mxu0 %v1995
    %2059 = vmatpush1.bf16.msra.mxu0 %v1994
    %2060 = vmatprep.subr.bf16.mxu0 %v1997
    %2061 = vmatpush1.bf16.msra.mxu0 %v1996
    %2062 = vmatprep.subr.bf16.mxu0 %v1999
    %2063 = vmatpush1.bf16.msra.mxu0 %v1998
    %2064 = vmatprep.subr.bf16.mxu0 %v2001
    %2065 = vmatpush1.bf16.msra.mxu0 %v2000
    %2066 = vmatprep.subr.bf16.mxu0 %v2003
    %2067 = vmatpush1.bf16.msra.mxu0 %v2002
    %2068 = vmatprep.subr.bf16.mxu0 %v2005
    %2069 = vmatpush1.bf16.msra.mxu0 %v2004
    %2070 = vmatprep.subr.bf16.mxu0 %v2007
    %2071 = vmatpush1.bf16.msra.mxu0 %v2006
    %2072 = vmatprep.subr.bf16.mxu0 %v2009
    %2073 = vmatpush1.bf16.msra.mxu0 %v2008
    %2074 = vmatprep.subr.bf16.mxu0 %v2011
    %2075 = vmatpush1.bf16.msra.mxu0 %v2010
    %2076 = vmatprep.subr.bf16.mxu0 %v2013
    %2077 = vmatpush1.bf16.msra.mxu0 %v2012
    %2078 = vmatprep.mubr.bf16.mxu0 %v1214
    %2079 = vmatmul.mubr.bf16.gmra.mrb[0].mxu0 %v1213
    %v2080 = vpop.f32.mrb[0].mxu0
    %v2081 = vadd.f32 0.0, %v2080
    %v2082 = vpop.f32.mrb[0].mxu0
    %v2083 = vadd.f32 0.0, %v2082
    %v2084 = vpop.f32.mrb[0].mxu0
    %v2085 = vpop.f32.mrb[0].mxu0
    %2086 = vdwg.mxu0
    %s2087 = scalar_lea.vmem %s7, 32
    %v2088 = vld [vmem:[%s2087] sm:$0xff]
    %v2089 = vld [vmem:[%s2087 + $0x8] sm:$0xff]
    %v2091 = vsel %vm693, %v2088, 0
    %v2094 = vsel %vm693, %v2089, 0
    %2096 = vmatprep.subr.mxu0 %v2083
    %2097 = vmatpush1.msra.mxu0 %v2081
    %2098 = vmatprep.subr.mxu0 0.0
    %2099 = vmatpush1.msra.mxu0 0.0
    %2100 = vmatprep.subr.mxu0 0.0
    %2101 = vmatpush1.msra.mxu0 0.0
    %2102 = vmatprep.subr.mxu0 0.0
    %2103 = vmatpush1.msra.mxu0 0.0
    %2104 = vmatprep.subr.mxu0 0.0
    %2105 = vmatpush1.msra.mxu0 0.0
    %2106 = vmatprep.subr.mxu0 0.0
    %2107 = vmatpush1.msra.mxu0 0.0
    %2108 = vmatprep.subr.mxu0 0.0
    %2109 = vmatpush1.msra.mxu0 0.0
    %2110 = vmatprep.subr.mxu0 0.0
    %2111 = vmatpush1.msra.mxu0 0.0
    %2112 = vmatprep.subr.mxu0 0.0
    %2113 = vmatpush1.msra.mxu0 0.0
    %2114 = vmatprep.subr.mxu0 0.0
    %2115 = vmatpush1.msra.mxu0 0.0
    %2116 = vmatprep.subr.mxu0 0.0
    %2117 = vmatpush1.msra.mxu0 0.0
    %2118 = vmatprep.subr.mxu0 0.0
    %2119 = vmatpush1.msra.mxu0 0.0
    %2120 = vmatprep.subr.mxu0 0.0
    %2121 = vmatpush1.msra.mxu0 0.0
    %2122 = vmatprep.subr.mxu0 0.0
    %2123 = vmatpush1.msra.mxu0 0.0
    %2124 = vmatprep.subr.mxu0 0.0
    %2125 = vmatpush1.msra.mxu0 0.0
    %2126 = vmatprep.subr.mxu0 0.0
    %2127 = vmatpush1.msra.mxu0 0.0
    %2128 = vmatprep.subr.mxu0 0.0
    %2129 = vmatpush1.msra.mxu0 0.0
    %2130 = vmatprep.subr.mxu0 0.0
    %2131 = vmatpush1.msra.mxu0 0.0
    %2132 = vmatprep.subr.mxu0 0.0
    %2133 = vmatpush1.msra.mxu0 0.0
    %2134 = vmatprep.subr.mxu0 0.0
    %2135 = vmatpush1.msra.mxu0 0.0
    %2136 = vmatprep.subr.mxu0 0.0
    %2137 = vmatpush1.msra.mxu0 0.0
    %2138 = vmatprep.subr.mxu0 0.0
    %2139 = vmatpush1.msra.mxu0 0.0
    %2140 = vmatprep.subr.mxu0 0.0
    %2141 = vmatpush1.msra.mxu0 0.0
    %2142 = vmatprep.subr.mxu0 0.0
    %2143 = vmatpush1.msra.mxu0 0.0
    %2144 = vmatprep.subr.mxu0 0.0
    %2145 = vmatpush1.msra.mxu0 0.0
    %2146 = vmatprep.subr.mxu0 0.0
    %2147 = vmatpush1.msra.mxu0 0.0
    %2148 = vmatprep.subr.mxu0 0.0
    %2149 = vmatpush1.msra.mxu0 0.0
    %2150 = vmatprep.subr.mxu0 0.0
    %2151 = vmatpush1.msra.mxu0 0.0
    %2152 = vmatprep.subr.mxu0 0.0
    %2153 = vmatpush1.msra.mxu0 0.0
    %2154 = vmatprep.subr.mxu0 0.0
    %2155 = vmatpush1.msra.mxu0 0.0
    %2156 = vmatprep.subr.mxu0 0.0
    %2157 = vmatpush1.msra.mxu0 0.0
    %2158 = vmatprep.subr.mxu0 0.0
    %2159 = vmatpush1.msra.mxu0 0.0
    %2160 = vmatprep.mubr.f32.mxu0 0.0
    %2161 = vmatmul.mubr.f32.gmra.mrb[0].mxu0 %v2091
    %v2162 = vpop.f32.mrb[0].mxu0
    %v2163 = vadd.f32 0.0, %v2162
    %v2164 = vpop.f32.mrb[0].mxu0
    %v2165 = vadd.f32 0.0, %v2164
    %2166 = vmatprep.mubr.f32.mxu0 0.0
    %2167 = vmatmul.mubr.f32.gmra.mrb[0].mxu0 %v2094
    %v2168 = vpop.f32.mrb[0].mxu0
    %v2169 = vadd.f32 0.0, %v2168
    %v2170 = vpop.f32.mrb[0].mxu0
    %v2171 = vadd.f32 0.0, %v2170
    %2172 = vdwg.mxu0
    %v2173 = vadd.f32 %v1843, %v2163
    %v2174 = vadd.f32 %v1845, %v2165
    %v2175 = vadd.f32 %v1849, %v2169
    %v2176 = vadd.f32 %v1851, %v2171
    %s2177 = scalar_lea.vmem %s6, 768
    %v2178 = vld [vmem:[%s2177] sm:$0xff]
    %v2179 = vld [vmem:[%s2177 + $0x8] sm:$0xff]
    %v2180 = vld [vmem:[%s2177 + $0x10] sm:$0xff]
    %v2181 = vld [vmem:[%s2177 + $0x18] sm:$0xff]
    %v2182 = vld [vmem:[%s2177 + $0x20] sm:$0xff]
    %v2183 = vld [vmem:[%s2177 + $0x28] sm:$0xff]
    %v2184 = vld [vmem:[%s2177 + $0x30] sm:$0xff]
    %v2185 = vld [vmem:[%s2177 + $0x38] sm:$0xff]
    %v2186 = vld [vmem:[%s2177 + $0x40] sm:$0xff]
    %v2187 = vld [vmem:[%s2177 + $0x48] sm:$0xff]
    %v2188 = vld [vmem:[%s2177 + $0x50] sm:$0xff]
    %v2189 = vld [vmem:[%s2177 + $0x58] sm:$0xff]
    %v2190 = vld [vmem:[%s2177 + $0x60] sm:$0xff]
    %v2191 = vld [vmem:[%s2177 + $0x68] sm:$0xff]
    %v2192 = vld [vmem:[%s2177 + $0x70] sm:$0xff]
    %v2193 = vld [vmem:[%s2177 + $0x78] sm:$0xff]
    %v2194 = vld [vmem:[%s2177 + $0x80] sm:$0xff]
    %v2195 = vld [vmem:[%s2177 + $0x88] sm:$0xff]
    %v2196 = vld [vmem:[%s2177 + $0x90] sm:$0xff]
    %v2197 = vld [vmem:[%s2177 + $0x98] sm:$0xff]
    %v2198 = vld [vmem:[%s2177 + $0xa0] sm:$0xff]
    %v2199 = vld [vmem:[%s2177 + $0xa8] sm:$0xff]
    %v2200 = vld [vmem:[%s2177 + $0xb0] sm:$0xff]
    %v2201 = vld [vmem:[%s2177 + $0xb8] sm:$0xff]
    %v2202 = vld [vmem:[%s2177 + $0xc0] sm:$0xff]
    %v2203 = vld [vmem:[%s2177 + $0xc8] sm:$0xff]
    %v2204 = vld [vmem:[%s2177 + $0xd0] sm:$0xff]
    %v2205 = vld [vmem:[%s2177 + $0xd8] sm:$0xff]
    %v2206 = vld [vmem:[%s2177 + $0xe0] sm:$0xff]
    %v2207 = vld [vmem:[%s2177 + $0xe8] sm:$0xff]
    %v2208 = vld [vmem:[%s2177 + $0xf0] sm:$0xff]
    %v2209 = vld [vmem:[%s2177 + $0xf8] sm:$0xff]
    %v2242 = vunpack.c.l.b16 %v2178
    %v2243 = vunpack.c.h.b16 %v2178
    %v2244 = vunpack.c.l.b16 %v2179
    %v2245 = vunpack.c.h.b16 %v2179
    %v2246 = vunpack.c.l.b16 %v2180
    %v2247 = vunpack.c.h.b16 %v2180
    %v2248 = vunpack.c.l.b16 %v2181
    %v2249 = vunpack.c.h.b16 %v2181
    %v2250 = vunpack.c.l.b16 %v2182
    %v2251 = vunpack.c.h.b16 %v2182
    %v2252 = vunpack.c.l.b16 %v2183
    %v2253 = vunpack.c.h.b16 %v2183
    %v2254 = vunpack.c.l.b16 %v2184
    %v2255 = vunpack.c.h.b16 %v2184
    %v2256 = vunpack.c.l.b16 %v2185
    %v2257 = vunpack.c.h.b16 %v2185
    %v2258 = vunpack.c.l.b16 %v2186
    %v2259 = vunpack.c.h.b16 %v2186
    %v2260 = vunpack.c.l.b16 %v2187
    %v2261 = vunpack.c.h.b16 %v2187
    %v2262 = vunpack.c.l.b16 %v2188
    %v2263 = vunpack.c.h.b16 %v2188
    %v2264 = vunpack.c.l.b16 %v2189
    %v2265 = vunpack.c.h.b16 %v2189
    %v2266 = vunpack.c.l.b16 %v2190
    %v2267 = vunpack.c.h.b16 %v2190
    %v2268 = vunpack.c.l.b16 %v2191
    %v2269 = vunpack.c.h.b16 %v2191
    %v2270 = vunpack.c.l.b16 %v2192
    %v2271 = vunpack.c.h.b16 %v2192
    %v2272 = vunpack.c.l.b16 %v2193
    %v2273 = vunpack.c.h.b16 %v2193
    %v2274 = vunpack.c.l.b16 %v2194
    %v2275 = vunpack.c.h.b16 %v2194
    %v2276 = vunpack.c.l.b16 %v2195
    %v2277 = vunpack.c.h.b16 %v2195
    %v2278 = vunpack.c.l.b16 %v2196
    %v2279 = vunpack.c.h.b16 %v2196
    %v2280 = vunpack.c.l.b16 %v2197
    %v2281 = vunpack.c.h.b16 %v2197
    %v2282 = vunpack.c.l.b16 %v2198
    %v2283 = vunpack.c.h.b16 %v2198
    %v2284 = vunpack.c.l.b16 %v2199
    %v2285 = vunpack.c.h.b16 %v2199
    %v2286 = vunpack.c.l.b16 %v2200
    %v2287 = vunpack.c.h.b16 %v2200
    %v2288 = vunpack.c.l.b16 %v2201
    %v2289 = vunpack.c.h.b16 %v2201
    %v2290 = vunpack.c.l.b16 %v2202
    %v2291 = vunpack.c.h.b16 %v2202
    %v2292 = vunpack.c.l.b16 %v2203
    %v2293 = vunpack.c.h.b16 %v2203
    %v2294 = vunpack.c.l.b16 %v2204
    %v2295 = vunpack.c.h.b16 %v2204
    %v2296 = vunpack.c.l.b16 %v2205
    %v2297 = vunpack.c.h.b16 %v2205
    %v2298 = vunpack.c.l.b16 %v2206
    %v2299 = vunpack.c.h.b16 %v2206
    %v2300 = vunpack.c.l.b16 %v2207
    %v2301 = vunpack.c.h.b16 %v2207
    %v2302 = vunpack.c.l.b16 %v2208
    %v2303 = vunpack.c.h.b16 %v2208
    %v2304 = vunpack.c.l.b16 %v2209
    %v2305 = vunpack.c.h.b16 %v2209
    %v2306 = vpack.c.b16 %v2244, %v2242
    %v2307 = vpack.c.b16 %v2245, %v2243
    %v2308 = vpack.c.b16 %v2248, %v2246
    %v2309 = vpack.c.b16 %v2249, %v2247
    %v2310 = vpack.c.b16 %v2252, %v2250
    %v2311 = vpack.c.b16 %v2253, %v2251
    %v2312 = vpack.c.b16 %v2256, %v2254
    %v2313 = vpack.c.b16 %v2257, %v2255
    %v2314 = vpack.c.b16 %v2260, %v2258
    %v2315 = vpack.c.b16 %v2261, %v2259
    %v2316 = vpack.c.b16 %v2264, %v2262
    %v2317 = vpack.c.b16 %v2265, %v2263
    %v2318 = vpack.c.b16 %v2268, %v2266
    %v2319 = vpack.c.b16 %v2269, %v2267
    %v2320 = vpack.c.b16 %v2272, %v2270
    %v2321 = vpack.c.b16 %v2273, %v2271
    %v2322 = vpack.c.b16 %v2276, %v2274
    %v2323 = vpack.c.b16 %v2277, %v2275
    %v2324 = vpack.c.b16 %v2280, %v2278
    %v2325 = vpack.c.b16 %v2281, %v2279
    %v2326 = vpack.c.b16 %v2284, %v2282
    %v2327 = vpack.c.b16 %v2285, %v2283
    %v2328 = vpack.c.b16 %v2288, %v2286
    %v2329 = vpack.c.b16 %v2289, %v2287
    %v2330 = vpack.c.b16 %v2292, %v2290
    %v2331 = vpack.c.b16 %v2293, %v2291
    %v2332 = vpack.c.b16 %v2296, %v2294
    %v2333 = vpack.c.b16 %v2297, %v2295
    %v2334 = vpack.c.b16 %v2300, %v2298
    %v2335 = vpack.c.b16 %v2301, %v2299
    %v2336 = vpack.c.b16 %v2304, %v2302
    %v2337 = vpack.c.b16 %v2305, %v2303
    %2370 = vmatprep.subr.bf16.mxu0 %v2307
    %2371 = vmatpush1.bf16.msra.mxu0 %v2306
    %2372 = vmatprep.subr.bf16.mxu0 %v2309
    %2373 = vmatpush1.bf16.msra.mxu0 %v2308
    %2374 = vmatprep.subr.bf16.mxu0 %v2311
    %2375 = vmatpush1.bf16.msra.mxu0 %v2310
    %2376 = vmatprep.subr.bf16.mxu0 %v2313
    %2377 = vmatpush1.bf16.msra.mxu0 %v2312
    %2378 = vmatprep.subr.bf16.mxu0 %v2315
    %2379 = vmatpush1.bf16.msra.mxu0 %v2314
    %2380 = vmatprep.subr.bf16.mxu0 %v2317
    %2381 = vmatpush1.bf16.msra.mxu0 %v2316
    %2382 = vmatprep.subr.bf16.mxu0 %v2319
    %2383 = vmatpush1.bf16.msra.mxu0 %v2318
    %2384 = vmatprep.subr.bf16.mxu0 %v2321
    %2385 = vmatpush1.bf16.msra.mxu0 %v2320
    %2386 = vmatprep.subr.bf16.mxu0 %v2323
    %2387 = vmatpush1.bf16.msra.mxu0 %v2322
    %2388 = vmatprep.subr.bf16.mxu0 %v2325
    %2389 = vmatpush1.bf16.msra.mxu0 %v2324
    %2390 = vmatprep.subr.bf16.mxu0 %v2327
    %2391 = vmatpush1.bf16.msra.mxu0 %v2326
    %2392 = vmatprep.subr.bf16.mxu0 %v2329
    %2393 = vmatpush1.bf16.msra.mxu0 %v2328
    %2394 = vmatprep.subr.bf16.mxu0 %v2331
    %2395 = vmatpush1.bf16.msra.mxu0 %v2330
    %2396 = vmatprep.subr.bf16.mxu0 %v2333
    %2397 = vmatpush1.bf16.msra.mxu0 %v2332
    %2398 = vmatprep.subr.bf16.mxu0 %v2335
    %2399 = vmatpush1.bf16.msra.mxu0 %v2334
    %2400 = vmatprep.subr.bf16.mxu0 %v2337
    %2401 = vmatpush1.bf16.msra.mxu0 %v2336
    %2402 = vmatprep.mubr.bf16.mxu0 %v1214
    %2403 = vmatmul.mubr.bf16.gmra.mrb[0].mxu0 %v1213
    %v2404 = vpop.f32.mrb[0].mxu0
    %v2405 = vadd.f32 0.0, %v2404
    %v2406 = vpop.f32.mrb[0].mxu0
    %v2407 = vadd.f32 0.0, %v2406
    %v2408 = vpop.f32.mrb[0].mxu0
    %v2409 = vpop.f32.mrb[0].mxu0
    %2410 = vdwg.mxu0
    %s2411 = scalar_lea.vmem %s7, 48
    %v2412 = vld [vmem:[%s2411] sm:$0xff]
    %v2413 = vld [vmem:[%s2411 + $0x8] sm:$0xff]
    %v2415 = vsel %vm693, %v2412, 0
    %v2418 = vsel %vm693, %v2413, 0
    %2420 = vmatprep.subr.mxu0 %v2407
    %2421 = vmatpush1.msra.mxu0 %v2405
    %2422 = vmatprep.subr.mxu0 0.0
    %2423 = vmatpush1.msra.mxu0 0.0
    %2424 = vmatprep.subr.mxu0 0.0
    %2425 = vmatpush1.msra.mxu0 0.0
    %2426 = vmatprep.subr.mxu0 0.0
    %2427 = vmatpush1.msra.mxu0 0.0
    %2428 = vmatprep.subr.mxu0 0.0
    %2429 = vmatpush1.msra.mxu0 0.0
    %2430 = vmatprep.subr.mxu0 0.0
    %2431 = vmatpush1.msra.mxu0 0.0
    %2432 = vmatprep.subr.mxu0 0.0
    %2433 = vmatpush1.msra.mxu0 0.0
    %2434 = vmatprep.subr.mxu0 0.0
    %2435 = vmatpush1.msra.mxu0 0.0
    %2436 = vmatprep.subr.mxu0 0.0
    %2437 = vmatpush1.msra.mxu0 0.0
    %2438 = vmatprep.subr.mxu0 0.0
    %2439 = vmatpush1.msra.mxu0 0.0
    %2440 = vmatprep.subr.mxu0 0.0
    %2441 = vmatpush1.msra.mxu0 0.0
    %2442 = vmatprep.subr.mxu0 0.0
    %2443 = vmatpush1.msra.mxu0 0.0
    %2444 = vmatprep.subr.mxu0 0.0
    %2445 = vmatpush1.msra.mxu0 0.0
    %2446 = vmatprep.subr.mxu0 0.0
    %2447 = vmatpush1.msra.mxu0 0.0
    %2448 = vmatprep.subr.mxu0 0.0
    %2449 = vmatpush1.msra.mxu0 0.0
    %2450 = vmatprep.subr.mxu0 0.0
    %2451 = vmatpush1.msra.mxu0 0.0
    %2452 = vmatprep.subr.mxu0 0.0
    %2453 = vmatpush1.msra.mxu0 0.0
    %2454 = vmatprep.subr.mxu0 0.0
    %2455 = vmatpush1.msra.mxu0 0.0
    %2456 = vmatprep.subr.mxu0 0.0
    %2457 = vmatpush1.msra.mxu0 0.0
    %2458 = vmatprep.subr.mxu0 0.0
    %2459 = vmatpush1.msra.mxu0 0.0
    %2460 = vmatprep.subr.mxu0 0.0
    %2461 = vmatpush1.msra.mxu0 0.0
    %2462 = vmatprep.subr.mxu0 0.0
    %2463 = vmatpush1.msra.mxu0 0.0
    %2464 = vmatprep.subr.mxu0 0.0
    %2465 = vmatpush1.msra.mxu0 0.0
    %2466 = vmatprep.subr.mxu0 0.0
    %2467 = vmatpush1.msra.mxu0 0.0
    %2468 = vmatprep.subr.mxu0 0.0
    %2469 = vmatpush1.msra.mxu0 0.0
    %2470 = vmatprep.subr.mxu0 0.0
    %2471 = vmatpush1.msra.mxu0 0.0
    %2472 = vmatprep.subr.mxu0 0.0
    %2473 = vmatpush1.msra.mxu0 0.0
    %2474 = vmatprep.subr.mxu0 0.0
    %2475 = vmatpush1.msra.mxu0 0.0
    %2476 = vmatprep.subr.mxu0 0.0
    %2477 = vmatpush1.msra.mxu0 0.0
    %2478 = vmatprep.subr.mxu0 0.0
    %2479 = vmatpush1.msra.mxu0 0.0
    %2480 = vmatprep.subr.mxu0 0.0
    %2481 = vmatpush1.msra.mxu0 0.0
    %2482 = vmatprep.subr.mxu0 0.0
    %2483 = vmatpush1.msra.mxu0 0.0
    %2484 = vmatprep.mubr.f32.mxu0 0.0
    %2485 = vmatmul.mubr.f32.gmra.mrb[0].mxu0 %v2415
    %v2486 = vpop.f32.mrb[0].mxu0
    %v2487 = vadd.f32 0.0, %v2486
    %v2488 = vpop.f32.mrb[0].mxu0
    %v2489 = vadd.f32 0.0, %v2488
    %2490 = vmatprep.mubr.f32.mxu0 0.0
    %2491 = vmatmul.mubr.f32.gmra.mrb[0].mxu0 %v2418
    %v2492 = vpop.f32.mrb[0].mxu0
    %v2493 = vadd.f32 0.0, %v2492
    %v2494 = vpop.f32.mrb[0].mxu0
    %v2495 = vadd.f32 0.0, %v2494
    %2496 = vdwg.mxu0
    %v2497 = vadd.f32 %v2173, %v2487
    %v2498 = vadd.f32 %v2174, %v2489
    %v2499 = vadd.f32 %v2175, %v2493
    %v2500 = vadd.f32 %v2176, %v2495
    %v2501 = vsel %vm153, 1.0, 0
    %2503 = vmatprep.subr.mxu0 %v2498
    %2504 = vmatpush1.msra.mxu0 %v2497
    %2505 = vmatprep.subr.mxu0 %v2500
    %2506 = vmatpush1.msra.mxu0 %v2499
    %2507 = vmatprep.subr.mxu0 0.0
    %2508 = vmatpush1.msra.mxu0 0.0
    %2509 = vmatprep.subr.mxu0 0.0
    %2510 = vmatpush1.msra.mxu0 0.0
    %2511 = vmatprep.subr.mxu0 0.0
    %2512 = vmatpush1.msra.mxu0 0.0
    %2513 = vmatprep.subr.mxu0 0.0
    %2514 = vmatpush1.msra.mxu0 0.0
    %2515 = vmatprep.subr.mxu0 0.0
    %2516 = vmatpush1.msra.mxu0 0.0
    %2517 = vmatprep.subr.mxu0 0.0
    %2518 = vmatpush1.msra.mxu0 0.0
    %2519 = vmatprep.subr.mxu0 0.0
    %2520 = vmatpush1.msra.mxu0 0.0
    %2521 = vmatprep.subr.mxu0 0.0
    %2522 = vmatpush1.msra.mxu0 0.0
    %2523 = vmatprep.subr.mxu0 0.0
    %2524 = vmatpush1.msra.mxu0 0.0
    %2525 = vmatprep.subr.mxu0 0.0
    %2526 = vmatpush1.msra.mxu0 0.0
    %2527 = vmatprep.subr.mxu0 0.0
    %2528 = vmatpush1.msra.mxu0 0.0
    %2529 = vmatprep.subr.mxu0 0.0
    %2530 = vmatpush1.msra.mxu0 0.0
    %2531 = vmatprep.subr.mxu0 0.0
    %2532 = vmatpush1.msra.mxu0 0.0
    %2533 = vmatprep.subr.mxu0 0.0
    %2534 = vmatpush1.msra.mxu0 0.0
    %2535 = vmatprep.subr.mxu0 0.0
    %2536 = vmatpush1.msra.mxu0 0.0
    %2537 = vmatprep.subr.mxu0 0.0
    %2538 = vmatpush1.msra.mxu0 0.0
    %2539 = vmatprep.subr.mxu0 0.0
    %2540 = vmatpush1.msra.mxu0 0.0
    %2541 = vmatprep.subr.mxu0 0.0
    %2542 = vmatpush1.msra.mxu0 0.0
    %2543 = vmatprep.subr.mxu0 0.0
    %2544 = vmatpush1.msra.mxu0 0.0
    %2545 = vmatprep.subr.mxu0 0.0
    %2546 = vmatpush1.msra.mxu0 0.0
    %2547 = vmatprep.subr.mxu0 0.0
    %2548 = vmatpush1.msra.mxu0 0.0
    %2549 = vmatprep.subr.mxu0 0.0
    %2550 = vmatpush1.msra.mxu0 0.0
    %2551 = vmatprep.subr.mxu0 0.0
    %2552 = vmatpush1.msra.mxu0 0.0
    %2553 = vmatprep.subr.mxu0 0.0
    %2554 = vmatpush1.msra.mxu0 0.0
    %2555 = vmatprep.subr.mxu0 0.0
    %2556 = vmatpush1.msra.mxu0 0.0
    %2557 = vmatprep.subr.mxu0 0.0
    %2558 = vmatpush1.msra.mxu0 0.0
    %2559 = vmatprep.subr.mxu0 0.0
    %2560 = vmatpush1.msra.mxu0 0.0
    %2561 = vmatprep.subr.mxu0 0.0
    %2562 = vmatpush1.msra.mxu0 0.0
    %2563 = vmatprep.subr.mxu0 0.0
    %2564 = vmatpush1.msra.mxu0 0.0
    %2565 = vmatprep.subr.mxu0 0.0
    %2566 = vmatpush1.msra.mxu0 0.0
    %2567 = vmatprep.mubr.f32.mxu0 0.0
    %2568 = vmatmul.mubr.f32.gmra.mrb[0].mxu0 %v2501
    %v2569 = vpop.f32.mrb[0].mxu0
    %v2570 = vadd.f32 0.0, %v2569
    %v2571 = vpop.f32.mrb[0].mxu0
    %v2572 = vadd.f32 0.0, %v2571
    %2573 = vdwg.mxu0
    %v2574 = vmul.f32 %v2497, %v2497
    %v2575 = vmul.f32 %v2498, %v2498
    %v2576 = vmul.f32 %v2499, %v2499
    %v2577 = vmul.f32 %v2500, %v2500
    %2578 = vmatprep.subr.mxu0 %v2575
    %2579 = vmatpush1.msra.mxu0 %v2574
    %2580 = vmatprep.subr.mxu0 %v2577
    %2581 = vmatpush1.msra.mxu0 %v2576
    %2582 = vmatprep.subr.mxu0 0.0
    %2583 = vmatpush1.msra.mxu0 0.0
    %2584 = vmatprep.subr.mxu0 0.0
    %2585 = vmatpush1.msra.mxu0 0.0
    %2586 = vmatprep.subr.mxu0 0.0
    %2587 = vmatpush1.msra.mxu0 0.0
    %2588 = vmatprep.subr.mxu0 0.0
    %2589 = vmatpush1.msra.mxu0 0.0
    %2590 = vmatprep.subr.mxu0 0.0
    %2591 = vmatpush1.msra.mxu0 0.0
    %2592 = vmatprep.subr.mxu0 0.0
    %2593 = vmatpush1.msra.mxu0 0.0
    %2594 = vmatprep.subr.mxu0 0.0
    %2595 = vmatpush1.msra.mxu0 0.0
    %2596 = vmatprep.subr.mxu0 0.0
    %2597 = vmatpush1.msra.mxu0 0.0
    %2598 = vmatprep.subr.mxu0 0.0
    %2599 = vmatpush1.msra.mxu0 0.0
    %2600 = vmatprep.subr.mxu0 0.0
    %2601 = vmatpush1.msra.mxu0 0.0
    %2602 = vmatprep.subr.mxu0 0.0
    %2603 = vmatpush1.msra.mxu0 0.0
    %2604 = vmatprep.subr.mxu0 0.0
    %2605 = vmatpush1.msra.mxu0 0.0
    %2606 = vmatprep.subr.mxu0 0.0
    %2607 = vmatpush1.msra.mxu0 0.0
    %2608 = vmatprep.subr.mxu0 0.0
    %2609 = vmatpush1.msra.mxu0 0.0
    %2610 = vmatprep.subr.mxu0 0.0
    %2611 = vmatpush1.msra.mxu0 0.0
    %2612 = vmatprep.subr.mxu0 0.0
    %2613 = vmatpush1.msra.mxu0 0.0
    %2614 = vmatprep.subr.mxu0 0.0
    %2615 = vmatpush1.msra.mxu0 0.0
    %2616 = vmatprep.subr.mxu0 0.0
    %2617 = vmatpush1.msra.mxu0 0.0
    %2618 = vmatprep.subr.mxu0 0.0
    %2619 = vmatpush1.msra.mxu0 0.0
    %2620 = vmatprep.subr.mxu0 0.0
    %2621 = vmatpush1.msra.mxu0 0.0
    %2622 = vmatprep.subr.mxu0 0.0
    %2623 = vmatpush1.msra.mxu0 0.0
    %2624 = vmatprep.subr.mxu0 0.0
    %2625 = vmatpush1.msra.mxu0 0.0
    %2626 = vmatprep.subr.mxu0 0.0
    %2627 = vmatpush1.msra.mxu0 0.0
    %2628 = vmatprep.subr.mxu0 0.0
    %2629 = vmatpush1.msra.mxu0 0.0
    %2630 = vmatprep.subr.mxu0 0.0
    %2631 = vmatpush1.msra.mxu0 0.0
    %2632 = vmatprep.subr.mxu0 0.0
    %2633 = vmatpush1.msra.mxu0 0.0
    %2634 = vmatprep.subr.mxu0 0.0
    %2635 = vmatpush1.msra.mxu0 0.0
    %2636 = vmatprep.subr.mxu0 0.0
    %2637 = vmatpush1.msra.mxu0 0.0
    %2638 = vmatprep.subr.mxu0 0.0
    %2639 = vmatpush1.msra.mxu0 0.0
    %2640 = vmatprep.subr.mxu0 0.0
    %2641 = vmatpush1.msra.mxu0 0.0
    %2642 = vmatprep.mubr.f32.mxu0 0.0
    %2643 = vmatmul.mubr.f32.gmra.mrb[0].mxu0 %v2501
    %v2644 = vpop.f32.mrb[0].mxu0
    %v2645 = vadd.f32 0.0, %v2644
    %v2646 = vpop.f32.mrb[0].mxu0
    %v2647 = vadd.f32 0.0, %v2646
    %2648 = vdwg.mxu0
    %v2649 = vld [vmem:[%s8] sm:$0xff]
    %v2650 = vld [vmem:[%s8 + $0x8] sm:$0xff]
    %v2651 = vld [vmem:[%s8 + $0x10] sm:$0xff]
    %v2652 = vld [vmem:[%s8 + $0x18] sm:$0xff]
    %v2653 = vld [vmem:[%s8 + $0x20] sm:$0xff]
    %v2654 = vld [vmem:[%s8 + $0x28] sm:$0xff]
    %v2655 = vld [vmem:[%s8 + $0x30] sm:$0xff]
    %v2656 = vld [vmem:[%s8 + $0x38] sm:$0xff]
    %v2657 = vld [vmem:[%s8 + $0x40] sm:$0xff]
    %v2658 = vld [vmem:[%s8 + $0x48] sm:$0xff]
    %v2659 = vld [vmem:[%s8 + $0x50] sm:$0xff]
    %v2660 = vld [vmem:[%s8 + $0x58] sm:$0xff]
    %v2661 = vld [vmem:[%s8 + $0x60] sm:$0xff]
    %v2662 = vld [vmem:[%s8 + $0x68] sm:$0xff]
    %v2663 = vld [vmem:[%s8 + $0x70] sm:$0xff]
    %v2664 = vld [vmem:[%s8 + $0x78] sm:$0xff]
    %v2665 = vld [vmem:[%s8 + $0x80] sm:$0xff]
    %v2666 = vld [vmem:[%s8 + $0x88] sm:$0xff]
    %v2667 = vld [vmem:[%s8 + $0x90] sm:$0xff]
    %v2668 = vld [vmem:[%s8 + $0x98] sm:$0xff]
    %v2669 = vld [vmem:[%s8 + $0xa0] sm:$0xff]
    %v2670 = vld [vmem:[%s8 + $0xa8] sm:$0xff]
    %v2671 = vld [vmem:[%s8 + $0xb0] sm:$0xff]
    %v2672 = vld [vmem:[%s8 + $0xb8] sm:$0xff]
    %v2673 = vld [vmem:[%s8 + $0xc0] sm:$0xff]
    %v2674 = vld [vmem:[%s8 + $0xc8] sm:$0xff]
    %v2675 = vld [vmem:[%s8 + $0xd0] sm:$0xff]
    %v2676 = vld [vmem:[%s8 + $0xd8] sm:$0xff]
    %v2677 = vld [vmem:[%s8 + $0xe0] sm:$0xff]
    %v2678 = vld [vmem:[%s8 + $0xe8] sm:$0xff]
    %v2679 = vld [vmem:[%s8 + $0xf0] sm:$0xff]
    %v2680 = vld [vmem:[%s8 + $0xf8] sm:$0xff]
    %2681 = vmatprep.subr.mxu0 0.0
    %2682 = vmatpush1.msra.mxu0 %v2649
    %2683 = vmatprep.subr.mxu0 0.0
    %2684 = vmatpush1.msra.mxu0 %v2650
    %2685 = vmatprep.subr.mxu0 0.0
    %2686 = vmatpush1.msra.mxu0 %v2651
    %2687 = vmatprep.subr.mxu0 0.0
    %2688 = vmatpush1.msra.mxu0 %v2652
    %2689 = vmatprep.subr.mxu0 0.0
    %2690 = vmatpush1.msra.mxu0 %v2653
    %2691 = vmatprep.subr.mxu0 0.0
    %2692 = vmatpush1.msra.mxu0 %v2654
    %2693 = vmatprep.subr.mxu0 0.0
    %2694 = vmatpush1.msra.mxu0 %v2655
    %2695 = vmatprep.subr.mxu0 0.0
    %2696 = vmatpush1.msra.mxu0 %v2656
    %2697 = vmatprep.subr.mxu0 0.0
    %2698 = vmatpush1.msra.mxu0 %v2657
    %2699 = vmatprep.subr.mxu0 0.0
    %2700 = vmatpush1.msra.mxu0 %v2658
    %2701 = vmatprep.subr.mxu0 0.0
    %2702 = vmatpush1.msra.mxu0 %v2659
    %2703 = vmatprep.subr.mxu0 0.0
    %2704 = vmatpush1.msra.mxu0 %v2660
    %2705 = vmatprep.subr.mxu0 0.0
    %2706 = vmatpush1.msra.mxu0 %v2661
    %2707 = vmatprep.subr.mxu0 0.0
    %2708 = vmatpush1.msra.mxu0 %v2662
    %2709 = vmatprep.subr.mxu0 0.0
    %2710 = vmatpush1.msra.mxu0 %v2663
    %2711 = vmatprep.subr.mxu0 0.0
    %2712 = vmatpush1.msra.mxu0 %v2664
    %2713 = vmatprep.subr.mxu0 0.0
    %2714 = vmatpush1.msra.mxu0 %v2665
    %2715 = vmatprep.subr.mxu0 0.0
    %2716 = vmatpush1.msra.mxu0 %v2666
    %2717 = vmatprep.subr.mxu0 0.0
    %2718 = vmatpush1.msra.mxu0 %v2667
    %2719 = vmatprep.subr.mxu0 0.0
    %2720 = vmatpush1.msra.mxu0 %v2668
    %2721 = vmatprep.subr.mxu0 0.0
    %2722 = vmatpush1.msra.mxu0 %v2669
    %2723 = vmatprep.subr.mxu0 0.0
    %2724 = vmatpush1.msra.mxu0 %v2670
    %2725 = vmatprep.subr.mxu0 0.0
    %2726 = vmatpush1.msra.mxu0 %v2671
    %2727 = vmatprep.subr.mxu0 0.0
    %2728 = vmatpush1.msra.mxu0 %v2672
    %2729 = vmatprep.subr.mxu0 0.0
    %2730 = vmatpush1.msra.mxu0 %v2673
    %2731 = vmatprep.subr.mxu0 0.0
    %2732 = vmatpush1.msra.mxu0 %v2674
    %2733 = vmatprep.subr.mxu0 0.0
    %2734 = vmatpush1.msra.mxu0 %v2675
    %2735 = vmatprep.subr.mxu0 0.0
    %2736 = vmatpush1.msra.mxu0 %v2676
    %2737 = vmatprep.subr.mxu0 0.0
    %2738 = vmatpush1.msra.mxu0 %v2677
    %2739 = vmatprep.subr.mxu0 0.0
    %2740 = vmatpush1.msra.mxu0 %v2678
    %2741 = vmatprep.subr.mxu0 0.0
    %2742 = vmatpush1.msra.mxu0 %v2679
    %2743 = vmatprep.subr.mxu0 0.0
    %2744 = vmatpush1.msra.mxu0 %v2680
    %2745 = vmatprep.mubr.f32.mxu0 %v2572
    %2746 = vmatmul.mubr.f32.gmra.mrb[0].mxu0 %v2570
    %v2747 = vpop.f32.mrb[0].mxu0
    %v2748 = vadd.f32 0.0, %v2747
    %v2749 = vpop.f32.mrb[0].mxu0
    %2750 = vdwg.mxu0
    %v2751 = vmul.f32 %v2748, 0.0078125
    %2752 = vmatprep.subr.mxu0 0.0
    %2753 = vmatpush1.msra.mxu0 %v2649
    %2754 = vmatprep.subr.mxu0 0.0
    %2755 = vmatpush1.msra.mxu0 %v2650
    %2756 = vmatprep.subr.mxu0 0.0
    %2757 = vmatpush1.msra.mxu0 %v2651
    %2758 = vmatprep.subr.mxu0 0.0
    %2759 = vmatpush1.msra.mxu0 %v2652
    %2760 = vmatprep.subr.mxu0 0.0
    %2761 = vmatpush1.msra.mxu0 %v2653
    %2762 = vmatprep.subr.mxu0 0.0
    %2763 = vmatpush1.msra.mxu0 %v2654
    %2764 = vmatprep.subr.mxu0 0.0
    %2765 = vmatpush1.msra.mxu0 %v2655
    %2766 = vmatprep.subr.mxu0 0.0
    %2767 = vmatpush1.msra.mxu0 %v2656
    %2768 = vmatprep.subr.mxu0 0.0
    %2769 = vmatpush1.msra.mxu0 %v2657
    %2770 = vmatprep.subr.mxu0 0.0
    %2771 = vmatpush1.msra.mxu0 %v2658
    %2772 = vmatprep.subr.mxu0 0.0
    %2773 = vmatpush1.msra.mxu0 %v2659
    %2774 = vmatprep.subr.mxu0 0.0
    %2775 = vmatpush1.msra.mxu0 %v2660
    %2776 = vmatprep.subr.mxu0 0.0
    %2777 = vmatpush1.msra.mxu0 %v2661
    %2778 = vmatprep.subr.mxu0 0.0
    %2779 = vmatpush1.msra.mxu0 %v2662
    %2780 = vmatprep.subr.mxu0 0.0
    %2781 = vmatpush1.msra.mxu0 %v2663
    %2782 = vmatprep.subr.mxu0 0.0
    %2783 = vmatpush1.msra.mxu0 %v2664
    %2784 = vmatprep.subr.mxu0 0.0
    %2785 = vmatpush1.msra.mxu0 %v2665
    %2786 = vmatprep.subr.mxu0 0.0
    %2787 = vmatpush1.msra.mxu0 %v2666
    %2788 = vmatprep.subr.mxu0 0.0
    %2789 = vmatpush1.msra.mxu0 %v2667
    %2790 = vmatprep.subr.mxu0 0.0
    %2791 = vmatpush1.msra.mxu0 %v2668
    %2792 = vmatprep.subr.mxu0 0.0
    %2793 = vmatpush1.msra.mxu0 %v2669
    %2794 = vmatprep.subr.mxu0 0.0
    %2795 = vmatpush1.msra.mxu0 %v2670
    %2796 = vmatprep.subr.mxu0 0.0
    %2797 = vmatpush1.msra.mxu0 %v2671
    %2798 = vmatprep.subr.mxu0 0.0
    %2799 = vmatpush1.msra.mxu0 %v2672
    %2800 = vmatprep.subr.mxu0 0.0
    %2801 = vmatpush1.msra.mxu0 %v2673
    %2802 = vmatprep.subr.mxu0 0.0
    %2803 = vmatpush1.msra.mxu0 %v2674
    %2804 = vmatprep.subr.mxu0 0.0
    %2805 = vmatpush1.msra.mxu0 %v2675
    %2806 = vmatprep.subr.mxu0 0.0
    %2807 = vmatpush1.msra.mxu0 %v2676
    %2808 = vmatprep.subr.mxu0 0.0
    %2809 = vmatpush1.msra.mxu0 %v2677
    %2810 = vmatprep.subr.mxu0 0.0
    %2811 = vmatpush1.msra.mxu0 %v2678
    %2812 = vmatprep.subr.mxu0 0.0
    %2813 = vmatpush1.msra.mxu0 %v2679
    %2814 = vmatprep.subr.mxu0 0.0
    %2815 = vmatpush1.msra.mxu0 %v2680
    %2816 = vmatprep.mubr.f32.mxu0 %v2647
    %2817 = vmatmul.mubr.f32.gmra.mrb[0].mxu0 %v2645
    %v2818 = vpop.f32.mrb[0].mxu0
    %v2819 = vadd.f32 0.0, %v2818
    %v2820 = vpop.f32.mrb[0].mxu0
    %2821 = vdwg.mxu0
    %v2822 = vmul.f32 %v2819, 0.0078125
    %v2823 = vmul.f32 %v2751, %v2751
    %v2824 = vsub.f32 %v2822, %v2823
    %v2825 = vld [vmem:[#allocation7] sm:$0x1]
    %v2826 = vld [vmem:[#allocation7 + $0x1] sm:$0x1]
    %v2827 = vadd.f32 %v2824, 1e-05
    %v2828 = vrsqrt.pop %v2827
    %v2829 = vmul.f32 %v2825, %v2828
    %v2830 = vmul.f32 %v2751, %v2829
    %v2831 = vsub.f32 %v2826, %v2830
    %v2832 = vld [vmem:[#allocation6] sm:$0xff]
    %v2833 = vld [vmem:[#allocation6 + $0x8] sm:$0xff]
    %v2834 = vld [vmem:[#allocation6 + $0x10] sm:$0xff]
    %v2835 = vld [vmem:[#allocation6 + $0x18] sm:$0xff]
    %v2836 = vld [vmem:[#allocation6 + $0x20] sm:$0xff]
    %v2837 = vld [vmem:[#allocation6 + $0x28] sm:$0xff]
    %v2838 = vld [vmem:[#allocation6 + $0x30] sm:$0xff]
    %v2839 = vld [vmem:[#allocation6 + $0x38] sm:$0xff]
    %vm2840 = vcmask 261120
    %v2842 = vsel %vm2840, %v2829, 0
    %2844 = vmatprep.subr.mxu0 %v2833
    %2845 = vmatpush1.msra.mxu0 %v2832
    %2846 = vmatprep.subr.mxu0 %v2835
    %2847 = vmatpush1.msra.mxu0 %v2834
    %2848 = vmatprep.subr.mxu0 %v2837
    %2849 = vmatpush1.msra.mxu0 %v2836
    %2850 = vmatprep.subr.mxu0 %v2839
    %2851 = vmatpush1.msra.mxu0 %v2838
    %2852 = vmatprep.subr.mxu0 0.0
    %2853 = vmatpush1.msra.mxu0 0.0
    %2854 = vmatprep.subr.mxu0 0.0
    %2855 = vmatpush1.msra.mxu0 0.0
    %2856 = vmatprep.subr.mxu0 0.0
    %2857 = vmatpush1.msra.mxu0 0.0
    %2858 = vmatprep.subr.mxu0 0.0
    %2859 = vmatpush1.msra.mxu0 0.0
    %2860 = vmatprep.subr.mxu0 0.0
    %2861 = vmatpush1.msra.mxu0 0.0
    %2862 = vmatprep.subr.mxu0 0.0
    %2863 = vmatpush1.msra.mxu0 0.0
    %2864 = vmatprep.subr.mxu0 0.0
    %2865 = vmatpush1.msra.mxu0 0.0
    %2866 = vmatprep.subr.mxu0 0.0
    %2867 = vmatpush1.msra.mxu0 0.0
    %2868 = vmatprep.subr.mxu0 0.0
    %2869 = vmatpush1.msra.mxu0 0.0
    %2870 = vmatprep.subr.mxu0 0.0
    %2871 = vmatpush1.msra.mxu0 0.0
    %2872 = vmatprep.subr.mxu0 0.0
    %2873 = vmatpush1.msra.mxu0 0.0
    %2874 = vmatprep.subr.mxu0 0.0
    %2875 = vmatpush1.msra.mxu0 0.0
    %2876 = vmatprep.subr.mxu0 0.0
    %2877 = vmatpush1.msra.mxu0 0.0
    %2878 = vmatprep.subr.mxu0 0.0
    %2879 = vmatpush1.msra.mxu0 0.0
    %2880 = vmatprep.subr.mxu0 0.0
    %2881 = vmatpush1.msra.mxu0 0.0
    %2882 = vmatprep.subr.mxu0 0.0
    %2883 = vmatpush1.msra.mxu0 0.0
    %2884 = vmatprep.subr.mxu0 0.0
    %2885 = vmatpush1.msra.mxu0 0.0
    %2886 = vmatprep.subr.mxu0 0.0
    %2887 = vmatpush1.msra.mxu0 0.0
    %2888 = vmatprep.subr.mxu0 0.0
    %2889 = vmatpush1.msra.mxu0 0.0
    %2890 = vmatprep.subr.mxu0 0.0
    %2891 = vmatpush1.msra.mxu0 0.0
    %2892 = vmatprep.subr.mxu0 0.0
    %2893 = vmatpush1.msra.mxu0 0.0
    %2894 = vmatprep.subr.mxu0 0.0
    %2895 = vmatpush1.msra.mxu0 0.0
    %2896 = vmatprep.subr.mxu0 0.0
    %2897 = vmatpush1.msra.mxu0 0.0
    %2898 = vmatprep.subr.mxu0 0.0
    %2899 = vmatpush1.msra.mxu0 0.0
    %2900 = vmatprep.subr.mxu0 0.0
    %2901 = vmatpush1.msra.mxu0 0.0
    %2902 = vmatprep.subr.mxu0 0.0
    %2903 = vmatpush1.msra.mxu0 0.0
    %2904 = vmatprep.subr.mxu0 0.0
    %2905 = vmatpush1.msra.mxu0 0.0
    %2906 = vmatprep.subr.mxu0 0.0
    %2907 = vmatpush1.msra.mxu0 0.0
    %2908 = vmatprep.mubr.f32.mxu0 0.0
    %2909 = vmatmul.mubr.f32.gmra.mrb[0].mxu0 %v2842
    %v2910 = vpop.f32.mrb[0].mxu0
    %v2911 = vadd.f32 0.0, %v2910
    %v2912 = vpop.f32.mrb[0].mxu0
    %v2913 = vadd.f32 0.0, %v2912
    %2914 = vdwg.mxu0
    %v2916 = vsel %vm2840, %v2831, 0
    %2918 = vmatprep.subr.mxu0 %v2833
    %2919 = vmatpush1.msra.mxu0 %v2832
    %2920 = vmatprep.subr.mxu0 %v2835
    %2921 = vmatpush1.msra.mxu0 %v2834
    %2922 = vmatprep.subr.mxu0 %v2837
    %2923 = vmatpush1.msra.mxu0 %v2836
    %2924 = vmatprep.subr.mxu0 %v2839
    %2925 = vmatpush1.msra.mxu0 %v2838
    %2926 = vmatprep.subr.mxu0 0.0
    %2927 = vmatpush1.msra.mxu0 0.0
    %2928 = vmatprep.subr.mxu0 0.0
    %2929 = vmatpush1.msra.mxu0 0.0
    %2930 = vmatprep.subr.mxu0 0.0
    %2931 = vmatpush1.msra.mxu0 0.0
    %2932 = vmatprep.subr.mxu0 0.0
    %2933 = vmatpush1.msra.mxu0 0.0
    %2934 = vmatprep.subr.mxu0 0.0
    %2935 = vmatpush1.msra.mxu0 0.0
    %2936 = vmatprep.subr.mxu0 0.0
    %2937 = vmatpush1.msra.mxu0 0.0
    %2938 = vmatprep.subr.mxu0 0.0
    %2939 = vmatpush1.msra.mxu0 0.0
    %2940 = vmatprep.subr.mxu0 0.0
    %2941 = vmatpush1.msra.mxu0 0.0
    %2942 = vmatprep.subr.mxu0 0.0
    %2943 = vmatpush1.msra.mxu0 0.0
    %2944 = vmatprep.subr.mxu0 0.0
    %2945 = vmatpush1.msra.mxu0 0.0
    %2946 = vmatprep.subr.mxu0 0.0
    %2947 = vmatpush1.msra.mxu0 0.0
    %2948 = vmatprep.subr.mxu0 0.0
    %2949 = vmatpush1.msra.mxu0 0.0
    %2950 = vmatprep.subr.mxu0 0.0
    %2951 = vmatpush1.msra.mxu0 0.0
    %2952 = vmatprep.subr.mxu0 0.0
    %2953 = vmatpush1.msra.mxu0 0.0
    %2954 = vmatprep.subr.mxu0 0.0
    %2955 = vmatpush1.msra.mxu0 0.0
    %2956 = vmatprep.subr.mxu0 0.0
    %2957 = vmatpush1.msra.mxu0 0.0
    %2958 = vmatprep.subr.mxu0 0.0
    %2959 = vmatpush1.msra.mxu0 0.0
    %2960 = vmatprep.subr.mxu0 0.0
    %2961 = vmatpush1.msra.mxu0 0.0
    %2962 = vmatprep.subr.mxu0 0.0
    %2963 = vmatpush1.msra.mxu0 0.0
    %2964 = vmatprep.subr.mxu0 0.0
    %2965 = vmatpush1.msra.mxu0 0.0
    %2966 = vmatprep.subr.mxu0 0.0
    %2967 = vmatpush1.msra.mxu0 0.0
    %2968 = vmatprep.subr.mxu0 0.0
    %2969 = vmatpush1.msra.mxu0 0.0
    %2970 = vmatprep.subr.mxu0 0.0
    %2971 = vmatpush1.msra.mxu0 0.0
    %2972 = vmatprep.subr.mxu0 0.0
    %2973 = vmatpush1.msra.mxu0 0.0
    %2974 = vmatprep.subr.mxu0 0.0
    %2975 = vmatpush1.msra.mxu0 0.0
    %2976 = vmatprep.subr.mxu0 0.0
    %2977 = vmatpush1.msra.mxu0 0.0
    %2978 = vmatprep.subr.mxu0 0.0
    %2979 = vmatpush1.msra.mxu0 0.0
    %2980 = vmatprep.subr.mxu0 0.0
    %2981 = vmatpush1.msra.mxu0 0.0
    %2982 = vmatprep.mubr.f32.mxu0 0.0
    %2983 = vmatmul.mubr.f32.gmra.mrb[0].mxu0 %v2916
    %v2984 = vpop.f32.mrb[0].mxu0
    %v2985 = vadd.f32 0.0, %v2984
    %v2986 = vpop.f32.mrb[0].mxu0
    %v2987 = vadd.f32 0.0, %v2986
    %2988 = vdwg.mxu0
    %v2989 = vlaneseq
    %v2990 = vshrl.u32 %v2989, 7
    %v2991 = vsub.s32 0, %v2990
    %v2992 = vrot.slane %v2911, %v2991
    %v2993 = vlaneseq
    %v2994 = vshrl.u32 %v2993, 7
    %v2995 = vsub.s32 0, %v2994
    %v2996 = vrot.slane %v2913, %v2995
    %v2997 = vmul.f32 %v2497, %v2992
    %v2998 = vmul.f32 %v2498, %v2996
    %v2999 = vmul.f32 %v2499, %v2992
    %v3000 = vmul.f32 %v2500, %v2996
    %v3001 = vlaneseq
    %v3002 = vshrl.u32 %v3001, 7
    %v3003 = vsub.s32 0, %v3002
    %v3004 = vrot.slane %v2985, %v3003
    %v3005 = vlaneseq
    %v3006 = vshrl.u32 %v3005, 7
    %v3007 = vsub.s32 0, %v3006
    %v3008 = vrot.slane %v2987, %v3007
    %v3009 = vadd.f32 %v2997, %v3004
    %v3010 = vadd.f32 %v2998, %v3008
    %v3011 = vadd.f32 %v2999, %v3004
    %v3012 = vadd.f32 %v3000, %v3008
    %v3013 = vmul.f32 %v3009, 0.2
    %v3014 = vmul.f32 %v3010, 0.2
    %v3015 = vmul.f32 %v3011, 0.2
    %v3016 = vmul.f32 %v3012, 0.2
    %v3017 = vmax.f32 %v3009, %v3013
    %v3018 = vmax.f32 %v3010, %v3014
    %v3019 = vmax.f32 %v3011, %v3015
    %v3020 = vmax.f32 %v3012, %v3016
    %v3021 = vpack.c.bf16 %v3019, %v3017
    %v3022 = vpack.c.bf16 %v3020, %v3018
    %v3023 = vld [vmem:[%s11] sm:$0xff]
    %v3024 = vld [vmem:[%s11 + $0x8] sm:$0xff]
    %v3025 = vld [vmem:[%s11 + $0x10] sm:$0xff]
    %v3026 = vld [vmem:[%s11 + $0x18] sm:$0xff]
    %v3027 = vld [vmem:[%s11 + $0x20] sm:$0xff]
    %v3028 = vld [vmem:[%s11 + $0x28] sm:$0xff]
    %v3029 = vld [vmem:[%s11 + $0x30] sm:$0xff]
    %v3030 = vld [vmem:[%s11 + $0x38] sm:$0xff]
    %v3031 = vld [vmem:[%s11 + $0x40] sm:$0xff]
    %v3032 = vld [vmem:[%s11 + $0x48] sm:$0xff]
    %v3033 = vld [vmem:[%s11 + $0x50] sm:$0xff]
    %v3034 = vld [vmem:[%s11 + $0x58] sm:$0xff]
    %v3035 = vld [vmem:[%s11 + $0x60] sm:$0xff]
    %v3036 = vld [vmem:[%s11 + $0x68] sm:$0xff]
    %v3037 = vld [vmem:[%s11 + $0x70] sm:$0xff]
    %v3038 = vld [vmem:[%s11 + $0x78] sm:$0xff]
    %v3039 = vld [vmem:[%s11 + $0x80] sm:$0xff]
    %v3040 = vld [vmem:[%s11 + $0x88] sm:$0xff]
    %v3041 = vld [vmem:[%s11 + $0x90] sm:$0xff]
    %v3042 = vld [vmem:[%s11 + $0x98] sm:$0xff]
    %v3043 = vld [vmem:[%s11 + $0xa0] sm:$0xff]
    %v3044 = vld [vmem:[%s11 + $0xa8] sm:$0xff]
    %v3045 = vld [vmem:[%s11 + $0xb0] sm:$0xff]
    %v3046 = vld [vmem:[%s11 + $0xb8] sm:$0xff]
    %v3047 = vld [vmem:[%s11 + $0xc0] sm:$0xff]
    %v3048 = vld [vmem:[%s11 + $0xc8] sm:$0xff]
    %v3049 = vld [vmem:[%s11 + $0xd0] sm:$0xff]
    %v3050 = vld [vmem:[%s11 + $0xd8] sm:$0xff]
    %v3051 = vld [vmem:[%s11 + $0xe0] sm:$0xff]
    %v3052 = vld [vmem:[%s11 + $0xe8] sm:$0xff]
    %v3053 = vld [vmem:[%s11 + $0xf0] sm:$0xff]
    %v3054 = vld [vmem:[%s11 + $0xf8] sm:$0xff]
    %v3087 = vunpack.c.l.b16 %v3023
    %v3088 = vunpack.c.h.b16 %v3023
    %v3089 = vunpack.c.l.b16 %v3024
    %v3090 = vunpack.c.h.b16 %v3024
    %v3091 = vunpack.c.l.b16 %v3025
    %v3092 = vunpack.c.h.b16 %v3025
    %v3093 = vunpack.c.l.b16 %v3026
    %v3094 = vunpack.c.h.b16 %v3026
    %v3095 = vunpack.c.l.b16 %v3027
    %v3096 = vunpack.c.h.b16 %v3027
    %v3097 = vunpack.c.l.b16 %v3028
    %v3098 = vunpack.c.h.b16 %v3028
    %v3099 = vunpack.c.l.b16 %v3029
    %v3100 = vunpack.c.h.b16 %v3029
    %v3101 = vunpack.c.l.b16 %v3030
    %v3102 = vunpack.c.h.b16 %v3030
    %v3103 = vunpack.c.l.b16 %v3031
    %v3104 = vunpack.c.h.b16 %v3031
    %v3105 = vunpack.c.l.b16 %v3032
    %v3106 = vunpack.c.h.b16 %v3032
    %v3107 = vunpack.c.l.b16 %v3033
    %v3108 = vunpack.c.h.b16 %v3033
    %v3109 = vunpack.c.l.b16 %v3034
    %v3110 = vunpack.c.h.b16 %v3034
    %v3111 = vunpack.c.l.b16 %v3035
    %v3112 = vunpack.c.h.b16 %v3035
    %v3113 = vunpack.c.l.b16 %v3036
    %v3114 = vunpack.c.h.b16 %v3036
    %v3115 = vunpack.c.l.b16 %v3037
    %v3116 = vunpack.c.h.b16 %v3037
    %v3117 = vunpack.c.l.b16 %v3038
    %v3118 = vunpack.c.h.b16 %v3038
    %v3119 = vunpack.c.l.b16 %v3039
    %v3120 = vunpack.c.h.b16 %v3039
    %v3121 = vunpack.c.l.b16 %v3040
    %v3122 = vunpack.c.h.b16 %v3040
    %v3123 = vunpack.c.l.b16 %v3041
    %v3124 = vunpack.c.h.b16 %v3041
    %v3125 = vunpack.c.l.b16 %v3042
    %v3126 = vunpack.c.h.b16 %v3042
    %v3127 = vunpack.c.l.b16 %v3043
    %v3128 = vunpack.c.h.b16 %v3043
    %v3129 = vunpack.c.l.b16 %v3044
    %v3130 = vunpack.c.h.b16 %v3044
    %v3131 = vunpack.c.l.b16 %v3045
    %v3132 = vunpack.c.h.b16 %v3045
    %v3133 = vunpack.c.l.b16 %v3046
    %v3134 = vunpack.c.h.b16 %v3046
    %v3135 = vunpack.c.l.b16 %v3047
    %v3136 = vunpack.c.h.b16 %v3047
    %v3137 = vunpack.c.l.b16 %v3048
    %v3138 = vunpack.c.h.b16 %v3048
    %v3139 = vunpack.c.l.b16 %v3049
    %v3140 = vunpack.c.h.b16 %v3049
    %v3141 = vunpack.c.l.b16 %v3050
    %v3142 = vunpack.c.h.b16 %v3050
    %v3143 = vunpack.c.l.b16 %v3051
    %v3144 = vunpack.c.h.b16 %v3051
    %v3145 = vunpack.c.l.b16 %v3052
    %v3146 = vunpack.c.h.b16 %v3052
    %v3147 = vunpack.c.l.b16 %v3053
    %v3148 = vunpack.c.h.b16 %v3053
    %v3149 = vunpack.c.l.b16 %v3054
    %v3150 = vunpack.c.h.b16 %v3054
    %v3151 = vpack.c.b16 %v3089, %v3087
    %v3152 = vpack.c.b16 %v3090, %v3088
    %v3153 = vpack.c.b16 %v3093, %v3091
    %v3154 = vpack.c.b16 %v3094, %v3092
    %v3155 = vpack.c.b16 %v3097, %v3095
    %v3156 = vpack.c.b16 %v3098, %v3096
    %v3157 = vpack.c.b16 %v3101, %v3099
    %v3158 = vpack.c.b16 %v3102, %v3100
    %v3159 = vpack.c.b16 %v3105, %v3103
    %v3160 = vpack.c.b16 %v3106, %v3104
    %v3161 = vpack.c.b16 %v3109, %v3107
    %v3162 = vpack.c.b16 %v3110, %v3108
    %v3163 = vpack.c.b16 %v3113, %v3111
    %v3164 = vpack.c.b16 %v3114, %v3112
    %v3165 = vpack.c.b16 %v3117, %v3115
    %v3166 = vpack.c.b16 %v3118, %v3116
    %v3167 = vpack.c.b16 %v3121, %v3119
    %v3168 = vpack.c.b16 %v3122, %v3120
    %v3169 = vpack.c.b16 %v3125, %v3123
    %v3170 = vpack.c.b16 %v3126, %v3124
    %v3171 = vpack.c.b16 %v3129, %v3127
    %v3172 = vpack.c.b16 %v3130, %v3128
    %v3173 = vpack.c.b16 %v3133, %v3131
    %v3174 = vpack.c.b16 %v3134, %v3132
    %v3175 = vpack.c.b16 %v3137, %v3135
    %v3176 = vpack.c.b16 %v3138, %v3136
    %v3177 = vpack.c.b16 %v3141, %v3139
    %v3178 = vpack.c.b16 %v3142, %v3140
    %v3179 = vpack.c.b16 %v3145, %v3143
    %v3180 = vpack.c.b16 %v3146, %v3144
    %v3181 = vpack.c.b16 %v3149, %v3147
    %v3182 = vpack.c.b16 %v3150, %v3148
    %3215 = vmatprep.subr.bf16.mxu0 %v3152
    %3216 = vmatpush1.bf16.msra.mxu0 %v3151
    %3217 = vmatprep.subr.bf16.mxu0 %v3154
    %3218 = vmatpush1.bf16.msra.mxu0 %v3153
    %3219 = vmatprep.subr.bf16.mxu0 %v3156
    %3220 = vmatpush1.bf16.msra.mxu0 %v3155
    %3221 = vmatprep.subr.bf16.mxu0 %v3158
    %3222 = vmatpush1.bf16.msra.mxu0 %v3157
    %3223 = vmatprep.subr.bf16.mxu0 %v3160
    %3224 = vmatpush1.bf16.msra.mxu0 %v3159
    %3225 = vmatprep.subr.bf16.mxu0 %v3162
    %3226 = vmatpush1.bf16.msra.mxu0 %v3161
    %3227 = vmatprep.subr.bf16.mxu0 %v3164
    %3228 = vmatpush1.bf16.msra.mxu0 %v3163
    %3229 = vmatprep.subr.bf16.mxu0 %v3166
    %3230 = vmatpush1.bf16.msra.mxu0 %v3165
    %3231 = vmatprep.subr.bf16.mxu0 %v3168
    %3232 = vmatpush1.bf16.msra.mxu0 %v3167
    %3233 = vmatprep.subr.bf16.mxu0 %v3170
    %3234 = vmatpush1.bf16.msra.mxu0 %v3169
    %3235 = vmatprep.subr.bf16.mxu0 %v3172
    %3236 = vmatpush1.bf16.msra.mxu0 %v3171
    %3237 = vmatprep.subr.bf16.mxu0 %v3174
    %3238 = vmatpush1.bf16.msra.mxu0 %v3173
    %3239 = vmatprep.subr.bf16.mxu0 %v3176
    %3240 = vmatpush1.bf16.msra.mxu0 %v3175
    %3241 = vmatprep.subr.bf16.mxu0 %v3178
    %3242 = vmatpush1.bf16.msra.mxu0 %v3177
    %3243 = vmatprep.subr.bf16.mxu0 %v3180
    %3244 = vmatpush1.bf16.msra.mxu0 %v3179
    %3245 = vmatprep.subr.bf16.mxu0 %v3182
    %3246 = vmatpush1.bf16.msra.mxu0 %v3181
    %3247 = vmatprep.mubr.bf16.mxu0 %v3022
    %3248 = vmatmul.mubr.bf16.gmra.mrb[0].mxu0 %v3021
    %v3249 = vpop.f32.mrb[0].mxu0
    %v3250 = vadd.f32 0.0, %v3249
    %v3251 = vpop.f32.mrb[0].mxu0
    %v3252 = vadd.f32 0.0, %v3251
    %v3253 = vpop.f32.mrb[0].mxu0
    %v3254 = vadd.f32 0.0, %v3253
    %v3255 = vpop.f32.mrb[0].mxu0
    %v3256 = vadd.f32 0.0, %v3255
    %3257 = vdwg.mxu0
    %v3258 = vld [vmem:[%s12] sm:$0xff]
    %v3259 = vld [vmem:[%s12 + $0x8] sm:$0xff]
    %v3260 = vld [vmem:[%s12 + $0x10] sm:$0xff]
    %v3261 = vld [vmem:[%s12 + $0x18] sm:$0xff]
    %s3262 = scalar_lea.vmem %s11, 256
    %v3263 = vld [vmem:[%s3262] sm:$0xff]
    %v3264 = vld [vmem:[%s3262 + $0x8] sm:$0xff]
    %v3265 = vld [vmem:[%s3262 + $0x10] sm:$0xff]
    %v3266 = vld [vmem:[%s3262 + $0x18] sm:$0xff]
    %v3267 = vld [vmem:[%s3262 + $0x20] sm:$0xff]
    %v3268 = vld [vmem:[%s3262 + $0x28] sm:$0xff]
    %v3269 = vld [vmem:[%s3262 + $0x30] sm:$0xff]
    %v3270 = vld [vmem:[%s3262 + $0x38] sm:$0xff]
    %v3271 = vld [vmem:[%s3262 + $0x40] sm:$0xff]
    %v3272 = vld [vmem:[%s3262 + $0x48] sm:$0xff]
    %v3273 = vld [vmem:[%s3262 + $0x50] sm:$0xff]
    %v3274 = vld [vmem:[%s3262 + $0x58] sm:$0xff]
    %v3275 = vld [vmem:[%s3262 + $0x60] sm:$0xff]
    %v3276 = vld [vmem:[%s3262 + $0x68] sm:$0xff]
    %v3277 = vld [vmem:[%s3262 + $0x70] sm:$0xff]
    %v3278 = vld [vmem:[%s3262 + $0x78] sm:$0xff]
    %v3279 = vld [vmem:[%s3262 + $0x80] sm:$0xff]
    %v3280 = vld [vmem:[%s3262 + $0x88] sm:$0xff]
    %v3281 = vld [vmem:[%s3262 + $0x90] sm:$0xff]
    %v3282 = vld [vmem:[%s3262 + $0x98] sm:$0xff]
    %v3283 = vld [vmem:[%s3262 + $0xa0] sm:$0xff]
    %v3284 = vld [vmem:[%s3262 + $0xa8] sm:$0xff]
    %v3285 = vld [vmem:[%s3262 + $0xb0] sm:$0xff]
    %v3286 = vld [vmem:[%s3262 + $0xb8] sm:$0xff]
    %v3287 = vld [vmem:[%s3262 + $0xc0] sm:$0xff]
    %v3288 = vld [vmem:[%s3262 + $0xc8] sm:$0xff]
    %v3289 = vld [vmem:[%s3262 + $0xd0] sm:$0xff]
    %v3290 = vld [vmem:[%s3262 + $0xd8] sm:$0xff]
    %v3291 = vld [vmem:[%s3262 + $0xe0] sm:$0xff]
    %v3292 = vld [vmem:[%s3262 + $0xe8] sm:$0xff]
    %v3293 = vld [vmem:[%s3262 + $0xf0] sm:$0xff]
    %v3294 = vld [vmem:[%s3262 + $0xf8] sm:$0xff]
    %v3327 = vunpack.c.l.b16 %v3263
    %v3328 = vunpack.c.h.b16 %v3263
    %v3329 = vunpack.c.l.b16 %v3264
    %v3330 = vunpack.c.h.b16 %v3264
    %v3331 = vunpack.c.l.b16 %v3265
    %v3332 = vunpack.c.h.b16 %v3265
    %v3333 = vunpack.c.l.b16 %v3266
    %v3334 = vunpack.c.h.b16 %v3266
    %v3335 = vunpack.c.l.b16 %v3267
    %v3336 = vunpack.c.h.b16 %v3267
    %v3337 = vunpack.c.l.b16 %v3268
    %v3338 = vunpack.c.h.b16 %v3268
    %v3339 = vunpack.c.l.b16 %v3269
    %v3340 = vunpack.c.h.b16 %v3269
    %v3341 = vunpack.c.l.b16 %v3270
    %v3342 = vunpack.c.h.b16 %v3270
    %v3343 = vunpack.c.l.b16 %v3271
    %v3344 = vunpack.c.h.b16 %v3271
    %v3345 = vunpack.c.l.b16 %v3272
    %v3346 = vunpack.c.h.b16 %v3272
    %v3347 = vunpack.c.l.b16 %v3273
    %v3348 = vunpack.c.h.b16 %v3273
    %v3349 = vunpack.c.l.b16 %v3274
    %v3350 = vunpack.c.h.b16 %v3274
    %v3351 = vunpack.c.l.b16 %v3275
    %v3352 = vunpack.c.h.b16 %v3275
    %v3353 = vunpack.c.l.b16 %v3276
    %v3354 = vunpack.c.h.b16 %v3276
    %v3355 = vunpack.c.l.b16 %v3277
    %v3356 = vunpack.c.h.b16 %v3277
    %v3357 = vunpack.c.l.b16 %v3278
    %v3358 = vunpack.c.h.b16 %v3278
    %v3359 = vunpack.c.l.b16 %v3279
    %v3360 = vunpack.c.h.b16 %v3279
    %v3361 = vunpack.c.l.b16 %v3280
    %v3362 = vunpack.c.h.b16 %v3280
    %v3363 = vunpack.c.l.b16 %v3281
    %v3364 = vunpack.c.h.b16 %v3281
    %v3365 = vunpack.c.l.b16 %v3282
    %v3366 = vunpack.c.h.b16 %v3282
    %v3367 = vunpack.c.l.b16 %v3283
    %v3368 = vunpack.c.h.b16 %v3283
    %v3369 = vunpack.c.l.b16 %v3284
    %v3370 = vunpack.c.h.b16 %v3284
    %v3371 = vunpack.c.l.b16 %v3285
    %v3372 = vunpack.c.h.b16 %v3285
    %v3373 = vunpack.c.l.b16 %v3286
    %v3374 = vunpack.c.h.b16 %v3286
    %v3375 = vunpack.c.l.b16 %v3287
    %v3376 = vunpack.c.h.b16 %v3287
    %v3377 = vunpack.c.l.b16 %v3288
    %v3378 = vunpack.c.h.b16 %v3288
    %v3379 = vunpack.c.l.b16 %v3289
    %v3380 = vunpack.c.h.b16 %v3289
    %v3381 = vunpack.c.l.b16 %v3290
    %v3382 = vunpack.c.h.b16 %v3290
    %v3383 = vunpack.c.l.b16 %v3291
    %v3384 = vunpack.c.h.b16 %v3291
    %v3385 = vunpack.c.l.b16 %v3292
    %v3386 = vunpack.c.h.b16 %v3292
    %v3387 = vunpack.c.l.b16 %v3293
    %v3388 = vunpack.c.h.b16 %v3293
    %v3389 = vunpack.c.l.b16 %v3294
    %v3390 = vunpack.c.h.b16 %v3294
    %v3391 = vpack.c.b16 %v3329, %v3327
    %v3392 = vpack.c.b16 %v3330, %v3328
    %v3393 = vpack.c.b16 %v3333, %v3331
    %v3394 = vpack.c.b16 %v3334, %v3332
    %v3395 = vpack.c.b16 %v3337, %v3335
    %v3396 = vpack.c.b16 %v3338, %v3336
    %v3397 = vpack.c.b16 %v3341, %v3339
    %v3398 = vpack.c.b16 %v3342, %v3340
    %v3399 = vpack.c.b16 %v3345, %v3343
    %v3400 = vpack.c.b16 %v3346, %v3344
    %v3401 = vpack.c.b16 %v3349, %v3347
    %v3402 = vpack.c.b16 %v3350, %v3348
    %v3403 = vpack.c.b16 %v3353, %v3351
    %v3404 = vpack.c.b16 %v3354, %v3352
    %v3405 = vpack.c.b16 %v3357, %v3355
    %v3406 = vpack.c.b16 %v3358, %v3356
    %v3407 = vpack.c.b16 %v3361, %v3359
    %v3408 = vpack.c.b16 %v3362, %v3360
    %v3409 = vpack.c.b16 %v3365, %v3363
    %v3410 = vpack.c.b16 %v3366, %v3364
    %v3411 = vpack.c.b16 %v3369, %v3367
    %v3412 = vpack.c.b16 %v3370, %v3368
    %v3413 = vpack.c.b16 %v3373, %v3371
    %v3414 = vpack.c.b16 %v3374, %v3372
    %v3415 = vpack.c.b16 %v3377, %v3375
    %v3416 = vpack.c.b16 %v3378, %v3376
    %v3417 = vpack.c.b16 %v3381, %v3379
    %v3418 = vpack.c.b16 %v3382, %v3380
    %v3419 = vpack.c.b16 %v3385, %v3383
    %v3420 = vpack.c.b16 %v3386, %v3384
    %v3421 = vpack.c.b16 %v3389, %v3387
    %v3422 = vpack.c.b16 %v3390, %v3388
    %3455 = vmatprep.subr.bf16.mxu0 %v3392
    %3456 = vmatpush1.bf16.msra.mxu0 %v3391
    %3457 = vmatprep.subr.bf16.mxu0 %v3394
    %3458 = vmatpush1.bf16.msra.mxu0 %v3393
    %3459 = vmatprep.subr.bf16.mxu0 %v3396
    %3460 = vmatpush1.bf16.msra.mxu0 %v3395
    %3461 = vmatprep.subr.bf16.mxu0 %v3398
    %3462 = vmatpush1.bf16.msra.mxu0 %v3397
    %3463 = vmatprep.subr.bf16.mxu0 %v3400
    %3464 = vmatpush1.bf16.msra.mxu0 %v3399
    %3465 = vmatprep.subr.bf16.mxu0 %v3402
    %3466 = vmatpush1.bf16.msra.mxu0 %v3401
    %3467 = vmatprep.subr.bf16.mxu0 %v3404
    %3468 = vmatpush1.bf16.msra.mxu0 %v3403
    %3469 = vmatprep.subr.bf16.mxu0 %v3406
    %3470 = vmatpush1.bf16.msra.mxu0 %v3405
    %3471 = vmatprep.subr.bf16.mxu0 %v3408
    %3472 = vmatpush1.bf16.msra.mxu0 %v3407
    %3473 = vmatprep.subr.bf16.mxu0 %v3410
    %3474 = vmatpush1.bf16.msra.mxu0 %v3409
    %3475 = vmatprep.subr.bf16.mxu0 %v3412
    %3476 = vmatpush1.bf16.msra.mxu0 %v3411
    %3477 = vmatprep.subr.bf16.mxu0 %v3414
    %3478 = vmatpush1.bf16.msra.mxu0 %v3413
    %3479 = vmatprep.subr.bf16.mxu0 %v3416
    %3480 = vmatpush1.bf16.msra.mxu0 %v3415
    %3481 = vmatprep.subr.bf16.mxu0 %v3418
    %3482 = vmatpush1.bf16.msra.mxu0 %v3417
    %3483 = vmatprep.subr.bf16.mxu0 %v3420
    %3484 = vmatpush1.bf16.msra.mxu0 %v3419
    %3485 = vmatprep.subr.bf16.mxu0 %v3422
    %3486 = vmatpush1.bf16.msra.mxu0 %v3421
    %3487 = vmatprep.mubr.bf16.mxu0 %v3022
    %3488 = vmatmul.mubr.bf16.gmra.mrb[0].mxu0 %v3021
    %v3489 = vpop.f32.mrb[0].mxu0
    %v3490 = vadd.f32 0.0, %v3489
    %v3491 = vpop.f32.mrb[0].mxu0
    %v3492 = vadd.f32 0.0, %v3491
    %v3493 = vpop.f32.mrb[0].mxu0
    %v3494 = vadd.f32 0.0, %v3493
    %v3495 = vpop.f32.mrb[0].mxu0
    %v3496 = vadd.f32 0.0, %v3495
    %3497 = vdwg.mxu0
    %s3498 = scalar_lea.vmem %s12, 32
    %v3499 = vld [vmem:[%s3498] sm:$0xff]
    %v3500 = vld [vmem:[%s3498 + $0x8] sm:$0xff]
    %v3501 = vld [vmem:[%s3498 + $0x10] sm:$0xff]
    %v3502 = vld [vmem:[%s3498 + $0x18] sm:$0xff]
    %v3504 = vsel %vm153, %v3499, 0
    %v3507 = vsel %vm153, %v3500, 0
    %v3510 = vsel %vm153, %v3501, 0
    %v3513 = vsel %vm153, %v3502, 0
    %3515 = vmatprep.subr.mxu0 %v3492
    %3516 = vmatpush1.msra.mxu0 %v3490
    %3517 = vmatprep.subr.mxu0 %v3496
    %3518 = vmatpush1.msra.mxu0 %v3494
    %3519 = vmatprep.subr.mxu0 0.0
    %3520 = vmatpush1.msra.mxu0 0.0
    %3521 = vmatprep.subr.mxu0 0.0
    %3522 = vmatpush1.msra.mxu0 0.0
    %3523 = vmatprep.subr.mxu0 0.0
    %3524 = vmatpush1.msra.mxu0 0.0
    %3525 = vmatprep.subr.mxu0 0.0
    %3526 = vmatpush1.msra.mxu0 0.0
    %3527 = vmatprep.subr.mxu0 0.0
    %3528 = vmatpush1.msra.mxu0 0.0
    %3529 = vmatprep.subr.mxu0 0.0
    %3530 = vmatpush1.msra.mxu0 0.0
    %3531 = vmatprep.subr.mxu0 0.0
    %3532 = vmatpush1.msra.mxu0 0.0
    %3533 = vmatprep.subr.mxu0 0.0
    %3534 = vmatpush1.msra.mxu0 0.0
    %3535 = vmatprep.subr.mxu0 0.0
    %3536 = vmatpush1.msra.mxu0 0.0
    %3537 = vmatprep.subr.mxu0 0.0
    %3538 = vmatpush1.msra.mxu0 0.0
    %3539 = vmatprep.subr.mxu0 0.0
    %3540 = vmatpush1.msra.mxu0 0.0
    %3541 = vmatprep.subr.mxu0 0.0
    %3542 = vmatpush1.msra.mxu0 0.0
    %3543 = vmatprep.subr.mxu0 0.0
    %3544 = vmatpush1.msra.mxu0 0.0
    %3545 = vmatprep.subr.mxu0 0.0
    %3546 = vmatpush1.msra.mxu0 0.0
    %3547 = vmatprep.subr.mxu0 0.0
    %3548 = vmatpush1.msra.mxu0 0.0
    %3549 = vmatprep.subr.mxu0 0.0
    %3550 = vmatpush1.msra.mxu0 0.0
    %3551 = vmatprep.subr.mxu0 0.0
    %3552 = vmatpush1.msra.mxu0 0.0
    %3553 = vmatprep.subr.mxu0 0.0
    %3554 = vmatpush1.msra.mxu0 0.0
    %3555 = vmatprep.subr.mxu0 0.0
    %3556 = vmatpush1.msra.mxu0 0.0
    %3557 = vmatprep.subr.mxu0 0.0
    %3558 = vmatpush1.msra.mxu0 0.0
    %3559 = vmatprep.subr.mxu0 0.0
    %3560 = vmatpush1.msra.mxu0 0.0
    %3561 = vmatprep.subr.mxu0 0.0
    %3562 = vmatpush1.msra.mxu0 0.0
    %3563 = vmatprep.subr.mxu0 0.0
    %3564 = vmatpush1.msra.mxu0 0.0
    %3565 = vmatprep.subr.mxu0 0.0
    %3566 = vmatpush1.msra.mxu0 0.0
    %3567 = vmatprep.subr.mxu0 0.0
    %3568 = vmatpush1.msra.mxu0 0.0
    %3569 = vmatprep.subr.mxu0 0.0
    %3570 = vmatpush1.msra.mxu0 0.0
    %3571 = vmatprep.subr.mxu0 0.0
    %3572 = vmatpush1.msra.mxu0 0.0
    %3573 = vmatprep.subr.mxu0 0.0
    %3574 = vmatpush1.msra.mxu0 0.0
    %3575 = vmatprep.subr.mxu0 0.0
    %3576 = vmatpush1.msra.mxu0 0.0
    %3577 = vmatprep.subr.mxu0 0.0
    %3578 = vmatpush1.msra.mxu0 0.0
    %3579 = vmatprep.mubr.f32.mxu0 0.0
    %3580 = vmatmul.mubr.f32.gmra.mrb[0].mxu0 %v3504
    %v3581 = vpop.f32.mrb[0].mxu0
    %v3582 = vadd.f32 0.0, %v3581
    %v3583 = vpop.f32.mrb[0].mxu0
    %v3584 = vadd.f32 0.0, %v3583
    %3585 = vmatprep.mubr.f32.mxu0 0.0
    %3586 = vmatmul.mubr.f32.gmra.mrb[0].mxu0 %v3507
    %v3587 = vpop.f32.mrb[0].mxu0
    %v3588 = vadd.f32 0.0, %v3587
    %v3589 = vpop.f32.mrb[0].mxu0
    %v3590 = vadd.f32 0.0, %v3589
    %3591 = vmatprep.mubr.f32.mxu0 0.0
    %3592 = vmatmul.mubr.f32.gmra.mrb[0].mxu0 %v3510
    %v3593 = vpop.f32.mrb[0].mxu0
    %v3594 = vadd.f32 0.0, %v3593
    %v3595 = vpop.f32.mrb[0].mxu0
    %v3596 = vadd.f32 0.0, %v3595
    %3597 = vmatprep.mubr.f32.mxu0 0.0
    %3598 = vmatmul.mubr.f32.gmra.mrb[0].mxu0 %v3513
    %v3599 = vpop.f32.mrb[0].mxu0
    %v3600 = vadd.f32 0.0, %v3599
    %v3601 = vpop.f32.mrb[0].mxu0
    %v3602 = vadd.f32 0.0, %v3601
    %3603 = vdwg.mxu0
    %v3605 = vsel %vm153, %v3258, 0
    %v3608 = vsel %vm153, %v3259, 0
    %v3611 = vsel %vm153, %v3260, 0
    %v3614 = vsel %vm153, %v3261, 0
    %3616 = vmatprep.subr.mxu0 %v3252
    %3617 = vmatpush1.msra.mxu0 %v3250
    %3618 = vmatprep.subr.mxu0 %v3256
    %3619 = vmatpush1.msra.mxu0 %v3254
    %3620 = vmatprep.subr.mxu0 0.0
    %3621 = vmatpush1.msra.mxu0 0.0
    %3622 = vmatprep.subr.mxu0 0.0
    %3623 = vmatpush1.msra.mxu0 0.0
    %3624 = vmatprep.subr.mxu0 0.0
    %3625 = vmatpush1.msra.mxu0 0.0
    %3626 = vmatprep.subr.mxu0 0.0
    %3627 = vmatpush1.msra.mxu0 0.0
    %3628 = vmatprep.subr.mxu0 0.0
    %3629 = vmatpush1.msra.mxu0 0.0
    %3630 = vmatprep.subr.mxu0 0.0
    %3631 = vmatpush1.msra.mxu0 0.0
    %3632 = vmatprep.subr.mxu0 0.0
    %3633 = vmatpush1.msra.mxu0 0.0
    %3634 = vmatprep.subr.mxu0 0.0
    %3635 = vmatpush1.msra.mxu0 0.0
    %3636 = vmatprep.subr.mxu0 0.0
    %3637 = vmatpush1.msra.mxu0 0.0
    %3638 = vmatprep.subr.mxu0 0.0
    %3639 = vmatpush1.msra.mxu0 0.0
    %3640 = vmatprep.subr.mxu0 0.0
    %3641 = vmatpush1.msra.mxu0 0.0
    %3642 = vmatprep.subr.mxu0 0.0
    %3643 = vmatpush1.msra.mxu0 0.0
    %3644 = vmatprep.subr.mxu0 0.0
    %3645 = vmatpush1.msra.mxu0 0.0
    %3646 = vmatprep.subr.mxu0 0.0
    %3647 = vmatpush1.msra.mxu0 0.0
    %3648 = vmatprep.subr.mxu0 0.0
    %3649 = vmatpush1.msra.mxu0 0.0
    %3650 = vmatprep.subr.mxu0 0.0
    %3651 = vmatpush1.msra.mxu0 0.0
    %3652 = vmatprep.subr.mxu0 0.0
    %3653 = vmatpush1.msra.mxu0 0.0
    %3654 = vmatprep.subr.mxu0 0.0
    %3655 = vmatpush1.msra.mxu0 0.0
    %3656 = vmatprep.subr.mxu0 0.0
    %3657 = vmatpush1.msra.mxu0 0.0
    %3658 = vmatprep.subr.mxu0 0.0
    %3659 = vmatpush1.msra.mxu0 0.0
    %3660 = vmatprep.subr.mxu0 0.0
    %3661 = vmatpush1.msra.mxu0 0.0
    %3662 = vmatprep.subr.mxu0 0.0
    %3663 = vmatpush1.msra.mxu0 0.0
    %3664 = vmatprep.subr.mxu0 0.0
    %3665 = vmatpush1.msra.mxu0 0.0
    %3666 = vmatprep.subr.mxu0 0.0
    %3667 = vmatpush1.msra.mxu0 0.0
    %3668 = vmatprep.subr.mxu0 0.0
    %3669 = vmatpush1.msra.mxu0 0.0
    %3670 = vmatprep.subr.mxu0 0.0
    %3671 = vmatpush1.msra.mxu0 0.0
    %3672 = vmatprep.subr.mxu0 0.0
    %3673 = vmatpush1.msra.mxu0 0.0
    %3674 = vmatprep.subr.mxu0 0.0
    %3675 = vmatpush1.msra.mxu0 0.0
    %3676 = vmatprep.subr.mxu0 0.0
    %3677 = vmatpush1.msra.mxu0 0.0
    %3678 = vmatprep.subr.mxu0 0.0
    %3679 = vmatpush1.msra.mxu0 0.0
    %3680 = vmatprep.mubr.f32.mxu0 0.0
    %3681 = vmatmul.mubr.f32.gmra.mrb[0].mxu0 %v3605
    %v3682 = vpop.f32.mrb[0].mxu0
    %v3683 = vadd.f32 %v3582, %v3682
    %v3684 = vpop.f32.mrb[0].mxu0
    %v3685 = vadd.f32 %v3584, %v3684
    %3686 = vmatprep.mubr.f32.mxu0 0.0
    %3687 = vmatmul.mubr.f32.gmra.mrb[0].mxu0 %v3608
    %v3688 = vpop.f32.mrb[0].mxu0
    %v3689 = vadd.f32 %v3588, %v3688
    %v3690 = vpop.f32.mrb[0].mxu0
    %v3691 = vadd.f32 %v3590, %v3690
    %3692 = vmatprep.mubr.f32.mxu0 0.0
    %3693 = vmatmul.mubr.f32.gmra.mrb[0].mxu0 %v3611
    %v3694 = vpop.f32.mrb[0].mxu0
    %v3695 = vadd.f32 %v3594, %v3694
    %v3696 = vpop.f32.mrb[0].mxu0
    %v3697 = vadd.f32 %v3596, %v3696
    %3698 = vmatprep.mubr.f32.mxu0 0.0
    %3699 = vmatmul.mubr.f32.gmra.mrb[0].mxu0 %v3614
    %v3700 = vpop.f32.mrb[0].mxu0
    %v3701 = vadd.f32 %v3600, %v3700
    %v3702 = vpop.f32.mrb[0].mxu0
    %v3703 = vadd.f32 %v3602, %v3702
    %3704 = vdwg.mxu0
    %s3705 = scalar_lea.vmem %s11, 512
    %v3706 = vld [vmem:[%s3705] sm:$0xff]
    %v3707 = vld [vmem:[%s3705 + $0x8] sm:$0xff]
    %v3708 = vld [vmem:[%s3705 + $0x10] sm:$0xff]
    %v3709 = vld [vmem:[%s3705 + $0x18] sm:$0xff]
    %v3710 = vld [vmem:[%s3705 + $0x20] sm:$0xff]
    %v3711 = vld [vmem:[%s3705 + $0x28] sm:$0xff]
    %v3712 = vld [vmem:[%s3705 + $0x30] sm:$0xff]
    %v3713 = vld [vmem:[%s3705 + $0x38] sm:$0xff]
    %v3714 = vld [vmem:[%s3705 + $0x40] sm:$0xff]
    %v3715 = vld [vmem:[%s3705 + $0x48] sm:$0xff]
    %v3716 = vld [vmem:[%s3705 + $0x50] sm:$0xff]
    %v3717 = vld [vmem:[%s3705 + $0x58] sm:$0xff]
    %v3718 = vld [vmem:[%s3705 + $0x60] sm:$0xff]
    %v3719 = vld [vmem:[%s3705 + $0x68] sm:$0xff]
    %v3720 = vld [vmem:[%s3705 + $0x70] sm:$0xff]
    %v3721 = vld [vmem:[%s3705 + $0x78] sm:$0xff]
    %v3722 = vld [vmem:[%s3705 + $0x80] sm:$0xff]
    %v3723 = vld [vmem:[%s3705 + $0x88] sm:$0xff]
    %v3724 = vld [vmem:[%s3705 + $0x90] sm:$0xff]
    %v3725 = vld [vmem:[%s3705 + $0x98] sm:$0xff]
    %v3726 = vld [vmem:[%s3705 + $0xa0] sm:$0xff]
    %v3727 = vld [vmem:[%s3705 + $0xa8] sm:$0xff]
    %v3728 = vld [vmem:[%s3705 + $0xb0] sm:$0xff]
    %v3729 = vld [vmem:[%s3705 + $0xb8] sm:$0xff]
    %v3730 = vld [vmem:[%s3705 + $0xc0] sm:$0xff]
    %v3731 = vld [vmem:[%s3705 + $0xc8] sm:$0xff]
    %v3732 = vld [vmem:[%s3705 + $0xd0] sm:$0xff]
    %v3733 = vld [vmem:[%s3705 + $0xd8] sm:$0xff]
    %v3734 = vld [vmem:[%s3705 + $0xe0] sm:$0xff]
    %v3735 = vld [vmem:[%s3705 + $0xe8] sm:$0xff]
    %v3736 = vld [vmem:[%s3705 + $0xf0] sm:$0xff]
    %v3737 = vld [vmem:[%s3705 + $0xf8] sm:$0xff]
    %v3770 = vunpack.c.l.b16 %v3706
    %v3771 = vunpack.c.h.b16 %v3706
    %v3772 = vunpack.c.l.b16 %v3707
    %v3773 = vunpack.c.h.b16 %v3707
    %v3774 = vunpack.c.l.b16 %v3708
    %v3775 = vunpack.c.h.b16 %v3708
    %v3776 = vunpack.c.l.b16 %v3709
    %v3777 = vunpack.c.h.b16 %v3709
    %v3778 = vunpack.c.l.b16 %v3710
    %v3779 = vunpack.c.h.b16 %v3710
    %v3780 = vunpack.c.l.b16 %v3711
    %v3781 = vunpack.c.h.b16 %v3711
    %v3782 = vunpack.c.l.b16 %v3712
    %v3783 = vunpack.c.h.b16 %v3712
    %v3784 = vunpack.c.l.b16 %v3713
    %v3785 = vunpack.c.h.b16 %v3713
    %v3786 = vunpack.c.l.b16 %v3714
    %v3787 = vunpack.c.h.b16 %v3714
    %v3788 = vunpack.c.l.b16 %v3715
    %v3789 = vunpack.c.h.b16 %v3715
    %v3790 = vunpack.c.l.b16 %v3716
    %v3791 = vunpack.c.h.b16 %v3716
    %v3792 = vunpack.c.l.b16 %v3717
    %v3793 = vunpack.c.h.b16 %v3717
    %v3794 = vunpack.c.l.b16 %v3718
    %v3795 = vunpack.c.h.b16 %v3718
    %v3796 = vunpack.c.l.b16 %v3719
    %v3797 = vunpack.c.h.b16 %v3719
    %v3798 = vunpack.c.l.b16 %v3720
    %v3799 = vunpack.c.h.b16 %v3720
    %v3800 = vunpack.c.l.b16 %v3721
    %v3801 = vunpack.c.h.b16 %v3721
    %v3802 = vunpack.c.l.b16 %v3722
    %v3803 = vunpack.c.h.b16 %v3722
    %v3804 = vunpack.c.l.b16 %v3723
    %v3805 = vunpack.c.h.b16 %v3723
    %v3806 = vunpack.c.l.b16 %v3724
    %v3807 = vunpack.c.h.b16 %v3724
    %v3808 = vunpack.c.l.b16 %v3725
    %v3809 = vunpack.c.h.b16 %v3725
    %v3810 = vunpack.c.l.b16 %v3726
    %v3811 = vunpack.c.h.b16 %v3726
    %v3812 = vunpack.c.l.b16 %v3727
    %v3813 = vunpack.c.h.b16 %v3727
    %v3814 = vunpack.c.l.b16 %v3728
    %v3815 = vunpack.c.h.b16 %v3728
    %v3816 = vunpack.c.l.b16 %v3729
    %v3817 = vunpack.c.h.b16 %v3729
    %v3818 = vunpack.c.l.b16 %v3730
    %v3819 = vunpack.c.h.b16 %v3730
    %v3820 = vunpack.c.l.b16 %v3731
    %v3821 = vunpack.c.h.b16 %v3731
    %v3822 = vunpack.c.l.b16 %v3732
    %v3823 = vunpack.c.h.b16 %v3732
    %v3824 = vunpack.c.l.b16 %v3733
    %v3825 = vunpack.c.h.b16 %v3733
    %v3826 = vunpack.c.l.b16 %v3734
    %v3827 = vunpack.c.h.b16 %v3734
    %v3828 = vunpack.c.l.b16 %v3735
    %v3829 = vunpack.c.h.b16 %v3735
    %v3830 = vunpack.c.l.b16 %v3736
    %v3831 = vunpack.c.h.b16 %v3736
    %v3832 = vunpack.c.l.b16 %v3737
    %v3833 = vunpack.c.h.b16 %v3737
    %v3834 = vpack.c.b16 %v3772, %v3770
    %v3835 = vpack.c.b16 %v3773, %v3771
    %v3836 = vpack.c.b16 %v3776, %v3774
    %v3837 = vpack.c.b16 %v3777, %v3775
    %v3838 = vpack.c.b16 %v3780, %v3778
    %v3839 = vpack.c.b16 %v3781, %v3779
    %v3840 = vpack.c.b16 %v3784, %v3782
    %v3841 = vpack.c.b16 %v3785, %v3783
    %v3842 = vpack.c.b16 %v3788, %v3786
    %v3843 = vpack.c.b16 %v3789, %v3787
    %v3844 = vpack.c.b16 %v3792, %v3790
    %v3845 = vpack.c.b16 %v3793, %v3791
    %v3846 = vpack.c.b16 %v3796, %v3794
    %v3847 = vpack.c.b16 %v3797, %v3795
    %v3848 = vpack.c.b16 %v3800, %v3798
    %v3849 = vpack.c.b16 %v3801, %v3799
    %v3850 = vpack.c.b16 %v3804, %v3802
    %v3851 = vpack.c.b16 %v3805, %v3803
    %v3852 = vpack.c.b16 %v3808, %v3806
    %v3853 = vpack.c.b16 %v3809, %v3807
    %v3854 = vpack.c.b16 %v3812, %v3810
    %v3855 = vpack.c.b16 %v3813, %v3811
    %v3856 = vpack.c.b16 %v3816, %v3814
    %v3857 = vpack.c.b16 %v3817, %v3815
    %v3858 = vpack.c.b16 %v3820, %v3818
    %v3859 = vpack.c.b16 %v3821, %v3819
    %v3860 = vpack.c.b16 %v3824, %v3822
    %v3861 = vpack.c.b16 %v3825, %v3823
    %v3862 = vpack.c.b16 %v3828, %v3826
    %v3863 = vpack.c.b16 %v3829, %v3827
    %v3864 = vpack.c.b16 %v3832, %v3830
    %v3865 = vpack.c.b16 %v3833, %v3831
    %3898 = vmatprep.subr.bf16.mxu0 %v3835
    %3899 = vmatpush1.bf16.msra.mxu0 %v3834
    %3900 = vmatprep.subr.bf16.mxu0 %v3837
    %3901 = vmatpush1.bf16.msra.mxu0 %v3836
    %3902 = vmatprep.subr.bf16.mxu0 %v3839
    %3903 = vmatpush1.bf16.msra.mxu0 %v3838
    %3904 = vmatprep.subr.bf16.mxu0 %v3841
    %3905 = vmatpush1.bf16.msra.mxu0 %v3840
    %3906 = vmatprep.subr.bf16.mxu0 %v3843
    %3907 = vmatpush1.bf16.msra.mxu0 %v3842
    %3908 = vmatprep.subr.bf16.mxu0 %v3845
    %3909 = vmatpush1.bf16.msra.mxu0 %v3844
    %3910 = vmatprep.subr.bf16.mxu0 %v3847
    %3911 = vmatpush1.bf16.msra.mxu0 %v3846
    %3912 = vmatprep.subr.bf16.mxu0 %v3849
    %3913 = vmatpush1.bf16.msra.mxu0 %v3848
    %3914 = vmatprep.subr.bf16.mxu0 %v3851
    %3915 = vmatpush1.bf16.msra.mxu0 %v3850
    %3916 = vmatprep.subr.bf16.mxu0 %v3853
    %3917 = vmatpush1.bf16.msra.mxu0 %v3852
    %3918 = vmatprep.subr.bf16.mxu0 %v3855
    %3919 = vmatpush1.bf16.msra.mxu0 %v3854
    %3920 = vmatprep.subr.bf16.mxu0 %v3857
    %3921 = vmatpush1.bf16.msra.mxu0 %v3856
    %3922 = vmatprep.subr.bf16.mxu0 %v3859
    %3923 = vmatpush1.bf16.msra.mxu0 %v3858
    %3924 = vmatprep.subr.bf16.mxu0 %v3861
    %3925 = vmatpush1.bf16.msra.mxu0 %v3860
    %3926 = vmatprep.subr.bf16.mxu0 %v3863
    %3927 = vmatpush1.bf16.msra.mxu0 %v3862
    %3928 = vmatprep.subr.bf16.mxu0 %v3865
    %3929 = vmatpush1.bf16.msra.mxu0 %v3864
    %3930 = vmatprep.mubr.bf16.mxu0 %v3022
    %3931 = vmatmul.mubr.bf16.gmra.mrb[0].mxu0 %v3021
    %v3932 = vpop.f32.mrb[0].mxu0
    %v3933 = vadd.f32 0.0, %v3932
    %v3934 = vpop.f32.mrb[0].mxu0
    %v3935 = vadd.f32 0.0, %v3934
    %v3936 = vpop.f32.mrb[0].mxu0
    %v3937 = vadd.f32 0.0, %v3936
    %v3938 = vpop.f32.mrb[0].mxu0
    %v3939 = vadd.f32 0.0, %v3938
    %3940 = vdwg.mxu0
    %s3941 = scalar_lea.vmem %s12, 64
    %v3942 = vld [vmem:[%s3941] sm:$0xff]
    %v3943 = vld [vmem:[%s3941 + $0x8] sm:$0xff]
    %v3944 = vld [vmem:[%s3941 + $0x10] sm:$0xff]
    %v3945 = vld [vmem:[%s3941 + $0x18] sm:$0xff]
    %v3947 = vsel %vm153, %v3942, 0
    %v3950 = vsel %vm153, %v3943, 0
    %v3953 = vsel %vm153, %v3944, 0
    %v3956 = vsel %vm153, %v3945, 0
    %3958 = vmatprep.subr.mxu0 %v3935
    %3959 = vmatpush1.msra.mxu0 %v3933
    %3960 = vmatprep.subr.mxu0 %v3939
    %3961 = vmatpush1.msra.mxu0 %v3937
    %3962 = vmatprep.subr.mxu0 0.0
    %3963 = vmatpush1.msra.mxu0 0.0
    %3964 = vmatprep.subr.mxu0 0.0
    %3965 = vmatpush1.msra.mxu0 0.0
    %3966 = vmatprep.subr.mxu0 0.0
    %3967 = vmatpush1.msra.mxu0 0.0
    %3968 = vmatprep.subr.mxu0 0.0
    %3969 = vmatpush1.msra.mxu0 0.0
    %3970 = vmatprep.subr.mxu0 0.0
    %3971 = vmatpush1.msra.mxu0 0.0
    %3972 = vmatprep.subr.mxu0 0.0
    %3973 = vmatpush1.msra.mxu0 0.0
    %3974 = vmatprep.subr.mxu0 0.0
    %3975 = vmatpush1.msra.mxu0 0.0
    %3976 = vmatprep.subr.mxu0 0.0
    %3977 = vmatpush1.msra.mxu0 0.0
    %3978 = vmatprep.subr.mxu0 0.0
    %3979 = vmatpush1.msra.mxu0 0.0
    %3980 = vmatprep.subr.mxu0 0.0
    %3981 = vmatpush1.msra.mxu0 0.0
    %3982 = vmatprep.subr.mxu0 0.0
    %3983 = vmatpush1.msra.mxu0 0.0
    %3984 = vmatprep.subr.mxu0 0.0
    %3985 = vmatpush1.msra.mxu0 0.0
    %3986 = vmatprep.subr.mxu0 0.0
    %3987 = vmatpush1.msra.mxu0 0.0
    %3988 = vmatprep.subr.mxu0 0.0
    %3989 = vmatpush1.msra.mxu0 0.0
    %3990 = vmatprep.subr.mxu0 0.0
    %3991 = vmatpush1.msra.mxu0 0.0
    %3992 = vmatprep.subr.mxu0 0.0
    %3993 = vmatpush1.msra.mxu0 0.0
    %3994 = vmatprep.subr.mxu0 0.0
    %3995 = vmatpush1.msra.mxu0 0.0
    %3996 = vmatprep.subr.mxu0 0.0
    %3997 = vmatpush1.msra.mxu0 0.0
    %3998 = vmatprep.subr.mxu0 0.0
    %3999 = vmatpush1.msra.mxu0 0.0
    %4000 = vmatprep.subr.mxu0 0.0
    %4001 = vmatpush1.msra.mxu0 0.0
    %4002 = vmatprep.subr.mxu0 0.0
    %4003 = vmatpush1.msra.mxu0 0.0
    %4004 = vmatprep.subr.mxu0 0.0
    %4005 = vmatpush1.msra.mxu0 0.0
    %4006 = vmatprep.subr.mxu0 0.0
    %4007 = vmatpush1.msra.mxu0 0.0
    %4008 = vmatprep.subr.mxu0 0.0
    %4009 = vmatpush1.msra.mxu0 0.0
    %4010 = vmatprep.subr.mxu0 0.0
    %4011 = vmatpush1.msra.mxu0 0.0
    %4012 = vmatprep.subr.mxu0 0.0
    %4013 = vmatpush1.msra.mxu0 0.0
    %4014 = vmatprep.subr.mxu0 0.0
    %4015 = vmatpush1.msra.mxu0 0.0
    %4016 = vmatprep.subr.mxu0 0.0
    %4017 = vmatpush1.msra.mxu0 0.0
    %4018 = vmatprep.subr.mxu0 0.0
    %4019 = vmatpush1.msra.mxu0 0.0
    %4020 = vmatprep.subr.mxu0 0.0
    %4021 = vmatpush1.msra.mxu0 0.0
    %4022 = vmatprep.mubr.f32.mxu0 0.0
    %4023 = vmatmul.mubr.f32.gmra.mrb[0].mxu0 %v3947
    %v4024 = vpop.f32.mrb[0].mxu0
    %v4025 = vadd.f32 0.0, %v4024
    %v4026 = vpop.f32.mrb[0].mxu0
    %v4027 = vadd.f32 0.0, %v4026
    %4028 = vmatprep.mubr.f32.mxu0 0.0
    %4029 = vmatmul.mubr.f32.gmra.mrb[0].mxu0 %v3950
    %v4030 = vpop.f32.mrb[0].mxu0
    %v4031 = vadd.f32 0.0, %v4030
    %v4032 = vpop.f32.mrb[0].mxu0
    %v4033 = vadd.f32 0.0, %v4032
    %4034 = vmatprep.mubr.f32.mxu0 0.0
    %4035 = vmatmul.mubr.f32.gmra.mrb[0].mxu0 %v3953
    %v4036 = vpop.f32.mrb[0].mxu0
    %v4037 = vadd.f32 0.0, %v4036
    %v4038 = vpop.f32.mrb[0].mxu0
    %v4039 = vadd.f32 0.0, %v4038
    %4040 = vmatprep.mubr.f32.mxu0 0.0
    %4041 = vmatmul.mubr.f32.gmra.mrb[0].mxu0 %v3956
    %v4042 = vpop.f32.mrb[0].mxu0
    %v4043 = vadd.f32 0.0, %v4042
    %v4044 = vpop.f32.mrb[0].mxu0
    %v4045 = vadd.f32 0.0, %v4044
    %4046 = vdwg.mxu0
    %v4047 = vadd.f32 %v3683, %v4025
    %v4048 = vadd.f32 %v3685, %v4027
    %v4049 = vadd.f32 %v3689, %v4031
    %v4050 = vadd.f32 %v3691, %v4033
    %v4051 = vadd.f32 %v3695, %v4037
    %v4052 = vadd.f32 %v3697, %v4039
    %v4053 = vadd.f32 %v3701, %v4043
    %v4054 = vadd.f32 %v3703, %v4045
    %s4055 = scalar_lea.vmem %s11, 768
    %v4056 = vld [vmem:[%s4055] sm:$0xff]
    %v4057 = vld [vmem:[%s4055 + $0x8] sm:$0xff]
    %v4058 = vld [vmem:[%s4055 + $0x10] sm:$0xff]
    %v4059 = vld [vmem:[%s4055 + $0x18] sm:$0xff]
    %v4060 = vld [vmem:[%s4055 + $0x20] sm:$0xff]
    %v4061 = vld [vmem:[%s4055 + $0x28] sm:$0xff]
    %v4062 = vld [vmem:[%s4055 + $0x30] sm:$0xff]
    %v4063 = vld [vmem:[%s4055 + $0x38] sm:$0xff]
    %v4064 = vld [vmem:[%s4055 + $0x40] sm:$0xff]
    %v4065 = vld [vmem:[%s4055 + $0x48] sm:$0xff]
    %v4066 = vld [vmem:[%s4055 + $0x50] sm:$0xff]
    %v4067 = vld [vmem:[%s4055 + $0x58] sm:$0xff]
    %v4068 = vld [vmem:[%s4055 + $0x60] sm:$0xff]
    %v4069 = vld [vmem:[%s4055 + $0x68] sm:$0xff]
    %v4070 = vld [vmem:[%s4055 + $0x70] sm:$0xff]
    %v4071 = vld [vmem:[%s4055 + $0x78] sm:$0xff]
    %v4072 = vld [vmem:[%s4055 + $0x80] sm:$0xff]
    %v4073 = vld [vmem:[%s4055 + $0x88] sm:$0xff]
    %v4074 = vld [vmem:[%s4055 + $0x90] sm:$0xff]
    %v4075 = vld [vmem:[%s4055 + $0x98] sm:$0xff]
    %v4076 = vld [vmem:[%s4055 + $0xa0] sm:$0xff]
    %v4077 = vld [vmem:[%s4055 + $0xa8] sm:$0xff]
    %v4078 = vld [vmem:[%s4055 + $0xb0] sm:$0xff]
    %v4079 = vld [vmem:[%s4055 + $0xb8] sm:$0xff]
    %v4080 = vld [vmem:[%s4055 + $0xc0] sm:$0xff]
    %v4081 = vld [vmem:[%s4055 + $0xc8] sm:$0xff]
    %v4082 = vld [vmem:[%s4055 + $0xd0] sm:$0xff]
    %v4083 = vld [vmem:[%s4055 + $0xd8] sm:$0xff]
    %v4084 = vld [vmem:[%s4055 + $0xe0] sm:$0xff]
    %v4085 = vld [vmem:[%s4055 + $0xe8] sm:$0xff]
    %v4086 = vld [vmem:[%s4055 + $0xf0] sm:$0xff]
    %v4087 = vld [vmem:[%s4055 + $0xf8] sm:$0xff]
    %v4120 = vunpack.c.l.b16 %v4056
    %v4121 = vunpack.c.h.b16 %v4056
    %v4122 = vunpack.c.l.b16 %v4057
    %v4123 = vunpack.c.h.b16 %v4057
    %v4124 = vunpack.c.l.b16 %v4058
    %v4125 = vunpack.c.h.b16 %v4058
    %v4126 = vunpack.c.l.b16 %v4059
    %v4127 = vunpack.c.h.b16 %v4059
    %v4128 = vunpack.c.l.b16 %v4060
    %v4129 = vunpack.c.h.b16 %v4060
    %v4130 = vunpack.c.l.b16 %v4061
    %v4131 = vunpack.c.h.b16 %v4061
    %v4132 = vunpack.c.l.b16 %v4062
    %v4133 = vunpack.c.h.b16 %v4062
    %v4134 = vunpack.c.l.b16 %v4063
    %v4135 = vunpack.c.h.b16 %v4063
    %v4136 = vunpack.c.l.b16 %v4064
    %v4137 = vunpack.c.h.b16 %v4064
    %v4138 = vunpack.c.l.b16 %v4065
    %v4139 = vunpack.c.h.b16 %v4065
    %v4140 = vunpack.c.l.b16 %v4066
    %v4141 = vunpack.c.h.b16 %v4066
    %v4142 = vunpack.c.l.b16 %v4067
    %v4143 = vunpack.c.h.b16 %v4067
    %v4144 = vunpack.c.l.b16 %v4068
    %v4145 = vunpack.c.h.b16 %v4068
    %v4146 = vunpack.c.l.b16 %v4069
    %v4147 = vunpack.c.h.b16 %v4069
    %v4148 = vunpack.c.l.b16 %v4070
    %v4149 = vunpack.c.h.b16 %v4070
    %v4150 = vunpack.c.l.b16 %v4071
    %v4151 = vunpack.c.h.b16 %v4071
    %v4152 = vunpack.c.l.b16 %v4072
    %v4153 = vunpack.c.h.b16 %v4072
    %v4154 = vunpack.c.l.b16 %v4073
    %v4155 = vunpack.c.h.b16 %v4073
    %v4156 = vunpack.c.l.b16 %v4074
    %v4157 = vunpack.c.h.b16 %v4074
    %v4158 = vunpack.c.l.b16 %v4075
    %v4159 = vunpack.c.h.b16 %v4075
    %v4160 = vunpack.c.l.b16 %v4076
    %v4161 = vunpack.c.h.b16 %v4076
    %v4162 = vunpack.c.l.b16 %v4077
    %v4163 = vunpack.c.h.b16 %v4077
    %v4164 = vunpack.c.l.b16 %v4078
    %v4165 = vunpack.c.h.b16 %v4078
    %v4166 = vunpack.c.l.b16 %v4079
    %v4167 = vunpack.c.h.b16 %v4079
    %v4168 = vunpack.c.l.b16 %v4080
    %v4169 = vunpack.c.h.b16 %v4080
    %v4170 = vunpack.c.l.b16 %v4081
    %v4171 = vunpack.c.h.b16 %v4081
    %v4172 = vunpack.c.l.b16 %v4082
    %v4173 = vunpack.c.h.b16 %v4082
    %v4174 = vunpack.c.l.b16 %v4083
    %v4175 = vunpack.c.h.b16 %v4083
    %v4176 = vunpack.c.l.b16 %v4084
    %v4177 = vunpack.c.h.b16 %v4084
    %v4178 = vunpack.c.l.b16 %v4085
    %v4179 = vunpack.c.h.b16 %v4085
    %v4180 = vunpack.c.l.b16 %v4086
    %v4181 = vunpack.c.h.b16 %v4086
    %v4182 = vunpack.c.l.b16 %v4087
    %v4183 = vunpack.c.h.b16 %v4087
    %v4184 = vpack.c.b16 %v4122, %v4120
    %v4185 = vpack.c.b16 %v4123, %v4121
    %v4186 = vpack.c.b16 %v4126, %v4124
    %v4187 = vpack.c.b16 %v4127, %v4125
    %v4188 = vpack.c.b16 %v4130, %v4128
    %v4189 = vpack.c.b16 %v4131, %v4129
    %v4190 = vpack.c.b16 %v4134, %v4132
    %v4191 = vpack.c.b16 %v4135, %v4133
    %v4192 = vpack.c.b16 %v4138, %v4136
    %v4193 = vpack.c.b16 %v4139, %v4137
    %v4194 = vpack.c.b16 %v4142, %v4140
    %v4195 = vpack.c.b16 %v4143, %v4141
    %v4196 = vpack.c.b16 %v4146, %v4144
    %v4197 = vpack.c.b16 %v4147, %v4145
    %v4198 = vpack.c.b16 %v4150, %v4148
    %v4199 = vpack.c.b16 %v4151, %v4149
    %v4200 = vpack.c.b16 %v4154, %v4152
    %v4201 = vpack.c.b16 %v4155, %v4153
    %v4202 = vpack.c.b16 %v4158, %v4156
    %v4203 = vpack.c.b16 %v4159, %v4157
    %v4204 = vpack.c.b16 %v4162, %v4160
    %v4205 = vpack.c.b16 %v4163, %v4161
    %v4206 = vpack.c.b16 %v4166, %v4164
    %v4207 = vpack.c.b16 %v4167, %v4165
    %v4208 = vpack.c.b16 %v4170, %v4168
    %v4209 = vpack.c.b16 %v4171, %v4169
    %v4210 = vpack.c.b16 %v4174, %v4172
    %v4211 = vpack.c.b16 %v4175, %v4173
    %v4212 = vpack.c.b16 %v4178, %v4176
    %v4213 = vpack.c.b16 %v4179, %v4177
    %v4214 = vpack.c.b16 %v4182, %v4180
    %v4215 = vpack.c.b16 %v4183, %v4181
    %4248 = vmatprep.subr.bf16.mxu0 %v4185
    %4249 = vmatpush1.bf16.msra.mxu0 %v4184
    %4250 = vmatprep.subr.bf16.mxu0 %v4187
    %4251 = vmatpush1.bf16.msra.mxu0 %v4186
    %4252 = vmatprep.subr.bf16.mxu0 %v4189
    %4253 = vmatpush1.bf16.msra.mxu0 %v4188
    %4254 = vmatprep.subr.bf16.mxu0 %v4191
    %4255 = vmatpush1.bf16.msra.mxu0 %v4190
    %4256 = vmatprep.subr.bf16.mxu0 %v4193
    %4257 = vmatpush1.bf16.msra.mxu0 %v4192
    %4258 = vmatprep.subr.bf16.mxu0 %v4195
    %4259 = vmatpush1.bf16.msra.mxu0 %v4194
    %4260 = vmatprep.subr.bf16.mxu0 %v4197
    %4261 = vmatpush1.bf16.msra.mxu0 %v4196
    %4262 = vmatprep.subr.bf16.mxu0 %v4199
    %4263 = vmatpush1.bf16.msra.mxu0 %v4198
    %4264 = vmatprep.subr.bf16.mxu0 %v4201
    %4265 = vmatpush1.bf16.msra.mxu0 %v4200
    %4266 = vmatprep.subr.bf16.mxu0 %v4203
    %4267 = vmatpush1.bf16.msra.mxu0 %v4202
    %4268 = vmatprep.subr.bf16.mxu0 %v4205
    %4269 = vmatpush1.bf16.msra.mxu0 %v4204
    %4270 = vmatprep.subr.bf16.mxu0 %v4207
    %4271 = vmatpush1.bf16.msra.mxu0 %v4206
    %4272 = vmatprep.subr.bf16.mxu0 %v4209
    %4273 = vmatpush1.bf16.msra.mxu0 %v4208
    %4274 = vmatprep.subr.bf16.mxu0 %v4211
    %4275 = vmatpush1.bf16.msra.mxu0 %v4210
    %4276 = vmatprep.subr.bf16.mxu0 %v4213
    %4277 = vmatpush1.bf16.msra.mxu0 %v4212
    %4278 = vmatprep.subr.bf16.mxu0 %v4215
    %4279 = vmatpush1.bf16.msra.mxu0 %v4214
    %4280 = vmatprep.mubr.bf16.mxu0 %v3022
    %4281 = vmatmul.mubr.bf16.gmra.mrb[0].mxu0 %v3021
    %v4282 = vpop.f32.mrb[0].mxu0
    %v4283 = vadd.f32 0.0, %v4282
    %v4284 = vpop.f32.mrb[0].mxu0
    %v4285 = vadd.f32 0.0, %v4284
    %v4286 = vpop.f32.mrb[0].mxu0
    %v4287 = vadd.f32 0.0, %v4286
    %v4288 = vpop.f32.mrb[0].mxu0
    %v4289 = vadd.f32 0.0, %v4288
    %4290 = vdwg.mxu0
    %s4291 = scalar_lea.vmem %s12, 96
    %v4292 = vld [vmem:[%s4291] sm:$0xff]
    %v4293 = vld [vmem:[%s4291 + $0x8] sm:$0xff]
    %v4294 = vld [vmem:[%s4291 + $0x10] sm:$0xff]
    %v4295 = vld [vmem:[%s4291 + $0x18] sm:$0xff]
    %v4297 = vsel %vm153, %v4292, 0
    %v4300 = vsel %vm153, %v4293, 0
    %v4303 = vsel %vm153, %v4294, 0
    %v4306 = vsel %vm153, %v4295, 0
    %4308 = vmatprep.subr.mxu0 %v4285
    %4309 = vmatpush1.msra.mxu0 %v4283
    %4310 = vmatprep.subr.mxu0 %v4289
    %4311 = vmatpush1.msra.mxu0 %v4287
    %4312 = vmatprep.subr.mxu0 0.0
    %4313 = vmatpush1.msra.mxu0 0.0
    %4314 = vmatprep.subr.mxu0 0.0
    %4315 = vmatpush1.msra.mxu0 0.0
    %4316 = vmatprep.subr.mxu0 0.0
    %4317 = vmatpush1.msra.mxu0 0.0
    %4318 = vmatprep.subr.mxu0 0.0
    %4319 = vmatpush1.msra.mxu0 0.0
    %4320 = vmatprep.subr.mxu0 0.0
    %4321 = vmatpush1.msra.mxu0 0.0
    %4322 = vmatprep.subr.mxu0 0.0
    %4323 = vmatpush1.msra.mxu0 0.0
    %4324 = vmatprep.subr.mxu0 0.0
    %4325 = vmatpush1.msra.mxu0 0.0
    %4326 = vmatprep.subr.mxu0 0.0
    %4327 = vmatpush1.msra.mxu0 0.0
    %4328 = vmatprep.subr.mxu0 0.0
    %4329 = vmatpush1.msra.mxu0 0.0
    %4330 = vmatprep.subr.mxu0 0.0
    %4331 = vmatpush1.msra.mxu0 0.0
    %4332 = vmatprep.subr.mxu0 0.0
    %4333 = vmatpush1.msra.mxu0 0.0
    %4334 = vmatprep.subr.mxu0 0.0
    %4335 = vmatpush1.msra.mxu0 0.0
    %4336 = vmatprep.subr.mxu0 0.0
    %4337 = vmatpush1.msra.mxu0 0.0
    %4338 = vmatprep.subr.mxu0 0.0
    %4339 = vmatpush1.msra.mxu0 0.0
    %4340 = vmatprep.subr.mxu0 0.0
    %4341 = vmatpush1.msra.mxu0 0.0
    %4342 = vmatprep.subr.mxu0 0.0
    %4343 = vmatpush1.msra.mxu0 0.0
    %4344 = vmatprep.subr.mxu0 0.0
    %4345 = vmatpush1.msra.mxu0 0.0
    %4346 = vmatprep.subr.mxu0 0.0
    %4347 = vmatpush1.msra.mxu0 0.0
    %4348 = vmatprep.subr.mxu0 0.0
    %4349 = vmatpush1.msra.mxu0 0.0
    %4350 = vmatprep.subr.mxu0 0.0
    %4351 = vmatpush1.msra.mxu0 0.0
    %4352 = vmatprep.subr.mxu0 0.0
    %4353 = vmatpush1.msra.mxu0 0.0
    %4354 = vmatprep.subr.mxu0 0.0
    %4355 = vmatpush1.msra.mxu0 0.0
    %4356 = vmatprep.subr.mxu0 0.0
    %4357 = vmatpush1.msra.mxu0 0.0
    %4358 = vmatprep.subr.mxu0 0.0
    %4359 = vmatpush1.msra.mxu0 0.0
    %4360 = vmatprep.subr.mxu0 0.0
    %4361 = vmatpush1.msra.mxu0 0.0
    %4362 = vmatprep.subr.mxu0 0.0
    %4363 = vmatpush1.msra.mxu0 0.0
    %4364 = vmatprep.subr.mxu0 0.0
    %4365 = vmatpush1.msra.mxu0 0.0
    %4366 = vmatprep.subr.mxu0 0.0
    %4367 = vmatpush1.msra.mxu0 0.0
    %4368 = vmatprep.subr.mxu0 0.0
    %4369 = vmatpush1.msra.mxu0 0.0
    %4370 = vmatprep.subr.mxu0 0.0
    %4371 = vmatpush1.msra.mxu0 0.0
    %4372 = vmatprep.mubr.f32.mxu0 0.0
    %4373 = vmatmul.mubr.f32.gmra.mrb[0].mxu0 %v4297
    %v4374 = vpop.f32.mrb[0].mxu0
    %v4375 = vadd.f32 0.0, %v4374
    %v4376 = vpop.f32.mrb[0].mxu0
    %v4377 = vadd.f32 0.0, %v4376
    %4378 = vmatprep.mubr.f32.mxu0 0.0
    %4379 = vmatmul.mubr.f32.gmra.mrb[0].mxu0 %v4300
    %v4380 = vpop.f32.mrb[0].mxu0
    %v4381 = vadd.f32 0.0, %v4380
    %v4382 = vpop.f32.mrb[0].mxu0
    %v4383 = vadd.f32 0.0, %v4382
    %4384 = vmatprep.mubr.f32.mxu0 0.0
    %4385 = vmatmul.mubr.f32.gmra.mrb[0].mxu0 %v4303
    %v4386 = vpop.f32.mrb[0].mxu0
    %v4387 = vadd.f32 0.0, %v4386
    %v4388 = vpop.f32.mrb[0].mxu0
    %v4389 = vadd.f32 0.0, %v4388
    %4390 = vmatprep.mubr.f32.mxu0 0.0
    %4391 = vmatmul.mubr.f32.gmra.mrb[0].mxu0 %v4306
    %v4392 = vpop.f32.mrb[0].mxu0
    %v4393 = vadd.f32 0.0, %v4392
    %v4394 = vpop.f32.mrb[0].mxu0
    %v4395 = vadd.f32 0.0, %v4394
    %4396 = vdwg.mxu0
    %v4397 = vadd.f32 %v4047, %v4375
    %v4398 = vadd.f32 %v4048, %v4377
    %v4399 = vadd.f32 %v4049, %v4381
    %v4400 = vadd.f32 %v4050, %v4383
    %v4401 = vadd.f32 %v4051, %v4387
    %v4402 = vadd.f32 %v4052, %v4389
    %v4403 = vadd.f32 %v4053, %v4393
    %v4404 = vadd.f32 %v4054, %v4395
    %v4405 = vsel %vm2840, 1.0, 0
    %4407 = vmatprep.subr.mxu0 %v4398
    %4408 = vmatpush1.msra.mxu0 %v4397
    %4409 = vmatprep.subr.mxu0 %v4400
    %4410 = vmatpush1.msra.mxu0 %v4399
    %4411 = vmatprep.subr.mxu0 %v4402
    %4412 = vmatpush1.msra.mxu0 %v4401
    %4413 = vmatprep.subr.mxu0 %v4404
    %4414 = vmatpush1.msra.mxu0 %v4403
    %4415 = vmatprep.subr.mxu0 0.0
    %4416 = vmatpush1.msra.mxu0 0.0
    %4417 = vmatprep.subr.mxu0 0.0
    %4418 = vmatpush1.msra.mxu0 0.0
    %4419 = vmatprep.subr.mxu0 0.0
    %4420 = vmatpush1.msra.mxu0 0.0
    %4421 = vmatprep.subr.mxu0 0.0
    %4422 = vmatpush1.msra.mxu0 0.0
    %4423 = vmatprep.subr.mxu0 0.0
    %4424 = vmatpush1.msra.mxu0 0.0
    %4425 = vmatprep.subr.mxu0 0.0
    %4426 = vmatpush1.msra.mxu0 0.0
    %4427 = vmatprep.subr.mxu0 0.0
    %4428 = vmatpush1.msra.mxu0 0.0
    %4429 = vmatprep.subr.mxu0 0.0
    %4430 = vmatpush1.msra.mxu0 0.0
    %4431 = vmatprep.subr.mxu0 0.0
    %4432 = vmatpush1.msra.mxu0 0.0
    %4433 = vmatprep.subr.mxu0 0.0
    %4434 = vmatpush1.msra.mxu0 0.0
    %4435 = vmatprep.subr.mxu0 0.0
    %4436 = vmatpush1.msra.mxu0 0.0
    %4437 = vmatprep.subr.mxu0 0.0
    %4438 = vmatpush1.msra.mxu0 0.0
    %4439 = vmatprep.subr.mxu0 0.0
    %4440 = vmatpush1.msra.mxu0 0.0
    %4441 = vmatprep.subr.mxu0 0.0
    %4442 = vmatpush1.msra.mxu0 0.0
    %4443 = vmatprep.subr.mxu0 0.0
    %4444 = vmatpush1.msra.mxu0 0.0
    %4445 = vmatprep.subr.mxu0 0.0
    %4446 = vmatpush1.msra.mxu0 0.0
    %4447 = vmatprep.subr.mxu0 0.0
    %4448 = vmatpush1.msra.mxu0 0.0
    %4449 = vmatprep.subr.mxu0 0.0
    %4450 = vmatpush1.msra.mxu0 0.0
    %4451 = vmatprep.subr.mxu0 0.0
    %4452 = vmatpush1.msra.mxu0 0.0
    %4453 = vmatprep.subr.mxu0 0.0
    %4454 = vmatpush1.msra.mxu0 0.0
    %4455 = vmatprep.subr.mxu0 0.0
    %4456 = vmatpush1.msra.mxu0 0.0
    %4457 = vmatprep.subr.mxu0 0.0
    %4458 = vmatpush1.msra.mxu0 0.0
    %4459 = vmatprep.subr.mxu0 0.0
    %4460 = vmatpush1.msra.mxu0 0.0
    %4461 = vmatprep.subr.mxu0 0.0
    %4462 = vmatpush1.msra.mxu0 0.0
    %4463 = vmatprep.subr.mxu0 0.0
    %4464 = vmatpush1.msra.mxu0 0.0
    %4465 = vmatprep.subr.mxu0 0.0
    %4466 = vmatpush1.msra.mxu0 0.0
    %4467 = vmatprep.subr.mxu0 0.0
    %4468 = vmatpush1.msra.mxu0 0.0
    %4469 = vmatprep.subr.mxu0 0.0
    %4470 = vmatpush1.msra.mxu0 0.0
    %4471 = vmatprep.mubr.f32.mxu0 0.0
    %4472 = vmatmul.mubr.f32.gmra.mrb[0].mxu0 %v4405
    %v4473 = vpop.f32.mrb[0].mxu0
    %v4474 = vadd.f32 0.0, %v4473
    %v4475 = vpop.f32.mrb[0].mxu0
    %v4476 = vadd.f32 0.0, %v4475
    %4477 = vdwg.mxu0
    %v4478 = vmul.f32 %v4397, %v4397
    %v4479 = vmul.f32 %v4398, %v4398
    %v4480 = vmul.f32 %v4399, %v4399
    %v4481 = vmul.f32 %v4400, %v4400
    %v4482 = vmul.f32 %v4401, %v4401
    %v4483 = vmul.f32 %v4402, %v4402
    %v4484 = vmul.f32 %v4403, %v4403
    %v4485 = vmul.f32 %v4404, %v4404
    %4486 = vmatprep.subr.mxu0 %v4479
    %4487 = vmatpush1.msra.mxu0 %v4478
    %4488 = vmatprep.subr.mxu0 %v4481
    %4489 = vmatpush1.msra.mxu0 %v4480
    %4490 = vmatprep.subr.mxu0 %v4483
    %4491 = vmatpush1.msra.mxu0 %v4482
    %4492 = vmatprep.subr.mxu0 %v4485
    %4493 = vmatpush1.msra.mxu0 %v4484
    %4494 = vmatprep.subr.mxu0 0.0
    %4495 = vmatpush1.msra.mxu0 0.0
    %4496 = vmatprep.subr.mxu0 0.0
    %4497 = vmatpush1.msra.mxu0 0.0
    %4498 = vmatprep.subr.mxu0 0.0
    %4499 = vmatpush1.msra.mxu0 0.0
    %4500 = vmatprep.subr.mxu0 0.0
    %4501 = vmatpush1.msra.mxu0 0.0
    %4502 = vmatprep.subr.mxu0 0.0
    %4503 = vmatpush1.msra.mxu0 0.0
    %4504 = vmatprep.subr.mxu0 0.0
    %4505 = vmatpush1.msra.mxu0 0.0
    %4506 = vmatprep.subr.mxu0 0.0
    %4507 = vmatpush1.msra.mxu0 0.0
    %4508 = vmatprep.subr.mxu0 0.0
    %4509 = vmatpush1.msra.mxu0 0.0
    %4510 = vmatprep.subr.mxu0 0.0
    %4511 = vmatpush1.msra.mxu0 0.0
    %4512 = vmatprep.subr.mxu0 0.0
    %4513 = vmatpush1.msra.mxu0 0.0
    %4514 = vmatprep.subr.mxu0 0.0
    %4515 = vmatpush1.msra.mxu0 0.0
    %4516 = vmatprep.subr.mxu0 0.0
    %4517 = vmatpush1.msra.mxu0 0.0
    %4518 = vmatprep.subr.mxu0 0.0
    %4519 = vmatpush1.msra.mxu0 0.0
    %4520 = vmatprep.subr.mxu0 0.0
    %4521 = vmatpush1.msra.mxu0 0.0
    %4522 = vmatprep.subr.mxu0 0.0
    %4523 = vmatpush1.msra.mxu0 0.0
    %4524 = vmatprep.subr.mxu0 0.0
    %4525 = vmatpush1.msra.mxu0 0.0
    %4526 = vmatprep.subr.mxu0 0.0
    %4527 = vmatpush1.msra.mxu0 0.0
    %4528 = vmatprep.subr.mxu0 0.0
    %4529 = vmatpush1.msra.mxu0 0.0
    %4530 = vmatprep.subr.mxu0 0.0
    %4531 = vmatpush1.msra.mxu0 0.0
    %4532 = vmatprep.subr.mxu0 0.0
    %4533 = vmatpush1.msra.mxu0 0.0
    %4534 = vmatprep.subr.mxu0 0.0
    %4535 = vmatpush1.msra.mxu0 0.0
    %4536 = vmatprep.subr.mxu0 0.0
    %4537 = vmatpush1.msra.mxu0 0.0
    %4538 = vmatprep.subr.mxu0 0.0
    %4539 = vmatpush1.msra.mxu0 0.0
    %4540 = vmatprep.subr.mxu0 0.0
    %4541 = vmatpush1.msra.mxu0 0.0
    %4542 = vmatprep.subr.mxu0 0.0
    %4543 = vmatpush1.msra.mxu0 0.0
    %4544 = vmatprep.subr.mxu0 0.0
    %4545 = vmatpush1.msra.mxu0 0.0
    %4546 = vmatprep.subr.mxu0 0.0
    %4547 = vmatpush1.msra.mxu0 0.0
    %4548 = vmatprep.subr.mxu0 0.0
    %4549 = vmatpush1.msra.mxu0 0.0
    %4550 = vmatprep.mubr.f32.mxu0 0.0
    %4551 = vmatmul.mubr.f32.gmra.mrb[0].mxu0 %v4405
    %v4552 = vpop.f32.mrb[0].mxu0
    %v4553 = vadd.f32 0.0, %v4552
    %v4554 = vpop.f32.mrb[0].mxu0
    %v4555 = vadd.f32 0.0, %v4554
    %4556 = vdwg.mxu0
    %v4557 = vld [vmem:[%s13] sm:$0xff]
    %v4558 = vld [vmem:[%s13 + $0x8] sm:$0xff]
    %v4559 = vld [vmem:[%s13 + $0x10] sm:$0xff]
    %v4560 = vld [vmem:[%s13 + $0x18] sm:$0xff]
    %v4561 = vld [vmem:[%s13 + $0x20] sm:$0xff]
    %v4562 = vld [vmem:[%s13 + $0x28] sm:$0xff]
    %v4563 = vld [vmem:[%s13 + $0x30] sm:$0xff]
    %v4564 = vld [vmem:[%s13 + $0x38] sm:$0xff]
    %v4565 = vld [vmem:[%s13 + $0x40] sm:$0xff]
    %v4566 = vld [vmem:[%s13 + $0x48] sm:$0xff]
    %v4567 = vld [vmem:[%s13 + $0x50] sm:$0xff]
    %v4568 = vld [vmem:[%s13 + $0x58] sm:$0xff]
    %v4569 = vld [vmem:[%s13 + $0x60] sm:$0xff]
    %v4570 = vld [vmem:[%s13 + $0x68] sm:$0xff]
    %v4571 = vld [vmem:[%s13 + $0x70] sm:$0xff]
    %v4572 = vld [vmem:[%s13 + $0x78] sm:$0xff]
    %v4573 = vld [vmem:[%s13 + $0x80] sm:$0xff]
    %v4574 = vld [vmem:[%s13 + $0x88] sm:$0xff]
    %v4575 = vld [vmem:[%s13 + $0x90] sm:$0xff]
    %v4576 = vld [vmem:[%s13 + $0x98] sm:$0xff]
    %v4577 = vld [vmem:[%s13 + $0xa0] sm:$0xff]
    %v4578 = vld [vmem:[%s13 + $0xa8] sm:$0xff]
    %v4579 = vld [vmem:[%s13 + $0xb0] sm:$0xff]
    %v4580 = vld [vmem:[%s13 + $0xb8] sm:$0xff]
    %v4581 = vld [vmem:[%s13 + $0xc0] sm:$0xff]
    %v4582 = vld [vmem:[%s13 + $0xc8] sm:$0xff]
    %v4583 = vld [vmem:[%s13 + $0xd0] sm:$0xff]
    %v4584 = vld [vmem:[%s13 + $0xd8] sm:$0xff]
    %v4585 = vld [vmem:[%s13 + $0xe0] sm:$0xff]
    %v4586 = vld [vmem:[%s13 + $0xe8] sm:$0xff]
    %v4587 = vld [vmem:[%s13 + $0xf0] sm:$0xff]
    %v4588 = vld [vmem:[%s13 + $0xf8] sm:$0xff]
    %4589 = vmatprep.subr.mxu0 0.0
    %4590 = vmatpush1.msra.mxu0 %v4557
    %4591 = vmatprep.subr.mxu0 0.0
    %4592 = vmatpush1.msra.mxu0 %v4558
    %4593 = vmatprep.subr.mxu0 0.0
    %4594 = vmatpush1.msra.mxu0 %v4559
    %4595 = vmatprep.subr.mxu0 0.0
    %4596 = vmatpush1.msra.mxu0 %v4560
    %4597 = vmatprep.subr.mxu0 0.0
    %4598 = vmatpush1.msra.mxu0 %v4561
    %4599 = vmatprep.subr.mxu0 0.0
    %4600 = vmatpush1.msra.mxu0 %v4562
    %4601 = vmatprep.subr.mxu0 0.0
    %4602 = vmatpush1.msra.mxu0 %v4563
    %4603 = vmatprep.subr.mxu0 0.0
    %4604 = vmatpush1.msra.mxu0 %v4564
    %4605 = vmatprep.subr.mxu0 0.0
    %4606 = vmatpush1.msra.mxu0 %v4565
    %4607 = vmatprep.subr.mxu0 0.0
    %4608 = vmatpush1.msra.mxu0 %v4566
    %4609 = vmatprep.subr.mxu0 0.0
    %4610 = vmatpush1.msra.mxu0 %v4567
    %4611 = vmatprep.subr.mxu0 0.0
    %4612 = vmatpush1.msra.mxu0 %v4568
    %4613 = vmatprep.subr.mxu0 0.0
    %4614 = vmatpush1.msra.mxu0 %v4569
    %4615 = vmatprep.subr.mxu0 0.0
    %4616 = vmatpush1.msra.mxu0 %v4570
    %4617 = vmatprep.subr.mxu0 0.0
    %4618 = vmatpush1.msra.mxu0 %v4571
    %4619 = vmatprep.subr.mxu0 0.0
    %4620 = vmatpush1.msra.mxu0 %v4572
    %4621 = vmatprep.subr.mxu0 0.0
    %4622 = vmatpush1.msra.mxu0 %v4573
    %4623 = vmatprep.subr.mxu0 0.0
    %4624 = vmatpush1.msra.mxu0 %v4574
    %4625 = vmatprep.subr.mxu0 0.0
    %4626 = vmatpush1.msra.mxu0 %v4575
    %4627 = vmatprep.subr.mxu0 0.0
    %4628 = vmatpush1.msra.mxu0 %v4576
    %4629 = vmatprep.subr.mxu0 0.0
    %4630 = vmatpush1.msra.mxu0 %v4577
    %4631 = vmatprep.subr.mxu0 0.0
    %4632 = vmatpush1.msra.mxu0 %v4578
    %4633 = vmatprep.subr.mxu0 0.0
    %4634 = vmatpush1.msra.mxu0 %v4579
    %4635 = vmatprep.subr.mxu0 0.0
    %4636 = vmatpush1.msra.mxu0 %v4580
    %4637 = vmatprep.subr.mxu0 0.0
    %4638 = vmatpush1.msra.mxu0 %v4581
    %4639 = vmatprep.subr.mxu0 0.0
    %4640 = vmatpush1.msra.mxu0 %v4582
    %4641 = vmatprep.subr.mxu0 0.0
    %4642 = vmatpush1.msra.mxu0 %v4583
    %4643 = vmatprep.subr.mxu0 0.0
    %4644 = vmatpush1.msra.mxu0 %v4584
    %4645 = vmatprep.subr.mxu0 0.0
    %4646 = vmatpush1.msra.mxu0 %v4585
    %4647 = vmatprep.subr.mxu0 0.0
    %4648 = vmatpush1.msra.mxu0 %v4586
    %4649 = vmatprep.subr.mxu0 0.0
    %4650 = vmatpush1.msra.mxu0 %v4587
    %4651 = vmatprep.subr.mxu0 0.0
    %4652 = vmatpush1.msra.mxu0 %v4588
    %4653 = vmatprep.mubr.f32.mxu0 %v4476
    %4654 = vmatmul.mubr.f32.gmra.mrb[0].mxu0 %v4474
    %v4655 = vpop.f32.mrb[0].mxu0
    %v4656 = vadd.f32 0.0, %v4655
    %v4657 = vpop.f32.mrb[0].mxu0
    %4658 = vdwg.mxu0
    %v4659 = vmul.f32 %v4656, 0.001953125
    %4660 = vmatprep.subr.mxu0 0.0
    %4661 = vmatpush1.msra.mxu0 %v4557
    %4662 = vmatprep.subr.mxu0 0.0
    %4663 = vmatpush1.msra.mxu0 %v4558
    %4664 = vmatprep.subr.mxu0 0.0
    %4665 = vmatpush1.msra.mxu0 %v4559
    %4666 = vmatprep.subr.mxu0 0.0
    %4667 = vmatpush1.msra.mxu0 %v4560
    %4668 = vmatprep.subr.mxu0 0.0
    %4669 = vmatpush1.msra.mxu0 %v4561
    %4670 = vmatprep.subr.mxu0 0.0
    %4671 = vmatpush1.msra.mxu0 %v4562
    %4672 = vmatprep.subr.mxu0 0.0
    %4673 = vmatpush1.msra.mxu0 %v4563
    %4674 = vmatprep.subr.mxu0 0.0
    %4675 = vmatpush1.msra.mxu0 %v4564
    %4676 = vmatprep.subr.mxu0 0.0
    %4677 = vmatpush1.msra.mxu0 %v4565
    %4678 = vmatprep.subr.mxu0 0.0
    %4679 = vmatpush1.msra.mxu0 %v4566
    %4680 = vmatprep.subr.mxu0 0.0
    %4681 = vmatpush1.msra.mxu0 %v4567
    %4682 = vmatprep.subr.mxu0 0.0
    %4683 = vmatpush1.msra.mxu0 %v4568
    %4684 = vmatprep.subr.mxu0 0.0
    %4685 = vmatpush1.msra.mxu0 %v4569
    %4686 = vmatprep.subr.mxu0 0.0
    %4687 = vmatpush1.msra.mxu0 %v4570
    %4688 = vmatprep.subr.mxu0 0.0
    %4689 = vmatpush1.msra.mxu0 %v4571
    %4690 = vmatprep.subr.mxu0 0.0
    %4691 = vmatpush1.msra.mxu0 %v4572
    %4692 = vmatprep.subr.mxu0 0.0
    %4693 = vmatpush1.msra.mxu0 %v4573
    %4694 = vmatprep.subr.mxu0 0.0
    %4695 = vmatpush1.msra.mxu0 %v4574
    %4696 = vmatprep.subr.mxu0 0.0
    %4697 = vmatpush1.msra.mxu0 %v4575
    %4698 = vmatprep.subr.mxu0 0.0
    %4699 = vmatpush1.msra.mxu0 %v4576
    %4700 = vmatprep.subr.mxu0 0.0
    %4701 = vmatpush1.msra.mxu0 %v4577
    %4702 = vmatprep.subr.mxu0 0.0
    %4703 = vmatpush1.msra.mxu0 %v4578
    %4704 = vmatprep.subr.mxu0 0.0
    %4705 = vmatpush1.msra.mxu0 %v4579
    %4706 = vmatprep.subr.mxu0 0.0
    %4707 = vmatpush1.msra.mxu0 %v4580
    %4708 = vmatprep.subr.mxu0 0.0
    %4709 = vmatpush1.msra.mxu0 %v4581
    %4710 = vmatprep.subr.mxu0 0.0
    %4711 = vmatpush1.msra.mxu0 %v4582
    %4712 = vmatprep.subr.mxu0 0.0
    %4713 = vmatpush1.msra.mxu0 %v4583
    %4714 = vmatprep.subr.mxu0 0.0
    %4715 = vmatpush1.msra.mxu0 %v4584
    %4716 = vmatprep.subr.mxu0 0.0
    %4717 = vmatpush1.msra.mxu0 %v4585
    %4718 = vmatprep.subr.mxu0 0.0
    %4719 = vmatpush1.msra.mxu0 %v4586
    %4720 = vmatprep.subr.mxu0 0.0
    %4721 = vmatpush1.msra.mxu0 %v4587
    %4722 = vmatprep.subr.mxu0 0.0
    %4723 = vmatpush1.msra.mxu0 %v4588
    %4724 = vmatprep.mubr.f32.mxu0 %v4555
    %4725 = vmatmul.mubr.f32.gmra.mrb[0].mxu0 %v4553
    %v4726 = vpop.f32.mrb[0].mxu0
    %v4727 = vadd.f32 0.0, %v4726
    %v4728 = vpop.f32.mrb[0].mxu0
    %4729 = vdwg.mxu0
    %v4730 = vmul.f32 %v4727, 0.001953125
    %v4731 = vmul.f32 %v4659, %v4659
    %v4732 = vsub.f32 %v4730, %v4731
    %v4733 = vld [vmem:[%s15] sm:$0x1]
    %v4734 = vld [vmem:[%s15 + $0x1] sm:$0x1]
    %v4735 = vadd.f32 %v4732, 1e-05
    %v4736 = vrsqrt.pop %v4735
    %v4737 = vmul.f32 %v4733, %v4736
    %v4738 = vmul.f32 %v4659, %v4737
    %v4739 = vsub.f32 %v4734, %v4738
    %v4740 = vld [vmem:[#allocation9] sm:$0xff]
    %v4741 = vld [vmem:[#allocation9 + $0x8] sm:$0xff]
    %v4742 = vld [vmem:[#allocation9 + $0x10] sm:$0xff]
    %v4743 = vld [vmem:[#allocation9 + $0x18] sm:$0xff]
    %v4745 = vsel %vm153, %v4737, 0
    %4747 = vmatprep.subr.mxu0 %v4741
    %4748 = vmatpush1.msra.mxu0 %v4740
    %4749 = vmatprep.subr.mxu0 %v4743
    %4750 = vmatpush1.msra.mxu0 %v4742
    %4751 = vmatprep.subr.mxu0 0.0
    %4752 = vmatpush1.msra.mxu0 0.0
    %4753 = vmatprep.subr.mxu0 0.0
    %4754 = vmatpush1.msra.mxu0 0.0
    %4755 = vmatprep.subr.mxu0 0.0
    %4756 = vmatpush1.msra.mxu0 0.0
    %4757 = vmatprep.subr.mxu0 0.0
    %4758 = vmatpush1.msra.mxu0 0.0
    %4759 = vmatprep.subr.mxu0 0.0
    %4760 = vmatpush1.msra.mxu0 0.0
    %4761 = vmatprep.subr.mxu0 0.0
    %4762 = vmatpush1.msra.mxu0 0.0
    %4763 = vmatprep.subr.mxu0 0.0
    %4764 = vmatpush1.msra.mxu0 0.0
    %4765 = vmatprep.subr.mxu0 0.0
    %4766 = vmatpush1.msra.mxu0 0.0
    %4767 = vmatprep.subr.mxu0 0.0
    %4768 = vmatpush1.msra.mxu0 0.0
    %4769 = vmatprep.subr.mxu0 0.0
    %4770 = vmatpush1.msra.mxu0 0.0
    %4771 = vmatprep.subr.mxu0 0.0
    %4772 = vmatpush1.msra.mxu0 0.0
    %4773 = vmatprep.subr.mxu0 0.0
    %4774 = vmatpush1.msra.mxu0 0.0
    %4775 = vmatprep.subr.mxu0 0.0
    %4776 = vmatpush1.msra.mxu0 0.0
    %4777 = vmatprep.subr.mxu0 0.0
    %4778 = vmatpush1.msra.mxu0 0.0
    %4779 = vmatprep.subr.mxu0 0.0
    %4780 = vmatpush1.msra.mxu0 0.0
    %4781 = vmatprep.subr.mxu0 0.0
    %4782 = vmatpush1.msra.mxu0 0.0
    %4783 = vmatprep.subr.mxu0 0.0
    %4784 = vmatpush1.msra.mxu0 0.0
    %4785 = vmatprep.subr.mxu0 0.0
    %4786 = vmatpush1.msra.mxu0 0.0
    %4787 = vmatprep.subr.mxu0 0.0
    %4788 = vmatpush1.msra.mxu0 0.0
    %4789 = vmatprep.subr.mxu0 0.0
    %4790 = vmatpush1.msra.mxu0 0.0
    %4791 = vmatprep.subr.mxu0 0.0
    %4792 = vmatpush1.msra.mxu0 0.0
    %4793 = vmatprep.subr.mxu0 0.0
    %4794 = vmatpush1.msra.mxu0 0.0
    %4795 = vmatprep.subr.mxu0 0.0
    %4796 = vmatpush1.msra.mxu0 0.0
    %4797 = vmatprep.subr.mxu0 0.0
    %4798 = vmatpush1.msra.mxu0 0.0
    %4799 = vmatprep.subr.mxu0 0.0
    %4800 = vmatpush1.msra.mxu0 0.0
    %4801 = vmatprep.subr.mxu0 0.0
    %4802 = vmatpush1.msra.mxu0 0.0
    %4803 = vmatprep.subr.mxu0 0.0
    %4804 = vmatpush1.msra.mxu0 0.0
    %4805 = vmatprep.subr.mxu0 0.0
    %4806 = vmatpush1.msra.mxu0 0.0
    %4807 = vmatprep.subr.mxu0 0.0
    %4808 = vmatpush1.msra.mxu0 0.0
    %4809 = vmatprep.subr.mxu0 0.0
    %4810 = vmatpush1.msra.mxu0 0.0
    %4811 = vmatprep.mubr.f32.mxu0 0.0
    %4812 = vmatmul.mubr.f32.gmra.mrb[0].mxu0 %v4745
    %v4813 = vpop.f32.mrb[0].mxu0
    %v4814 = vadd.f32 0.0, %v4813
    %v4815 = vpop.f32.mrb[0].mxu0
    %v4816 = vadd.f32 0.0, %v4815
    %4817 = vdwg.mxu0
    %v4819 = vsel %vm153, %v4739, 0
    %4821 = vmatprep.subr.mxu0 %v4741
    %4822 = vmatpush1.msra.mxu0 %v4740
    %4823 = vmatprep.subr.mxu0 %v4743
    %4824 = vmatpush1.msra.mxu0 %v4742
    %4825 = vmatprep.subr.mxu0 0.0
    %4826 = vmatpush1.msra.mxu0 0.0
    %4827 = vmatprep.subr.mxu0 0.0
    %4828 = vmatpush1.msra.mxu0 0.0
    %4829 = vmatprep.subr.mxu0 0.0
    %4830 = vmatpush1.msra.mxu0 0.0
    %4831 = vmatprep.subr.mxu0 0.0
    %4832 = vmatpush1.msra.mxu0 0.0
    %4833 = vmatprep.subr.mxu0 0.0
    %4834 = vmatpush1.msra.mxu0 0.0
    %4835 = vmatprep.subr.mxu0 0.0
    %4836 = vmatpush1.msra.mxu0 0.0
    %4837 = vmatprep.subr.mxu0 0.0
    %4838 = vmatpush1.msra.mxu0 0.0
    %4839 = vmatprep.subr.mxu0 0.0
    %4840 = vmatpush1.msra.mxu0 0.0
    %4841 = vmatprep.subr.mxu0 0.0
    %4842 = vmatpush1.msra.mxu0 0.0
    %4843 = vmatprep.subr.mxu0 0.0
    %4844 = vmatpush1.msra.mxu0 0.0
    %4845 = vmatprep.subr.mxu0 0.0
    %4846 = vmatpush1.msra.mxu0 0.0
    %4847 = vmatprep.subr.mxu0 0.0
    %4848 = vmatpush1.msra.mxu0 0.0
    %4849 = vmatprep.subr.mxu0 0.0
    %4850 = vmatpush1.msra.mxu0 0.0
    %4851 = vmatprep.subr.mxu0 0.0
    %4852 = vmatpush1.msra.mxu0 0.0
    %4853 = vmatprep.subr.mxu0 0.0
    %4854 = vmatpush1.msra.mxu0 0.0
    %4855 = vmatprep.subr.mxu0 0.0
    %4856 = vmatpush1.msra.mxu0 0.0
    %4857 = vmatprep.subr.mxu0 0.0
    %4858 = vmatpush1.msra.mxu0 0.0
    %4859 = vmatprep.subr.mxu0 0.0
    %4860 = vmatpush1.msra.mxu0 0.0
    %4861 = vmatprep.subr.mxu0 0.0
    %4862 = vmatpush1.msra.mxu0 0.0
    %4863 = vmatprep.subr.mxu0 0.0
    %4864 = vmatpush1.msra.mxu0 0.0
    %4865 = vmatprep.subr.mxu0 0.0
    %4866 = vmatpush1.msra.mxu0 0.0
    %4867 = vmatprep.subr.mxu0 0.0
    %4868 = vmatpush1.msra.mxu0 0.0
    %4869 = vmatprep.subr.mxu0 0.0
    %4870 = vmatpush1.msra.mxu0 0.0
    %4871 = vmatprep.subr.mxu0 0.0
    %4872 = vmatpush1.msra.mxu0 0.0
    %4873 = vmatprep.subr.mxu0 0.0
    %4874 = vmatpush1.msra.mxu0 0.0
    %4875 = vmatprep.subr.mxu0 0.0
    %4876 = vmatpush1.msra.mxu0 0.0
    %4877 = vmatprep.subr.mxu0 0.0
    %4878 = vmatpush1.msra.mxu0 0.0
    %4879 = vmatprep.subr.mxu0 0.0
    %4880 = vmatpush1.msra.mxu0 0.0
    %4881 = vmatprep.subr.mxu0 0.0
    %4882 = vmatpush1.msra.mxu0 0.0
    %4883 = vmatprep.subr.mxu0 0.0
    %4884 = vmatpush1.msra.mxu0 0.0
    %4885 = vmatprep.mubr.f32.mxu0 0.0
    %4886 = vmatmul.mubr.f32.gmra.mrb[0].mxu0 %v4819
    %v4887 = vpop.f32.mrb[0].mxu0
    %v4888 = vadd.f32 0.0, %v4887
    %v4889 = vpop.f32.mrb[0].mxu0
    %v4890 = vadd.f32 0.0, %v4889
    %4891 = vdwg.mxu0
    %v4892 = vlaneseq
    %v4893 = vshrl.u32 %v4892, 7
    %v4894 = vsub.s32 0, %v4893
    %v4895 = vrot.slane %v4814, %v4894
    %v4896 = vlaneseq
    %v4897 = vshrl.u32 %v4896, 7
    %v4898 = vsub.s32 0, %v4897
    %v4899 = vrot.slane %v4816, %v4898
    %v4900 = vmul.f32 %v4397, %v4895
    %v4901 = vmul.f32 %v4398, %v4899
    %v4902 = vmul.f32 %v4399, %v4895
    %v4903 = vmul.f32 %v4400, %v4899
    %v4904 = vmul.f32 %v4401, %v4895
    %v4905 = vmul.f32 %v4402, %v4899
    %v4906 = vmul.f32 %v4403, %v4895
    %v4907 = vmul.f32 %v4404, %v4899
    %v4908 = vlaneseq
    %v4909 = vshrl.u32 %v4908, 7
    %v4910 = vsub.s32 0, %v4909
    %v4911 = vrot.slane %v4888, %v4910
    %v4912 = vlaneseq
    %v4913 = vshrl.u32 %v4912, 7
    %v4914 = vsub.s32 0, %v4913
    %v4915 = vrot.slane %v4890, %v4914
    %v4916 = vadd.f32 %v4900, %v4911
    %v4917 = vadd.f32 %v4901, %v4915
    %v4918 = vadd.f32 %v4902, %v4911
    %v4919 = vadd.f32 %v4903, %v4915
    %v4920 = vadd.f32 %v4904, %v4911
    %v4921 = vadd.f32 %v4905, %v4915
    %v4922 = vadd.f32 %v4906, %v4911
    %v4923 = vadd.f32 %v4907, %v4915
    %v4924 = vmul.f32 %v4916, 0.2
    %v4925 = vmul.f32 %v4917, 0.2
    %v4926 = vmul.f32 %v4918, 0.2
    %v4927 = vmul.f32 %v4919, 0.2
    %v4928 = vmul.f32 %v4920, 0.2
    %v4929 = vmul.f32 %v4921, 0.2
    %v4930 = vmul.f32 %v4922, 0.2
    %v4931 = vmul.f32 %v4923, 0.2
    %v4932 = vmax.f32 %v4916, %v4924
    %v4933 = vmax.f32 %v4917, %v4925
    %v4934 = vmax.f32 %v4918, %v4926
    %v4935 = vmax.f32 %v4919, %v4927
    %v4936 = vmax.f32 %v4920, %v4928
    %v4937 = vmax.f32 %v4921, %v4929
    %v4938 = vmax.f32 %v4922, %v4930
    %v4939 = vmax.f32 %v4923, %v4931
    %v4940 = vpack.c.bf16 %v4934, %v4932
    %v4941 = vpack.c.bf16 %v4935, %v4933
    %v4942 = vpack.c.bf16 %v4938, %v4936
    %v4943 = vpack.c.bf16 %v4939, %v4937
    %v4944 = vld [vmem:[%s16] sm:$0xff]
    %v4945 = vld [vmem:[%s16 + $0x8] sm:$0xff]
    %v4946 = vld [vmem:[%s16 + $0x10] sm:$0xff]
    %v4947 = vld [vmem:[%s16 + $0x18] sm:$0xff]
    %v4948 = vld [vmem:[%s16 + $0x20] sm:$0xff]
    %v4949 = vld [vmem:[%s16 + $0x28] sm:$0xff]
    %v4950 = vld [vmem:[%s16 + $0x30] sm:$0xff]
    %v4951 = vld [vmem:[%s16 + $0x38] sm:$0xff]
    %v4952 = vld [vmem:[%s16 + $0x40] sm:$0xff]
    %v4953 = vld [vmem:[%s16 + $0x48] sm:$0xff]
    %v4954 = vld [vmem:[%s16 + $0x50] sm:$0xff]
    %v4955 = vld [vmem:[%s16 + $0x58] sm:$0xff]
    %v4956 = vld [vmem:[%s16 + $0x60] sm:$0xff]
    %v4957 = vld [vmem:[%s16 + $0x68] sm:$0xff]
    %v4958 = vld [vmem:[%s16 + $0x70] sm:$0xff]
    %v4959 = vld [vmem:[%s16 + $0x78] sm:$0xff]
    %v4960 = vld [vmem:[%s16 + $0x80] sm:$0xff]
    %v4961 = vld [vmem:[%s16 + $0x88] sm:$0xff]
    %v4962 = vld [vmem:[%s16 + $0x90] sm:$0xff]
    %v4963 = vld [vmem:[%s16 + $0x98] sm:$0xff]
    %v4964 = vld [vmem:[%s16 + $0xa0] sm:$0xff]
    %v4965 = vld [vmem:[%s16 + $0xa8] sm:$0xff]
    %v4966 = vld [vmem:[%s16 + $0xb0] sm:$0xff]
    %v4967 = vld [vmem:[%s16 + $0xb8] sm:$0xff]
    %v4968 = vld [vmem:[%s16 + $0xc0] sm:$0xff]
    %v4969 = vld [vmem:[%s16 + $0xc8] sm:$0xff]
    %v4970 = vld [vmem:[%s16 + $0xd0] sm:$0xff]
    %v4971 = vld [vmem:[%s16 + $0xd8] sm:$0xff]
    %v4972 = vld [vmem:[%s16 + $0xe0] sm:$0xff]
    %v4973 = vld [vmem:[%s16 + $0xe8] sm:$0xff]
    %v4974 = vld [vmem:[%s16 + $0xf0] sm:$0xff]
    %v4975 = vld [vmem:[%s16 + $0xf8] sm:$0xff]
    %v5008 = vunpack.c.l.b16 %v4944
    %v5009 = vunpack.c.h.b16 %v4944
    %v5010 = vunpack.c.l.b16 %v4945
    %v5011 = vunpack.c.h.b16 %v4945
    %v5012 = vunpack.c.l.b16 %v4946
    %v5013 = vunpack.c.h.b16 %v4946
    %v5014 = vunpack.c.l.b16 %v4947
    %v5015 = vunpack.c.h.b16 %v4947
    %v5016 = vunpack.c.l.b16 %v4948
    %v5017 = vunpack.c.h.b16 %v4948
    %v5018 = vunpack.c.l.b16 %v4949
    %v5019 = vunpack.c.h.b16 %v4949
    %v5020 = vunpack.c.l.b16 %v4950
    %v5021 = vunpack.c.h.b16 %v4950
    %v5022 = vunpack.c.l.b16 %v4951
    %v5023 = vunpack.c.h.b16 %v4951
    %v5024 = vunpack.c.l.b16 %v4952
    %v5025 = vunpack.c.h.b16 %v4952
    %v5026 = vunpack.c.l.b16 %v4953
    %v5027 = vunpack.c.h.b16 %v4953
    %v5028 = vunpack.c.l.b16 %v4954
    %v5029 = vunpack.c.h.b16 %v4954
    %v5030 = vunpack.c.l.b16 %v4955
    %v5031 = vunpack.c.h.b16 %v4955
    %v5032 = vunpack.c.l.b16 %v4956
    %v5033 = vunpack.c.h.b16 %v4956
    %v5034 = vunpack.c.l.b16 %v4957
    %v5035 = vunpack.c.h.b16 %v4957
    %v5036 = vunpack.c.l.b16 %v4958
    %v5037 = vunpack.c.h.b16 %v4958
    %v5038 = vunpack.c.l.b16 %v4959
    %v5039 = vunpack.c.h.b16 %v4959
    %v5040 = vunpack.c.l.b16 %v4960
    %v5041 = vunpack.c.h.b16 %v4960
    %v5042 = vunpack.c.l.b16 %v4961
    %v5043 = vunpack.c.h.b16 %v4961
    %v5044 = vunpack.c.l.b16 %v4962
    %v5045 = vunpack.c.h.b16 %v4962
    %v5046 = vunpack.c.l.b16 %v4963
    %v5047 = vunpack.c.h.b16 %v4963
    %v5048 = vunpack.c.l.b16 %v4964
    %v5049 = vunpack.c.h.b16 %v4964
    %v5050 = vunpack.c.l.b16 %v4965
    %v5051 = vunpack.c.h.b16 %v4965
    %v5052 = vunpack.c.l.b16 %v4966
    %v5053 = vunpack.c.h.b16 %v4966
    %v5054 = vunpack.c.l.b16 %v4967
    %v5055 = vunpack.c.h.b16 %v4967
    %v5056 = vunpack.c.l.b16 %v4968
    %v5057 = vunpack.c.h.b16 %v4968
    %v5058 = vunpack.c.l.b16 %v4969
    %v5059 = vunpack.c.h.b16 %v4969
    %v5060 = vunpack.c.l.b16 %v4970
    %v5061 = vunpack.c.h.b16 %v4970
    %v5062 = vunpack.c.l.b16 %v4971
    %v5063 = vunpack.c.h.b16 %v4971
    %v5064 = vunpack.c.l.b16 %v4972
    %v5065 = vunpack.c.h.b16 %v4972
    %v5066 = vunpack.c.l.b16 %v4973
    %v5067 = vunpack.c.h.b16 %v4973
    %v5068 = vunpack.c.l.b16 %v4974
    %v5069 = vunpack.c.h.b16 %v4974
    %v5070 = vunpack.c.l.b16 %v4975
    %v5071 = vunpack.c.h.b16 %v4975
    %v5072 = vpack.c.b16 %v5010, %v5008
    %v5073 = vpack.c.b16 %v5011, %v5009
    %v5074 = vpack.c.b16 %v5014, %v5012
    %v5075 = vpack.c.b16 %v5015, %v5013
    %v5076 = vpack.c.b16 %v5018, %v5016
    %v5077 = vpack.c.b16 %v5019, %v5017
    %v5078 = vpack.c.b16 %v5022, %v5020
    %v5079 = vpack.c.b16 %v5023, %v5021
    %v5080 = vpack.c.b16 %v5026, %v5024
    %v5081 = vpack.c.b16 %v5027, %v5025
    %v5082 = vpack.c.b16 %v5030, %v5028
    %v5083 = vpack.c.b16 %v5031, %v5029
    %v5084 = vpack.c.b16 %v5034, %v5032
    %v5085 = vpack.c.b16 %v5035, %v5033
    %v5086 = vpack.c.b16 %v5038, %v5036
    %v5087 = vpack.c.b16 %v5039, %v5037
    %v5088 = vpack.c.b16 %v5042, %v5040
    %v5089 = vpack.c.b16 %v5043, %v5041
    %v5090 = vpack.c.b16 %v5046, %v5044
    %v5091 = vpack.c.b16 %v5047, %v5045
    %v5092 = vpack.c.b16 %v5050, %v5048
    %v5093 = vpack.c.b16 %v5051, %v5049
    %v5094 = vpack.c.b16 %v5054, %v5052
    %v5095 = vpack.c.b16 %v5055, %v5053
    %v5096 = vpack.c.b16 %v5058, %v5056
    %v5097 = vpack.c.b16 %v5059, %v5057
    %v5098 = vpack.c.b16 %v5062, %v5060
    %v5099 = vpack.c.b16 %v5063, %v5061
    %v5100 = vpack.c.b16 %v5066, %v5064
    %v5101 = vpack.c.b16 %v5067, %v5065
    %v5102 = vpack.c.b16 %v5070, %v5068
    %v5103 = vpack.c.b16 %v5071, %v5069
    %5136 = vmatprep.subr.bf16.mxu0 %v5073
    %5137 = vmatpush1.bf16.msra.mxu0 %v5072
    %5138 = vmatprep.subr.bf16.mxu0 %v5075
    %5139 = vmatpush1.bf16.msra.mxu0 %v5074
    %5140 = vmatprep.subr.bf16.mxu0 %v5077
    %5141 = vmatpush1.bf16.msra.mxu0 %v5076
    %5142 = vmatprep.subr.bf16.mxu0 %v5079
    %5143 = vmatpush1.bf16.msra.mxu0 %v5078
    %5144 = vmatprep.subr.bf16.mxu0 %v5081
    %5145 = vmatpush1.bf16.msra.mxu0 %v5080
    %5146 = vmatprep.subr.bf16.mxu0 %v5083
    %5147 = vmatpush1.bf16.msra.mxu0 %v5082
    %5148 = vmatprep.subr.bf16.mxu0 %v5085
    %5149 = vmatpush1.bf16.msra.mxu0 %v5084
    %5150 = vmatprep.subr.bf16.mxu0 %v5087
    %5151 = vmatpush1.bf16.msra.mxu0 %v5086
    %5152 = vmatprep.subr.bf16.mxu0 %v5089
    %5153 = vmatpush1.bf16.msra.mxu0 %v5088
    %5154 = vmatprep.subr.bf16.mxu0 %v5091
    %5155 = vmatpush1.bf16.msra.mxu0 %v5090
    %5156 = vmatprep.subr.bf16.mxu0 %v5093
    %5157 = vmatpush1.bf16.msra.mxu0 %v5092
    %5158 = vmatprep.subr.bf16.mxu0 %v5095
    %5159 = vmatpush1.bf16.msra.mxu0 %v5094
    %5160 = vmatprep.subr.bf16.mxu0 %v5097
    %5161 = vmatpush1.bf16.msra.mxu0 %v5096
    %5162 = vmatprep.subr.bf16.mxu0 %v5099
    %5163 = vmatpush1.bf16.msra.mxu0 %v5098
    %5164 = vmatprep.subr.bf16.mxu0 %v5101
    %5165 = vmatpush1.bf16.msra.mxu0 %v5100
    %5166 = vmatprep.subr.bf16.mxu0 %v5103
    %5167 = vmatpush1.bf16.msra.mxu0 %v5102
    %5168 = vmatprep.mubr.bf16.mxu0 %v4941
    %5169 = vmatmul.mubr.bf16.gmra.mrb[0].mxu0 %v4940
    %v5170 = vpop.f32.mrb[0].mxu0
    %v5171 = vadd.f32 0.0, %v5170
    %v5172 = vpop.f32.mrb[0].mxu0
    %v5173 = vadd.f32 0.0, %v5172
    %v5174 = vpop.f32.mrb[0].mxu0
    %v5175 = vadd.f32 0.0, %v5174
    %v5176 = vpop.f32.mrb[0].mxu0
    %v5177 = vadd.f32 0.0, %v5176
    %5178 = vmatprep.mubr.bf16.mxu0 %v4943
    %5179 = vmatmul.mubr.bf16.gmra.mrb[0].mxu0 %v4942
    %v5180 = vpop.f32.mrb[0].mxu0
    %v5181 = vadd.f32 0.0, %v5180
    %v5182 = vpop.f32.mrb[0].mxu0
    %v5183 = vadd.f32 0.0, %v5182
    %v5184 = vpop.f32.mrb[0].mxu0
    %v5185 = vadd.f32 0.0, %v5184
    %v5186 = vpop.f32.mrb[0].mxu0
    %v5187 = vadd.f32 0.0, %v5186
    %5188 = vdwg.mxu0
    %v5189 = vld [vmem:[%s17] sm:$0xff]
    %v5190 = vld [vmem:[%s17 + $0x8] sm:$0xff]
    %v5191 = vld [vmem:[%s17 + $0x10] sm:$0xff]
    %v5192 = vld [vmem:[%s17 + $0x18] sm:$0xff]
    %v5193 = vld [vmem:[%s17 + $0x20] sm:$0xff]
    %v5194 = vld [vmem:[%s17 + $0x28] sm:$0xff]
    %v5195 = vld [vmem:[%s17 + $0x30] sm:$0xff]
    %v5196 = vld [vmem:[%s17 + $0x38] sm:$0xff]
    %s5197 = scalar_lea.vmem %s16, 256
    %v5198 = vld [vmem:[%s5197] sm:$0xff]
    %v5199 = vld [vmem:[%s5197 + $0x8] sm:$0xff]
    %v5200 = vld [vmem:[%s5197 + $0x10] sm:$0xff]
    %v5201 = vld [vmem:[%s5197 + $0x18] sm:$0xff]
    %v5202 = vld [vmem:[%s5197 + $0x20] sm:$0xff]
    %v5203 = vld [vmem:[%s5197 + $0x28] sm:$0xff]
    %v5204 = vld [vmem:[%s5197 + $0x30] sm:$0xff]
    %v5205 = vld [vmem:[%s5197 + $0x38] sm:$0xff]
    %v5206 = vld [vmem:[%s5197 + $0x40] sm:$0xff]
    %v5207 = vld [vmem:[%s5197 + $0x48] sm:$0xff]
    %v5208 = vld [vmem:[%s5197 + $0x50] sm:$0xff]
    %v5209 = vld [vmem:[%s5197 + $0x58] sm:$0xff]
    %v5210 = vld [vmem:[%s5197 + $0x60] sm:$0xff]
    %v5211 = vld [vmem:[%s5197 + $0x68] sm:$0xff]
    %v5212 = vld [vmem:[%s5197 + $0x70] sm:$0xff]
    %v5213 = vld [vmem:[%s5197 + $0x78] sm:$0xff]
    %v5214 = vld [vmem:[%s5197 + $0x80] sm:$0xff]
    %v5215 = vld [vmem:[%s5197 + $0x88] sm:$0xff]
    %v5216 = vld [vmem:[%s5197 + $0x90] sm:$0xff]
    %v5217 = vld [vmem:[%s5197 + $0x98] sm:$0xff]
    %v5218 = vld [vmem:[%s5197 + $0xa0] sm:$0xff]
    %v5219 = vld [vmem:[%s5197 + $0xa8] sm:$0xff]
    %v5220 = vld [vmem:[%s5197 + $0xb0] sm:$0xff]
    %v5221 = vld [vmem:[%s5197 + $0xb8] sm:$0xff]
    %v5222 = vld [vmem:[%s5197 + $0xc0] sm:$0xff]
    %v5223 = vld [vmem:[%s5197 + $0xc8] sm:$0xff]
    %v5224 = vld [vmem:[%s5197 + $0xd0] sm:$0xff]
    %v5225 = vld [vmem:[%s5197 + $0xd8] sm:$0xff]
    %v5226 = vld [vmem:[%s5197 + $0xe0] sm:$0xff]
    %v5227 = vld [vmem:[%s5197 + $0xe8] sm:$0xff]
    %v5228 = vld [vmem:[%s5197 + $0xf0] sm:$0xff]
    %v5229 = vld [vmem:[%s5197 + $0xf8] sm:$0xff]
    %v5262 = vunpack.c.l.b16 %v5198
    %v5263 = vunpack.c.h.b16 %v5198
    %v5264 = vunpack.c.l.b16 %v5199
    %v5265 = vunpack.c.h.b16 %v5199
    %v5266 = vunpack.c.l.b16 %v5200
    %v5267 = vunpack.c.h.b16 %v5200
    %v5268 = vunpack.c.l.b16 %v5201
    %v5269 = vunpack.c.h.b16 %v5201
    %v5270 = vunpack.c.l.b16 %v5202
    %v5271 = vunpack.c.h.b16 %v5202
    %v5272 = vunpack.c.l.b16 %v5203
    %v5273 = vunpack.c.h.b16 %v5203
    %v5274 = vunpack.c.l.b16 %v5204
    %v5275 = vunpack.c.h.b16 %v5204
    %v5276 = vunpack.c.l.b16 %v5205
    %v5277 = vunpack.c.h.b16 %v5205
    %v5278 = vunpack.c.l.b16 %v5206
    %v5279 = vunpack.c.h.b16 %v5206
    %v5280 = vunpack.c.l.b16 %v5207
    %v5281 = vunpack.c.h.b16 %v5207
    %v5282 = vunpack.c.l.b16 %v5208
    %v5283 = vunpack.c.h.b16 %v5208
    %v5284 = vunpack.c.l.b16 %v5209
    %v5285 = vunpack.c.h.b16 %v5209
    %v5286 = vunpack.c.l.b16 %v5210
    %v5287 = vunpack.c.h.b16 %v5210
    %v5288 = vunpack.c.l.b16 %v5211
    %v5289 = vunpack.c.h.b16 %v5211
    %v5290 = vunpack.c.l.b16 %v5212
    %v5291 = vunpack.c.h.b16 %v5212
    %v5292 = vunpack.c.l.b16 %v5213
    %v5293 = vunpack.c.h.b16 %v5213
    %v5294 = vunpack.c.l.b16 %v5214
    %v5295 = vunpack.c.h.b16 %v5214
    %v5296 = vunpack.c.l.b16 %v5215
    %v5297 = vunpack.c.h.b16 %v5215
    %v5298 = vunpack.c.l.b16 %v5216
    %v5299 = vunpack.c.h.b16 %v5216
    %v5300 = vunpack.c.l.b16 %v5217
    %v5301 = vunpack.c.h.b16 %v5217
    %v5302 = vunpack.c.l.b16 %v5218
    %v5303 = vunpack.c.h.b16 %v5218
    %v5304 = vunpack.c.l.b16 %v5219
    %v5305 = vunpack.c.h.b16 %v5219
    %v5306 = vunpack.c.l.b16 %v5220
    %v5307 = vunpack.c.h.b16 %v5220
    %v5308 = vunpack.c.l.b16 %v5221
    %v5309 = vunpack.c.h.b16 %v5221
    %v5310 = vunpack.c.l.b16 %v5222
    %v5311 = vunpack.c.h.b16 %v5222
    %v5312 = vunpack.c.l.b16 %v5223
    %v5313 = vunpack.c.h.b16 %v5223
    %v5314 = vunpack.c.l.b16 %v5224
    %v5315 = vunpack.c.h.b16 %v5224
    %v5316 = vunpack.c.l.b16 %v5225
    %v5317 = vunpack.c.h.b16 %v5225
    %v5318 = vunpack.c.l.b16 %v5226
    %v5319 = vunpack.c.h.b16 %v5226
    %v5320 = vunpack.c.l.b16 %v5227
    %v5321 = vunpack.c.h.b16 %v5227
    %v5322 = vunpack.c.l.b16 %v5228
    %v5323 = vunpack.c.h.b16 %v5228
    %v5324 = vunpack.c.l.b16 %v5229
    %v5325 = vunpack.c.h.b16 %v5229
    %v5326 = vpack.c.b16 %v5264, %v5262
    %v5327 = vpack.c.b16 %v5265, %v5263
    %v5328 = vpack.c.b16 %v5268, %v5266
    %v5329 = vpack.c.b16 %v5269, %v5267
    %v5330 = vpack.c.b16 %v5272, %v5270
    %v5331 = vpack.c.b16 %v5273, %v5271
    %v5332 = vpack.c.b16 %v5276, %v5274
    %v5333 = vpack.c.b16 %v5277, %v5275
    %v5334 = vpack.c.b16 %v5280, %v5278
    %v5335 = vpack.c.b16 %v5281, %v5279
    %v5336 = vpack.c.b16 %v5284, %v5282
    %v5337 = vpack.c.b16 %v5285, %v5283
    %v5338 = vpack.c.b16 %v5288, %v5286
    %v5339 = vpack.c.b16 %v5289, %v5287
    %v5340 = vpack.c.b16 %v5292, %v5290
    %v5341 = vpack.c.b16 %v5293, %v5291
    %v5342 = vpack.c.b16 %v5296, %v5294
    %v5343 = vpack.c.b16 %v5297, %v5295
    %v5344 = vpack.c.b16 %v5300, %v5298
    %v5345 = vpack.c.b16 %v5301, %v5299
    %v5346 = vpack.c.b16 %v5304, %v5302
    %v5347 = vpack.c.b16 %v5305, %v5303
    %v5348 = vpack.c.b16 %v5308, %v5306
    %v5349 = vpack.c.b16 %v5309, %v5307
    %v5350 = vpack.c.b16 %v5312, %v5310
    %v5351 = vpack.c.b16 %v5313, %v5311
    %v5352 = vpack.c.b16 %v5316, %v5314
    %v5353 = vpack.c.b16 %v5317, %v5315
    %v5354 = vpack.c.b16 %v5320, %v5318
    %v5355 = vpack.c.b16 %v5321, %v5319
    %v5356 = vpack.c.b16 %v5324, %v5322
    %v5357 = vpack.c.b16 %v5325, %v5323
    %5390 = vmatprep.subr.bf16.mxu0 %v5327
    %5391 = vmatpush1.bf16.msra.mxu0 %v5326
    %5392 = vmatprep.subr.bf16.mxu0 %v5329
    %5393 = vmatpush1.bf16.msra.mxu0 %v5328
    %5394 = vmatprep.subr.bf16.mxu0 %v5331
    %5395 = vmatpush1.bf16.msra.mxu0 %v5330
    %5396 = vmatprep.subr.bf16.mxu0 %v5333
    %5397 = vmatpush1.bf16.msra.mxu0 %v5332
    %5398 = vmatprep.subr.bf16.mxu0 %v5335
    %5399 = vmatpush1.bf16.msra.mxu0 %v5334
    %5400 = vmatprep.subr.bf16.mxu0 %v5337
    %5401 = vmatpush1.bf16.msra.mxu0 %v5336
    %5402 = vmatprep.subr.bf16.mxu0 %v5339
    %5403 = vmatpush1.bf16.msra.mxu0 %v5338
    %5404 = vmatprep.subr.bf16.mxu0 %v5341
    %5405 = vmatpush1.bf16.msra.mxu0 %v5340
    %5406 = vmatprep.subr.bf16.mxu0 %v5343
    %5407 = vmatpush1.bf16.msra.mxu0 %v5342
    %5408 = vmatprep.subr.bf16.mxu0 %v5345
    %5409 = vmatpush1.bf16.msra.mxu0 %v5344
    %5410 = vmatprep.subr.bf16.mxu0 %v5347
    %5411 = vmatpush1.bf16.msra.mxu0 %v5346
    %5412 = vmatprep.subr.bf16.mxu0 %v5349
    %5413 = vmatpush1.bf16.msra.mxu0 %v5348
    %5414 = vmatprep.subr.bf16.mxu0 %v5351
    %5415 = vmatpush1.bf16.msra.mxu0 %v5350
    %5416 = vmatprep.subr.bf16.mxu0 %v5353
    %5417 = vmatpush1.bf16.msra.mxu0 %v5352
    %5418 = vmatprep.subr.bf16.mxu0 %v5355
    %5419 = vmatpush1.bf16.msra.mxu0 %v5354
    %5420 = vmatprep.subr.bf16.mxu0 %v5357
    %5421 = vmatpush1.bf16.msra.mxu0 %v5356
    %5422 = vmatprep.mubr.bf16.mxu0 %v4941
    %5423 = vmatmul.mubr.bf16.gmra.mrb[0].mxu0 %v4940
    %v5424 = vpop.f32.mrb[0].mxu0
    %v5425 = vadd.f32 0.0, %v5424
    %v5426 = vpop.f32.mrb[0].mxu0
    %v5427 = vadd.f32 0.0, %v5426
    %v5428 = vpop.f32.mrb[0].mxu0
    %v5429 = vadd.f32 0.0, %v5428
    %v5430 = vpop.f32.mrb[0].mxu0
    %v5431 = vadd.f32 0.0, %v5430
    %5432 = vmatprep.mubr.bf16.mxu0 %v4943
    %5433 = vmatmul.mubr.bf16.gmra.mrb[0].mxu0 %v4942
    %v5434 = vpop.f32.mrb[0].mxu0
    %v5435 = vadd.f32 0.0, %v5434
    %v5436 = vpop.f32.mrb[0].mxu0
    %v5437 = vadd.f32 0.0, %v5436
    %v5438 = vpop.f32.mrb[0].mxu0
    %v5439 = vadd.f32 0.0, %v5438
    %v5440 = vpop.f32.mrb[0].mxu0
    %v5441 = vadd.f32 0.0, %v5440
    %5442 = vdwg.mxu0
    %s5443 = scalar_lea.vmem %s17, 64
    %v5444 = vld [vmem:[%s5443] sm:$0xff]
    %v5445 = vld [vmem:[%s5443 + $0x8] sm:$0xff]
    %v5446 = vld [vmem:[%s5443 + $0x10] sm:$0xff]
    %v5447 = vld [vmem:[%s5443 + $0x18] sm:$0xff]
    %v5448 = vld [vmem:[%s5443 + $0x20] sm:$0xff]
    %v5449 = vld [vmem:[%s5443 + $0x28] sm:$0xff]
    %v5450 = vld [vmem:[%s5443 + $0x30] sm:$0xff]
    %v5451 = vld [vmem:[%s5443 + $0x38] sm:$0xff]
    %v5453 = vsel %vm2840, %v5444, 0
    %v5456 = vsel %vm2840, %v5445, 0
    %v5459 = vsel %vm2840, %v5446, 0
    %v5462 = vsel %vm2840, %v5447, 0
    %v5465 = vsel %vm2840, %v5448, 0
    %v5468 = vsel %vm2840, %v5449, 0
    %v5471 = vsel %vm2840, %v5450, 0
    %v5474 = vsel %vm2840, %v5451, 0
    %5476 = vmatprep.subr.mxu0 %v5427
    %5477 = vmatpush1.msra.mxu0 %v5425
    %5478 = vmatprep.subr.mxu0 %v5431
    %5479 = vmatpush1.msra.mxu0 %v5429
    %5480 = vmatprep.subr.mxu0 %v5437
    %5481 = vmatpush1.msra.mxu0 %v5435
    %5482 = vmatprep.subr.mxu0 %v5441
    %5483 = vmatpush1.msra.mxu0 %v5439
    %5484 = vmatprep.subr.mxu0 0.0
    %5485 = vmatpush1.msra.mxu0 0.0
    %5486 = vmatprep.subr.mxu0 0.0
    %5487 = vmatpush1.msra.mxu0 0.0
    %5488 = vmatprep.subr.mxu0 0.0
    %5489 = vmatpush1.msra.mxu0 0.0
    %5490 = vmatprep.subr.mxu0 0.0
    %5491 = vmatpush1.msra.mxu0 0.0
    %5492 = vmatprep.subr.mxu0 0.0
    %5493 = vmatpush1.msra.mxu0 0.0
    %5494 = vmatprep.subr.mxu0 0.0
    %5495 = vmatpush1.msra.mxu0 0.0
    %5496 = vmatprep.subr.mxu0 0.0
    %5497 = vmatpush1.msra.mxu0 0.0
    %5498 = vmatprep.subr.mxu0 0.0
    %5499 = vmatpush1.msra.mxu0 0.0
    %5500 = vmatprep.subr.mxu0 0.0
    %5501 = vmatpush1.msra.mxu0 0.0
    %5502 = vmatprep.subr.mxu0 0.0
    %5503 = vmatpush1.msra.mxu0 0.0
    %5504 = vmatprep.subr.mxu0 0.0
    %5505 = vmatpush1.msra.mxu0 0.0
    %5506 = vmatprep.subr.mxu0 0.0
    %5507 = vmatpush1.msra.mxu0 0.0
    %5508 = vmatprep.subr.mxu0 0.0
    %5509 = vmatpush1.msra.mxu0 0.0
    %5510 = vmatprep.subr.mxu0 0.0
    %5511 = vmatpush1.msra.mxu0 0.0
    %5512 = vmatprep.subr.mxu0 0.0
    %5513 = vmatpush1.msra.mxu0 0.0
    %5514 = vmatprep.subr.mxu0 0.0
    %5515 = vmatpush1.msra.mxu0 0.0
    %5516 = vmatprep.subr.mxu0 0.0
    %5517 = vmatpush1.msra.mxu0 0.0
    %5518 = vmatprep.subr.mxu0 0.0
    %5519 = vmatpush1.msra.mxu0 0.0
    %5520 = vmatprep.subr.mxu0 0.0
    %5521 = vmatpush1.msra.mxu0 0.0
    %5522 = vmatprep.subr.mxu0 0.0
    %5523 = vmatpush1.msra.mxu0 0.0
    %5524 = vmatprep.subr.mxu0 0.0
    %5525 = vmatpush1.msra.mxu0 0.0
    %5526 = vmatprep.subr.mxu0 0.0
    %5527 = vmatpush1.msra.mxu0 0.0
    %5528 = vmatprep.subr.mxu0 0.0
    %5529 = vmatpush1.msra.mxu0 0.0
    %5530 = vmatprep.subr.mxu0 0.0
    %5531 = vmatpush1.msra.mxu0 0.0
    %5532 = vmatprep.subr.mxu0 0.0
    %5533 = vmatpush1.msra.mxu0 0.0
    %5534 = vmatprep.subr.mxu0 0.0
    %5535 = vmatpush1.msra.mxu0 0.0
    %5536 = vmatprep.subr.mxu0 0.0
    %5537 = vmatpush1.msra.mxu0 0.0
    %5538 = vmatprep.subr.mxu0 0.0
    %5539 = vmatpush1.msra.mxu0 0.0
    %5540 = vmatprep.mubr.f32.mxu0 0.0
    %5541 = vmatmul.mubr.f32.gmra.mrb[0].mxu0 %v5453
    %v5542 = vpop.f32.mrb[0].mxu0
    %v5543 = vadd.f32 0.0, %v5542
    %v5544 = vpop.f32.mrb[0].mxu0
    %v5545 = vadd.f32 0.0, %v5544
    %5546 = vmatprep.mubr.f32.mxu0 0.0
    %5547 = vmatmul.mubr.f32.gmra.mrb[0].mxu0 %v5456
    %v5548 = vpop.f32.mrb[0].mxu0
    %v5549 = vadd.f32 0.0, %v5548
    %v5550 = vpop.f32.mrb[0].mxu0
    %v5551 = vadd.f32 0.0, %v5550
    %5552 = vmatprep.mubr.f32.mxu0 0.0
    %5553 = vmatmul.mubr.f32.gmra.mrb[0].mxu0 %v5459
    %v5554 = vpop.f32.mrb[0].mxu0
    %v5555 = vadd.f32 0.0, %v5554
    %v5556 = vpop.f32.mrb[0].mxu0
    %v5557 = vadd.f32 0.0, %v5556
    %5558 = vmatprep.mubr.f32.mxu0 0.0
    %5559 = vmatmul.mubr.f32.gmra.mrb[0].mxu0 %v5462
    %v5560 = vpop.f32.mrb[0].mxu0
    %v5561 = vadd.f32 0.0, %v5560
    %v5562 = vpop.f32.mrb[0].mxu0
    %v5563 = vadd.f32 0.0, %v5562
    %5564 = vmatprep.mubr.f32.mxu0 0.0
    %5565 = vmatmul.mubr.f32.gmra.mrb[0].mxu0 %v5465
    %v5566 = vpop.f32.mrb[0].mxu0
    %v5567 = vadd.f32 0.0, %v5566
    %v5568 = vpop.f32.mrb[0].mxu0
    %v5569 = vadd.f32 0.0, %v5568
    %5570 = vmatprep.mubr.f32.mxu0 0.0
    %5571 = vmatmul.mubr.f32.gmra.mrb[0].mxu0 %v5468
    %v5572 = vpop.f32.mrb[0].mxu0
    %v5573 = vadd.f32 0.0, %v5572
    %v5574 = vpop.f32.mrb[0].mxu0
    %v5575 = vadd.f32 0.0, %v5574
    %5576 = vmatprep.mubr.f32.mxu0 0.0
    %5577 = vmatmul.mubr.f32.gmra.mrb[0].mxu0 %v5471
    %v5578 = vpop.f32.mrb[0].mxu0
    %v5579 = vadd.f32 0.0, %v5578
    %v5580 = vpop.f32.mrb[0].mxu0
    %v5581 = vadd.f32 0.0, %v5580
    %5582 = vmatprep.mubr.f32.mxu0 0.0
    %5583 = vmatmul.mubr.f32.gmra.mrb[0].mxu0 %v5474
    %v5584 = vpop.f32.mrb[0].mxu0
    %v5585 = vadd.f32 0.0, %v5584
    %v5586 = vpop.f32.mrb[0].mxu0
    %v5587 = vadd.f32 0.0, %v5586
    %5588 = vdwg.mxu0
    %v5590 = vsel %vm2840, %v5189, 0
    %v5593 = vsel %vm2840, %v5190, 0
    %v5596 = vsel %vm2840, %v5191, 0
    %v5599 = vsel %vm2840, %v5192, 0
    %v5602 = vsel %vm2840, %v5193, 0
    %v5605 = vsel %vm2840, %v5194, 0
    %v5608 = vsel %vm2840, %v5195, 0
    %v5611 = vsel %vm2840, %v5196, 0
    %5613 = vmatprep.subr.mxu0 %v5173
    %5614 = vmatpush1.msra.mxu0 %v5171
    %5615 = vmatprep.subr.mxu0 %v5177
    %5616 = vmatpush1.msra.mxu0 %v5175
    %5617 = vmatprep.subr.mxu0 %v5183
    %5618 = vmatpush1.msra.mxu0 %v5181
    %5619 = vmatprep.subr.mxu0 %v5187
    %5620 = vmatpush1.msra.mxu0 %v5185
    %5621 = vmatprep.subr.mxu0 0.0
    %5622 = vmatpush1.msra.mxu0 0.0
    %5623 = vmatprep.subr.mxu0 0.0
    %5624 = vmatpush1.msra.mxu0 0.0
    %5625 = vmatprep.subr.mxu0 0.0
    %5626 = vmatpush1.msra.mxu0 0.0
    %5627 = vmatprep.subr.mxu0 0.0
    %5628 = vmatpush1.msra.mxu0 0.0
    %5629 = vmatprep.subr.mxu0 0.0
    %5630 = vmatpush1.msra.mxu0 0.0
    %5631 = vmatprep.subr.mxu0 0.0
    %5632 = vmatpush1.msra.mxu0 0.0
    %5633 = vmatprep.subr.mxu0 0.0
    %5634 = vmatpush1.msra.mxu0 0.0
    %5635 = vmatprep.subr.mxu0 0.0
    %5636 = vmatpush1.msra.mxu0 0.0
    %5637 = vmatprep.subr.mxu0 0.0
    %5638 = vmatpush1.msra.mxu0 0.0
    %5639 = vmatprep.subr.mxu0 0.0
    %5640 = vmatpush1.msra.mxu0 0.0
    %5641 = vmatprep.subr.mxu0 0.0
    %5642 = vmatpush1.msra.mxu0 0.0
    %5643 = vmatprep.subr.mxu0 0.0
    %5644 = vmatpush1.msra.mxu0 0.0
    %5645 = vmatprep.subr.mxu0 0.0
    %5646 = vmatpush1.msra.mxu0 0.0
    %5647 = vmatprep.subr.mxu0 0.0
    %5648 = vmatpush1.msra.mxu0 0.0
    %5649 = vmatprep.subr.mxu0 0.0
    %5650 = vmatpush1.msra.mxu0 0.0
    %5651 = vmatprep.subr.mxu0 0.0
    %5652 = vmatpush1.msra.mxu0 0.0
    %5653 = vmatprep.subr.mxu0 0.0
    %5654 = vmatpush1.msra.mxu0 0.0
    %5655 = vmatprep.subr.mxu0 0.0
    %5656 = vmatpush1.msra.mxu0 0.0
    %5657 = vmatprep.subr.mxu0 0.0
    %5658 = vmatpush1.msra.mxu0 0.0
    %5659 = vmatprep.subr.mxu0 0.0
    %5660 = vmatpush1.msra.mxu0 0.0
    %5661 = vmatprep.subr.mxu0 0.0
    %5662 = vmatpush1.msra.mxu0 0.0
    %5663 = vmatprep.subr.mxu0 0.0
    %5664 = vmatpush1.msra.mxu0 0.0
    %5665 = vmatprep.subr.mxu0 0.0
    %5666 = vmatpush1.msra.mxu0 0.0
    %5667 = vmatprep.subr.mxu0 0.0
    %5668 = vmatpush1.msra.mxu0 0.0
    %5669 = vmatprep.subr.mxu0 0.0
    %5670 = vmatpush1.msra.mxu0 0.0
    %5671 = vmatprep.subr.mxu0 0.0
    %5672 = vmatpush1.msra.mxu0 0.0
    %5673 = vmatprep.subr.mxu0 0.0
    %5674 = vmatpush1.msra.mxu0 0.0
    %5675 = vmatprep.subr.mxu0 0.0
    %5676 = vmatpush1.msra.mxu0 0.0
    %5677 = vmatprep.mubr.f32.mxu0 0.0
    %5678 = vmatmul.mubr.f32.gmra.mrb[0].mxu0 %v5590
    %v5679 = vpop.f32.mrb[0].mxu0
    %v5680 = vadd.f32 %v5543, %v5679
    %v5681 = vpop.f32.mrb[0].mxu0
    %v5682 = vadd.f32 %v5545, %v5681
    %5683 = vmatprep.mubr.f32.mxu0 0.0
    %5684 = vmatmul.mubr.f32.gmra.mrb[0].mxu0 %v5593
    %v5685 = vpop.f32.mrb[0].mxu0
    %v5686 = vadd.f32 %v5549, %v5685
    %v5687 = vpop.f32.mrb[0].mxu0
    %v5688 = vadd.f32 %v5551, %v5687
    %5689 = vmatprep.mubr.f32.mxu0 0.0
    %5690 = vmatmul.mubr.f32.gmra.mrb[0].mxu0 %v5596
    %v5691 = vpop.f32.mrb[0].mxu0
    %v5692 = vadd.f32 %v5555, %v5691
    %v5693 = vpop.f32.mrb[0].mxu0
    %v5694 = vadd.f32 %v5557, %v5693
    %5695 = vmatprep.mubr.f32.mxu0 0.0
    %5696 = vmatmul.mubr.f32.gmra.mrb[0].mxu0 %v5599
    %v5697 = vpop.f32.mrb[0].mxu0
    %v5698 = vadd.f32 %v5561, %v5697
    %v5699 = vpop.f32.mrb[0].mxu0
    %v5700 = vadd.f32 %v5563, %v5699
    %5701 = vmatprep.mubr.f32.mxu0 0.0
    %5702 = vmatmul.mubr.f32.gmra.mrb[0].mxu0 %v5602
    %v5703 = vpop.f32.mrb[0].mxu0
    %v5704 = vadd.f32 %v5567, %v5703
    %v5705 = vpop.f32.mrb[0].mxu0
    %v5706 = vadd.f32 %v5569, %v5705
    %5707 = vmatprep.mubr.f32.mxu0 0.0
    %5708 = vmatmul.mubr.f32.gmra.mrb[0].mxu0 %v5605
    %v5709 = vpop.f32.mrb[0].mxu0
    %v5710 = vadd.f32 %v5573, %v5709
    %v5711 = vpop.f32.mrb[0].mxu0
    %v5712 = vadd.f32 %v5575, %v5711
    %5713 = vmatprep.mubr.f32.mxu0 0.0
    %5714 = vmatmul.mubr.f32.gmra.mrb[0].mxu0 %v5608
    %v5715 = vpop.f32.mrb[0].mxu0
    %v5716 = vadd.f32 %v5579, %v5715
    %v5717 = vpop.f32.mrb[0].mxu0
    %v5718 = vadd.f32 %v5581, %v5717
    %5719 = vmatprep.mubr.f32.mxu0 0.0
    %5720 = vmatmul.mubr.f32.gmra.mrb[0].mxu0 %v5611
    %v5721 = vpop.f32.mrb[0].mxu0
    %v5722 = vadd.f32 %v5585, %v5721
    %v5723 = vpop.f32.mrb[0].mxu0
    %v5724 = vadd.f32 %v5587, %v5723
    %5725 = vdwg.mxu0
    %s5726 = scalar_lea.vmem %s16, 512
    %v5727 = vld [vmem:[%s5726] sm:$0xff]
    %v5728 = vld [vmem:[%s5726 + $0x8] sm:$0xff]
    %v5729 = vld [vmem:[%s5726 + $0x10] sm:$0xff]
    %v5730 = vld [vmem:[%s5726 + $0x18] sm:$0xff]
    %v5731 = vld [vmem:[%s5726 + $0x20] sm:$0xff]
    %v5732 = vld [vmem:[%s5726 + $0x28] sm:$0xff]
    %v5733 = vld [vmem:[%s5726 + $0x30] sm:$0xff]
    %v5734 = vld [vmem:[%s5726 + $0x38] sm:$0xff]
    %v5735 = vld [vmem:[%s5726 + $0x40] sm:$0xff]
    %v5736 = vld [vmem:[%s5726 + $0x48] sm:$0xff]
    %v5737 = vld [vmem:[%s5726 + $0x50] sm:$0xff]
    %v5738 = vld [vmem:[%s5726 + $0x58] sm:$0xff]
    %v5739 = vld [vmem:[%s5726 + $0x60] sm:$0xff]
    %v5740 = vld [vmem:[%s5726 + $0x68] sm:$0xff]
    %v5741 = vld [vmem:[%s5726 + $0x70] sm:$0xff]
    %v5742 = vld [vmem:[%s5726 + $0x78] sm:$0xff]
    %v5743 = vld [vmem:[%s5726 + $0x80] sm:$0xff]
    %v5744 = vld [vmem:[%s5726 + $0x88] sm:$0xff]
    %v5745 = vld [vmem:[%s5726 + $0x90] sm:$0xff]
    %v5746 = vld [vmem:[%s5726 + $0x98] sm:$0xff]
    %v5747 = vld [vmem:[%s5726 + $0xa0] sm:$0xff]
    %v5748 = vld [vmem:[%s5726 + $0xa8] sm:$0xff]
    %v5749 = vld [vmem:[%s5726 + $0xb0] sm:$0xff]
    %v5750 = vld [vmem:[%s5726 + $0xb8] sm:$0xff]
    %v5751 = vld [vmem:[%s5726 + $0xc0] sm:$0xff]
    %v5752 = vld [vmem:[%s5726 + $0xc8] sm:$0xff]
    %v5753 = vld [vmem:[%s5726 + $0xd0] sm:$0xff]
    %v5754 = vld [vmem:[%s5726 + $0xd8] sm:$0xff]
    %v5755 = vld [vmem:[%s5726 + $0xe0] sm:$0xff]
    %v5756 = vld [vmem:[%s5726 + $0xe8] sm:$0xff]
    %v5757 = vld [vmem:[%s5726 + $0xf0] sm:$0xff]
    %v5758 = vld [vmem:[%s5726 + $0xf8] sm:$0xff]
    %v5791 = vunpack.c.l.b16 %v5727
    %v5792 = vunpack.c.h.b16 %v5727
    %v5793 = vunpack.c.l.b16 %v5728
    %v5794 = vunpack.c.h.b16 %v5728
    %v5795 = vunpack.c.l.b16 %v5729
    %v5796 = vunpack.c.h.b16 %v5729
    %v5797 = vunpack.c.l.b16 %v5730
    %v5798 = vunpack.c.h.b16 %v5730
    %v5799 = vunpack.c.l.b16 %v5731
    %v5800 = vunpack.c.h.b16 %v5731
    %v5801 = vunpack.c.l.b16 %v5732
    %v5802 = vunpack.c.h.b16 %v5732
    %v5803 = vunpack.c.l.b16 %v5733
    %v5804 = vunpack.c.h.b16 %v5733
    %v5805 = vunpack.c.l.b16 %v5734
    %v5806 = vunpack.c.h.b16 %v5734
    %v5807 = vunpack.c.l.b16 %v5735
    %v5808 = vunpack.c.h.b16 %v5735
    %v5809 = vunpack.c.l.b16 %v5736
    %v5810 = vunpack.c.h.b16 %v5736
    %v5811 = vunpack.c.l.b16 %v5737
    %v5812 = vunpack.c.h.b16 %v5737
    %v5813 = vunpack.c.l.b16 %v5738
    %v5814 = vunpack.c.h.b16 %v5738
    %v5815 = vunpack.c.l.b16 %v5739
    %v5816 = vunpack.c.h.b16 %v5739
    %v5817 = vunpack.c.l.b16 %v5740
    %v5818 = vunpack.c.h.b16 %v5740
    %v5819 = vunpack.c.l.b16 %v5741
    %v5820 = vunpack.c.h.b16 %v5741
    %v5821 = vunpack.c.l.b16 %v5742
    %v5822 = vunpack.c.h.b16 %v5742
    %v5823 = vunpack.c.l.b16 %v5743
    %v5824 = vunpack.c.h.b16 %v5743
    %v5825 = vunpack.c.l.b16 %v5744
    %v5826 = vunpack.c.h.b16 %v5744
    %v5827 = vunpack.c.l.b16 %v5745
    %v5828 = vunpack.c.h.b16 %v5745
    %v5829 = vunpack.c.l.b16 %v5746
    %v5830 = vunpack.c.h.b16 %v5746
    %v5831 = vunpack.c.l.b16 %v5747
    %v5832 = vunpack.c.h.b16 %v5747
    %v5833 = vunpack.c.l.b16 %v5748
    %v5834 = vunpack.c.h.b16 %v5748
    %v5835 = vunpack.c.l.b16 %v5749
    %v5836 = vunpack.c.h.b16 %v5749
    %v5837 = vunpack.c.l.b16 %v5750
    %v5838 = vunpack.c.h.b16 %v5750
    %v5839 = vunpack.c.l.b16 %v5751
    %v5840 = vunpack.c.h.b16 %v5751
    %v5841 = vunpack.c.l.b16 %v5752
    %v5842 = vunpack.c.h.b16 %v5752
    %v5843 = vunpack.c.l.b16 %v5753
    %v5844 = vunpack.c.h.b16 %v5753
    %v5845 = vunpack.c.l.b16 %v5754
    %v5846 = vunpack.c.h.b16 %v5754
    %v5847 = vunpack.c.l.b16 %v5755
    %v5848 = vunpack.c.h.b16 %v5755
    %v5849 = vunpack.c.l.b16 %v5756
    %v5850 = vunpack.c.h.b16 %v5756
    %v5851 = vunpack.c.l.b16 %v5757
    %v5852 = vunpack.c.h.b16 %v5757
    %v5853 = vunpack.c.l.b16 %v5758
    %v5854 = vunpack.c.h.b16 %v5758
    %v5855 = vpack.c.b16 %v5793, %v5791
    %v5856 = vpack.c.b16 %v5794, %v5792
    %v5857 = vpack.c.b16 %v5797, %v5795
    %v5858 = vpack.c.b16 %v5798, %v5796
    %v5859 = vpack.c.b16 %v5801, %v5799
    %v5860 = vpack.c.b16 %v5802, %v5800
    %v5861 = vpack.c.b16 %v5805, %v5803
    %v5862 = vpack.c.b16 %v5806, %v5804
    %v5863 = vpack.c.b16 %v5809, %v5807
    %v5864 = vpack.c.b16 %v5810, %v5808
    %v5865 = vpack.c.b16 %v5813, %v5811
    %v5866 = vpack.c.b16 %v5814, %v5812
    %v5867 = vpack.c.b16 %v5817, %v5815
    %v5868 = vpack.c.b16 %v5818, %v5816
    %v5869 = vpack.c.b16 %v5821, %v5819
    %v5870 = vpack.c.b16 %v5822, %v5820
    %v5871 = vpack.c.b16 %v5825, %v5823
    %v5872 = vpack.c.b16 %v5826, %v5824
    %v5873 = vpack.c.b16 %v5829, %v5827
    %v5874 = vpack.c.b16 %v5830, %v5828
    %v5875 = vpack.c.b16 %v5833, %v5831
    %v5876 = vpack.c.b16 %v5834, %v5832
    %v5877 = vpack.c.b16 %v5837, %v5835
    %v5878 = vpack.c.b16 %v5838, %v5836
    %v5879 = vpack.c.b16 %v5841, %v5839
    %v5880 = vpack.c.b16 %v5842, %v5840
    %v5881 = vpack.c.b16 %v5845, %v5843
    %v5882 = vpack.c.b16 %v5846, %v5844
    %v5883 = vpack.c.b16 %v5849, %v5847
    %v5884 = vpack.c.b16 %v5850, %v5848
    %v5885 = vpack.c.b16 %v5853, %v5851
    %v5886 = vpack.c.b16 %v5854, %v5852
    %5919 = vmatprep.subr.bf16.mxu0 %v5856
    %5920 = vmatpush1.bf16.msra.mxu0 %v5855
    %5921 = vmatprep.subr.bf16.mxu0 %v5858
    %5922 = vmatpush1.bf16.msra.mxu0 %v5857
    %5923 = vmatprep.subr.bf16.mxu0 %v5860
    %5924 = vmatpush1.bf16.msra.mxu0 %v5859
    %5925 = vmatprep.subr.bf16.mxu0 %v5862
    %5926 = vmatpush1.bf16.msra.mxu0 %v5861
    %5927 = vmatprep.subr.bf16.mxu0 %v5864
    %5928 = vmatpush1.bf16.msra.mxu0 %v5863
    %5929 = vmatprep.subr.bf16.mxu0 %v5866
    %5930 = vmatpush1.bf16.msra.mxu0 %v5865
    %5931 = vmatprep.subr.bf16.mxu0 %v5868
    %5932 = vmatpush1.bf16.msra.mxu0 %v5867
    %5933 = vmatprep.subr.bf16.mxu0 %v5870
    %5934 = vmatpush1.bf16.msra.mxu0 %v5869
    %5935 = vmatprep.subr.bf16.mxu0 %v5872
    %5936 = vmatpush1.bf16.msra.mxu0 %v5871
    %5937 = vmatprep.subr.bf16.mxu0 %v5874
    %5938 = vmatpush1.bf16.msra.mxu0 %v5873
    %5939 = vmatprep.subr.bf16.mxu0 %v5876
    %5940 = vmatpush1.bf16.msra.mxu0 %v5875
    %5941 = vmatprep.subr.bf16.mxu0 %v5878
    %5942 = vmatpush1.bf16.msra.mxu0 %v5877
    %5943 = vmatprep.subr.bf16.mxu0 %v5880
    %5944 = vmatpush1.bf16.msra.mxu0 %v5879
    %5945 = vmatprep.subr.bf16.mxu0 %v5882
    %5946 = vmatpush1.bf16.msra.mxu0 %v5881
    %5947 = vmatprep.subr.bf16.mxu0 %v5884
    %5948 = vmatpush1.bf16.msra.mxu0 %v5883
    %5949 = vmatprep.subr.bf16.mxu0 %v5886
    %5950 = vmatpush1.bf16.msra.mxu0 %v5885
    %5951 = vmatprep.mubr.bf16.mxu0 %v4941
    %5952 = vmatmul.mubr.bf16.gmra.mrb[0].mxu0 %v4940
    %v5953 = vpop.f32.mrb[0].mxu0
    %v5954 = vadd.f32 0.0, %v5953
    %v5955 = vpop.f32.mrb[0].mxu0
    %v5956 = vadd.f32 0.0, %v5955
    %v5957 = vpop.f32.mrb[0].mxu0
    %v5958 = vadd.f32 0.0, %v5957
    %v5959 = vpop.f32.mrb[0].mxu0
    %v5960 = vadd.f32 0.0, %v5959
    %5961 = vmatprep.mubr.bf16.mxu0 %v4943
    %5962 = vmatmul.mubr.bf16.gmra.mrb[0].mxu0 %v4942
    %v5963 = vpop.f32.mrb[0].mxu0
    %v5964 = vadd.f32 0.0, %v5963
    %v5965 = vpop.f32.mrb[0].mxu0
    %v5966 = vadd.f32 0.0, %v5965
    %v5967 = vpop.f32.mrb[0].mxu0
    %v5968 = vadd.f32 0.0, %v5967
    %v5969 = vpop.f32.mrb[0].mxu0
    %v5970 = vadd.f32 0.0, %v5969
    %5971 = vdwg.mxu0
    %s5972 = scalar_lea.vmem %s17, 128
    %v5973 = vld [vmem:[%s5972] sm:$0xff]
    %v5974 = vld [vmem:[%s5972 + $0x8] sm:$0xff]
    %v5975 = vld [vmem:[%s5972 + $0x10] sm:$0xff]
    %v5976 = vld [vmem:[%s5972 + $0x18] sm:$0xff]
    %v5977 = vld [vmem:[%s5972 + $0x20] sm:$0xff]
    %v5978 = vld [vmem:[%s5972 + $0x28] sm:$0xff]
    %v5979 = vld [vmem:[%s5972 + $0x30] sm:$0xff]
    %v5980 = vld [vmem:[%s5972 + $0x38] sm:$0xff]
    %v5982 = vsel %vm2840, %v5973, 0
    %v5985 = vsel %vm2840, %v5974, 0
    %v5988 = vsel %vm2840, %v5975, 0
    %v5991 = vsel %vm2840, %v5976, 0
    %v5994 = vsel %vm2840, %v5977, 0
    %v5997 = vsel %vm2840, %v5978, 0
    %v6000 = vsel %vm2840, %v5979, 0
    %v6003 = vsel %vm2840, %v5980, 0
    %6005 = vmatprep.subr.mxu0 %v5956
    %6006 = vmatpush1.msra.mxu0 %v5954
    %6007 = vmatprep.subr.mxu0 %v5960
    %6008 = vmatpush1.msra.mxu0 %v5958
    %6009 = vmatprep.subr.mxu0 %v5966
    %6010 = vmatpush1.msra.mxu0 %v5964
    %6011 = vmatprep.subr.mxu0 %v5970
    %6012 = vmatpush1.msra.mxu0 %v5968
    %6013 = vmatprep.subr.mxu0 0.0
    %6014 = vmatpush1.msra.mxu0 0.0
    %6015 = vmatprep.subr.mxu0 0.0
    %6016 = vmatpush1.msra.mxu0 0.0
    %6017 = vmatprep.subr.mxu0 0.0
    %6018 = vmatpush1.msra.mxu0 0.0
    %6019 = vmatprep.subr.mxu0 0.0
    %6020 = vmatpush1.msra.mxu0 0.0
    %6021 = vmatprep.subr.mxu0 0.0
    %6022 = vmatpush1.msra.mxu0 0.0
    %6023 = vmatprep.subr.mxu0 0.0
    %6024 = vmatpush1.msra.mxu0 0.0
    %6025 = vmatprep.subr.mxu0 0.0
    %6026 = vmatpush1.msra.mxu0 0.0
    %6027 = vmatprep.subr.mxu0 0.0
    %6028 = vmatpush1.msra.mxu0 0.0
    %6029 = vmatprep.subr.mxu0 0.0
    %6030 = vmatpush1.msra.mxu0 0.0
    %6031 = vmatprep.subr.mxu0 0.0
    %6032 = vmatpush1.msra.mxu0 0.0
    %6033 = vmatprep.subr.mxu0 0.0
    %6034 = vmatpush1.msra.mxu0 0.0
    %6035 = vmatprep.subr.mxu0 0.0
    %6036 = vmatpush1.msra.mxu0 0.0
    %6037 = vmatprep.subr.mxu0 0.0
    %6038 = vmatpush1.msra.mxu0 0.0
    %6039 = vmatprep.subr.mxu0 0.0
    %6040 = vmatpush1.msra.mxu0 0.0
    %6041 = vmatprep.subr.mxu0 0.0
    %6042 = vmatpush1.msra.mxu0 0.0
    %6043 = vmatprep.subr.mxu0 0.0
    %6044 = vmatpush1.msra.mxu0 0.0
    %6045 = vmatprep.subr.mxu0 0.0
    %6046 = vmatpush1.msra.mxu0 0.0
    %6047 = vmatprep.subr.mxu0 0.0
    %6048 = vmatpush1.msra.mxu0 0.0
    %6049 = vmatprep.subr.mxu0 0.0
    %6050 = vmatpush1.msra.mxu0 0.0
    %6051 = vmatprep.subr.mxu0 0.0
    %6052 = vmatpush1.msra.mxu0 0.0
    %6053 = vmatprep.subr.mxu0 0.0
    %6054 = vmatpush1.msra.mxu0 0.0
    %6055 = vmatprep.subr.mxu0 0.0
    %6056 = vmatpush1.msra.mxu0 0.0
    %6057 = vmatprep.subr.mxu0 0.0
    %6058 = vmatpush1.msra.mxu0 0.0
    %6059 = vmatprep.subr.mxu0 0.0
    %6060 = vmatpush1.msra.mxu0 0.0
    %6061 = vmatprep.subr.mxu0 0.0
    %6062 = vmatpush1.msra.mxu0 0.0
    %6063 = vmatprep.subr.mxu0 0.0
    %6064 = vmatpush1.msra.mxu0 0.0
    %6065 = vmatprep.subr.mxu0 0.0
    %6066 = vmatpush1.msra.mxu0 0.0
    %6067 = vmatprep.subr.mxu0 0.0
    %6068 = vmatpush1.msra.mxu0 0.0
    %6069 = vmatprep.mubr.f32.mxu0 0.0
    %6070 = vmatmul.mubr.f32.gmra.mrb[0].mxu0 %v5982
    %v6071 = vpop.f32.mrb[0].mxu0
    %v6072 = vadd.f32 0.0, %v6071
    %v6073 = vpop.f32.mrb[0].mxu0
    %v6074 = vadd.f32 0.0, %v6073
    %6075 = vmatprep.mubr.f32.mxu0 0.0
    %6076 = vmatmul.mubr.f32.gmra.mrb[0].mxu0 %v5985
    %v6077 = vpop.f32.mrb[0].mxu0
    %v6078 = vadd.f32 0.0, %v6077
    %v6079 = vpop.f32.mrb[0].mxu0
    %v6080 = vadd.f32 0.0, %v6079
    %6081 = vmatprep.mubr.f32.mxu0 0.0
    %6082 = vmatmul.mubr.f32.gmra.mrb[0].mxu0 %v5988
    %v6083 = vpop.f32.mrb[0].mxu0
    %v6084 = vadd.f32 0.0, %v6083
    %v6085 = vpop.f32.mrb[0].mxu0
    %v6086 = vadd.f32 0.0, %v6085
    %6087 = vmatprep.mubr.f32.mxu0 0.0
    %6088 = vmatmul.mubr.f32.gmra.mrb[0].mxu0 %v5991
    %v6089 = vpop.f32.mrb[0].mxu0
    %v6090 = vadd.f32 0.0, %v6089
    %v6091 = vpop.f32.mrb[0].mxu0
    %v6092 = vadd.f32 0.0, %v6091
    %6093 = vmatprep.mubr.f32.mxu0 0.0
    %6094 = vmatmul.mubr.f32.gmra.mrb[0].mxu0 %v5994
    %v6095 = vpop.f32.mrb[0].mxu0
    %v6096 = vadd.f32 0.0, %v6095
    %v6097 = vpop.f32.mrb[0].mxu0
    %v6098 = vadd.f32 0.0, %v6097
    %6099 = vmatprep.mubr.f32.mxu0 0.0
    %6100 = vmatmul.mubr.f32.gmra.mrb[0].mxu0 %v5997
    %v6101 = vpop.f32.mrb[0].mxu0
    %v6102 = vadd.f32 0.0, %v6101
    %v6103 = vpop.f32.mrb[0].mxu0
    %v6104 = vadd.f32 0.0, %v6103
    %6105 = vmatprep.mubr.f32.mxu0 0.0
    %6106 = vmatmul.mubr.f32.gmra.mrb[0].mxu0 %v6000
    %v6107 = vpop.f32.mrb[0].mxu0
    %v6108 = vadd.f32 0.0, %v6107
    %v6109 = vpop.f32.mrb[0].mxu0
    %v6110 = vadd.f32 0.0, %v6109
    %6111 = vmatprep.mubr.f32.mxu0 0.0
    %6112 = vmatmul.mubr.f32.gmra.mrb[0].mxu0 %v6003
    %v6113 = vpop.f32.mrb[0].mxu0
    %v6114 = vadd.f32 0.0, %v6113
    %v6115 = vpop.f32.mrb[0].mxu0
    %v6116 = vadd.f32 0.0, %v6115
    %6117 = vdwg.mxu0
    %v6118 = vadd.f32 %v5680, %v6072
    %v6119 = vadd.f32 %v5682, %v6074
    %v6120 = vadd.f32 %v5686, %v6078
    %v6121 = vadd.f32 %v5688, %v6080
    %v6122 = vadd.f32 %v5692, %v6084
    %v6123 = vadd.f32 %v5694, %v6086
    %v6124 = vadd.f32 %v5698, %v6090
    %v6125 = vadd.f32 %v5700, %v6092
    %v6126 = vadd.f32 %v5704, %v6096
    %v6127 = vadd.f32 %v5706, %v6098
    %v6128 = vadd.f32 %v5710, %v6102
    %v6129 = vadd.f32 %v5712, %v6104
    %v6130 = vadd.f32 %v5716, %v6108
    %v6131 = vadd.f32 %v5718, %v6110
    %v6132 = vadd.f32 %v5722, %v6114
    %v6133 = vadd.f32 %v5724, %v6116
    %s6134 = scalar_lea.vmem %s16, 768
    %v6135 = vld [vmem:[%s6134] sm:$0xff]
    %v6136 = vld [vmem:[%s6134 + $0x8] sm:$0xff]
    %v6137 = vld [vmem:[%s6134 + $0x10] sm:$0xff]
    %v6138 = vld [vmem:[%s6134 + $0x18] sm:$0xff]
    %v6139 = vld [vmem:[%s6134 + $0x20] sm:$0xff]
    %v6140 = vld [vmem:[%s6134 + $0x28] sm:$0xff]
    %v6141 = vld [vmem:[%s6134 + $0x30] sm:$0xff]
    %v6142 = vld [vmem:[%s6134 + $0x38] sm:$0xff]
    %v6143 = vld [vmem:[%s6134 + $0x40] sm:$0xff]
    %v6144 = vld [vmem:[%s6134 + $0x48] sm:$0xff]
    %v6145 = vld [vmem:[%s6134 + $0x50] sm:$0xff]
    %v6146 = vld [vmem:[%s6134 + $0x58] sm:$0xff]
    %v6147 = vld [vmem:[%s6134 + $0x60] sm:$0xff]
    %v6148 = vld [vmem:[%s6134 + $0x68] sm:$0xff]
    %v6149 = vld [vmem:[%s6134 + $0x70] sm:$0xff]
    %v6150 = vld [vmem:[%s6134 + $0x78] sm:$0xff]
    %v6151 = vld [vmem:[%s6134 + $0x80] sm:$0xff]
    %v6152 = vld [vmem:[%s6134 + $0x88] sm:$0xff]
    %v6153 = vld [vmem:[%s6134 + $0x90] sm:$0xff]
    %v6154 = vld [vmem:[%s6134 + $0x98] sm:$0xff]
    %v6155 = vld [vmem:[%s6134 + $0xa0] sm:$0xff]
    %v6156 = vld [vmem:[%s6134 + $0xa8] sm:$0xff]
    %v6157 = vld [vmem:[%s6134 + $0xb0] sm:$0xff]
    %v6158 = vld [vmem:[%s6134 + $0xb8] sm:$0xff]
    %v6159 = vld [vmem:[%s6134 + $0xc0] sm:$0xff]
    %v6160 = vld [vmem:[%s6134 + $0xc8] sm:$0xff]
    %v6161 = vld [vmem:[%s6134 + $0xd0] sm:$0xff]
    %v6162 = vld [vmem:[%s6134 + $0xd8] sm:$0xff]
    %v6163 = vld [vmem:[%s6134 + $0xe0] sm:$0xff]
    %v6164 = vld [vmem:[%s6134 + $0xe8] sm:$0xff]
    %v6165 = vld [vmem:[%s6134 + $0xf0] sm:$0xff]
    %v6166 = vld [vmem:[%s6134 + $0xf8] sm:$0xff]
    %v6199 = vunpack.c.l.b16 %v6135
    %v6200 = vunpack.c.h.b16 %v6135
    %v6201 = vunpack.c.l.b16 %v6136
    %v6202 = vunpack.c.h.b16 %v6136
    %v6203 = vunpack.c.l.b16 %v6137
    %v6204 = vunpack.c.h.b16 %v6137
    %v6205 = vunpack.c.l.b16 %v6138
    %v6206 = vunpack.c.h.b16 %v6138
    %v6207 = vunpack.c.l.b16 %v6139
    %v6208 = vunpack.c.h.b16 %v6139
    %v6209 = vunpack.c.l.b16 %v6140
    %v6210 = vunpack.c.h.b16 %v6140
    %v6211 = vunpack.c.l.b16 %v6141
    %v6212 = vunpack.c.h.b16 %v6141
    %v6213 = vunpack.c.l.b16 %v6142
    %v6214 = vunpack.c.h.b16 %v6142
    %v6215 = vunpack.c.l.b16 %v6143
    %v6216 = vunpack.c.h.b16 %v6143
    %v6217 = vunpack.c.l.b16 %v6144
    %v6218 = vunpack.c.h.b16 %v6144
    %v6219 = vunpack.c.l.b16 %v6145
    %v6220 = vunpack.c.h.b16 %v6145
    %v6221 = vunpack.c.l.b16 %v6146
    %v6222 = vunpack.c.h.b16 %v6146
    %v6223 = vunpack.c.l.b16 %v6147
    %v6224 = vunpack.c.h.b16 %v6147
    %v6225 = vunpack.c.l.b16 %v6148
    %v6226 = vunpack.c.h.b16 %v6148
    %v6227 = vunpack.c.l.b16 %v6149
    %v6228 = vunpack.c.h.b16 %v6149
    %v6229 = vunpack.c.l.b16 %v6150
    %v6230 = vunpack.c.h.b16 %v6150
    %v6231 = vunpack.c.l.b16 %v6151
    %v6232 = vunpack.c.h.b16 %v6151
    %v6233 = vunpack.c.l.b16 %v6152
    %v6234 = vunpack.c.h.b16 %v6152
    %v6235 = vunpack.c.l.b16 %v6153
    %v6236 = vunpack.c.h.b16 %v6153
    %v6237 = vunpack.c.l.b16 %v6154
    %v6238 = vunpack.c.h.b16 %v6154
    %v6239 = vunpack.c.l.b16 %v6155
    %v6240 = vunpack.c.h.b16 %v6155
    %v6241 = vunpack.c.l.b16 %v6156
    %v6242 = vunpack.c.h.b16 %v6156
    %v6243 = vunpack.c.l.b16 %v6157
    %v6244 = vunpack.c.h.b16 %v6157
    %v6245 = vunpack.c.l.b16 %v6158
    %v6246 = vunpack.c.h.b16 %v6158
    %v6247 = vunpack.c.l.b16 %v6159
    %v6248 = vunpack.c.h.b16 %v6159
    %v6249 = vunpack.c.l.b16 %v6160
    %v6250 = vunpack.c.h.b16 %v6160
    %v6251 = vunpack.c.l.b16 %v6161
    %v6252 = vunpack.c.h.b16 %v6161
    %v6253 = vunpack.c.l.b16 %v6162
    %v6254 = vunpack.c.h.b16 %v6162
    %v6255 = vunpack.c.l.b16 %v6163
    %v6256 = vunpack.c.h.b16 %v6163
    %v6257 = vunpack.c.l.b16 %v6164
    %v6258 = vunpack.c.h.b16 %v6164
    %v6259 = vunpack.c.l.b16 %v6165
    %v6260 = vunpack.c.h.b16 %v6165
    %v6261 = vunpack.c.l.b16 %v6166
    %v6262 = vunpack.c.h.b16 %v6166
    %v6263 = vpack.c.b16 %v6201, %v6199
    %v6264 = vpack.c.b16 %v6202, %v6200
    %v6265 = vpack.c.b16 %v6205, %v6203
    %v6266 = vpack.c.b16 %v6206, %v6204
    %v6267 = vpack.c.b16 %v6209, %v6207
    %v6268 = vpack.c.b16 %v6210, %v6208
    %v6269 = vpack.c.b16 %v6213, %v6211
    %v6270 = vpack.c.b16 %v6214, %v6212
    %v6271 = vpack.c.b16 %v6217, %v6215
    %v6272 = vpack.c.b16 %v6218, %v6216
    %v6273 = vpack.c.b16 %v6221, %v6219
    %v6274 = vpack.c.b16 %v6222, %v6220
    %v6275 = vpack.c.b16 %v6225, %v6223
    %v6276 = vpack.c.b16 %v6226, %v6224
    %v6277 = vpack.c.b16 %v6229, %v6227
    %v6278 = vpack.c.b16 %v6230, %v6228
    %v6279 = vpack.c.b16 %v6233, %v6231
    %v6280 = vpack.c.b16 %v6234, %v6232
    %v6281 = vpack.c.b16 %v6237, %v6235
    %v6282 = vpack.c.b16 %v6238, %v6236
    %v6283 = vpack.c.b16 %v6241, %v6239
    %v6284 = vpack.c.b16 %v6242, %v6240
    %v6285 = vpack.c.b16 %v6245, %v6243
    %v6286 = vpack.c.b16 %v6246, %v6244
    %v6287 = vpack.c.b16 %v6249, %v6247
    %v6288 = vpack.c.b16 %v6250, %v6248
    %v6289 = vpack.c.b16 %v6253, %v6251
    %v6290 = vpack.c.b16 %v6254, %v6252
    %v6291 = vpack.c.b16 %v6257, %v6255
    %v6292 = vpack.c.b16 %v6258, %v6256
    %v6293 = vpack.c.b16 %v6261, %v6259
    %v6294 = vpack.c.b16 %v6262, %v6260
    %6327 = vmatprep.subr.bf16.mxu0 %v6264
    %6328 = vmatpush1.bf16.msra.mxu0 %v6263
    %6329 = vmatprep.subr.bf16.mxu0 %v6266
    %6330 = vmatpush1.bf16.msra.mxu0 %v6265
    %6331 = vmatprep.subr.bf16.mxu0 %v6268
    %6332 = vmatpush1.bf16.msra.mxu0 %v6267
    %6333 = vmatprep.subr.bf16.mxu0 %v6270
    %6334 = vmatpush1.bf16.msra.mxu0 %v6269
    %6335 = vmatprep.subr.bf16.mxu0 %v6272
    %6336 = vmatpush1.bf16.msra.mxu0 %v6271
    %6337 = vmatprep.subr.bf16.mxu0 %v6274
    %6338 = vmatpush1.bf16.msra.mxu0 %v6273
    %6339 = vmatprep.subr.bf16.mxu0 %v6276
    %6340 = vmatpush1.bf16.msra.mxu0 %v6275
    %6341 = vmatprep.subr.bf16.mxu0 %v6278
    %6342 = vmatpush1.bf16.msra.mxu0 %v6277
    %6343 = vmatprep.subr.bf16.mxu0 %v6280
    %6344 = vmatpush1.bf16.msra.mxu0 %v6279
    %6345 = vmatprep.subr.bf16.mxu0 %v6282
    %6346 = vmatpush1.bf16.msra.mxu0 %v6281
    %6347 = vmatprep.subr.bf16.mxu0 %v6284
    %6348 = vmatpush1.bf16.msra.mxu0 %v6283
    %6349 = vmatprep.subr.bf16.mxu0 %v6286
    %6350 = vmatpush1.bf16.msra.mxu0 %v6285
    %6351 = vmatprep.subr.bf16.mxu0 %v6288
    %6352 = vmatpush1.bf16.msra.mxu0 %v6287
    %6353 = vmatprep.subr.bf16.mxu0 %v6290
    %6354 = vmatpush1.bf16.msra.mxu0 %v6289
    %6355 = vmatprep.subr.bf16.mxu0 %v6292
    %6356 = vmatpush1.bf16.msra.mxu0 %v6291
    %6357 = vmatprep.subr.bf16.mxu0 %v6294
    %6358 = vmatpush1.bf16.msra.mxu0 %v6293
    %6359 = vmatprep.mubr.bf16.mxu0 %v4941
    %6360 = vmatmul.mubr.bf16.gmra.mrb[0].mxu0 %v4940
    %v6361 = vpop.f32.mrb[0].mxu0
    %v6362 = vadd.f32 0.0, %v6361
    %v6363 = vpop.f32.mrb[0].mxu0
    %v6364 = vadd.f32 0.0, %v6363
    %v6365 = vpop.f32.mrb[0].mxu0
    %v6366 = vadd.f32 0.0, %v6365
    %v6367 = vpop.f32.mrb[0].mxu0
    %v6368 = vadd.f32 0.0, %v6367
    %6369 = vmatprep.mubr.bf16.mxu0 %v4943
    %6370 = vmatmul.mubr.bf16.gmra.mrb[0].mxu0 %v4942
    %v6371 = vpop.f32.mrb[0].mxu0
    %v6372 = vadd.f32 0.0, %v6371
    %v6373 = vpop.f32.mrb[0].mxu0
    %v6374 = vadd.f32 0.0, %v6373
    %v6375 = vpop.f32.mrb[0].mxu0
    %v6376 = vadd.f32 0.0, %v6375
    %v6377 = vpop.f32.mrb[0].mxu0
    %v6378 = vadd.f32 0.0, %v6377
    %6379 = vdwg.mxu0
    %s6380 = scalar_lea.vmem %s17, 192
    %v6381 = vld [vmem:[%s6380] sm:$0xff]
    %v6382 = vld [vmem:[%s6380 + $0x8] sm:$0xff]
    %v6383 = vld [vmem:[%s6380 + $0x10] sm:$0xff]
    %v6384 = vld [vmem:[%s6380 + $0x18] sm:$0xff]
    %v6385 = vld [vmem:[%s6380 + $0x20] sm:$0xff]
    %v6386 = vld [vmem:[%s6380 + $0x28] sm:$0xff]
    %v6387 = vld [vmem:[%s6380 + $0x30] sm:$0xff]
    %v6388 = vld [vmem:[%s6380 + $0x38] sm:$0xff]
    %v6390 = vsel %vm2840, %v6381, 0
    %v6393 = vsel %vm2840, %v6382, 0
    %v6396 = vsel %vm2840, %v6383, 0
    %v6399 = vsel %vm2840, %v6384, 0
    %v6402 = vsel %vm2840, %v6385, 0
    %v6405 = vsel %vm2840, %v6386, 0
    %v6408 = vsel %vm2840, %v6387, 0
    %v6411 = vsel %vm2840, %v6388, 0
    %6413 = vmatprep.subr.mxu0 %v6364
    %6414 = vmatpush1.msra.mxu0 %v6362
    %6415 = vmatprep.subr.mxu0 %v6368
    %6416 = vmatpush1.msra.mxu0 %v6366
    %6417 = vmatprep.subr.mxu0 %v6374
    %6418 = vmatpush1.msra.mxu0 %v6372
    %6419 = vmatprep.subr.mxu0 %v6378
    %6420 = vmatpush1.msra.mxu0 %v6376
    %6421 = vmatprep.subr.mxu0 0.0
    %6422 = vmatpush1.msra.mxu0 0.0
    %6423 = vmatprep.subr.mxu0 0.0
    %6424 = vmatpush1.msra.mxu0 0.0
    %6425 = vmatprep.subr.mxu0 0.0
    %6426 = vmatpush1.msra.mxu0 0.0
    %6427 = vmatprep.subr.mxu0 0.0
    %6428 = vmatpush1.msra.mxu0 0.0
    %6429 = vmatprep.subr.mxu0 0.0
    %6430 = vmatpush1.msra.mxu0 0.0
    %6431 = vmatprep.subr.mxu0 0.0
    %6432 = vmatpush1.msra.mxu0 0.0
    %6433 = vmatprep.subr.mxu0 0.0
    %6434 = vmatpush1.msra.mxu0 0.0
    %6435 = vmatprep.subr.mxu0 0.0
    %6436 = vmatpush1.msra.mxu0 0.0
    %6437 = vmatprep.subr.mxu0 0.0
    %6438 = vmatpush1.msra.mxu0 0.0
    %6439 = vmatprep.subr.mxu0 0.0
    %6440 = vmatpush1.msra.mxu0 0.0
    %6441 = vmatprep.subr.mxu0 0.0
    %6442 = vmatpush1.msra.mxu0 0.0
    %6443 = vmatprep.subr.mxu0 0.0
    %6444 = vmatpush1.msra.mxu0 0.0
    %6445 = vmatprep.subr.mxu0 0.0
    %6446 = vmatpush1.msra.mxu0 0.0
    %6447 = vmatprep.subr.mxu0 0.0
    %6448 = vmatpush1.msra.mxu0 0.0
    %6449 = vmatprep.subr.mxu0 0.0
    %6450 = vmatpush1.msra.mxu0 0.0
    %6451 = vmatprep.subr.mxu0 0.0
    %6452 = vmatpush1.msra.mxu0 0.0
    %6453 = vmatprep.subr.mxu0 0.0
    %6454 = vmatpush1.msra.mxu0 0.0
    %6455 = vmatprep.subr.mxu0 0.0
    %6456 = vmatpush1.msra.mxu0 0.0
    %6457 = vmatprep.subr.mxu0 0.0
    %6458 = vmatpush1.msra.mxu0 0.0
    %6459 = vmatprep.subr.mxu0 0.0
    %6460 = vmatpush1.msra.mxu0 0.0
    %6461 = vmatprep.subr.mxu0 0.0
    %6462 = vmatpush1.msra.mxu0 0.0
    %6463 = vmatprep.subr.mxu0 0.0
    %6464 = vmatpush1.msra.mxu0 0.0
    %6465 = vmatprep.subr.mxu0 0.0
    %6466 = vmatpush1.msra.mxu0 0.0
    %6467 = vmatprep.subr.mxu0 0.0
    %6468 = vmatpush1.msra.mxu0 0.0
    %6469 = vmatprep.subr.mxu0 0.0
    %6470 = vmatpush1.msra.mxu0 0.0
    %6471 = vmatprep.subr.mxu0 0.0
    %6472 = vmatpush1.msra.mxu0 0.0
    %6473 = vmatprep.subr.mxu0 0.0
    %6474 = vmatpush1.msra.mxu0 0.0
    %6475 = vmatprep.subr.mxu0 0.0
    %6476 = vmatpush1.msra.mxu0 0.0
    %6477 = vmatprep.mubr.f32.mxu0 0.0
    %6478 = vmatmul.mubr.f32.gmra.mrb[0].mxu0 %v6390
    %v6479 = vpop.f32.mrb[0].mxu0
    %v6480 = vadd.f32 0.0, %v6479
    %v6481 = vpop.f32.mrb[0].mxu0
    %v6482 = vadd.f32 0.0, %v6481
    %6483 = vmatprep.mubr.f32.mxu0 0.0
    %6484 = vmatmul.mubr.f32.gmra.mrb[0].mxu0 %v6393
    %v6485 = vpop.f32.mrb[0].mxu0
    %v6486 = vadd.f32 0.0, %v6485
    %v6487 = vpop.f32.mrb[0].mxu0
    %v6488 = vadd.f32 0.0, %v6487
    %6489 = vmatprep.mubr.f32.mxu0 0.0
    %6490 = vmatmul.mubr.f32.gmra.mrb[0].mxu0 %v6396
    %v6491 = vpop.f32.mrb[0].mxu0
    %v6492 = vadd.f32 0.0, %v6491
    %v6493 = vpop.f32.mrb[0].mxu0
    %v6494 = vadd.f32 0.0, %v6493
    %6495 = vmatprep.mubr.f32.mxu0 0.0
    %6496 = vmatmul.mubr.f32.gmra.mrb[0].mxu0 %v6399
    %v6497 = vpop.f32.mrb[0].mxu0
    %v6498 = vadd.f32 0.0, %v6497
    %v6499 = vpop.f32.mrb[0].mxu0
    %v6500 = vadd.f32 0.0, %v6499
    %6501 = vmatprep.mubr.f32.mxu0 0.0
    %6502 = vmatmul.mubr.f32.gmra.mrb[0].mxu0 %v6402
    %v6503 = vpop.f32.mrb[0].mxu0
    %v6504 = vadd.f32 0.0, %v6503
    %v6505 = vpop.f32.mrb[0].mxu0
    %v6506 = vadd.f32 0.0, %v6505
    %6507 = vmatprep.mubr.f32.mxu0 0.0
    %6508 = vmatmul.mubr.f32.gmra.mrb[0].mxu0 %v6405
    %v6509 = vpop.f32.mrb[0].mxu0
    %v6510 = vadd.f32 0.0, %v6509
    %v6511 = vpop.f32.mrb[0].mxu0
    %v6512 = vadd.f32 0.0, %v6511
    %6513 = vmatprep.mubr.f32.mxu0 0.0
    %6514 = vmatmul.mubr.f32.gmra.mrb[0].mxu0 %v6408
    %v6515 = vpop.f32.mrb[0].mxu0
    %v6516 = vadd.f32 0.0, %v6515
    %v6517 = vpop.f32.mrb[0].mxu0
    %v6518 = vadd.f32 0.0, %v6517
    %6519 = vmatprep.mubr.f32.mxu0 0.0
    %6520 = vmatmul.mubr.f32.gmra.mrb[0].mxu0 %v6411
    %v6521 = vpop.f32.mrb[0].mxu0
    %v6522 = vadd.f32 0.0, %v6521
    %v6523 = vpop.f32.mrb[0].mxu0
    %v6524 = vadd.f32 0.0, %v6523
    %6525 = vdwg.mxu0
    %v6526 = vadd.f32 %v6118, %v6480
    %v6527 = vadd.f32 %v6119, %v6482
    %v6528 = vadd.f32 %v6120, %v6486
    %v6529 = vadd.f32 %v6121, %v6488
    %v6530 = vadd.f32 %v6122, %v6492
    %v6531 = vadd.f32 %v6123, %v6494
    %v6532 = vadd.f32 %v6124, %v6498
    %v6533 = vadd.f32 %v6125, %v6500
    %v6534 = vadd.f32 %v6126, %v6504
    %v6535 = vadd.f32 %v6127, %v6506
    %v6536 = vadd.f32 %v6128, %v6510
    %v6537 = vadd.f32 %v6129, %v6512
    %v6538 = vadd.f32 %v6130, %v6516
    %v6539 = vadd.f32 %v6131, %v6518
    %v6540 = vadd.f32 %v6132, %v6522
    %v6541 = vadd.f32 %v6133, %v6524
    %v6542 = vsel %vm1040, 1.0, 0
    %6544 = vmatprep.subr.mxu0 %v6527
    %6545 = vmatpush1.msra.mxu0 %v6526
    %6546 = vmatprep.subr.mxu0 %v6529
    %6547 = vmatpush1.msra.mxu0 %v6528
    %6548 = vmatprep.subr.mxu0 %v6531
    %6549 = vmatpush1.msra.mxu0 %v6530
    %6550 = vmatprep.subr.mxu0 %v6533
    %6551 = vmatpush1.msra.mxu0 %v6532
    %6552 = vmatprep.subr.mxu0 %v6535
    %6553 = vmatpush1.msra.mxu0 %v6534
    %6554 = vmatprep.subr.mxu0 %v6537
    %6555 = vmatpush1.msra.mxu0 %v6536
    %6556 = vmatprep.subr.mxu0 %v6539
    %6557 = vmatpush1.msra.mxu0 %v6538
    %6558 = vmatprep.subr.mxu0 %v6541
    %6559 = vmatpush1.msra.mxu0 %v6540
    %6560 = vmatprep.subr.mxu0 0.0
    %6561 = vmatpush1.msra.mxu0 0.0
    %6562 = vmatprep.subr.mxu0 0.0
    %6563 = vmatpush1.msra.mxu0 0.0
    %6564 = vmatprep.subr.mxu0 0.0
    %6565 = vmatpush1.msra.mxu0 0.0
    %6566 = vmatprep.subr.mxu0 0.0
    %6567 = vmatpush1.msra.mxu0 0.0
    %6568 = vmatprep.subr.mxu0 0.0
    %6569 = vmatpush1.msra.mxu0 0.0
    %6570 = vmatprep.subr.mxu0 0.0
    %6571 = vmatpush1.msra.mxu0 0.0
    %6572 = vmatprep.subr.mxu0 0.0
    %6573 = vmatpush1.msra.mxu0 0.0
    %6574 = vmatprep.subr.mxu0 0.0
    %6575 = vmatpush1.msra.mxu0 0.0
    %6576 = vmatprep.subr.mxu0 0.0
    %6577 = vmatpush1.msra.mxu0 0.0
    %6578 = vmatprep.subr.mxu0 0.0
    %6579 = vmatpush1.msra.mxu0 0.0
    %6580 = vmatprep.subr.mxu0 0.0
    %6581 = vmatpush1.msra.mxu0 0.0
    %6582 = vmatprep.subr.mxu0 0.0
    %6583 = vmatpush1.msra.mxu0 0.0
    %6584 = vmatprep.subr.mxu0 0.0
    %6585 = vmatpush1.msra.mxu0 0.0
    %6586 = vmatprep.subr.mxu0 0.0
    %6587 = vmatpush1.msra.mxu0 0.0
    %6588 = vmatprep.subr.mxu0 0.0
    %6589 = vmatpush1.msra.mxu0 0.0
    %6590 = vmatprep.subr.mxu0 0.0
    %6591 = vmatpush1.msra.mxu0 0.0
    %6592 = vmatprep.subr.mxu0 0.0
    %6593 = vmatpush1.msra.mxu0 0.0
    %6594 = vmatprep.subr.mxu0 0.0
    %6595 = vmatpush1.msra.mxu0 0.0
    %6596 = vmatprep.subr.mxu0 0.0
    %6597 = vmatpush1.msra.mxu0 0.0
    %6598 = vmatprep.subr.mxu0 0.0
    %6599 = vmatpush1.msra.mxu0 0.0
    %6600 = vmatprep.subr.mxu0 0.0
    %6601 = vmatpush1.msra.mxu0 0.0
    %6602 = vmatprep.subr.mxu0 0.0
    %6603 = vmatpush1.msra.mxu0 0.0
    %6604 = vmatprep.subr.mxu0 0.0
    %6605 = vmatpush1.msra.mxu0 0.0
    %6606 = vmatprep.subr.mxu0 0.0
    %6607 = vmatpush1.msra.mxu0 0.0
    %6608 = vmatprep.mubr.f32.mxu0 0.0
    %6609 = vmatmul.mubr.f32.gmra.mrb[0].mxu0 %v6542
    %v6610 = vpop.f32.mrb[0].mxu0
    %v6611 = vadd.f32 0.0, %v6610
    %v6612 = vpop.f32.mrb[0].mxu0
    %v6613 = vadd.f32 0.0, %v6612
    %6614 = vdwg.mxu0
    %v6615 = vmul.f32 %v6526, %v6526
    %v6616 = vmul.f32 %v6527, %v6527
    %v6617 = vmul.f32 %v6528, %v6528
    %v6618 = vmul.f32 %v6529, %v6529
    %v6619 = vmul.f32 %v6530, %v6530
    %v6620 = vmul.f32 %v6531, %v6531
    %v6621 = vmul.f32 %v6532, %v6532
    %v6622 = vmul.f32 %v6533, %v6533
    %v6623 = vmul.f32 %v6534, %v6534
    %v6624 = vmul.f32 %v6535, %v6535
    %v6625 = vmul.f32 %v6536, %v6536
    %v6626 = vmul.f32 %v6537, %v6537
    %v6627 = vmul.f32 %v6538, %v6538
    %v6628 = vmul.f32 %v6539, %v6539
    %v6629 = vmul.f32 %v6540, %v6540
    %v6630 = vmul.f32 %v6541, %v6541
    %6631 = vmatprep.subr.mxu0 %v6616
    %6632 = vmatpush1.msra.mxu0 %v6615
    %6633 = vmatprep.subr.mxu0 %v6618
    %6634 = vmatpush1.msra.mxu0 %v6617
    %6635 = vmatprep.subr.mxu0 %v6620
    %6636 = vmatpush1.msra.mxu0 %v6619
    %6637 = vmatprep.subr.mxu0 %v6622
    %6638 = vmatpush1.msra.mxu0 %v6621
    %6639 = vmatprep.subr.mxu0 %v6624
    %6640 = vmatpush1.msra.mxu0 %v6623
    %6641 = vmatprep.subr.mxu0 %v6626
    %6642 = vmatpush1.msra.mxu0 %v6625
    %6643 = vmatprep.subr.mxu0 %v6628
    %6644 = vmatpush1.msra.mxu0 %v6627
    %6645 = vmatprep.subr.mxu0 %v6630
    %6646 = vmatpush1.msra.mxu0 %v6629
    %6647 = vmatprep.subr.mxu0 0.0
    %6648 = vmatpush1.msra.mxu0 0.0
    %6649 = vmatprep.subr.mxu0 0.0
    %6650 = vmatpush1.msra.mxu0 0.0
    %6651 = vmatprep.subr.mxu0 0.0
    %6652 = vmatpush1.msra.mxu0 0.0
    %6653 = vmatprep.subr.mxu0 0.0
    %6654 = vmatpush1.msra.mxu0 0.0
    %6655 = vmatprep.subr.mxu0 0.0
    %6656 = vmatpush1.msra.mxu0 0.0
    %6657 = vmatprep.subr.mxu0 0.0
    %6658 = vmatpush1.msra.mxu0 0.0
    %6659 = vmatprep.subr.mxu0 0.0
    %6660 = vmatpush1.msra.mxu0 0.0
    %6661 = vmatprep.subr.mxu0 0.0
    %6662 = vmatpush1.msra.mxu0 0.0
    %6663 = vmatprep.subr.mxu0 0.0
    %6664 = vmatpush1.msra.mxu0 0.0
    %6665 = vmatprep.subr.mxu0 0.0
    %6666 = vmatpush1.msra.mxu0 0.0
    %6667 = vmatprep.subr.mxu0 0.0
    %6668 = vmatpush1.msra.mxu0 0.0
    %6669 = vmatprep.subr.mxu0 0.0
    %6670 = vmatpush1.msra.mxu0 0.0
    %6671 = vmatprep.subr.mxu0 0.0
    %6672 = vmatpush1.msra.mxu0 0.0
    %6673 = vmatprep.subr.mxu0 0.0
    %6674 = vmatpush1.msra.mxu0 0.0
    %6675 = vmatprep.subr.mxu0 0.0
    %6676 = vmatpush1.msra.mxu0 0.0
    %6677 = vmatprep.subr.mxu0 0.0
    %6678 = vmatpush1.msra.mxu0 0.0
    %6679 = vmatprep.subr.mxu0 0.0
    %6680 = vmatpush1.msra.mxu0 0.0
    %6681 = vmatprep.subr.mxu0 0.0
    %6682 = vmatpush1.msra.mxu0 0.0
    %6683 = vmatprep.subr.mxu0 0.0
    %6684 = vmatpush1.msra.mxu0 0.0
    %6685 = vmatprep.subr.mxu0 0.0
    %6686 = vmatpush1.msra.mxu0 0.0
    %6687 = vmatprep.subr.mxu0 0.0
    %6688 = vmatpush1.msra.mxu0 0.0
    %6689 = vmatprep.subr.mxu0 0.0
    %6690 = vmatpush1.msra.mxu0 0.0
    %6691 = vmatprep.subr.mxu0 0.0
    %6692 = vmatpush1.msra.mxu0 0.0
    %6693 = vmatprep.subr.mxu0 0.0
    %6694 = vmatpush1.msra.mxu0 0.0
    %6695 = vmatprep.mubr.f32.mxu0 0.0
    %6696 = vmatmul.mubr.f32.gmra.mrb[0].mxu0 %v6542
    %v6697 = vpop.f32.mrb[0].mxu0
    %v6698 = vadd.f32 0.0, %v6697
    %v6699 = vpop.f32.mrb[0].mxu0
    %v6700 = vadd.f32 0.0, %v6699
    %6701 = vdwg.mxu0
    %v6702 = vld [vmem:[%s18] sm:$0xff]
    %v6703 = vld [vmem:[%s18 + $0x8] sm:$0xff]
    %v6704 = vld [vmem:[%s18 + $0x10] sm:$0xff]
    %v6705 = vld [vmem:[%s18 + $0x18] sm:$0xff]
    %v6706 = vld [vmem:[%s18 + $0x20] sm:$0xff]
    %v6707 = vld [vmem:[%s18 + $0x28] sm:$0xff]
    %v6708 = vld [vmem:[%s18 + $0x30] sm:$0xff]
    %v6709 = vld [vmem:[%s18 + $0x38] sm:$0xff]
    %v6710 = vld [vmem:[%s18 + $0x40] sm:$0xff]
    %v6711 = vld [vmem:[%s18 + $0x48] sm:$0xff]
    %v6712 = vld [vmem:[%s18 + $0x50] sm:$0xff]
    %v6713 = vld [vmem:[%s18 + $0x58] sm:$0xff]
    %v6714 = vld [vmem:[%s18 + $0x60] sm:$0xff]
    %v6715 = vld [vmem:[%s18 + $0x68] sm:$0xff]
    %v6716 = vld [vmem:[%s18 + $0x70] sm:$0xff]
    %v6717 = vld [vmem:[%s18 + $0x78] sm:$0xff]
    %v6718 = vld [vmem:[%s18 + $0x80] sm:$0xff]
    %v6719 = vld [vmem:[%s18 + $0x88] sm:$0xff]
    %v6720 = vld [vmem:[%s18 + $0x90] sm:$0xff]
    %v6721 = vld [vmem:[%s18 + $0x98] sm:$0xff]
    %v6722 = vld [vmem:[%s18 + $0xa0] sm:$0xff]
    %v6723 = vld [vmem:[%s18 + $0xa8] sm:$0xff]
    %v6724 = vld [vmem:[%s18 + $0xb0] sm:$0xff]
    %v6725 = vld [vmem:[%s18 + $0xb8] sm:$0xff]
    %v6726 = vld [vmem:[%s18 + $0xc0] sm:$0xff]
    %v6727 = vld [vmem:[%s18 + $0xc8] sm:$0xff]
    %v6728 = vld [vmem:[%s18 + $0xd0] sm:$0xff]
    %v6729 = vld [vmem:[%s18 + $0xd8] sm:$0xff]
    %v6730 = vld [vmem:[%s18 + $0xe0] sm:$0xff]
    %v6731 = vld [vmem:[%s18 + $0xe8] sm:$0xff]
    %v6732 = vld [vmem:[%s18 + $0xf0] sm:$0xff]
    %v6733 = vld [vmem:[%s18 + $0xf8] sm:$0xff]
    %6734 = vmatprep.subr.mxu0 0.0
    %6735 = vmatpush1.msra.mxu0 %v6702
    %6736 = vmatprep.subr.mxu0 0.0
    %6737 = vmatpush1.msra.mxu0 %v6703
    %6738 = vmatprep.subr.mxu0 0.0
    %6739 = vmatpush1.msra.mxu0 %v6704
    %6740 = vmatprep.subr.mxu0 0.0
    %6741 = vmatpush1.msra.mxu0 %v6705
    %6742 = vmatprep.subr.mxu0 0.0
    %6743 = vmatpush1.msra.mxu0 %v6706
    %6744 = vmatprep.subr.mxu0 0.0
    %6745 = vmatpush1.msra.mxu0 %v6707
    %6746 = vmatprep.subr.mxu0 0.0
    %6747 = vmatpush1.msra.mxu0 %v6708
    %6748 = vmatprep.subr.mxu0 0.0
    %6749 = vmatpush1.msra.mxu0 %v6709
    %6750 = vmatprep.subr.mxu0 0.0
    %6751 = vmatpush1.msra.mxu0 %v6710
    %6752 = vmatprep.subr.mxu0 0.0
    %6753 = vmatpush1.msra.mxu0 %v6711
    %6754 = vmatprep.subr.mxu0 0.0
    %6755 = vmatpush1.msra.mxu0 %v6712
    %6756 = vmatprep.subr.mxu0 0.0
    %6757 = vmatpush1.msra.mxu0 %v6713
    %6758 = vmatprep.subr.mxu0 0.0
    %6759 = vmatpush1.msra.mxu0 %v6714
    %6760 = vmatprep.subr.mxu0 0.0
    %6761 = vmatpush1.msra.mxu0 %v6715
    %6762 = vmatprep.subr.mxu0 0.0
    %6763 = vmatpush1.msra.mxu0 %v6716
    %6764 = vmatprep.subr.mxu0 0.0
    %6765 = vmatpush1.msra.mxu0 %v6717
    %6766 = vmatprep.subr.mxu0 0.0
    %6767 = vmatpush1.msra.mxu0 %v6718
    %6768 = vmatprep.subr.mxu0 0.0
    %6769 = vmatpush1.msra.mxu0 %v6719
    %6770 = vmatprep.subr.mxu0 0.0
    %6771 = vmatpush1.msra.mxu0 %v6720
    %6772 = vmatprep.subr.mxu0 0.0
    %6773 = vmatpush1.msra.mxu0 %v6721
    %6774 = vmatprep.subr.mxu0 0.0
    %6775 = vmatpush1.msra.mxu0 %v6722
    %6776 = vmatprep.subr.mxu0 0.0
    %6777 = vmatpush1.msra.mxu0 %v6723
    %6778 = vmatprep.subr.mxu0 0.0
    %6779 = vmatpush1.msra.mxu0 %v6724
    %6780 = vmatprep.subr.mxu0 0.0
    %6781 = vmatpush1.msra.mxu0 %v6725
    %6782 = vmatprep.subr.mxu0 0.0
    %6783 = vmatpush1.msra.mxu0 %v6726
    %6784 = vmatprep.subr.mxu0 0.0
    %6785 = vmatpush1.msra.mxu0 %v6727
    %6786 = vmatprep.subr.mxu0 0.0
    %6787 = vmatpush1.msra.mxu0 %v6728
    %6788 = vmatprep.subr.mxu0 0.0
    %6789 = vmatpush1.msra.mxu0 %v6729
    %6790 = vmatprep.subr.mxu0 0.0
    %6791 = vmatpush1.msra.mxu0 %v6730
    %6792 = vmatprep.subr.mxu0 0.0
    %6793 = vmatpush1.msra.mxu0 %v6731
    %6794 = vmatprep.subr.mxu0 0.0
    %6795 = vmatpush1.msra.mxu0 %v6732
    %6796 = vmatprep.subr.mxu0 0.0
    %6797 = vmatpush1.msra.mxu0 %v6733
    %6798 = vmatprep.mubr.f32.mxu0 %v6613
    %6799 = vmatmul.mubr.f32.gmra.mrb[0].mxu0 %v6611
    %v6800 = vpop.f32.mrb[0].mxu0
    %v6801 = vadd.f32 0.0, %v6800
    %v6802 = vpop.f32.mrb[0].mxu0
    %6803 = vdwg.mxu0
    %v6804 = vmul.f32 %v6801, 0.00048828125
    %6805 = vmatprep.subr.mxu0 0.0
    %6806 = vmatpush1.msra.mxu0 %v6702
    %6807 = vmatprep.subr.mxu0 0.0
    %6808 = vmatpush1.msra.mxu0 %v6703
    %6809 = vmatprep.subr.mxu0 0.0
    %6810 = vmatpush1.msra.mxu0 %v6704
    %6811 = vmatprep.subr.mxu0 0.0
    %6812 = vmatpush1.msra.mxu0 %v6705
    %6813 = vmatprep.subr.mxu0 0.0
    %6814 = vmatpush1.msra.mxu0 %v6706
    %6815 = vmatprep.subr.mxu0 0.0
    %6816 = vmatpush1.msra.mxu0 %v6707
    %6817 = vmatprep.subr.mxu0 0.0
    %6818 = vmatpush1.msra.mxu0 %v6708
    %6819 = vmatprep.subr.mxu0 0.0
    %6820 = vmatpush1.msra.mxu0 %v6709
    %6821 = vmatprep.subr.mxu0 0.0
    %6822 = vmatpush1.msra.mxu0 %v6710
    %6823 = vmatprep.subr.mxu0 0.0
    %6824 = vmatpush1.msra.mxu0 %v6711
    %6825 = vmatprep.subr.mxu0 0.0
    %6826 = vmatpush1.msra.mxu0 %v6712
    %6827 = vmatprep.subr.mxu0 0.0
    %6828 = vmatpush1.msra.mxu0 %v6713
    %6829 = vmatprep.subr.mxu0 0.0
    %6830 = vmatpush1.msra.mxu0 %v6714
    %6831 = vmatprep.subr.mxu0 0.0
    %6832 = vmatpush1.msra.mxu0 %v6715
    %6833 = vmatprep.subr.mxu0 0.0
    %6834 = vmatpush1.msra.mxu0 %v6716
    %6835 = vmatprep.subr.mxu0 0.0
    %6836 = vmatpush1.msra.mxu0 %v6717
    %6837 = vmatprep.subr.mxu0 0.0
    %6838 = vmatpush1.msra.mxu0 %v6718
    %6839 = vmatprep.subr.mxu0 0.0
    %6840 = vmatpush1.msra.mxu0 %v6719
    %6841 = vmatprep.subr.mxu0 0.0
    %6842 = vmatpush1.msra.mxu0 %v6720
    %6843 = vmatprep.subr.mxu0 0.0
    %6844 = vmatpush1.msra.mxu0 %v6721
    %6845 = vmatprep.subr.mxu0 0.0
    %6846 = vmatpush1.msra.mxu0 %v6722
    %6847 = vmatprep.subr.mxu0 0.0
    %6848 = vmatpush1.msra.mxu0 %v6723
    %6849 = vmatprep.subr.mxu0 0.0
    %6850 = vmatpush1.msra.mxu0 %v6724
    %6851 = vmatprep.subr.mxu0 0.0
    %6852 = vmatpush1.msra.mxu0 %v6725
    %6853 = vmatprep.subr.mxu0 0.0
    %6854 = vmatpush1.msra.mxu0 %v6726
    %6855 = vmatprep.subr.mxu0 0.0
    %6856 = vmatpush1.msra.mxu0 %v6727
    %6857 = vmatprep.subr.mxu0 0.0
    %6858 = vmatpush1.msra.mxu0 %v6728
    %6859 = vmatprep.subr.mxu0 0.0
    %6860 = vmatpush1.msra.mxu0 %v6729
    %6861 = vmatprep.subr.mxu0 0.0
    %6862 = vmatpush1.msra.mxu0 %v6730
    %6863 = vmatprep.subr.mxu0 0.0
    %6864 = vmatpush1.msra.mxu0 %v6731
    %6865 = vmatprep.subr.mxu0 0.0
    %6866 = vmatpush1.msra.mxu0 %v6732
    %6867 = vmatprep.subr.mxu0 0.0
    %6868 = vmatpush1.msra.mxu0 %v6733
    %6869 = vmatprep.mubr.f32.mxu0 %v6700
    %6870 = vmatmul.mubr.f32.gmra.mrb[0].mxu0 %v6698
    %v6871 = vpop.f32.mrb[0].mxu0
    %v6872 = vadd.f32 0.0, %v6871
    %v6873 = vpop.f32.mrb[0].mxu0
    %6874 = vdwg.mxu0
    %v6875 = vmul.f32 %v6872, 0.00048828125
    %v6876 = vmul.f32 %v6804, %v6804
    %v6877 = vsub.f32 %v6875, %v6876
    %v6878 = vld [vmem:[%s20] sm:$0x1]
    %v6879 = vld [vmem:[%s20 + $0x1] sm:$0x1]
    %v6880 = vadd.f32 %v6877, 1e-05
    %v6881 = vrsqrt.pop %v6880
    %v6882 = vmul.f32 %v6878, %v6881
    %v6883 = vmul.f32 %v6804, %v6882
    %v6884 = vsub.f32 %v6879, %v6883
    %v6885 = vld [vmem:[%s19] sm:$0xff]
    %v6886 = vld [vmem:[%s19 + $0x8] sm:$0xff]
    %v6888 = vsel %vm693, %v6882, 0
    %6890 = vmatprep.subr.mxu0 %v6886
    %6891 = vmatpush1.msra.mxu0 %v6885
    %6892 = vmatprep.subr.mxu0 0.0
    %6893 = vmatpush1.msra.mxu0 0.0
    %6894 = vmatprep.subr.mxu0 0.0
    %6895 = vmatpush1.msra.mxu0 0.0
    %6896 = vmatprep.subr.mxu0 0.0
    %6897 = vmatpush1.msra.mxu0 0.0
    %6898 = vmatprep.subr.mxu0 0.0
    %6899 = vmatpush1.msra.mxu0 0.0
    %6900 = vmatprep.subr.mxu0 0.0
    %6901 = vmatpush1.msra.mxu0 0.0
    %6902 = vmatprep.subr.mxu0 0.0
    %6903 = vmatpush1.msra.mxu0 0.0
    %6904 = vmatprep.subr.mxu0 0.0
    %6905 = vmatpush1.msra.mxu0 0.0
    %6906 = vmatprep.subr.mxu0 0.0
    %6907 = vmatpush1.msra.mxu0 0.0
    %6908 = vmatprep.subr.mxu0 0.0
    %6909 = vmatpush1.msra.mxu0 0.0
    %6910 = vmatprep.subr.mxu0 0.0
    %6911 = vmatpush1.msra.mxu0 0.0
    %6912 = vmatprep.subr.mxu0 0.0
    %6913 = vmatpush1.msra.mxu0 0.0
    %6914 = vmatprep.subr.mxu0 0.0
    %6915 = vmatpush1.msra.mxu0 0.0
    %6916 = vmatprep.subr.mxu0 0.0
    %6917 = vmatpush1.msra.mxu0 0.0
    %6918 = vmatprep.subr.mxu0 0.0
    %6919 = vmatpush1.msra.mxu0 0.0
    %6920 = vmatprep.subr.mxu0 0.0
    %6921 = vmatpush1.msra.mxu0 0.0
    %6922 = vmatprep.subr.mxu0 0.0
    %6923 = vmatpush1.msra.mxu0 0.0
    %6924 = vmatprep.subr.mxu0 0.0
    %6925 = vmatpush1.msra.mxu0 0.0
    %6926 = vmatprep.subr.mxu0 0.0
    %6927 = vmatpush1.msra.mxu0 0.0
    %6928 = vmatprep.subr.mxu0 0.0
    %6929 = vmatpush1.msra.mxu0 0.0
    %6930 = vmatprep.subr.mxu0 0.0
    %6931 = vmatpush1.msra.mxu0 0.0
    %6932 = vmatprep.subr.mxu0 0.0
    %6933 = vmatpush1.msra.mxu0 0.0
    %6934 = vmatprep.subr.mxu0 0.0
    %6935 = vmatpush1.msra.mxu0 0.0
    %6936 = vmatprep.subr.mxu0 0.0
    %6937 = vmatpush1.msra.mxu0 0.0
    %6938 = vmatprep.subr.mxu0 0.0
    %6939 = vmatpush1.msra.mxu0 0.0
    %6940 = vmatprep.subr.mxu0 0.0
    %6941 = vmatpush1.msra.mxu0 0.0
    %6942 = vmatprep.subr.mxu0 0.0
    %6943 = vmatpush1.msra.mxu0 0.0
    %6944 = vmatprep.subr.mxu0 0.0
    %6945 = vmatpush1.msra.mxu0 0.0
    %6946 = vmatprep.subr.mxu0 0.0
    %6947 = vmatpush1.msra.mxu0 0.0
    %6948 = vmatprep.subr.mxu0 0.0
    %6949 = vmatpush1.msra.mxu0 0.0
    %6950 = vmatprep.subr.mxu0 0.0
    %6951 = vmatpush1.msra.mxu0 0.0
    %6952 = vmatprep.subr.mxu0 0.0
    %6953 = vmatpush1.msra.mxu0 0.0
    %6954 = vmatprep.mubr.f32.mxu0 0.0
    %6955 = vmatmul.mubr.f32.gmra.mrb[0].mxu0 %v6888
    %v6956 = vpop.f32.mrb[0].mxu0
    %v6957 = vadd.f32 0.0, %v6956
    %v6958 = vpop.f32.mrb[0].mxu0
    %v6959 = vadd.f32 0.0, %v6958
    %6960 = vdwg.mxu0
    %v6962 = vsel %vm693, %v6884, 0
    %6964 = vmatprep.subr.mxu0 %v6886
    %6965 = vmatpush1.msra.mxu0 %v6885
    %6966 = vmatprep.subr.mxu0 0.0
    %6967 = vmatpush1.msra.mxu0 0.0
    %6968 = vmatprep.subr.mxu0 0.0
    %6969 = vmatpush1.msra.mxu0 0.0
    %6970 = vmatprep.subr.mxu0 0.0
    %6971 = vmatpush1.msra.mxu0 0.0
    %6972 = vmatprep.subr.mxu0 0.0
    %6973 = vmatpush1.msra.mxu0 0.0
    %6974 = vmatprep.subr.mxu0 0.0
    %6975 = vmatpush1.msra.mxu0 0.0
    %6976 = vmatprep.subr.mxu0 0.0
    %6977 = vmatpush1.msra.mxu0 0.0
    %6978 = vmatprep.subr.mxu0 0.0
    %6979 = vmatpush1.msra.mxu0 0.0
    %6980 = vmatprep.subr.mxu0 0.0
    %6981 = vmatpush1.msra.mxu0 0.0
    %6982 = vmatprep.subr.mxu0 0.0
    %6983 = vmatpush1.msra.mxu0 0.0
    %6984 = vmatprep.subr.mxu0 0.0
    %6985 = vmatpush1.msra.mxu0 0.0
    %6986 = vmatprep.subr.mxu0 0.0
    %6987 = vmatpush1.msra.mxu0 0.0
    %6988 = vmatprep.subr.mxu0 0.0
    %6989 = vmatpush1.msra.mxu0 0.0
    %6990 = vmatprep.subr.mxu0 0.0
    %6991 = vmatpush1.msra.mxu0 0.0
    %6992 = vmatprep.subr.mxu0 0.0
    %6993 = vmatpush1.msra.mxu0 0.0
    %6994 = vmatprep.subr.mxu0 0.0
    %6995 = vmatpush1.msra.mxu0 0.0
    %6996 = vmatprep.subr.mxu0 0.0
    %6997 = vmatpush1.msra.mxu0 0.0
    %6998 = vmatprep.subr.mxu0 0.0
    %6999 = vmatpush1.msra.mxu0 0.0
    %7000 = vmatprep.subr.mxu0 0.0
    %7001 = vmatpush1.msra.mxu0 0.0
    %7002 = vmatprep.subr.mxu0 0.0
    %7003 = vmatpush1.msra.mxu0 0.0
    %7004 = vmatprep.subr.mxu0 0.0
    %7005 = vmatpush1.msra.mxu0 0.0
    %7006 = vmatprep.subr.mxu0 0.0
    %7007 = vmatpush1.msra.mxu0 0.0
    %7008 = vmatprep.subr.mxu0 0.0
    %7009 = vmatpush1.msra.mxu0 0.0
    %7010 = vmatprep.subr.mxu0 0.0
    %7011 = vmatpush1.msra.mxu0 0.0
    %7012 = vmatprep.subr.mxu0 0.0
    %7013 = vmatpush1.msra.mxu0 0.0
    %7014 = vmatprep.subr.mxu0 0.0
    %7015 = vmatpush1.msra.mxu0 0.0
    %7016 = vmatprep.subr.mxu0 0.0
    %7017 = vmatpush1.msra.mxu0 0.0
    %7018 = vmatprep.subr.mxu0 0.0
    %7019 = vmatpush1.msra.mxu0 0.0
    %7020 = vmatprep.subr.mxu0 0.0
    %7021 = vmatpush1.msra.mxu0 0.0
    %7022 = vmatprep.subr.mxu0 0.0
    %7023 = vmatpush1.msra.mxu0 0.0
    %7024 = vmatprep.subr.mxu0 0.0
    %7025 = vmatpush1.msra.mxu0 0.0
    %7026 = vmatprep.subr.mxu0 0.0
    %7027 = vmatpush1.msra.mxu0 0.0
    %7028 = vmatprep.mubr.f32.mxu0 0.0
    %7029 = vmatmul.mubr.f32.gmra.mrb[0].mxu0 %v6962
    %v7030 = vpop.f32.mrb[0].mxu0
    %v7031 = vadd.f32 0.0, %v7030
    %v7032 = vpop.f32.mrb[0].mxu0
    %v7033 = vadd.f32 0.0, %v7032
    %7034 = vdwg.mxu0
    %v7035 = vlaneseq
    %v7036 = vshrl.u32 %v7035, 7
    %v7037 = vsub.s32 0, %v7036
    %v7038 = vrot.slane %v6957, %v7037
    %v7039 = vlaneseq
    %v7040 = vshrl.u32 %v7039, 7
    %v7041 = vsub.s32 0, %v7040
    %v7042 = vrot.slane %v6959, %v7041
    %v7043 = vmul.f32 %v6526, %v7038
    %v7044 = vmul.f32 %v6527, %v7042
    %v7045 = vmul.f32 %v6528, %v7038
    %v7046 = vmul.f32 %v6529, %v7042
    %v7047 = vmul.f32 %v6530, %v7038
    %v7048 = vmul.f32 %v6531, %v7042
    %v7049 = vmul.f32 %v6532, %v7038
    %v7050 = vmul.f32 %v6533, %v7042
    %v7051 = vmul.f32 %v6534, %v7038
    %v7052 = vmul.f32 %v6535, %v7042
    %v7053 = vmul.f32 %v6536, %v7038
    %v7054 = vmul.f32 %v6537, %v7042
    %v7055 = vmul.f32 %v6538, %v7038
    %v7056 = vmul.f32 %v6539, %v7042
    %v7057 = vmul.f32 %v6540, %v7038
    %v7058 = vmul.f32 %v6541, %v7042
    %v7059 = vlaneseq
    %v7060 = vshrl.u32 %v7059, 7
    %v7061 = vsub.s32 0, %v7060
    %v7062 = vrot.slane %v7031, %v7061
    %v7063 = vlaneseq
    %v7064 = vshrl.u32 %v7063, 7
    %v7065 = vsub.s32 0, %v7064
    %v7066 = vrot.slane %v7033, %v7065
    %v7067 = vadd.f32 %v7043, %v7062
    %v7068 = vadd.f32 %v7044, %v7066
    %v7069 = vadd.f32 %v7045, %v7062
    %v7070 = vadd.f32 %v7046, %v7066
    %v7071 = vadd.f32 %v7047, %v7062
    %v7072 = vadd.f32 %v7048, %v7066
    %v7073 = vadd.f32 %v7049, %v7062
    %v7074 = vadd.f32 %v7050, %v7066
    %v7075 = vadd.f32 %v7051, %v7062
    %v7076 = vadd.f32 %v7052, %v7066
    %v7077 = vadd.f32 %v7053, %v7062
    %v7078 = vadd.f32 %v7054, %v7066
    %v7079 = vadd.f32 %v7055, %v7062
    %v7080 = vadd.f32 %v7056, %v7066
    %v7081 = vadd.f32 %v7057, %v7062
    %v7082 = vadd.f32 %v7058, %v7066
    %v7083 = vmul.f32 %v7067, 0.2
    %v7084 = vmul.f32 %v7068, 0.2
    %v7085 = vmul.f32 %v7069, 0.2
    %v7086 = vmul.f32 %v7070, 0.2
    %v7087 = vmul.f32 %v7071, 0.2
    %v7088 = vmul.f32 %v7072, 0.2
    %v7089 = vmul.f32 %v7073, 0.2
    %v7090 = vmul.f32 %v7074, 0.2
    %v7091 = vmul.f32 %v7075, 0.2
    %v7092 = vmul.f32 %v7076, 0.2
    %v7093 = vmul.f32 %v7077, 0.2
    %v7094 = vmul.f32 %v7078, 0.2
    %v7095 = vmul.f32 %v7079, 0.2
    %v7096 = vmul.f32 %v7080, 0.2
    %v7097 = vmul.f32 %v7081, 0.2
    %v7098 = vmul.f32 %v7082, 0.2
    %v7099 = vmax.f32 %v7067, %v7083
    %v7100 = vmax.f32 %v7068, %v7084
    %v7101 = vmax.f32 %v7069, %v7085
    %v7102 = vmax.f32 %v7070, %v7086
    %v7103 = vmax.f32 %v7071, %v7087
    %v7104 = vmax.f32 %v7072, %v7088
    %v7105 = vmax.f32 %v7073, %v7089
    %v7106 = vmax.f32 %v7074, %v7090
    %v7107 = vmax.f32 %v7075, %v7091
    %v7108 = vmax.f32 %v7076, %v7092
    %v7109 = vmax.f32 %v7077, %v7093
    %v7110 = vmax.f32 %v7078, %v7094
    %v7111 = vmax.f32 %v7079, %v7095
    %v7112 = vmax.f32 %v7080, %v7096
    %v7113 = vmax.f32 %v7081, %v7097
    %v7114 = vmax.f32 %v7082, %v7098
    %v7115 = vpack.c.bf16 %v7101, %v7099
    %v7116 = vpack.c.bf16 %v7102, %v7100
    %v7117 = vpack.c.bf16 %v7105, %v7103
    %v7118 = vpack.c.bf16 %v7106, %v7104
    %v7119 = vpack.c.bf16 %v7109, %v7107
    %v7120 = vpack.c.bf16 %v7110, %v7108
    %v7121 = vpack.c.bf16 %v7113, %v7111
    %v7122 = vpack.c.bf16 %v7114, %v7112
    %v7123 = vld [vmem:[%s21] sm:$0xff]
    %v7124 = vld [vmem:[%s21 + $0x8] sm:$0xff]
    %v7125 = vld [vmem:[%s21 + $0x10] sm:$0xff]
    %v7126 = vld [vmem:[%s21 + $0x18] sm:$0xff]
    %v7127 = vld [vmem:[%s21 + $0x20] sm:$0xff]
    %v7128 = vld [vmem:[%s21 + $0x28] sm:$0xff]
    %v7129 = vld [vmem:[%s21 + $0x30] sm:$0xff]
    %v7130 = vld [vmem:[%s21 + $0x38] sm:$0xff]
    %v7131 = vld [vmem:[%s21 + $0x40] sm:$0xff]
    %v7132 = vld [vmem:[%s21 + $0x48] sm:$0xff]
    %v7133 = vld [vmem:[%s21 + $0x50] sm:$0xff]
    %v7134 = vld [vmem:[%s21 + $0x58] sm:$0xff]
    %v7135 = vld [vmem:[%s21 + $0x60] sm:$0xff]
    %v7136 = vld [vmem:[%s21 + $0x68] sm:$0xff]
    %v7137 = vld [vmem:[%s21 + $0x70] sm:$0xff]
    %v7138 = vld [vmem:[%s21 + $0x78] sm:$0xff]
    %v7139 = vld [vmem:[%s21 + $0x80] sm:$0xff]
    %v7140 = vld [vmem:[%s21 + $0x88] sm:$0xff]
    %v7141 = vld [vmem:[%s21 + $0x90] sm:$0xff]
    %v7142 = vld [vmem:[%s21 + $0x98] sm:$0xff]
    %v7143 = vld [vmem:[%s21 + $0xa0] sm:$0xff]
    %v7144 = vld [vmem:[%s21 + $0xa8] sm:$0xff]
    %v7145 = vld [vmem:[%s21 + $0xb0] sm:$0xff]
    %v7146 = vld [vmem:[%s21 + $0xb8] sm:$0xff]
    %v7147 = vld [vmem:[%s21 + $0xc0] sm:$0xff]
    %v7148 = vld [vmem:[%s21 + $0xc8] sm:$0xff]
    %v7149 = vld [vmem:[%s21 + $0xd0] sm:$0xff]
    %v7150 = vld [vmem:[%s21 + $0xd8] sm:$0xff]
    %v7151 = vld [vmem:[%s21 + $0xe0] sm:$0xff]
    %v7152 = vld [vmem:[%s21 + $0xe8] sm:$0xff]
    %v7153 = vld [vmem:[%s21 + $0xf0] sm:$0xff]
    %v7154 = vld [vmem:[%s21 + $0xf8] sm:$0xff]
    %v7187 = vunpack.c.l.b16 %v7123
    %v7188 = vunpack.c.h.b16 %v7123
    %v7189 = vunpack.c.l.b16 %v7124
    %v7190 = vunpack.c.h.b16 %v7124
    %v7191 = vunpack.c.l.b16 %v7125
    %v7192 = vunpack.c.h.b16 %v7125
    %v7193 = vunpack.c.l.b16 %v7126
    %v7194 = vunpack.c.h.b16 %v7126
    %v7195 = vunpack.c.l.b16 %v7127
    %v7196 = vunpack.c.h.b16 %v7127
    %v7197 = vunpack.c.l.b16 %v7128
    %v7198 = vunpack.c.h.b16 %v7128
    %v7199 = vunpack.c.l.b16 %v7129
    %v7200 = vunpack.c.h.b16 %v7129
    %v7201 = vunpack.c.l.b16 %v7130
    %v7202 = vunpack.c.h.b16 %v7130
    %v7203 = vunpack.c.l.b16 %v7131
    %v7204 = vunpack.c.h.b16 %v7131
    %v7205 = vunpack.c.l.b16 %v7132
    %v7206 = vunpack.c.h.b16 %v7132
    %v7207 = vunpack.c.l.b16 %v7133
    %v7208 = vunpack.c.h.b16 %v7133
    %v7209 = vunpack.c.l.b16 %v7134
    %v7210 = vunpack.c.h.b16 %v7134
    %v7211 = vunpack.c.l.b16 %v7135
    %v7212 = vunpack.c.h.b16 %v7135
    %v7213 = vunpack.c.l.b16 %v7136
    %v7214 = vunpack.c.h.b16 %v7136
    %v7215 = vunpack.c.l.b16 %v7137
    %v7216 = vunpack.c.h.b16 %v7137
    %v7217 = vunpack.c.l.b16 %v7138
    %v7218 = vunpack.c.h.b16 %v7138
    %v7219 = vunpack.c.l.b16 %v7139
    %v7220 = vunpack.c.h.b16 %v7139
    %v7221 = vunpack.c.l.b16 %v7140
    %v7222 = vunpack.c.h.b16 %v7140
    %v7223 = vunpack.c.l.b16 %v7141
    %v7224 = vunpack.c.h.b16 %v7141
    %v7225 = vunpack.c.l.b16 %v7142
    %v7226 = vunpack.c.h.b16 %v7142
    %v7227 = vunpack.c.l.b16 %v7143
    %v7228 = vunpack.c.h.b16 %v7143
    %v7229 = vunpack.c.l.b16 %v7144
    %v7230 = vunpack.c.h.b16 %v7144
    %v7231 = vunpack.c.l.b16 %v7145
    %v7232 = vunpack.c.h.b16 %v7145
    %v7233 = vunpack.c.l.b16 %v7146
    %v7234 = vunpack.c.h.b16 %v7146
    %v7235 = vunpack.c.l.b16 %v7147
    %v7236 = vunpack.c.h.b16 %v7147
    %v7237 = vunpack.c.l.b16 %v7148
    %v7238 = vunpack.c.h.b16 %v7148
    %v7239 = vunpack.c.l.b16 %v7149
    %v7240 = vunpack.c.h.b16 %v7149
    %v7241 = vunpack.c.l.b16 %v7150
    %v7242 = vunpack.c.h.b16 %v7150
    %v7243 = vunpack.c.l.b16 %v7151
    %v7244 = vunpack.c.h.b16 %v7151
    %v7245 = vunpack.c.l.b16 %v7152
    %v7246 = vunpack.c.h.b16 %v7152
    %v7247 = vunpack.c.l.b16 %v7153
    %v7248 = vunpack.c.h.b16 %v7153
    %v7249 = vunpack.c.l.b16 %v7154
    %v7250 = vunpack.c.h.b16 %v7154
    %v7251 = vpack.c.b16 %v7189, %v7187
    %v7252 = vpack.c.b16 %v7190, %v7188
    %v7253 = vpack.c.b16 %v7193, %v7191
    %v7254 = vpack.c.b16 %v7194, %v7192
    %v7255 = vpack.c.b16 %v7197, %v7195
    %v7256 = vpack.c.b16 %v7198, %v7196
    %v7257 = vpack.c.b16 %v7201, %v7199
    %v7258 = vpack.c.b16 %v7202, %v7200
    %v7259 = vpack.c.b16 %v7205, %v7203
    %v7260 = vpack.c.b16 %v7206, %v7204
    %v7261 = vpack.c.b16 %v7209, %v7207
    %v7262 = vpack.c.b16 %v7210, %v7208
    %v7263 = vpack.c.b16 %v7213, %v7211
    %v7264 = vpack.c.b16 %v7214, %v7212
    %v7265 = vpack.c.b16 %v7217, %v7215
    %v7266 = vpack.c.b16 %v7218, %v7216
    %v7267 = vpack.c.b16 %v7221, %v7219
    %v7268 = vpack.c.b16 %v7222, %v7220
    %v7269 = vpack.c.b16 %v7225, %v7223
    %v7270 = vpack.c.b16 %v7226, %v7224
    %v7271 = vpack.c.b16 %v7229, %v7227
    %v7272 = vpack.c.b16 %v7230, %v7228
    %v7273 = vpack.c.b16 %v7233, %v7231
    %v7274 = vpack.c.b16 %v7234, %v7232
    %v7275 = vpack.c.b16 %v7237, %v7235
    %v7276 = vpack.c.b16 %v7238, %v7236
    %v7277 = vpack.c.b16 %v7241, %v7239
    %v7278 = vpack.c.b16 %v7242, %v7240
    %v7279 = vpack.c.b16 %v7245, %v7243
    %v7280 = vpack.c.b16 %v7246, %v7244
    %v7281 = vpack.c.b16 %v7249, %v7247
    %v7282 = vpack.c.b16 %v7250, %v7248
    %7315 = vmatprep.subr.bf16.mxu0 %v7252
    %7316 = vmatpush1.bf16.msra.mxu0 %v7251
    %7317 = vmatprep.subr.bf16.mxu0 %v7254
    %7318 = vmatpush1.bf16.msra.mxu0 %v7253
    %7319 = vmatprep.subr.bf16.mxu0 %v7256
    %7320 = vmatpush1.bf16.msra.mxu0 %v7255
    %7321 = vmatprep.subr.bf16.mxu0 %v7258
    %7322 = vmatpush1.bf16.msra.mxu0 %v7257
    %7323 = vmatprep.subr.bf16.mxu0 %v7260
    %7324 = vmatpush1.bf16.msra.mxu0 %v7259
    %7325 = vmatprep.subr.bf16.mxu0 %v7262
    %7326 = vmatpush1.bf16.msra.mxu0 %v7261
    %7327 = vmatprep.subr.bf16.mxu0 %v7264
    %7328 = vmatpush1.bf16.msra.mxu0 %v7263
    %7329 = vmatprep.subr.bf16.mxu0 %v7266
    %7330 = vmatpush1.bf16.msra.mxu0 %v7265
    %7331 = vmatprep.subr.bf16.mxu0 %v7268
    %7332 = vmatpush1.bf16.msra.mxu0 %v7267
    %7333 = vmatprep.subr.bf16.mxu0 %v7270
    %7334 = vmatpush1.bf16.msra.mxu0 %v7269
    %7335 = vmatprep.subr.bf16.mxu0 %v7272
    %7336 = vmatpush1.bf16.msra.mxu0 %v7271
    %7337 = vmatprep.subr.bf16.mxu0 %v7274
    %7338 = vmatpush1.bf16.msra.mxu0 %v7273
    %7339 = vmatprep.subr.bf16.mxu0 %v7276
    %7340 = vmatpush1.bf16.msra.mxu0 %v7275
    %7341 = vmatprep.subr.bf16.mxu0 %v7278
    %7342 = vmatpush1.bf16.msra.mxu0 %v7277
    %7343 = vmatprep.subr.bf16.mxu0 %v7280
    %7344 = vmatpush1.bf16.msra.mxu0 %v7279
    %7345 = vmatprep.subr.bf16.mxu0 %v7282
    %7346 = vmatpush1.bf16.msra.mxu0 %v7281
    %7347 = vmatprep.mubr.bf16.mxu0 %v7116
    %7348 = vmatmul.mubr.bf16.gmra.mrb[0].mxu0 %v7115
    %v7349 = vpop.f32.mrb[0].mxu0
    %v7350 = vadd.f32 0.0, %v7349
    %v7351 = vpop.f32.mrb[0].mxu0
    %v7352 = vadd.f32 0.0, %v7351
    %v7353 = vpop.f32.mrb[0].mxu0
    %v7354 = vadd.f32 0.0, %v7353
    %v7355 = vpop.f32.mrb[0].mxu0
    %v7356 = vadd.f32 0.0, %v7355
    %7357 = vmatprep.mubr.bf16.mxu0 %v7118
    %7358 = vmatmul.mubr.bf16.gmra.mrb[0].mxu0 %v7117
    %v7359 = vpop.f32.mrb[0].mxu0
    %v7360 = vadd.f32 0.0, %v7359
    %v7361 = vpop.f32.mrb[0].mxu0
    %v7362 = vadd.f32 0.0, %v7361
    %v7363 = vpop.f32.mrb[0].mxu0
    %v7364 = vadd.f32 0.0, %v7363
    %v7365 = vpop.f32.mrb[0].mxu0
    %v7366 = vadd.f32 0.0, %v7365
    %7367 = vmatprep.mubr.bf16.mxu0 %v7120
    %7368 = vmatmul.mubr.bf16.gmra.mrb[0].mxu0 %v7119
    %v7369 = vpop.f32.mrb[0].mxu0
    %v7370 = vadd.f32 0.0, %v7369
    %v7371 = vpop.f32.mrb[0].mxu0
    %v7372 = vadd.f32 0.0, %v7371
    %v7373 = vpop.f32.mrb[0].mxu0
    %v7374 = vadd.f32 0.0, %v7373
    %v7375 = vpop.f32.mrb[0].mxu0
    %v7376 = vadd.f32 0.0, %v7375
    %7377 = vmatprep.mubr.bf16.mxu0 %v7122
    %7378 = vmatmul.mubr.bf16.gmra.mrb[0].mxu0 %v7121
    %v7379 = vpop.f32.mrb[0].mxu0
    %v7380 = vadd.f32 0.0, %v7379
    %v7381 = vpop.f32.mrb[0].mxu0
    %v7382 = vadd.f32 0.0, %v7381
    %v7383 = vpop.f32.mrb[0].mxu0
    %v7384 = vadd.f32 0.0, %v7383
    %v7385 = vpop.f32.mrb[0].mxu0
    %v7386 = vadd.f32 0.0, %v7385
    %7387 = vdwg.mxu0
    %v7388 = vld [vmem:[%s22] sm:$0xff]
    %v7389 = vld [vmem:[%s22 + $0x8] sm:$0xff]
    %v7390 = vld [vmem:[%s22 + $0x10] sm:$0xff]
    %v7391 = vld [vmem:[%s22 + $0x18] sm:$0xff]
    %v7392 = vld [vmem:[%s22 + $0x20] sm:$0xff]
    %v7393 = vld [vmem:[%s22 + $0x28] sm:$0xff]
    %v7394 = vld [vmem:[%s22 + $0x30] sm:$0xff]
    %v7395 = vld [vmem:[%s22 + $0x38] sm:$0xff]
    %v7396 = vld [vmem:[%s22 + $0x40] sm:$0xff]
    %v7397 = vld [vmem:[%s22 + $0x48] sm:$0xff]
    %v7398 = vld [vmem:[%s22 + $0x50] sm:$0xff]
    %v7399 = vld [vmem:[%s22 + $0x58] sm:$0xff]
    %v7400 = vld [vmem:[%s22 + $0x60] sm:$0xff]
    %v7401 = vld [vmem:[%s22 + $0x68] sm:$0xff]
    %v7402 = vld [vmem:[%s22 + $0x70] sm:$0xff]
    %v7403 = vld [vmem:[%s22 + $0x78] sm:$0xff]
    %s7404 = scalar_lea.vmem %s21, 256
    %v7405 = vld [vmem:[%s7404] sm:$0xff]
    %v7406 = vld [vmem:[%s7404 + $0x8] sm:$0xff]
    %v7407 = vld [vmem:[%s7404 + $0x10] sm:$0xff]
    %v7408 = vld [vmem:[%s7404 + $0x18] sm:$0xff]
    %v7409 = vld [vmem:[%s7404 + $0x20] sm:$0xff]
    %v7410 = vld [vmem:[%s7404 + $0x28] sm:$0xff]
    %v7411 = vld [vmem:[%s7404 + $0x30] sm:$0xff]
    %v7412 = vld [vmem:[%s7404 + $0x38] sm:$0xff]
    %v7413 = vld [vmem:[%s7404 + $0x40] sm:$0xff]
    %v7414 = vld [vmem:[%s7404 + $0x48] sm:$0xff]
    %v7415 = vld [vmem:[%s7404 + $0x50] sm:$0xff]
    %v7416 = vld [vmem:[%s7404 + $0x58] sm:$0xff]
    %v7417 = vld [vmem:[%s7404 + $0x60] sm:$0xff]
    %v7418 = vld [vmem:[%s7404 + $0x68] sm:$0xff]
    %v7419 = vld [vmem:[%s7404 + $0x70] sm:$0xff]
    %v7420 = vld [vmem:[%s7404 + $0x78] sm:$0xff]
    %v7421 = vld [vmem:[%s7404 + $0x80] sm:$0xff]
    %v7422 = vld [vmem:[%s7404 + $0x88] sm:$0xff]
    %v7423 = vld [vmem:[%s7404 + $0x90] sm:$0xff]
    %v7424 = vld [vmem:[%s7404 + $0x98] sm:$0xff]
    %v7425 = vld [vmem:[%s7404 + $0xa0] sm:$0xff]
    %v7426 = vld [vmem:[%s7404 + $0xa8] sm:$0xff]
    %v7427 = vld [vmem:[%s7404 + $0xb0] sm:$0xff]
    %v7428 = vld [vmem:[%s7404 + $0xb8] sm:$0xff]
    %v7429 = vld [vmem:[%s7404 + $0xc0] sm:$0xff]
    %v7430 = vld [vmem:[%s7404 + $0xc8] sm:$0xff]
    %v7431 = vld [vmem:[%s7404 + $0xd0] sm:$0xff]
    %v7432 = vld [vmem:[%s7404 + $0xd8] sm:$0xff]
    %v7433 = vld [vmem:[%s7404 + $0xe0] sm:$0xff]
    %v7434 = vld [vmem:[%s7404 + $0xe8] sm:$0xff]
    %v7435 = vld [vmem:[%s7404 + $0xf0] sm:$0xff]
    %v7436 = vld [vmem:[%s7404 + $0xf8] sm:$0xff]
    %v7469 = vunpack.c.l.b16 %v7405
    %v7470 = vunpack.c.h.b16 %v7405
    %v7471 = vunpack.c.l.b16 %v7406
    %v7472 = vunpack.c.h.b16 %v7406
    %v7473 = vunpack.c.l.b16 %v7407
    %v7474 = vunpack.c.h.b16 %v7407
    %v7475 = vunpack.c.l.b16 %v7408
    %v7476 = vunpack.c.h.b16 %v7408
    %v7477 = vunpack.c.l.b16 %v7409
    %v7478 = vunpack.c.h.b16 %v7409
    %v7479 = vunpack.c.l.b16 %v7410
    %v7480 = vunpack.c.h.b16 %v7410
    %v7481 = vunpack.c.l.b16 %v7411
    %v7482 = vunpack.c.h.b16 %v7411
    %v7483 = vunpack.c.l.b16 %v7412
    %v7484 = vunpack.c.h.b16 %v7412
    %v7485 = vunpack.c.l.b16 %v7413
    %v7486 = vunpack.c.h.b16 %v7413
    %v7487 = vunpack.c.l.b16 %v7414
    %v7488 = vunpack.c.h.b16 %v7414
    %v7489 = vunpack.c.l.b16 %v7415
    %v7490 = vunpack.c.h.b16 %v7415
    %v7491 = vunpack.c.l.b16 %v7416
    %v7492 = vunpack.c.h.b16 %v7416
    %v7493 = vunpack.c.l.b16 %v7417
    %v7494 = vunpack.c.h.b16 %v7417
    %v7495 = vunpack.c.l.b16 %v7418
    %v7496 = vunpack.c.h.b16 %v7418
    %v7497 = vunpack.c.l.b16 %v7419
    %v7498 = vunpack.c.h.b16 %v7419
    %v7499 = vunpack.c.l.b16 %v7420
    %v7500 = vunpack.c.h.b16 %v7420
    %v7501 = vunpack.c.l.b16 %v7421
    %v7502 = vunpack.c.h.b16 %v7421
    %v7503 = vunpack.c.l.b16 %v7422
    %v7504 = vunpack.c.h.b16 %v7422
    %v7505 = vunpack.c.l.b16 %v7423
    %v7506 = vunpack.c.h.b16 %v7423
    %v7507 = vunpack.c.l.b16 %v7424
    %v7508 = vunpack.c.h.b16 %v7424
    %v7509 = vunpack.c.l.b16 %v7425
    %v7510 = vunpack.c.h.b16 %v7425
    %v7511 = vunpack.c.l.b16 %v7426
    %v7512 = vunpack.c.h.b16 %v7426
    %v7513 = vunpack.c.l.b16 %v7427
    %v7514 = vunpack.c.h.b16 %v7427
    %v7515 = vunpack.c.l.b16 %v7428
    %v7516 = vunpack.c.h.b16 %v7428
    %v7517 = vunpack.c.l.b16 %v7429
    %v7518 = vunpack.c.h.b16 %v7429
    %v7519 = vunpack.c.l.b16 %v7430
    %v7520 = vunpack.c.h.b16 %v7430
    %v7521 = vunpack.c.l.b16 %v7431
    %v7522 = vunpack.c.h.b16 %v7431
    %v7523 = vunpack.c.l.b16 %v7432
    %v7524 = vunpack.c.h.b16 %v7432
    %v7525 = vunpack.c.l.b16 %v7433
    %v7526 = vunpack.c.h.b16 %v7433
    %v7527 = vunpack.c.l.b16 %v7434
    %v7528 = vunpack.c.h.b16 %v7434
    %v7529 = vunpack.c.l.b16 %v7435
    %v7530 = vunpack.c.h.b16 %v7435
    %v7531 = vunpack.c.l.b16 %v7436
    %v7532 = vunpack.c.h.b16 %v7436
    %v7533 = vpack.c.b16 %v7471, %v7469
    %v7534 = vpack.c.b16 %v7472, %v7470
    %v7535 = vpack.c.b16 %v7475, %v7473
    %v7536 = vpack.c.b16 %v7476, %v7474
    %v7537 = vpack.c.b16 %v7479, %v7477
    %v7538 = vpack.c.b16 %v7480, %v7478
    %v7539 = vpack.c.b16 %v7483, %v7481
    %v7540 = vpack.c.b16 %v7484, %v7482
    %v7541 = vpack.c.b16 %v7487, %v7485
    %v7542 = vpack.c.b16 %v7488, %v7486
    %v7543 = vpack.c.b16 %v7491, %v7489
    %v7544 = vpack.c.b16 %v7492, %v7490
    %v7545 = vpack.c.b16 %v7495, %v7493
    %v7546 = vpack.c.b16 %v7496, %v7494
    %v7547 = vpack.c.b16 %v7499, %v7497
    %v7548 = vpack.c.b16 %v7500, %v7498
    %v7549 = vpack.c.b16 %v7503, %v7501
    %v7550 = vpack.c.b16 %v7504, %v7502
    %v7551 = vpack.c.b16 %v7507, %v7505
    %v7552 = vpack.c.b16 %v7508, %v7506
    %v7553 = vpack.c.b16 %v7511, %v7509
    %v7554 = vpack.c.b16 %v7512, %v7510
    %v7555 = vpack.c.b16 %v7515, %v7513
    %v7556 = vpack.c.b16 %v7516, %v7514
    %v7557 = vpack.c.b16 %v7519, %v7517
    %v7558 = vpack.c.b16 %v7520, %v7518
    %v7559 = vpack.c.b16 %v7523, %v7521
    %v7560 = vpack.c.b16 %v7524, %v7522
    %v7561 = vpack.c.b16 %v7527, %v7525
    %v7562 = vpack.c.b16 %v7528, %v7526
    %v7563 = vpack.c.b16 %v7531, %v7529
    %v7564 = vpack.c.b16 %v7532, %v7530
    %7597 = vmatprep.subr.bf16.mxu0 %v7534
    %7598 = vmatpush1.bf16.msra.mxu0 %v7533
    %7599 = vmatprep.subr.bf16.mxu0 %v7536
    %7600 = vmatpush1.bf16.msra.mxu0 %v7535
    %7601 = vmatprep.subr.bf16.mxu0 %v7538
    %7602 = vmatpush1.bf16.msra.mxu0 %v7537
    %7603 = vmatprep.subr.bf16.mxu0 %v7540
    %7604 = vmatpush1.bf16.msra.mxu0 %v7539
    %7605 = vmatprep.subr.bf16.mxu0 %v7542
    %7606 = vmatpush1.bf16.msra.mxu0 %v7541
    %7607 = vmatprep.subr.bf16.mxu0 %v7544
    %7608 = vmatpush1.bf16.msra.mxu0 %v7543
    %7609 = vmatprep.subr.bf16.mxu0 %v7546
    %7610 = vmatpush1.bf16.msra.mxu0 %v7545
    %7611 = vmatprep.subr.bf16.mxu0 %v7548
    %7612 = vmatpush1.bf16.msra.mxu0 %v7547
    %7613 = vmatprep.subr.bf16.mxu0 %v7550
    %7614 = vmatpush1.bf16.msra.mxu0 %v7549
    %7615 = vmatprep.subr.bf16.mxu0 %v7552
    %7616 = vmatpush1.bf16.msra.mxu0 %v7551
    %7617 = vmatprep.subr.bf16.mxu0 %v7554
    %7618 = vmatpush1.bf16.msra.mxu0 %v7553
    %7619 = vmatprep.subr.bf16.mxu0 %v7556
    %7620 = vmatpush1.bf16.msra.mxu0 %v7555
    %7621 = vmatprep.subr.bf16.mxu0 %v7558
    %7622 = vmatpush1.bf16.msra.mxu0 %v7557
    %7623 = vmatprep.subr.bf16.mxu0 %v7560
    %7624 = vmatpush1.bf16.msra.mxu0 %v7559
    %7625 = vmatprep.subr.bf16.mxu0 %v7562
    %7626 = vmatpush1.bf16.msra.mxu0 %v7561
    %7627 = vmatprep.subr.bf16.mxu0 %v7564
    %7628 = vmatpush1.bf16.msra.mxu0 %v7563
    %7629 = vmatprep.mubr.bf16.mxu0 %v7116
    %7630 = vmatmul.mubr.bf16.gmra.mrb[0].mxu0 %v7115
    %v7631 = vpop.f32.mrb[0].mxu0
    %v7632 = vadd.f32 0.0, %v7631
    %v7633 = vpop.f32.mrb[0].mxu0
    %v7634 = vadd.f32 0.0, %v7633
    %v7635 = vpop.f32.mrb[0].mxu0
    %v7636 = vadd.f32 0.0, %v7635
    %v7637 = vpop.f32.mrb[0].mxu0
    %v7638 = vadd.f32 0.0, %v7637
    %7639 = vmatprep.mubr.bf16.mxu0 %v7118
    %7640 = vmatmul.mubr.bf16.gmra.mrb[0].mxu0 %v7117
    %v7641 = vpop.f32.mrb[0].mxu0
    %v7642 = vadd.f32 0.0, %v7641
    %v7643 = vpop.f32.mrb[0].mxu0
    %v7644 = vadd.f32 0.0, %v7643
    %v7645 = vpop.f32.mrb[0].mxu0
    %v7646 = vadd.f32 0.0, %v7645
    %v7647 = vpop.f32.mrb[0].mxu0
    %v7648 = vadd.f32 0.0, %v7647
    %7649 = vmatprep.mubr.bf16.mxu0 %v7120
    %7650 = vmatmul.mubr.bf16.gmra.mrb[0].mxu0 %v7119
    %v7651 = vpop.f32.mrb[0].mxu0
    %v7652 = vadd.f32 0.0, %v7651
    %v7653 = vpop.f32.mrb[0].mxu0
    %v7654 = vadd.f32 0.0, %v7653
    %v7655 = vpop.f32.mrb[0].mxu0
    %v7656 = vadd.f32 0.0, %v7655
    %v7657 = vpop.f32.mrb[0].mxu0
    %v7658 = vadd.f32 0.0, %v7657
    %7659 = vmatprep.mubr.bf16.mxu0 %v7122
    %7660 = vmatmul.mubr.bf16.gmra.mrb[0].mxu0 %v7121
    %v7661 = vpop.f32.mrb[0].mxu0
    %v7662 = vadd.f32 0.0, %v7661
    %v7663 = vpop.f32.mrb[0].mxu0
    %v7664 = vadd.f32 0.0, %v7663
    %v7665 = vpop.f32.mrb[0].mxu0
    %v7666 = vadd.f32 0.0, %v7665
    %v7667 = vpop.f32.mrb[0].mxu0
    %v7668 = vadd.f32 0.0, %v7667
    %7669 = vdwg.mxu0
    %s7670 = scalar_lea.vmem %s22, 128
    %v7671 = vld [vmem:[%s7670] sm:$0xff]
    %v7672 = vld [vmem:[%s7670 + $0x8] sm:$0xff]
    %v7673 = vld [vmem:[%s7670 + $0x10] sm:$0xff]
    %v7674 = vld [vmem:[%s7670 + $0x18] sm:$0xff]
    %v7675 = vld [vmem:[%s7670 + $0x20] sm:$0xff]
    %v7676 = vld [vmem:[%s7670 + $0x28] sm:$0xff]
    %v7677 = vld [vmem:[%s7670 + $0x30] sm:$0xff]
    %v7678 = vld [vmem:[%s7670 + $0x38] sm:$0xff]
    %v7679 = vld [vmem:[%s7670 + $0x40] sm:$0xff]
    %v7680 = vld [vmem:[%s7670 + $0x48] sm:$0xff]
    %v7681 = vld [vmem:[%s7670 + $0x50] sm:$0xff]
    %v7682 = vld [vmem:[%s7670 + $0x58] sm:$0xff]
    %v7683 = vld [vmem:[%s7670 + $0x60] sm:$0xff]
    %v7684 = vld [vmem:[%s7670 + $0x68] sm:$0xff]
    %v7685 = vld [vmem:[%s7670 + $0x70] sm:$0xff]
    %v7686 = vld [vmem:[%s7670 + $0x78] sm:$0xff]
    %v7688 = vsel %vm1040, %v7671, 0
    %v7691 = vsel %vm1040, %v7672, 0
    %v7694 = vsel %vm1040, %v7673, 0
    %v7697 = vsel %vm1040, %v7674, 0
    %v7700 = vsel %vm1040, %v7675, 0
    %v7703 = vsel %vm1040, %v7676, 0
    %v7706 = vsel %vm1040, %v7677, 0
    %v7709 = vsel %vm1040, %v7678, 0
    %v7712 = vsel %vm1040, %v7679, 0
    %v7715 = vsel %vm1040, %v7680, 0
    %v7718 = vsel %vm1040, %v7681, 0
    %v7721 = vsel %vm1040, %v7682, 0
    %v7724 = vsel %vm1040, %v7683, 0
    %v7727 = vsel %vm1040, %v7684, 0
    %v7730 = vsel %vm1040, %v7685, 0
    %v7733 = vsel %vm1040, %v7686, 0
    %7735 = vmatprep.subr.mxu0 %v7634
    %7736 = vmatpush1.msra.mxu0 %v7632
    %7737 = vmatprep.subr.mxu0 %v7638
    %7738 = vmatpush1.msra.mxu0 %v7636
    %7739 = vmatprep.subr.mxu0 %v7644
    %7740 = vmatpush1.msra.mxu0 %v7642
    %7741 = vmatprep.subr.mxu0 %v7648
    %7742 = vmatpush1.msra.mxu0 %v7646
    %7743 = vmatprep.subr.mxu0 %v7654
    %7744 = vmatpush1.msra.mxu0 %v7652
    %7745 = vmatprep.subr.mxu0 %v7658
    %7746 = vmatpush1.msra.mxu0 %v7656
    %7747 = vmatprep.subr.mxu0 %v7664
    %7748 = vmatpush1.msra.mxu0 %v7662
    %7749 = vmatprep.subr.mxu0 %v7668
    %7750 = vmatpush1.msra.mxu0 %v7666
    %7751 = vmatprep.subr.mxu0 0.0
    %7752 = vmatpush1.msra.mxu0 0.0
    %7753 = vmatprep.subr.mxu0 0.0
    %7754 = vmatpush1.msra.mxu0 0.0
    %7755 = vmatprep.subr.mxu0 0.0
    %7756 = vmatpush1.msra.mxu0 0.0
    %7757 = vmatprep.subr.mxu0 0.0
    %7758 = vmatpush1.msra.mxu0 0.0
    %7759 = vmatprep.subr.mxu0 0.0
    %7760 = vmatpush1.msra.mxu0 0.0
    %7761 = vmatprep.subr.mxu0 0.0
    %7762 = vmatpush1.msra.mxu0 0.0
    %7763 = vmatprep.subr.mxu0 0.0
    %7764 = vmatpush1.msra.mxu0 0.0
    %7765 = vmatprep.subr.mxu0 0.0
    %7766 = vmatpush1.msra.mxu0 0.0
    %7767 = vmatprep.subr.mxu0 0.0
    %7768 = vmatpush1.msra.mxu0 0.0
    %7769 = vmatprep.subr.mxu0 0.0
    %7770 = vmatpush1.msra.mxu0 0.0
    %7771 = vmatprep.subr.mxu0 0.0
    %7772 = vmatpush1.msra.mxu0 0.0
    %7773 = vmatprep.subr.mxu0 0.0
    %7774 = vmatpush1.msra.mxu0 0.0
    %7775 = vmatprep.subr.mxu0 0.0
    %7776 = vmatpush1.msra.mxu0 0.0
    %7777 = vmatprep.subr.mxu0 0.0
    %7778 = vmatpush1.msra.mxu0 0.0
    %7779 = vmatprep.subr.mxu0 0.0
    %7780 = vmatpush1.msra.mxu0 0.0
    %7781 = vmatprep.subr.mxu0 0.0
    %7782 = vmatpush1.msra.mxu0 0.0
    %7783 = vmatprep.subr.mxu0 0.0
    %7784 = vmatpush1.msra.mxu0 0.0
    %7785 = vmatprep.subr.mxu0 0.0
    %7786 = vmatpush1.msra.mxu0 0.0
    %7787 = vmatprep.subr.mxu0 0.0
    %7788 = vmatpush1.msra.mxu0 0.0
    %7789 = vmatprep.subr.mxu0 0.0
    %7790 = vmatpush1.msra.mxu0 0.0
    %7791 = vmatprep.subr.mxu0 0.0
    %7792 = vmatpush1.msra.mxu0 0.0
    %7793 = vmatprep.subr.mxu0 0.0
    %7794 = vmatpush1.msra.mxu0 0.0
    %7795 = vmatprep.subr.mxu0 0.0
    %7796 = vmatpush1.msra.mxu0 0.0
    %7797 = vmatprep.subr.mxu0 0.0
    %7798 = vmatpush1.msra.mxu0 0.0
    %7799 = vmatprep.mubr.f32.mxu0 0.0
    %7800 = vmatmul.mubr.f32.gmra.mrb[0].mxu0 %v7688
    %v7801 = vpop.f32.mrb[0].mxu0
    %v7802 = vadd.f32 0.0, %v7801
    %v7803 = vpop.f32.mrb[0].mxu0
    %v7804 = vadd.f32 0.0, %v7803
    %7805 = vmatprep.mubr.f32.mxu0 0.0
    %7806 = vmatmul.mubr.f32.gmra.mrb[0].mxu0 %v7691
    %v7807 = vpop.f32.mrb[0].mxu0
    %v7808 = vadd.f32 0.0, %v7807
    %v7809 = vpop.f32.mrb[0].mxu0
    %v7810 = vadd.f32 0.0, %v7809
    %7811 = vmatprep.mubr.f32.mxu0 0.0
    %7812 = vmatmul.mubr.f32.gmra.mrb[0].mxu0 %v7694
    %v7813 = vpop.f32.mrb[0].mxu0
    %v7814 = vadd.f32 0.0, %v7813
    %v7815 = vpop.f32.mrb[0].mxu0
    %v7816 = vadd.f32 0.0, %v7815
    %7817 = vmatprep.mubr.f32.mxu0 0.0
    %7818 = vmatmul.mubr.f32.gmra.mrb[0].mxu0 %v7697
    %v7819 = vpop.f32.mrb[0].mxu0
    %v7820 = vadd.f32 0.0, %v7819
    %v7821 = vpop.f32.mrb[0].mxu0
    %v7822 = vadd.f32 0.0, %v7821
    %7823 = vmatprep.mubr.f32.mxu0 0.0
    %7824 = vmatmul.mubr.f32.gmra.mrb[0].mxu0 %v7700
    %v7825 = vpop.f32.mrb[0].mxu0
    %v7826 = vadd.f32 0.0, %v7825
    %v7827 = vpop.f32.mrb[0].mxu0
    %v7828 = vadd.f32 0.0, %v7827
    %7829 = vmatprep.mubr.f32.mxu0 0.0
    %7830 = vmatmul.mubr.f32.gmra.mrb[0].mxu0 %v7703
    %v7831 = vpop.f32.mrb[0].mxu0
    %v7832 = vadd.f32 0.0, %v7831
    %v7833 = vpop.f32.mrb[0].mxu0
    %v7834 = vadd.f32 0.0, %v7833
    %7835 = vmatprep.mubr.f32.mxu0 0.0
    %7836 = vmatmul.mubr.f32.gmra.mrb[0].mxu0 %v7706
    %v7837 = vpop.f32.mrb[0].mxu0
    %v7838 = vadd.f32 0.0, %v7837
    %v7839 = vpop.f32.mrb[0].mxu0
    %v7840 = vadd.f32 0.0, %v7839
    %7841 = vmatprep.mubr.f32.mxu0 0.0
    %7842 = vmatmul.mubr.f32.gmra.mrb[0].mxu0 %v7709
    %v7843 = vpop.f32.mrb[0].mxu0
    %v7844 = vadd.f32 0.0, %v7843
    %v7845 = vpop.f32.mrb[0].mxu0
    %v7846 = vadd.f32 0.0, %v7845
    %7847 = vmatprep.mubr.f32.mxu0 0.0
    %7848 = vmatmul.mubr.f32.gmra.mrb[0].mxu0 %v7712
    %v7849 = vpop.f32.mrb[0].mxu0
    %v7850 = vadd.f32 0.0, %v7849
    %v7851 = vpop.f32.mrb[0].mxu0
    %v7852 = vadd.f32 0.0, %v7851
    %7853 = vmatprep.mubr.f32.mxu0 0.0
    %7854 = vmatmul.mubr.f32.gmra.mrb[0].mxu0 %v7715
    %v7855 = vpop.f32.mrb[0].mxu0
    %v7856 = vadd.f32 0.0, %v7855
    %v7857 = vpop.f32.mrb[0].mxu0
    %v7858 = vadd.f32 0.0, %v7857
    %7859 = vmatprep.mubr.f32.mxu0 0.0
    %7860 = vmatmul.mubr.f32.gmra.mrb[0].mxu0 %v7718
    %v7861 = vpop.f32.mrb[0].mxu0
    %v7862 = vadd.f32 0.0, %v7861
    %v7863 = vpop.f32.mrb[0].mxu0
    %v7864 = vadd.f32 0.0, %v7863
    %7865 = vmatprep.mubr.f32.mxu0 0.0
    %7866 = vmatmul.mubr.f32.gmra.mrb[0].mxu0 %v7721
    %v7867 = vpop.f32.mrb[0].mxu0
    %v7868 = vadd.f32 0.0, %v7867
    %v7869 = vpop.f32.mrb[0].mxu0
    %v7870 = vadd.f32 0.0, %v7869
    %7871 = vmatprep.mubr.f32.mxu0 0.0
    %7872 = vmatmul.mubr.f32.gmra.mrb[0].mxu0 %v7724
    %v7873 = vpop.f32.mrb[0].mxu0
    %v7874 = vadd.f32 0.0, %v7873
    %v7875 = vpop.f32.mrb[0].mxu0
    %v7876 = vadd.f32 0.0, %v7875
    %7877 = vmatprep.mubr.f32.mxu0 0.0
    %7878 = vmatmul.mubr.f32.gmra.mrb[0].mxu0 %v7727
    %v7879 = vpop.f32.mrb[0].mxu0
    %v7880 = vadd.f32 0.0, %v7879
    %v7881 = vpop.f32.mrb[0].mxu0
    %v7882 = vadd.f32 0.0, %v7881
    %7883 = vmatprep.mubr.f32.mxu0 0.0
    %7884 = vmatmul.mubr.f32.gmra.mrb[0].mxu0 %v7730
    %v7885 = vpop.f32.mrb[0].mxu0
    %v7886 = vadd.f32 0.0, %v7885
    %v7887 = vpop.f32.mrb[0].mxu0
    %v7888 = vadd.f32 0.0, %v7887
    %7889 = vmatprep.mubr.f32.mxu0 0.0
    %7890 = vmatmul.mubr.f32.gmra.mrb[0].mxu0 %v7733
    %v7891 = vpop.f32.mrb[0].mxu0
    %v7892 = vadd.f32 0.0, %v7891
    %v7893 = vpop.f32.mrb[0].mxu0
    %v7894 = vadd.f32 0.0, %v7893
    %7895 = vdwg.mxu0
    %v7897 = vsel %vm1040, %v7388, 0
    %v7900 = vsel %vm1040, %v7389, 0
    %v7903 = vsel %vm1040, %v7390, 0
    %v7906 = vsel %vm1040, %v7391, 0
    %v7909 = vsel %vm1040, %v7392, 0
    %v7912 = vsel %vm1040, %v7393, 0
    %v7915 = vsel %vm1040, %v7394, 0
    %v7918 = vsel %vm1040, %v7395, 0
    %v7921 = vsel %vm1040, %v7396, 0
    %v7924 = vsel %vm1040, %v7397, 0
    %v7927 = vsel %vm1040, %v7398, 0
    %v7930 = vsel %vm1040, %v7399, 0
    %v7933 = vsel %vm1040, %v7400, 0
    %v7936 = vsel %vm1040, %v7401, 0
    %v7939 = vsel %vm1040, %v7402, 0
    %v7942 = vsel %vm1040, %v7403, 0
    %7944 = vmatprep.subr.mxu0 %v7352
    %7945 = vmatpush1.msra.mxu0 %v7350
    %7946 = vmatprep.subr.mxu0 %v7356
    %7947 = vmatpush1.msra.mxu0 %v7354
    %7948 = vmatprep.subr.mxu0 %v7362
    %7949 = vmatpush1.msra.mxu0 %v7360
    %7950 = vmatprep.subr.mxu0 %v7366
    %7951 = vmatpush1.msra.mxu0 %v7364
    %7952 = vmatprep.subr.mxu0 %v7372
    %7953 = vmatpush1.msra.mxu0 %v7370
    %7954 = vmatprep.subr.mxu0 %v7376
    %7955 = vmatpush1.msra.mxu0 %v7374
    %7956 = vmatprep.subr.mxu0 %v7382
    %7957 = vmatpush1.msra.mxu0 %v7380
    %7958 = vmatprep.subr.mxu0 %v7386
    %7959 = vmatpush1.msra.mxu0 %v7384
    %7960 = vmatprep.subr.mxu0 0.0
    %7961 = vmatpush1.msra.mxu0 0.0
    %7962 = vmatprep.subr.mxu0 0.0
    %7963 = vmatpush1.msra.mxu0 0.0
    %7964 = vmatprep.subr.mxu0 0.0
    %7965 = vmatpush1.msra.mxu0 0.0
    %7966 = vmatprep.subr.mxu0 0.0
    %7967 = vmatpush1.msra.mxu0 0.0
    %7968 = vmatprep.subr.mxu0 0.0
    %7969 = vmatpush1.msra.mxu0 0.0
    %7970 = vmatprep.subr.mxu0 0.0
    %7971 = vmatpush1.msra.mxu0 0.0
    %7972 = vmatprep.subr.mxu0 0.0
    %7973 = vmatpush1.msra.mxu0 0.0
    %7974 = vmatprep.subr.mxu0 0.0
    %7975 = vmatpush1.msra.mxu0 0.0
    %7976 = vmatprep.subr.mxu0 0.0
    %7977 = vmatpush1.msra.mxu0 0.0
    %7978 = vmatprep.subr.mxu0 0.0
    %7979 = vmatpush1.msra.mxu0 0.0
    %7980 = vmatprep.subr.mxu0 0.0
    %7981 = vmatpush1.msra.mxu0 0.0
    %7982 = vmatprep.subr.mxu0 0.0
    %7983 = vmatpush1.msra.mxu0 0.0
    %7984 = vmatprep.subr.mxu0 0.0
    %7985 = vmatpush1.msra.mxu0 0.0
    %7986 = vmatprep.subr.mxu0 0.0
    %7987 = vmatpush1.msra.mxu0 0.0
    %7988 = vmatprep.subr.mxu0 0.0
    %7989 = vmatpush1.msra.mxu0 0.0
    %7990 = vmatprep.subr.mxu0 0.0
    %7991 = vmatpush1.msra.mxu0 0.0
    %7992 = vmatprep.subr.mxu0 0.0
    %7993 = vmatpush1.msra.mxu0 0.0
    %7994 = vmatprep.subr.mxu0 0.0
    %7995 = vmatpush1.msra.mxu0 0.0
    %7996 = vmatprep.subr.mxu0 0.0
    %7997 = vmatpush1.msra.mxu0 0.0
    %7998 = vmatprep.subr.mxu0 0.0
    %7999 = vmatpush1.msra.mxu0 0.0
    %8000 = vmatprep.subr.mxu0 0.0
    %8001 = vmatpush1.msra.mxu0 0.0
    %8002 = vmatprep.subr.mxu0 0.0
    %8003 = vmatpush1.msra.mxu0 0.0
    %8004 = vmatprep.subr.mxu0 0.0
    %8005 = vmatpush1.msra.mxu0 0.0
    %8006 = vmatprep.subr.mxu0 0.0
    %8007 = vmatpush1.msra.mxu0 0.0
    %8008 = vmatprep.mubr.f32.mxu0 0.0
    %8009 = vmatmul.mubr.f32.gmra.mrb[0].mxu0 %v7897
    %v8010 = vpop.f32.mrb[0].mxu0
    %v8011 = vadd.f32 %v7802, %v8010
    %v8012 = vpop.f32.mrb[0].mxu0
    %v8013 = vadd.f32 %v7804, %v8012
    %8014 = vmatprep.mubr.f32.mxu0 0.0
    %8015 = vmatmul.mubr.f32.gmra.mrb[0].mxu0 %v7900
    %v8016 = vpop.f32.mrb[0].mxu0
    %v8017 = vadd.f32 %v7808, %v8016
    %v8018 = vpop.f32.mrb[0].mxu0
    %v8019 = vadd.f32 %v7810, %v8018
    %8020 = vmatprep.mubr.f32.mxu0 0.0
    %8021 = vmatmul.mubr.f32.gmra.mrb[0].mxu0 %v7903
    %v8022 = vpop.f32.mrb[0].mxu0
    %v8023 = vadd.f32 %v7814, %v8022
    %v8024 = vpop.f32.mrb[0].mxu0
    %v8025 = vadd.f32 %v7816, %v8024
    %8026 = vmatprep.mubr.f32.mxu0 0.0
    %8027 = vmatmul.mubr.f32.gmra.mrb[0].mxu0 %v7906
    %v8028 = vpop.f32.mrb[0].mxu0
    %v8029 = vadd.f32 %v7820, %v8028
    %v8030 = vpop.f32.mrb[0].mxu0
    %v8031 = vadd.f32 %v7822, %v8030
    %8032 = vmatprep.mubr.f32.mxu0 0.0
    %8033 = vmatmul.mubr.f32.gmra.mrb[0].mxu0 %v7909
    %v8034 = vpop.f32.mrb[0].mxu0
    %v8035 = vadd.f32 %v7826, %v8034
    %v8036 = vpop.f32.mrb[0].mxu0
    %v8037 = vadd.f32 %v7828, %v8036
    %8038 = vmatprep.mubr.f32.mxu0 0.0
    %8039 = vmatmul.mubr.f32.gmra.mrb[0].mxu0 %v7912
    %v8040 = vpop.f32.mrb[0].mxu0
    %v8041 = vadd.f32 %v7832, %v8040
    %v8042 = vpop.f32.mrb[0].mxu0
    %v8043 = vadd.f32 %v7834, %v8042
    %8044 = vmatprep.mubr.f32.mxu0 0.0
    %8045 = vmatmul.mubr.f32.gmra.mrb[0].mxu0 %v7915
    %v8046 = vpop.f32.mrb[0].mxu0
    %v8047 = vadd.f32 %v7838, %v8046
    %v8048 = vpop.f32.mrb[0].mxu0
    %v8049 = vadd.f32 %v7840, %v8048
    %8050 = vmatprep.mubr.f32.mxu0 0.0
    %8051 = vmatmul.mubr.f32.gmra.mrb[0].mxu0 %v7918
    %v8052 = vpop.f32.mrb[0].mxu0
    %v8053 = vadd.f32 %v7844, %v8052
    %v8054 = vpop.f32.mrb[0].mxu0
    %v8055 = vadd.f32 %v7846, %v8054
    %8056 = vmatprep.mubr.f32.mxu0 0.0
    %8057 = vmatmul.mubr.f32.gmra.mrb[0].mxu0 %v7921
    %v8058 = vpop.f32.mrb[0].mxu0
    %v8059 = vadd.f32 %v7850, %v8058
    %v8060 = vpop.f32.mrb[0].mxu0
    %v8061 = vadd.f32 %v7852, %v8060
    %8062 = vmatprep.mubr.f32.mxu0 0.0
    %8063 = vmatmul.mubr.f32.gmra.mrb[0].mxu0 %v7924
    %v8064 = vpop.f32.mrb[0].mxu0
    %v8065 = vadd.f32 %v7856, %v8064
    %v8066 = vpop.f32.mrb[0].mxu0
    %v8067 = vadd.f32 %v7858, %v8066
    %8068 = vmatprep.mubr.f32.mxu0 0.0
    %8069 = vmatmul.mubr.f32.gmra.mrb[0].mxu0 %v7927
    %v8070 = vpop.f32.mrb[0].mxu0
    %v8071 = vadd.f32 %v7862, %v8070
    %v8072 = vpop.f32.mrb[0].mxu0
    %v8073 = vadd.f32 %v7864, %v8072
    %8074 = vmatprep.mubr.f32.mxu0 0.0
    %8075 = vmatmul.mubr.f32.gmra.mrb[0].mxu0 %v7930
    %v8076 = vpop.f32.mrb[0].mxu0
    %v8077 = vadd.f32 %v7868, %v8076
    %v8078 = vpop.f32.mrb[0].mxu0
    %v8079 = vadd.f32 %v7870, %v8078
    %8080 = vmatprep.mubr.f32.mxu0 0.0
    %8081 = vmatmul.mubr.f32.gmra.mrb[0].mxu0 %v7933
    %v8082 = vpop.f32.mrb[0].mxu0
    %v8083 = vadd.f32 %v7874, %v8082
    %v8084 = vpop.f32.mrb[0].mxu0
    %v8085 = vadd.f32 %v7876, %v8084
    %8086 = vmatprep.mubr.f32.mxu0 0.0
    %8087 = vmatmul.mubr.f32.gmra.mrb[0].mxu0 %v7936
    %v8088 = vpop.f32.mrb[0].mxu0
    %v8089 = vadd.f32 %v7880, %v8088
    %v8090 = vpop.f32.mrb[0].mxu0
    %v8091 = vadd.f32 %v7882, %v8090
    %8092 = vmatprep.mubr.f32.mxu0 0.0
    %8093 = vmatmul.mubr.f32.gmra.mrb[0].mxu0 %v7939
    %v8094 = vpop.f32.mrb[0].mxu0
    %v8095 = vadd.f32 %v7886, %v8094
    %v8096 = vpop.f32.mrb[0].mxu0
    %v8097 = vadd.f32 %v7888, %v8096
    %8098 = vmatprep.mubr.f32.mxu0 0.0
    %8099 = vmatmul.mubr.f32.gmra.mrb[0].mxu0 %v7942
    %v8100 = vpop.f32.mrb[0].mxu0
    %v8101 = vadd.f32 %v7892, %v8100
    %v8102 = vpop.f32.mrb[0].mxu0
    %v8103 = vadd.f32 %v7894, %v8102
    %8104 = vdwg.mxu0
    %s8105 = scalar_lea.vmem %s21, 512
    %v8106 = vld [vmem:[%s8105] sm:$0xff]
    %v8107 = vld [vmem:[%s8105 + $0x8] sm:$0xff]
    %v8108 = vld [vmem:[%s8105 + $0x10] sm:$0xff]
    %v8109 = vld [vmem:[%s8105 + $0x18] sm:$0xff]
    %v8110 = vld [vmem:[%s8105 + $0x20] sm:$0xff]
    %v8111 = vld [vmem:[%s8105 + $0x28] sm:$0xff]
    %v8112 = vld [vmem:[%s8105 + $0x30] sm:$0xff]
    %v8113 = vld [vmem:[%s8105 + $0x38] sm:$0xff]
    %v8114 = vld [vmem:[%s8105 + $0x40] sm:$0xff]
    %v8115 = vld [vmem:[%s8105 + $0x48] sm:$0xff]
    %v8116 = vld [vmem:[%s8105 + $0x50] sm:$0xff]
    %v8117 = vld [vmem:[%s8105 + $0x58] sm:$0xff]
    %v8118 = vld [vmem:[%s8105 + $0x60] sm:$0xff]
    %v8119 = vld [vmem:[%s8105 + $0x68] sm:$0xff]
    %v8120 = vld [vmem:[%s8105 + $0x70] sm:$0xff]
    %v8121 = vld [vmem:[%s8105 + $0x78] sm:$0xff]
    %v8122 = vld [vmem:[%s8105 + $0x80] sm:$0xff]
    %v8123 = vld [vmem:[%s8105 + $0x88] sm:$0xff]
    %v8124 = vld [vmem:[%s8105 + $0x90] sm:$0xff]
    %v8125 = vld [vmem:[%s8105 + $0x98] sm:$0xff]
    %v8126 = vld [vmem:[%s8105 + $0xa0] sm:$0xff]
    %v8127 = vld [vmem:[%s8105 + $0xa8] sm:$0xff]
    %v8128 = vld [vmem:[%s8105 + $0xb0] sm:$0xff]
    %v8129 = vld [vmem:[%s8105 + $0xb8] sm:$0xff]
    %v8130 = vld [vmem:[%s8105 + $0xc0] sm:$0xff]
    %v8131 = vld [vmem:[%s8105 + $0xc8] sm:$0xff]
    %v8132 = vld [vmem:[%s8105 + $0xd0] sm:$0xff]
    %v8133 = vld [vmem:[%s8105 + $0xd8] sm:$0xff]
    %v8134 = vld [vmem:[%s8105 + $0xe0] sm:$0xff]
    %v8135 = vld [vmem:[%s8105 + $0xe8] sm:$0xff]
    %v8136 = vld [vmem:[%s8105 + $0xf0] sm:$0xff]
    %v8137 = vld [vmem:[%s8105 + $0xf8] sm:$0xff]
    %v8170 = vunpack.c.l.b16 %v8106
    %v8171 = vunpack.c.h.b16 %v8106
    %v8172 = vunpack.c.l.b16 %v8107
    %v8173 = vunpack.c.h.b16 %v8107
    %v8174 = vunpack.c.l.b16 %v8108
    %v8175 = vunpack.c.h.b16 %v8108
    %v8176 = vunpack.c.l.b16 %v8109
    %v8177 = vunpack.c.h.b16 %v8109
    %v8178 = vunpack.c.l.b16 %v8110
    %v8179 = vunpack.c.h.b16 %v8110
    %v8180 = vunpack.c.l.b16 %v8111
    %v8181 = vunpack.c.h.b16 %v8111
    %v8182 = vunpack.c.l.b16 %v8112
    %v8183 = vunpack.c.h.b16 %v8112
    %v8184 = vunpack.c.l.b16 %v8113
    %v8185 = vunpack.c.h.b16 %v8113
    %v8186 = vunpack.c.l.b16 %v8114
    %v8187 = vunpack.c.h.b16 %v8114
    %v8188 = vunpack.c.l.b16 %v8115
    %v8189 = vunpack.c.h.b16 %v8115
    %v8190 = vunpack.c.l.b16 %v8116
    %v8191 = vunpack.c.h.b16 %v8116
    %v8192 = vunpack.c.l.b16 %v8117
    %v8193 = vunpack.c.h.b16 %v8117
    %v8194 = vunpack.c.l.b16 %v8118
    %v8195 = vunpack.c.h.b16 %v8118
    %v8196 = vunpack.c.l.b16 %v8119
    %v8197 = vunpack.c.h.b16 %v8119
    %v8198 = vunpack.c.l.b16 %v8120
    %v8199 = vunpack.c.h.b16 %v8120
    %v8200 = vunpack.c.l.b16 %v8121
    %v8201 = vunpack.c.h.b16 %v8121
    %v8202 = vunpack.c.l.b16 %v8122
    %v8203 = vunpack.c.h.b16 %v8122
    %v8204 = vunpack.c.l.b16 %v8123
    %v8205 = vunpack.c.h.b16 %v8123
    %v8206 = vunpack.c.l.b16 %v8124
    %v8207 = vunpack.c.h.b16 %v8124
    %v8208 = vunpack.c.l.b16 %v8125
    %v8209 = vunpack.c.h.b16 %v8125
    %v8210 = vunpack.c.l.b16 %v8126
    %v8211 = vunpack.c.h.b16 %v8126
    %v8212 = vunpack.c.l.b16 %v8127
    %v8213 = vunpack.c.h.b16 %v8127
    %v8214 = vunpack.c.l.b16 %v8128
    %v8215 = vunpack.c.h.b16 %v8128
    %v8216 = vunpack.c.l.b16 %v8129
    %v8217 = vunpack.c.h.b16 %v8129
    %v8218 = vunpack.c.l.b16 %v8130
    %v8219 = vunpack.c.h.b16 %v8130
    %v8220 = vunpack.c.l.b16 %v8131
    %v8221 = vunpack.c.h.b16 %v8131
    %v8222 = vunpack.c.l.b16 %v8132
    %v8223 = vunpack.c.h.b16 %v8132
    %v8224 = vunpack.c.l.b16 %v8133
    %v8225 = vunpack.c.h.b16 %v8133
    %v8226 = vunpack.c.l.b16 %v8134
    %v8227 = vunpack.c.h.b16 %v8134
    %v8228 = vunpack.c.l.b16 %v8135
    %v8229 = vunpack.c.h.b16 %v8135
    %v8230 = vunpack.c.l.b16 %v8136
    %v8231 = vunpack.c.h.b16 %v8136
    %v8232 = vunpack.c.l.b16 %v8137
    %v8233 = vunpack.c.h.b16 %v8137
    %v8234 = vpack.c.b16 %v8172, %v8170
    %v8235 = vpack.c.b16 %v8173, %v8171
    %v8236 = vpack.c.b16 %v8176, %v8174
    %v8237 = vpack.c.b16 %v8177, %v8175
    %v8238 = vpack.c.b16 %v8180, %v8178
    %v8239 = vpack.c.b16 %v8181, %v8179
    %v8240 = vpack.c.b16 %v8184, %v8182
    %v8241 = vpack.c.b16 %v8185, %v8183
    %v8242 = vpack.c.b16 %v8188, %v8186
    %v8243 = vpack.c.b16 %v8189, %v8187
    %v8244 = vpack.c.b16 %v8192, %v8190
    %v8245 = vpack.c.b16 %v8193, %v8191
    %v8246 = vpack.c.b16 %v8196, %v8194
    %v8247 = vpack.c.b16 %v8197, %v8195
    %v8248 = vpack.c.b16 %v8200, %v8198
    %v8249 = vpack.c.b16 %v8201, %v8199
    %v8250 = vpack.c.b16 %v8204, %v8202
    %v8251 = vpack.c.b16 %v8205, %v8203
    %v8252 = vpack.c.b16 %v8208, %v8206
    %v8253 = vpack.c.b16 %v8209, %v8207
    %v8254 = vpack.c.b16 %v8212, %v8210
    %v8255 = vpack.c.b16 %v8213, %v8211
    %v8256 = vpack.c.b16 %v8216, %v8214
    %v8257 = vpack.c.b16 %v8217, %v8215
    %v8258 = vpack.c.b16 %v8220, %v8218
    %v8259 = vpack.c.b16 %v8221, %v8219
    %v8260 = vpack.c.b16 %v8224, %v8222
    %v8261 = vpack.c.b16 %v8225, %v8223
    %v8262 = vpack.c.b16 %v8228, %v8226
    %v8263 = vpack.c.b16 %v8229, %v8227
    %v8264 = vpack.c.b16 %v8232, %v8230
    %v8265 = vpack.c.b16 %v8233, %v8231
    %8298 = vmatprep.subr.bf16.mxu0 %v8235
    %8299 = vmatpush1.bf16.msra.mxu0 %v8234
    %8300 = vmatprep.subr.bf16.mxu0 %v8237
    %8301 = vmatpush1.bf16.msra.mxu0 %v8236
    %8302 = vmatprep.subr.bf16.mxu0 %v8239
    %8303 = vmatpush1.bf16.msra.mxu0 %v8238
    %8304 = vmatprep.subr.bf16.mxu0 %v8241
    %8305 = vmatpush1.bf16.msra.mxu0 %v8240
    %8306 = vmatprep.subr.bf16.mxu0 %v8243
    %8307 = vmatpush1.bf16.msra.mxu0 %v8242
    %8308 = vmatprep.subr.bf16.mxu0 %v8245
    %8309 = vmatpush1.bf16.msra.mxu0 %v8244
    %8310 = vmatprep.subr.bf16.mxu0 %v8247
    %8311 = vmatpush1.bf16.msra.mxu0 %v8246
    %8312 = vmatprep.subr.bf16.mxu0 %v8249
    %8313 = vmatpush1.bf16.msra.mxu0 %v8248
    %8314 = vmatprep.subr.bf16.mxu0 %v8251
    %8315 = vmatpush1.bf16.msra.mxu0 %v8250
    %8316 = vmatprep.subr.bf16.mxu0 %v8253
    %8317 = vmatpush1.bf16.msra.mxu0 %v8252
    %8318 = vmatprep.subr.bf16.mxu0 %v8255
    %8319 = vmatpush1.bf16.msra.mxu0 %v8254
    %8320 = vmatprep.subr.bf16.mxu0 %v8257
    %8321 = vmatpush1.bf16.msra.mxu0 %v8256
    %8322 = vmatprep.subr.bf16.mxu0 %v8259
    %8323 = vmatpush1.bf16.msra.mxu0 %v8258
    %8324 = vmatprep.subr.bf16.mxu0 %v8261
    %8325 = vmatpush1.bf16.msra.mxu0 %v8260
    %8326 = vmatprep.subr.bf16.mxu0 %v8263
    %8327 = vmatpush1.bf16.msra.mxu0 %v8262
    %8328 = vmatprep.subr.bf16.mxu0 %v8265
    %8329 = vmatpush1.bf16.msra.mxu0 %v8264
    %8330 = vmatprep.mubr.bf16.mxu0 %v7116
    %8331 = vmatmul.mubr.bf16.gmra.mrb[0].mxu0 %v7115
    %v8332 = vpop.f32.mrb[0].mxu0
    %v8333 = vadd.f32 0.0, %v8332
    %v8334 = vpop.f32.mrb[0].mxu0
    %v8335 = vadd.f32 0.0, %v8334
    %v8336 = vpop.f32.mrb[0].mxu0
    %v8337 = vadd.f32 0.0, %v8336
    %v8338 = vpop.f32.mrb[0].mxu0
    %v8339 = vadd.f32 0.0, %v8338
    %8340 = vmatprep.mubr.bf16.mxu0 %v7118
    %8341 = vmatmul.mubr.bf16.gmra.mrb[0].mxu0 %v7117
    %v8342 = vpop.f32.mrb[0].mxu0
    %v8343 = vadd.f32 0.0, %v8342
    %v8344 = vpop.f32.mrb[0].mxu0
    %v8345 = vadd.f32 0.0, %v8344
    %v8346 = vpop.f32.mrb[0].mxu0
    %v8347 = vadd.f32 0.0, %v8346
    %v8348 = vpop.f32.mrb[0].mxu0
    %v8349 = vadd.f32 0.0, %v8348
    %8350 = vmatprep.mubr.bf16.mxu0 %v7120
    %8351 = vmatmul.mubr.bf16.gmra.mrb[0].mxu0 %v7119
    %v8352 = vpop.f32.mrb[0].mxu0
    %v8353 = vadd.f32 0.0, %v8352
    %v8354 = vpop.f32.mrb[0].mxu0
    %v8355 = vadd.f32 0.0, %v8354
    %v8356 = vpop.f32.mrb[0].mxu0
    %v8357 = vadd.f32 0.0, %v8356
    %v8358 = vpop.f32.mrb[0].mxu0
    %v8359 = vadd.f32 0.0, %v8358
    %8360 = vmatprep.mubr.bf16.mxu0 %v7122
    %8361 = vmatmul.mubr.bf16.gmra.mrb[0].mxu0 %v7121
    %v8362 = vpop.f32.mrb[0].mxu0
    %v8363 = vadd.f32 0.0, %v8362
    %v8364 = vpop.f32.mrb[0].mxu0
    %v8365 = vadd.f32 0.0, %v8364
    %v8366 = vpop.f32.mrb[0].mxu0
    %v8367 = vadd.f32 0.0, %v8366
    %v8368 = vpop.f32.mrb[0].mxu0
    %v8369 = vadd.f32 0.0, %v8368
    %8370 = vdwg.mxu0
    %s8371 = scalar_lea.vmem %s22, 256
    %v8372 = vld [vmem:[%s8371] sm:$0xff]
    %v8373 = vld [vmem:[%s8371 + $0x8] sm:$0xff]
    %v8374 = vld [vmem:[%s8371 + $0x10] sm:$0xff]
    %v8375 = vld [vmem:[%s8371 + $0x18] sm:$0xff]
    %v8376 = vld [vmem:[%s8371 + $0x20] sm:$0xff]
    %v8377 = vld [vmem:[%s8371 + $0x28] sm:$0xff]
    %v8378 = vld [vmem:[%s8371 + $0x30] sm:$0xff]
    %v8379 = vld [vmem:[%s8371 + $0x38] sm:$0xff]
    %v8380 = vld [vmem:[%s8371 + $0x40] sm:$0xff]
    %v8381 = vld [vmem:[%s8371 + $0x48] sm:$0xff]
    %v8382 = vld [vmem:[%s8371 + $0x50] sm:$0xff]
    %v8383 = vld [vmem:[%s8371 + $0x58] sm:$0xff]
    %v8384 = vld [vmem:[%s8371 + $0x60] sm:$0xff]
    %v8385 = vld [vmem:[%s8371 + $0x68] sm:$0xff]
    %v8386 = vld [vmem:[%s8371 + $0x70] sm:$0xff]
    %v8387 = vld [vmem:[%s8371 + $0x78] sm:$0xff]
    %v8389 = vsel %vm1040, %v8372, 0
    %v8392 = vsel %vm1040, %v8373, 0
    %v8395 = vsel %vm1040, %v8374, 0
    %v8398 = vsel %vm1040, %v8375, 0
    %v8401 = vsel %vm1040, %v8376, 0
    %v8404 = vsel %vm1040, %v8377, 0
    %v8407 = vsel %vm1040, %v8378, 0
    %v8410 = vsel %vm1040, %v8379, 0
    %v8413 = vsel %vm1040, %v8380, 0
    %v8416 = vsel %vm1040, %v8381, 0
    %v8419 = vsel %vm1040, %v8382, 0
    %v8422 = vsel %vm1040, %v8383, 0
    %v8425 = vsel %vm1040, %v8384, 0
    %v8428 = vsel %vm1040, %v8385, 0
    %v8431 = vsel %vm1040, %v8386, 0
    %v8434 = vsel %vm1040, %v8387, 0
    %8436 = vmatprep.subr.mxu0 %v8335
    %8437 = vmatpush1.msra.mxu0 %v8333
    %8438 = vmatprep.subr.mxu0 %v8339
    %8439 = vmatpush1.msra.mxu0 %v8337
    %8440 = vmatprep.subr.mxu0 %v8345
    %8441 = vmatpush1.msra.mxu0 %v8343
    %8442 = vmatprep.subr.mxu0 %v8349
    %8443 = vmatpush1.msra.mxu0 %v8347
    %8444 = vmatprep.subr.mxu0 %v8355
    %8445 = vmatpush1.msra.mxu0 %v8353
    %8446 = vmatprep.subr.mxu0 %v8359
    %8447 = vmatpush1.msra.mxu0 %v8357
    %8448 = vmatprep.subr.mxu0 %v8365
    %8449 = vmatpush1.msra.mxu0 %v8363
    %8450 = vmatprep.subr.mxu0 %v8369
    %8451 = vmatpush1.msra.mxu0 %v8367
    %8452 = vmatprep.subr.mxu0 0.0
    %8453 = vmatpush1.msra.mxu0 0.0
    %8454 = vmatprep.subr.mxu0 0.0
    %8455 = vmatpush1.msra.mxu0 0.0
    %8456 = vmatprep.subr.mxu0 0.0
    %8457 = vmatpush1.msra.mxu0 0.0
    %8458 = vmatprep.subr.mxu0 0.0
    %8459 = vmatpush1.msra.mxu0 0.0
    %8460 = vmatprep.subr.mxu0 0.0
    %8461 = vmatpush1.msra.mxu0 0.0
    %8462 = vmatprep.subr.mxu0 0.0
    %8463 = vmatpush1.msra.mxu0 0.0
    %8464 = vmatprep.subr.mxu0 0.0
    %8465 = vmatpush1.msra.mxu0 0.0
    %8466 = vmatprep.subr.mxu0 0.0
    %8467 = vmatpush1.msra.mxu0 0.0
    %8468 = vmatprep.subr.mxu0 0.0
    %8469 = vmatpush1.msra.mxu0 0.0
    %8470 = vmatprep.subr.mxu0 0.0
    %8471 = vmatpush1.msra.mxu0 0.0
    %8472 = vmatprep.subr.mxu0 0.0
    %8473 = vmatpush1.msra.mxu0 0.0
    %8474 = vmatprep.subr.mxu0 0.0
    %8475 = vmatpush1.msra.mxu0 0.0
    %8476 = vmatprep.subr.mxu0 0.0
    %8477 = vmatpush1.msra.mxu0 0.0
    %8478 = vmatprep.subr.mxu0 0.0
    %8479 = vmatpush1.msra.mxu0 0.0
    %8480 = vmatprep.subr.mxu0 0.0
    %8481 = vmatpush1.msra.mxu0 0.0
    %8482 = vmatprep.subr.mxu0 0.0
    %8483 = vmatpush1.msra.mxu0 0.0
    %8484 = vmatprep.subr.mxu0 0.0
    %8485 = vmatpush1.msra.mxu0 0.0
    %8486 = vmatprep.subr.mxu0 0.0
    %8487 = vmatpush1.msra.mxu0 0.0
    %8488 = vmatprep.subr.mxu0 0.0
    %8489 = vmatpush1.msra.mxu0 0.0
    %8490 = vmatprep.subr.mxu0 0.0
    %8491 = vmatpush1.msra.mxu0 0.0
    %8492 = vmatprep.subr.mxu0 0.0
    %8493 = vmatpush1.msra.mxu0 0.0
    %8494 = vmatprep.subr.mxu0 0.0
    %8495 = vmatpush1.msra.mxu0 0.0
    %8496 = vmatprep.subr.mxu0 0.0
    %8497 = vmatpush1.msra.mxu0 0.0
    %8498 = vmatprep.subr.mxu0 0.0
    %8499 = vmatpush1.msra.mxu0 0.0
    %8500 = vmatprep.mubr.f32.mxu0 0.0
    %8501 = vmatmul.mubr.f32.gmra.mrb[0].mxu0 %v8389
    %v8502 = vpop.f32.mrb[0].mxu0
    %v8503 = vadd.f32 0.0, %v8502
    %v8504 = vpop.f32.mrb[0].mxu0
    %v8505 = vadd.f32 0.0, %v8504
    %8506 = vmatprep.mubr.f32.mxu0 0.0
    %8507 = vmatmul.mubr.f32.gmra.mrb[0].mxu0 %v8392
    %v8508 = vpop.f32.mrb[0].mxu0
    %v8509 = vadd.f32 0.0, %v8508
    %v8510 = vpop.f32.mrb[0].mxu0
    %v8511 = vadd.f32 0.0, %v8510
    %8512 = vmatprep.mubr.f32.mxu0 0.0
    %8513 = vmatmul.mubr.f32.gmra.mrb[0].mxu0 %v8395
    %v8514 = vpop.f32.mrb[0].mxu0
    %v8515 = vadd.f32 0.0, %v8514
    %v8516 = vpop.f32.mrb[0].mxu0
    %v8517 = vadd.f32 0.0, %v8516
    %8518 = vmatprep.mubr.f32.mxu0 0.0
    %8519 = vmatmul.mubr.f32.gmra.mrb[0].mxu0 %v8398
    %v8520 = vpop.f32.mrb[0].mxu0
    %v8521 = vadd.f32 0.0, %v8520
    %v8522 = vpop.f32.mrb[0].mxu0
    %v8523 = vadd.f32 0.0, %v8522
    %8524 = vmatprep.mubr.f32.mxu0 0.0
    %8525 = vmatmul.mubr.f32.gmra.mrb[0].mxu0 %v8401
    %v8526 = vpop.f32.mrb[0].mxu0
    %v8527 = vadd.f32 0.0, %v8526
    %v8528 = vpop.f32.mrb[0].mxu0
    %v8529 = vadd.f32 0.0, %v8528
    %8530 = vmatprep.mubr.f32.mxu0 0.0
    %8531 = vmatmul.mubr.f32.gmra.mrb[0].mxu0 %v8404
    %v8532 = vpop.f32.mrb[0].mxu0
    %v8533 = vadd.f32 0.0, %v8532
    %v8534 = vpop.f32.mrb[0].mxu0
    %v8535 = vadd.f32 0.0, %v8534
    %8536 = vmatprep.mubr.f32.mxu0 0.0
    %8537 = vmatmul.mubr.f32.gmra.mrb[0].mxu0 %v8407
    %v8538 = vpop.f32.mrb[0].mxu0
    %v8539 = vadd.f32 0.0, %v8538
    %v8540 = vpop.f32.mrb[0].mxu0
    %v8541 = vadd.f32 0.0, %v8540
    %8542 = vmatprep.mubr.f32.mxu0 0.0
    %8543 = vmatmul.mubr.f32.gmra.mrb[0].mxu0 %v8410
    %v8544 = vpop.f32.mrb[0].mxu0
    %v8545 = vadd.f32 0.0, %v8544
    %v8546 = vpop.f32.mrb[0].mxu0
    %v8547 = vadd.f32 0.0, %v8546
    %8548 = vmatprep.mubr.f32.mxu0 0.0
    %8549 = vmatmul.mubr.f32.gmra.mrb[0].mxu0 %v8413
    %v8550 = vpop.f32.mrb[0].mxu0
    %v8551 = vadd.f32 0.0, %v8550
    %v8552 = vpop.f32.mrb[0].mxu0
    %v8553 = vadd.f32 0.0, %v8552
    %8554 = vmatprep.mubr.f32.mxu0 0.0
    %8555 = vmatmul.mubr.f32.gmra.mrb[0].mxu0 %v8416
    %v8556 = vpop.f32.mrb[0].mxu0
    %v8557 = vadd.f32 0.0, %v8556
    %v8558 = vpop.f32.mrb[0].mxu0
    %v8559 = vadd.f32 0.0, %v8558
    %8560 = vmatprep.mubr.f32.mxu0 0.0
    %8561 = vmatmul.mubr.f32.gmra.mrb[0].mxu0 %v8419
    %v8562 = vpop.f32.mrb[0].mxu0
    %v8563 = vadd.f32 0.0, %v8562
    %v8564 = vpop.f32.mrb[0].mxu0
    %v8565 = vadd.f32 0.0, %v8564
    %8566 = vmatprep.mubr.f32.mxu0 0.0
    %8567 = vmatmul.mubr.f32.gmra.mrb[0].mxu0 %v8422
    %v8568 = vpop.f32.mrb[0].mxu0
    %v8569 = vadd.f32 0.0, %v8568
    %v8570 = vpop.f32.mrb[0].mxu0
    %v8571 = vadd.f32 0.0, %v8570
    %8572 = vmatprep.mubr.f32.mxu0 0.0
    %8573 = vmatmul.mubr.f32.gmra.mrb[0].mxu0 %v8425
    %v8574 = vpop.f32.mrb[0].mxu0
    %v8575 = vadd.f32 0.0, %v8574
    %v8576 = vpop.f32.mrb[0].mxu0
    %v8577 = vadd.f32 0.0, %v8576
    %8578 = vmatprep.mubr.f32.mxu0 0.0
    %8579 = vmatmul.mubr.f32.gmra.mrb[0].mxu0 %v8428
    %v8580 = vpop.f32.mrb[0].mxu0
    %v8581 = vadd.f32 0.0, %v8580
    %v8582 = vpop.f32.mrb[0].mxu0
    %v8583 = vadd.f32 0.0, %v8582
    %8584 = vmatprep.mubr.f32.mxu0 0.0
    %8585 = vmatmul.mubr.f32.gmra.mrb[0].mxu0 %v8431
    %v8586 = vpop.f32.mrb[0].mxu0
    %v8587 = vadd.f32 0.0, %v8586
    %v8588 = vpop.f32.mrb[0].mxu0
    %v8589 = vadd.f32 0.0, %v8588
    %8590 = vmatprep.mubr.f32.mxu0 0.0
    %8591 = vmatmul.mubr.f32.gmra.mrb[0].mxu0 %v8434
    %v8592 = vpop.f32.mrb[0].mxu0
    %v8593 = vadd.f32 0.0, %v8592
    %v8594 = vpop.f32.mrb[0].mxu0
    %v8595 = vadd.f32 0.0, %v8594
    %8596 = vdwg.mxu0
    %v8597 = vadd.f32 %v8011, %v8503
    %v8598 = vadd.f32 %v8013, %v8505
    %v8599 = vadd.f32 %v8017, %v8509
    %v8600 = vadd.f32 %v8019, %v8511
    %v8601 = vadd.f32 %v8023, %v8515
    %v8602 = vadd.f32 %v8025, %v8517
    %v8603 = vadd.f32 %v8029, %v8521
    %v8604 = vadd.f32 %v8031, %v8523
    %v8605 = vadd.f32 %v8035, %v8527
    %v8606 = vadd.f32 %v8037, %v8529
    %v8607 = vadd.f32 %v8041, %v8533
    %v8608 = vadd.f32 %v8043, %v8535
    %v8609 = vadd.f32 %v8047, %v8539
    %v8610 = vadd.f32 %v8049, %v8541
    %v8611 = vadd.f32 %v8053, %v8545
    %v8612 = vadd.f32 %v8055, %v8547
    %v8613 = vadd.f32 %v8059, %v8551
    %v8614 = vadd.f32 %v8061, %v8553
    %v8615 = vadd.f32 %v8065, %v8557
    %v8616 = vadd.f32 %v8067, %v8559
    %v8617 = vadd.f32 %v8071, %v8563
    %v8618 = vadd.f32 %v8073, %v8565
    %v8619 = vadd.f32 %v8077, %v8569
    %v8620 = vadd.f32 %v8079, %v8571
    %v8621 = vadd.f32 %v8083, %v8575
    %v8622 = vadd.f32 %v8085, %v8577
    %v8623 = vadd.f32 %v8089, %v8581
    %v8624 = vadd.f32 %v8091, %v8583
    %v8625 = vadd.f32 %v8095, %v8587
    %v8626 = vadd.f32 %v8097, %v8589
    %v8627 = vadd.f32 %v8101, %v8593
    %v8628 = vadd.f32 %v8103, %v8595
    %s8629 = scalar_lea.vmem %s21, 768
    %v8630 = vld [vmem:[%s8629] sm:$0xff]
    %v8631 = vld [vmem:[%s8629 + $0x8] sm:$0xff]
    %v8632 = vld [vmem:[%s8629 + $0x10] sm:$0xff]
    %v8633 = vld [vmem:[%s8629 + $0x18] sm:$0xff]
    %v8634 = vld [vmem:[%s8629 + $0x20] sm:$0xff]
    %v8635 = vld [vmem:[%s8629 + $0x28] sm:$0xff]
    %v8636 = vld [vmem:[%s8629 + $0x30] sm:$0xff]
    %v8637 = vld [vmem:[%s8629 + $0x38] sm:$0xff]
    %v8638 = vld [vmem:[%s8629 + $0x40] sm:$0xff]
    %v8639 = vld [vmem:[%s8629 + $0x48] sm:$0xff]
    %v8640 = vld [vmem:[%s8629 + $0x50] sm:$0xff]
    %v8641 = vld [vmem:[%s8629 + $0x58] sm:$0xff]
    %v8642 = vld [vmem:[%s8629 + $0x60] sm:$0xff]
    %v8643 = vld [vmem:[%s8629 + $0x68] sm:$0xff]
    %v8644 = vld [vmem:[%s8629 + $0x70] sm:$0xff]
    %v8645 = vld [vmem:[%s8629 + $0x78] sm:$0xff]
    %v8646 = vld [vmem:[%s8629 + $0x80] sm:$0xff]
    %v8647 = vld [vmem:[%s8629 + $0x88] sm:$0xff]
    %v8648 = vld [vmem:[%s8629 + $0x90] sm:$0xff]
    %v8649 = vld [vmem:[%s8629 + $0x98] sm:$0xff]
    %v8650 = vld [vmem:[%s8629 + $0xa0] sm:$0xff]
    %v8651 = vld [vmem:[%s8629 + $0xa8] sm:$0xff]
    %v8652 = vld [vmem:[%s8629 + $0xb0] sm:$0xff]
    %v8653 = vld [vmem:[%s8629 + $0xb8] sm:$0xff]
    %v8654 = vld [vmem:[%s8629 + $0xc0] sm:$0xff]
    %v8655 = vld [vmem:[%s8629 + $0xc8] sm:$0xff]
    %v8656 = vld [vmem:[%s8629 + $0xd0] sm:$0xff]
    %v8657 = vld [vmem:[%s8629 + $0xd8] sm:$0xff]
    %v8658 = vld [vmem:[%s8629 + $0xe0] sm:$0xff]
    %v8659 = vld [vmem:[%s8629 + $0xe8] sm:$0xff]
    %v8660 = vld [vmem:[%s8629 + $0xf0] sm:$0xff]
    %v8661 = vld [vmem:[%s8629 + $0xf8] sm:$0xff]
    %v8694 = vunpack.c.l.b16 %v8630
    %v8695 = vunpack.c.h.b16 %v8630
    %v8696 = vunpack.c.l.b16 %v8631
    %v8697 = vunpack.c.h.b16 %v8631
    %v8698 = vunpack.c.l.b16 %v8632
    %v8699 = vunpack.c.h.b16 %v8632
    %v8700 = vunpack.c.l.b16 %v8633
    %v8701 = vunpack.c.h.b16 %v8633
    %v8702 = vunpack.c.l.b16 %v8634
    %v8703 = vunpack.c.h.b16 %v8634
    %v8704 = vunpack.c.l.b16 %v8635
    %v8705 = vunpack.c.h.b16 %v8635
    %v8706 = vunpack.c.l.b16 %v8636
    %v8707 = vunpack.c.h.b16 %v8636
    %v8708 = vunpack.c.l.b16 %v8637
    %v8709 = vunpack.c.h.b16 %v8637
    %v8710 = vunpack.c.l.b16 %v8638
    %v8711 = vunpack.c.h.b16 %v8638
    %v8712 = vunpack.c.l.b16 %v8639
    %v8713 = vunpack.c.h.b16 %v8639
    %v8714 = vunpack.c.l.b16 %v8640
    %v8715 = vunpack.c.h.b16 %v8640
    %v8716 = vunpack.c.l.b16 %v8641
    %v8717 = vunpack.c.h.b16 %v8641
    %v8718 = vunpack.c.l.b16 %v8642
    %v8719 = vunpack.c.h.b16 %v8642
    %v8720 = vunpack.c.l.b16 %v8643
    %v8721 = vunpack.c.h.b16 %v8643
    %v8722 = vunpack.c.l.b16 %v8644
    %v8723 = vunpack.c.h.b16 %v8644
    %v8724 = vunpack.c.l.b16 %v8645
    %v8725 = vunpack.c.h.b16 %v8645
    %v8726 = vunpack.c.l.b16 %v8646
    %v8727 = vunpack.c.h.b16 %v8646
    %v8728 = vunpack.c.l.b16 %v8647
    %v8729 = vunpack.c.h.b16 %v8647
    %v8730 = vunpack.c.l.b16 %v8648
    %v8731 = vunpack.c.h.b16 %v8648
    %v8732 = vunpack.c.l.b16 %v8649
    %v8733 = vunpack.c.h.b16 %v8649
    %v8734 = vunpack.c.l.b16 %v8650
    %v8735 = vunpack.c.h.b16 %v8650
    %v8736 = vunpack.c.l.b16 %v8651
    %v8737 = vunpack.c.h.b16 %v8651
    %v8738 = vunpack.c.l.b16 %v8652
    %v8739 = vunpack.c.h.b16 %v8652
    %v8740 = vunpack.c.l.b16 %v8653
    %v8741 = vunpack.c.h.b16 %v8653
    %v8742 = vunpack.c.l.b16 %v8654
    %v8743 = vunpack.c.h.b16 %v8654
    %v8744 = vunpack.c.l.b16 %v8655
    %v8745 = vunpack.c.h.b16 %v8655
    %v8746 = vunpack.c.l.b16 %v8656
    %v8747 = vunpack.c.h.b16 %v8656
    %v8748 = vunpack.c.l.b16 %v8657
    %v8749 = vunpack.c.h.b16 %v8657
    %v8750 = vunpack.c.l.b16 %v8658
    %v8751 = vunpack.c.h.b16 %v8658
    %v8752 = vunpack.c.l.b16 %v8659
    %v8753 = vunpack.c.h.b16 %v8659
    %v8754 = vunpack.c.l.b16 %v8660
    %v8755 = vunpack.c.h.b16 %v8660
    %v8756 = vunpack.c.l.b16 %v8661
    %v8757 = vunpack.c.h.b16 %v8661
    %v8758 = vpack.c.b16 %v8696, %v8694
    %v8759 = vpack.c.b16 %v8697, %v8695
    %v8760 = vpack.c.b16 %v8700, %v8698
    %v8761 = vpack.c.b16 %v8701, %v8699
    %v8762 = vpack.c.b16 %v8704, %v8702
    %v8763 = vpack.c.b16 %v8705, %v8703
    %v8764 = vpack.c.b16 %v8708, %v8706
    %v8765 = vpack.c.b16 %v8709, %v8707
    %v8766 = vpack.c.b16 %v8712, %v8710
    %v8767 = vpack.c.b16 %v8713, %v8711
    %v8768 = vpack.c.b16 %v8716, %v8714
    %v8769 = vpack.c.b16 %v8717, %v8715
    %v8770 = vpack.c.b16 %v8720, %v8718
    %v8771 = vpack.c.b16 %v8721, %v8719
    %v8772 = vpack.c.b16 %v8724, %v8722
    %v8773 = vpack.c.b16 %v8725, %v8723
    %v8774 = vpack.c.b16 %v8728, %v8726
    %v8775 = vpack.c.b16 %v8729, %v8727
    %v8776 = vpack.c.b16 %v8732, %v8730
    %v8777 = vpack.c.b16 %v8733, %v8731
    %v8778 = vpack.c.b16 %v8736, %v8734
    %v8779 = vpack.c.b16 %v8737, %v8735
    %v8780 = vpack.c.b16 %v8740, %v8738
    %v8781 = vpack.c.b16 %v8741, %v8739
    %v8782 = vpack.c.b16 %v8744, %v8742
    %v8783 = vpack.c.b16 %v8745, %v8743
    %v8784 = vpack.c.b16 %v8748, %v8746
    %v8785 = vpack.c.b16 %v8749, %v8747
    %v8786 = vpack.c.b16 %v8752, %v8750
    %v8787 = vpack.c.b16 %v8753, %v8751
    %v8788 = vpack.c.b16 %v8756, %v8754
    %v8789 = vpack.c.b16 %v8757, %v8755
    %8822 = vmatprep.subr.bf16.mxu0 %v8759
    %8823 = vmatpush1.bf16.msra.mxu0 %v8758
    %8824 = vmatprep.subr.bf16.mxu0 %v8761
    %8825 = vmatpush1.bf16.msra.mxu0 %v8760
    %8826 = vmatprep.subr.bf16.mxu0 %v8763
    %8827 = vmatpush1.bf16.msra.mxu0 %v8762
    %8828 = vmatprep.subr.bf16.mxu0 %v8765
    %8829 = vmatpush1.bf16.msra.mxu0 %v8764
    %8830 = vmatprep.subr.bf16.mxu0 %v8767
    %8831 = vmatpush1.bf16.msra.mxu0 %v8766
    %8832 = vmatprep.subr.bf16.mxu0 %v8769
    %8833 = vmatpush1.bf16.msra.mxu0 %v8768
    %8834 = vmatprep.subr.bf16.mxu0 %v8771
    %8835 = vmatpush1.bf16.msra.mxu0 %v8770
    %8836 = vmatprep.subr.bf16.mxu0 %v8773
    %8837 = vmatpush1.bf16.msra.mxu0 %v8772
    %8838 = vmatprep.subr.bf16.mxu0 %v8775
    %8839 = vmatpush1.bf16.msra.mxu0 %v8774
    %8840 = vmatprep.subr.bf16.mxu0 %v8777
    %8841 = vmatpush1.bf16.msra.mxu0 %v8776
    %8842 = vmatprep.subr.bf16.mxu0 %v8779
    %8843 = vmatpush1.bf16.msra.mxu0 %v8778
    %8844 = vmatprep.subr.bf16.mxu0 %v8781
    %8845 = vmatpush1.bf16.msra.mxu0 %v8780
    %8846 = vmatprep.subr.bf16.mxu0 %v8783
    %8847 = vmatpush1.bf16.msra.mxu0 %v8782
    %8848 = vmatprep.subr.bf16.mxu0 %v8785
    %8849 = vmatpush1.bf16.msra.mxu0 %v8784
    %8850 = vmatprep.subr.bf16.mxu0 %v8787
    %8851 = vmatpush1.bf16.msra.mxu0 %v8786
    %8852 = vmatprep.subr.bf16.mxu0 %v8789
    %8853 = vmatpush1.bf16.msra.mxu0 %v8788
    %8854 = vmatprep.mubr.bf16.mxu0 %v7116
    %8855 = vmatmul.mubr.bf16.gmra.mrb[0].mxu0 %v7115
    %v8856 = vpop.f32.mrb[0].mxu0
    %v8857 = vadd.f32 0.0, %v8856
    %v8858 = vpop.f32.mrb[0].mxu0
    %v8859 = vadd.f32 0.0, %v8858
    %v8860 = vpop.f32.mrb[0].mxu0
    %v8861 = vadd.f32 0.0, %v8860
    %v8862 = vpop.f32.mrb[0].mxu0
    %v8863 = vadd.f32 0.0, %v8862
    %8864 = vmatprep.mubr.bf16.mxu0 %v7118
    %8865 = vmatmul.mubr.bf16.gmra.mrb[0].mxu0 %v7117
    %v8866 = vpop.f32.mrb[0].mxu0
    %v8867 = vadd.f32 0.0, %v8866
    %v8868 = vpop.f32.mrb[0].mxu0
    %v8869 = vadd.f32 0.0, %v8868
    %v8870 = vpop.f32.mrb[0].mxu0
    %v8871 = vadd.f32 0.0, %v8870
    %v8872 = vpop.f32.mrb[0].mxu0
    %v8873 = vadd.f32 0.0, %v8872
    %8874 = vmatprep.mubr.bf16.mxu0 %v7120
    %8875 = vmatmul.mubr.bf16.gmra.mrb[0].mxu0 %v7119
    %v8876 = vpop.f32.mrb[0].mxu0
    %v8877 = vadd.f32 0.0, %v8876
    %v8878 = vpop.f32.mrb[0].mxu0
    %v8879 = vadd.f32 0.0, %v8878
    %v8880 = vpop.f32.mrb[0].mxu0
    %v8881 = vadd.f32 0.0, %v8880
    %v8882 = vpop.f32.mrb[0].mxu0
    %v8883 = vadd.f32 0.0, %v8882
    %8884 = vmatprep.mubr.bf16.mxu0 %v7122
    %8885 = vmatmul.mubr.bf16.gmra.mrb[0].mxu0 %v7121
    %v8886 = vpop.f32.mrb[0].mxu0
    %v8887 = vadd.f32 0.0, %v8886
    %v8888 = vpop.f32.mrb[0].mxu0
    %v8889 = vadd.f32 0.0, %v8888
    %v8890 = vpop.f32.mrb[0].mxu0
    %v8891 = vadd.f32 0.0, %v8890
    %v8892 = vpop.f32.mrb[0].mxu0
    %v8893 = vadd.f32 0.0, %v8892
    %8894 = vdwg.mxu0
    %s8895 = scalar_lea.vmem %s22, 384
    %v8896 = vld [vmem:[%s8895] sm:$0xff]
    %v8897 = vld [vmem:[%s8895 + $0x8] sm:$0xff]
    %v8898 = vld [vmem:[%s8895 + $0x10] sm:$0xff]
    %v8899 = vld [vmem:[%s8895 + $0x18] sm:$0xff]
    %v8900 = vld [vmem:[%s8895 + $0x20] sm:$0xff]
    %v8901 = vld [vmem:[%s8895 + $0x28] sm:$0xff]
    %v8902 = vld [vmem:[%s8895 + $0x30] sm:$0xff]
    %v8903 = vld [vmem:[%s8895 + $0x38] sm:$0xff]
    %v8904 = vld [vmem:[%s8895 + $0x40] sm:$0xff]
    %v8905 = vld [vmem:[%s8895 + $0x48] sm:$0xff]
    %v8906 = vld [vmem:[%s8895 + $0x50] sm:$0xff]
    %v8907 = vld [vmem:[%s8895 + $0x58] sm:$0xff]
    %v8908 = vld [vmem:[%s8895 + $0x60] sm:$0xff]
    %v8909 = vld [vmem:[%s8895 + $0x68] sm:$0xff]
    %v8910 = vld [vmem:[%s8895 + $0x70] sm:$0xff]
    %v8911 = vld [vmem:[%s8895 + $0x78] sm:$0xff]
    %v8913 = vsel %vm1040, %v8896, 0
    %v8916 = vsel %vm1040, %v8897, 0
    %v8919 = vsel %vm1040, %v8898, 0
    %v8922 = vsel %vm1040, %v8899, 0
    %v8925 = vsel %vm1040, %v8900, 0
    %v8928 = vsel %vm1040, %v8901, 0
    %v8931 = vsel %vm1040, %v8902, 0
    %v8934 = vsel %vm1040, %v8903, 0
    %v8937 = vsel %vm1040, %v8904, 0
    %v8940 = vsel %vm1040, %v8905, 0
    %v8943 = vsel %vm1040, %v8906, 0
    %v8946 = vsel %vm1040, %v8907, 0
    %v8949 = vsel %vm1040, %v8908, 0
    %v8952 = vsel %vm1040, %v8909, 0
    %v8955 = vsel %vm1040, %v8910, 0
    %v8958 = vsel %vm1040, %v8911, 0
    %8960 = vmatprep.subr.mxu0 %v8859
    %8961 = vmatpush1.msra.mxu0 %v8857
    %8962 = vmatprep.subr.mxu0 %v8863
    %8963 = vmatpush1.msra.mxu0 %v8861
    %8964 = vmatprep.subr.mxu0 %v8869
    %8965 = vmatpush1.msra.mxu0 %v8867
    %8966 = vmatprep.subr.mxu0 %v8873
    %8967 = vmatpush1.msra.mxu0 %v8871
    %8968 = vmatprep.subr.mxu0 %v8879
    %8969 = vmatpush1.msra.mxu0 %v8877
    %8970 = vmatprep.subr.mxu0 %v8883
    %8971 = vmatpush1.msra.mxu0 %v8881
    %8972 = vmatprep.subr.mxu0 %v8889
    %8973 = vmatpush1.msra.mxu0 %v8887
    %8974 = vmatprep.subr.mxu0 %v8893
    %8975 = vmatpush1.msra.mxu0 %v8891
    %8976 = vmatprep.subr.mxu0 0.0
    %8977 = vmatpush1.msra.mxu0 0.0
    %8978 = vmatprep.subr.mxu0 0.0
    %8979 = vmatpush1.msra.mxu0 0.0
    %8980 = vmatprep.subr.mxu0 0.0
    %8981 = vmatpush1.msra.mxu0 0.0
    %8982 = vmatprep.subr.mxu0 0.0
    %8983 = vmatpush1.msra.mxu0 0.0
    %8984 = vmatprep.subr.mxu0 0.0
    %8985 = vmatpush1.msra.mxu0 0.0
    %8986 = vmatprep.subr.mxu0 0.0
    %8987 = vmatpush1.msra.mxu0 0.0
    %8988 = vmatprep.subr.mxu0 0.0
    %8989 = vmatpush1.msra.mxu0 0.0
    %8990 = vmatprep.subr.mxu0 0.0
    %8991 = vmatpush1.msra.mxu0 0.0
    %8992 = vmatprep.subr.mxu0 0.0
    %8993 = vmatpush1.msra.mxu0 0.0
    %8994 = vmatprep.subr.mxu0 0.0
    %8995 = vmatpush1.msra.mxu0 0.0
    %8996 = vmatprep.subr.mxu0 0.0
    %8997 = vmatpush1.msra.mxu0 0.0
    %8998 = vmatprep.subr.mxu0 0.0
    %8999 = vmatpush1.msra.mxu0 0.0
    %9000 = vmatprep.subr.mxu0 0.0
    %9001 = vmatpush1.msra.mxu0 0.0
    %9002 = vmatprep.subr.mxu0 0.0
    %9003 = vmatpush1.msra.mxu0 0.0
    %9004 = vmatprep.subr.mxu0 0.0
    %9005 = vmatpush1.msra.mxu0 0.0
    %9006 = vmatprep.subr.mxu0 0.0
    %9007 = vmatpush1.msra.mxu0 0.0
    %9008 = vmatprep.subr.mxu0 0.0
    %9009 = vmatpush1.msra.mxu0 0.0
    %9010 = vmatprep.subr.mxu0 0.0
    %9011 = vmatpush1.msra.mxu0 0.0
    %9012 = vmatprep.subr.mxu0 0.0
    %9013 = vmatpush1.msra.mxu0 0.0
    %9014 = vmatprep.subr.mxu0 0.0
    %9015 = vmatpush1.msra.mxu0 0.0
    %9016 = vmatprep.subr.mxu0 0.0
    %9017 = vmatpush1.msra.mxu0 0.0
    %9018 = vmatprep.subr.mxu0 0.0
    %9019 = vmatpush1.msra.mxu0 0.0
    %9020 = vmatprep.subr.mxu0 0.0
    %9021 = vmatpush1.msra.mxu0 0.0
    %9022 = vmatprep.subr.mxu0 0.0
    %9023 = vmatpush1.msra.mxu0 0.0
    %9024 = vmatprep.mubr.f32.mxu0 0.0
    %9025 = vmatmul.mubr.f32.gmra.mrb[0].mxu0 %v8913
    %v9026 = vpop.f32.mrb[0].mxu0
    %v9027 = vadd.f32 0.0, %v9026
    %v9028 = vpop.f32.mrb[0].mxu0
    %v9029 = vadd.f32 0.0, %v9028
    %9030 = vmatprep.mubr.f32.mxu0 0.0
    %9031 = vmatmul.mubr.f32.gmra.mrb[0].mxu0 %v8916
    %v9032 = vpop.f32.mrb[0].mxu0
    %v9033 = vadd.f32 0.0, %v9032
    %v9034 = vpop.f32.mrb[0].mxu0
    %v9035 = vadd.f32 0.0, %v9034
    %9036 = vmatprep.mubr.f32.mxu0 0.0
    %9037 = vmatmul.mubr.f32.gmra.mrb[0].mxu0 %v8919
    %v9038 = vpop.f32.mrb[0].mxu0
    %v9039 = vadd.f32 0.0, %v9038
    %v9040 = vpop.f32.mrb[0].mxu0
    %v9041 = vadd.f32 0.0, %v9040
    %9042 = vmatprep.mubr.f32.mxu0 0.0
    %9043 = vmatmul.mubr.f32.gmra.mrb[0].mxu0 %v8922
    %v9044 = vpop.f32.mrb[0].mxu0
    %v9045 = vadd.f32 0.0, %v9044
    %v9046 = vpop.f32.mrb[0].mxu0
    %v9047 = vadd.f32 0.0, %v9046
    %9048 = vmatprep.mubr.f32.mxu0 0.0
    %9049 = vmatmul.mubr.f32.gmra.mrb[0].mxu0 %v8925
    %v9050 = vpop.f32.mrb[0].mxu0
    %v9051 = vadd.f32 0.0, %v9050
    %v9052 = vpop.f32.mrb[0].mxu0
    %v9053 = vadd.f32 0.0, %v9052
    %9054 = vmatprep.mubr.f32.mxu0 0.0
    %9055 = vmatmul.mubr.f32.gmra.mrb[0].mxu0 %v8928
    %v9056 = vpop.f32.mrb[0].mxu0
    %v9057 = vadd.f32 0.0, %v9056
    %v9058 = vpop.f32.mrb[0].mxu0
    %v9059 = vadd.f32 0.0, %v9058
    %9060 = vmatprep.mubr.f32.mxu0 0.0
    %9061 = vmatmul.mubr.f32.gmra.mrb[0].mxu0 %v8931
    %v9062 = vpop.f32.mrb[0].mxu0
    %v9063 = vadd.f32 0.0, %v9062
    %v9064 = vpop.f32.mrb[0].mxu0
    %v9065 = vadd.f32 0.0, %v9064
    %9066 = vmatprep.mubr.f32.mxu0 0.0
    %9067 = vmatmul.mubr.f32.gmra.mrb[0].mxu0 %v8934
    %v9068 = vpop.f32.mrb[0].mxu0
    %v9069 = vadd.f32 0.0, %v9068
    %v9070 = vpop.f32.mrb[0].mxu0
    %v9071 = vadd.f32 0.0, %v9070
    %9072 = vmatprep.mubr.f32.mxu0 0.0
    %9073 = vmatmul.mubr.f32.gmra.mrb[0].mxu0 %v8937
    %v9074 = vpop.f32.mrb[0].mxu0
    %v9075 = vadd.f32 0.0, %v9074
    %v9076 = vpop.f32.mrb[0].mxu0
    %v9077 = vadd.f32 0.0, %v9076
    %9078 = vmatprep.mubr.f32.mxu0 0.0
    %9079 = vmatmul.mubr.f32.gmra.mrb[0].mxu0 %v8940
    %v9080 = vpop.f32.mrb[0].mxu0
    %v9081 = vadd.f32 0.0, %v9080
    %v9082 = vpop.f32.mrb[0].mxu0
    %v9083 = vadd.f32 0.0, %v9082
    %9084 = vmatprep.mubr.f32.mxu0 0.0
    %9085 = vmatmul.mubr.f32.gmra.mrb[0].mxu0 %v8943
    %v9086 = vpop.f32.mrb[0].mxu0
    %v9087 = vadd.f32 0.0, %v9086
    %v9088 = vpop.f32.mrb[0].mxu0
    %v9089 = vadd.f32 0.0, %v9088
    %9090 = vmatprep.mubr.f32.mxu0 0.0
    %9091 = vmatmul.mubr.f32.gmra.mrb[0].mxu0 %v8946
    %v9092 = vpop.f32.mrb[0].mxu0
    %v9093 = vadd.f32 0.0, %v9092
    %v9094 = vpop.f32.mrb[0].mxu0
    %v9095 = vadd.f32 0.0, %v9094
    %9096 = vmatprep.mubr.f32.mxu0 0.0
    %9097 = vmatmul.mubr.f32.gmra.mrb[0].mxu0 %v8949
    %v9098 = vpop.f32.mrb[0].mxu0
    %v9099 = vadd.f32 0.0, %v9098
    %v9100 = vpop.f32.mrb[0].mxu0
    %v9101 = vadd.f32 0.0, %v9100
    %9102 = vmatprep.mubr.f32.mxu0 0.0
    %9103 = vmatmul.mubr.f32.gmra.mrb[0].mxu0 %v8952
    %v9104 = vpop.f32.mrb[0].mxu0
    %v9105 = vadd.f32 0.0, %v9104
    %v9106 = vpop.f32.mrb[0].mxu0
    %v9107 = vadd.f32 0.0, %v9106
    %9108 = vmatprep.mubr.f32.mxu0 0.0
    %9109 = vmatmul.mubr.f32.gmra.mrb[0].mxu0 %v8955
    %v9110 = vpop.f32.mrb[0].mxu0
    %v9111 = vadd.f32 0.0, %v9110
    %v9112 = vpop.f32.mrb[0].mxu0
    %v9113 = vadd.f32 0.0, %v9112
    %9114 = vmatprep.mubr.f32.mxu0 0.0
    %9115 = vmatmul.mubr.f32.gmra.mrb[0].mxu0 %v8958
    %v9116 = vpop.f32.mrb[0].mxu0
    %v9117 = vadd.f32 0.0, %v9116
    %v9118 = vpop.f32.mrb[0].mxu0
    %v9119 = vadd.f32 0.0, %v9118
    %9120 = vdwg.mxu0
    %v9121 = vadd.f32 %v8597, %v9027
    %v9122 = vadd.f32 %v8598, %v9029
    %v9123 = vadd.f32 %v8599, %v9033
    %v9124 = vadd.f32 %v8600, %v9035
    %v9125 = vadd.f32 %v8601, %v9039
    %v9126 = vadd.f32 %v8602, %v9041
    %v9127 = vadd.f32 %v8603, %v9045
    %v9128 = vadd.f32 %v8604, %v9047
    %v9129 = vadd.f32 %v8605, %v9051
    %v9130 = vadd.f32 %v8606, %v9053
    %v9131 = vadd.f32 %v8607, %v9057
    %v9132 = vadd.f32 %v8608, %v9059
    %v9133 = vadd.f32 %v8609, %v9063
    %v9134 = vadd.f32 %v8610, %v9065
    %v9135 = vadd.f32 %v8611, %v9069
    %v9136 = vadd.f32 %v8612, %v9071
    %v9137 = vadd.f32 %v8613, %v9075
    %v9138 = vadd.f32 %v8614, %v9077
    %v9139 = vadd.f32 %v8615, %v9081
    %v9140 = vadd.f32 %v8616, %v9083
    %v9141 = vadd.f32 %v8617, %v9087
    %v9142 = vadd.f32 %v8618, %v9089
    %v9143 = vadd.f32 %v8619, %v9093
    %v9144 = vadd.f32 %v8620, %v9095
    %v9145 = vadd.f32 %v8621, %v9099
    %v9146 = vadd.f32 %v8622, %v9101
    %v9147 = vadd.f32 %v8623, %v9105
    %v9148 = vadd.f32 %v8624, %v9107
    %v9149 = vadd.f32 %v8625, %v9111
    %v9150 = vadd.f32 %v8626, %v9113
    %v9151 = vadd.f32 %v8627, %v9117
    %v9152 = vadd.f32 %v8628, %v9119
    %v9153 = vtanh.pop %v9121
    %v9154 = vtanh.pop %v9122
    %v9155 = vtanh.pop %v9123
    %v9156 = vtanh.pop %v9124
    %v9157 = vtanh.pop %v9125
    %v9158 = vtanh.pop %v9126
    %v9159 = vtanh.pop %v9127
    %v9160 = vtanh.pop %v9128
    %v9161 = vtanh.pop %v9129
    %v9162 = vtanh.pop %v9130
    %v9163 = vtanh.pop %v9131
    %v9164 = vtanh.pop %v9132
    %v9165 = vtanh.pop %v9133
    %v9166 = vtanh.pop %v9134
    %v9167 = vtanh.pop %v9135
    %v9168 = vtanh.pop %v9136
    %v9169 = vtanh.pop %v9137
    %v9170 = vtanh.pop %v9138
    %v9171 = vtanh.pop %v9139
    %v9172 = vtanh.pop %v9140
    %v9173 = vtanh.pop %v9141
    %v9174 = vtanh.pop %v9142
    %v9175 = vtanh.pop %v9143
    %v9176 = vtanh.pop %v9144
    %v9177 = vtanh.pop %v9145
    %v9178 = vtanh.pop %v9146
    %v9179 = vtanh.pop %v9147
    %v9180 = vtanh.pop %v9148
    %v9181 = vtanh.pop %v9149
    %v9182 = vtanh.pop %v9150
    %v9183 = vtanh.pop %v9151
    %v9184 = vtanh.pop %v9152
    %9185 = vst [vmem:[%s23] sm:$0xff] %v9153
    %9186 = vst.msk [vmem:[%s23 + $0x8] sm:$0xff] %vm1040, %v9154
    %9187 = vst [vmem:[%s23 + $0x10] sm:$0xff] %v9155
    %9188 = vst.msk [vmem:[%s23 + $0x18] sm:$0xff] %vm1040, %v9156
    %9189 = vst [vmem:[%s23 + $0x20] sm:$0xff] %v9157
    %9190 = vst.msk [vmem:[%s23 + $0x28] sm:$0xff] %vm1040, %v9158
    %9191 = vst [vmem:[%s23 + $0x30] sm:$0xff] %v9159
    %9192 = vst.msk [vmem:[%s23 + $0x38] sm:$0xff] %vm1040, %v9160
    %9193 = vst [vmem:[%s23 + $0x40] sm:$0xff] %v9161
    %9194 = vst.msk [vmem:[%s23 + $0x48] sm:$0xff] %vm1040, %v9162
    %9195 = vst [vmem:[%s23 + $0x50] sm:$0xff] %v9163
    %9196 = vst.msk [vmem:[%s23 + $0x58] sm:$0xff] %vm1040, %v9164
    %9197 = vst [vmem:[%s23 + $0x60] sm:$0xff] %v9165
    %9198 = vst.msk [vmem:[%s23 + $0x68] sm:$0xff] %vm1040, %v9166
    %9199 = vst [vmem:[%s23 + $0x70] sm:$0xff] %v9167
    %9200 = vst.msk [vmem:[%s23 + $0x78] sm:$0xff] %vm1040, %v9168
    %9201 = vst [vmem:[%s23 + $0x80] sm:$0xff] %v9169
    %9202 = vst.msk [vmem:[%s23 + $0x88] sm:$0xff] %vm1040, %v9170
    %9203 = vst [vmem:[%s23 + $0x90] sm:$0xff] %v9171
    %9204 = vst.msk [vmem:[%s23 + $0x98] sm:$0xff] %vm1040, %v9172
    %9205 = vst [vmem:[%s23 + $0xa0] sm:$0xff] %v9173
    %9206 = vst.msk [vmem:[%s23 + $0xa8] sm:$0xff] %vm1040, %v9174
    %9207 = vst [vmem:[%s23 + $0xb0] sm:$0xff] %v9175
    %9208 = vst.msk [vmem:[%s23 + $0xb8] sm:$0xff] %vm1040, %v9176
    %9209 = vst [vmem:[%s23 + $0xc0] sm:$0xff] %v9177
    %9210 = vst.msk [vmem:[%s23 + $0xc8] sm:$0xff] %vm1040, %v9178
    %9211 = vst [vmem:[%s23 + $0xd0] sm:$0xff] %v9179
    %9212 = vst.msk [vmem:[%s23 + $0xd8] sm:$0xff] %vm1040, %v9180
    %9213 = vst [vmem:[%s23 + $0xe0] sm:$0xff] %v9181
    %9214 = vst.msk [vmem:[%s23 + $0xe8] sm:$0xff] %vm1040, %v9182
    %9215 = vst [vmem:[%s23 + $0xf0] sm:$0xff] %v9183
    %9216 = vst.msk [vmem:[%s23 + $0xf8] sm:$0xff] %vm1040, %v9184
    // Predicated region
    $region114: #{generator_forward.1} parent=1 // pred_check
      _
    $region115: #{generator_forward.1} parent=1 // pred_check_branch
      %9218 = sbr.rel (0) target = $region117
    $region116: #{generator_forward.1} parent=1 // pred_region
      _
    $region117: #{generator_forward.1} parent=1 // pred_fallthru
      _
    // Predicated region
    $region118: #{generator_forward.1} parent=1 // pred_check
      _
    $region119: #{generator_forward.1} parent=1 // pred_check_branch
      %9220 = sbr.rel (0) target = $region121
    $region120: #{generator_forward.1} parent=1 // pred_region
      _
    $region121: #{generator_forward.1} parent=1 // pred_fallthru
      _
    %9221 = vsyncpa [#allocation3], 1
    %9222 = vsyncpa [#allocation5], 1
    %9223 = vsyncpa [#allocation8], 1

</llo_original>
